<compile_context>
chip_gen: v5e
topology: v5e:2x2
jax: 0.10.0
libtpu: 0.0.40
codegen_flags: <defaults>
</compile_context>

<pallas_src>
from functools import partial

import jax
import jax.numpy as jnp
from jax.experimental import pallas as pl
from jax.experimental.pallas import tpu as pltpu

NEG_INF = -1e9


# ----------------------------------------------------------------------------
# Fused per-layer kernel (grid axis = layer index; x / m carried in output refs)
# ----------------------------------------------------------------------------
def _fused_layer_kernel(qid_x_ref, kval_x_ref, qid_m_ref, kval_m_ref,
                        x_hbm_ref, m_hbm_ref,
                        ag_ref, ab_ref, wq_ref, wk_ref, wv_ref, wo_ref, bo_ref,
                        fg_ref, fb_ref, w1_ref, b1_ref, w2_ref, b2_ref,
                        x_ref, m_ref, sem_ref, *, heads, dim_head):
    # Layer 0 only: one-shot DMA of the input state HBM -> carried output blocks (VMEM).
    # The x/m inputs stay in HBM for the rest of the run (no duplicated VMEM residency).
    @pl.when(pl.program_id(0) == 0)
    def _init():
        cpx = pltpu.make_async_copy(x_hbm_ref, x_ref, sem_ref.at[0])
        cpm = pltpu.make_async_copy(m_hbm_ref, m_ref, sem_ref.at[1])
        cpx.start()
        cpm.start()
        cpx.wait()
        cpm.wait()

    def layernorm(t, g, b):                       # f32 elementwise math (v5e-safe)
        mu = jnp.mean(t, axis=-1, keepdims=True)
        var = jnp.mean(jnp.square(t - mu), axis=-1, keepdims=True)
        return (t - mu) * jax.lax.rsqrt(var + 1e-5) * g + b

    # In-kernel additive mask bias from tiny vectors:
    #   qid  (Nq, 1): batch id of each query row
    #   kval (1, Nk): batch id of each key column, or -1 where the key is masked out.
    # Equality -> attendable (same batch AND key not masked), else -1e9.  This encodes
    # both key masking and the cross-batch block-diagonal structure of the
    # batch-flattened attention with a couple of VPU ops per tile.
    def make_bias(qid, kval):
        return jnp.where(qid == kval, 0.0, NEG_INF)

    def attend(xq, xc, qid, kval, idx):
        g = ag_ref[0, idx]                        # (D,)
        b = ab_ref[0, idx]
        nq = layernorm(xq, g, b).astype(jnp.bfloat16)
        # Reuse the normalized tensor for self-attention (trace-time identity check).
        nc = nq if xc is xq else layernorm(xc, g, b).astype(jnp.bfloat16)
        bias = make_bias(qid, kval)               # (Nq, Nk) f32

        # Fused QKV projections: M = B*L rows, K = D = 128, N = heads*dim_head.
        # (1/sqrt(dim_head) is pre-folded into wq at pack time.)
        q = jnp.dot(nq, wq_ref[0, idx],
                    preferred_element_type=jnp.float32).astype(jnp.bfloat16)
        k = jnp.dot(nc, wk_ref[0, idx],
                    preferred_element_type=jnp.float32).astype(jnp.bfloat16)
        v = jnp.dot(nc, wv_ref[0, idx],
                    preferred_element_type=jnp.float32).astype(jnp.bfloat16)

        outs = []
        for h in range(heads):                    # static; slices are whole 128-lane tiles
            sl = slice(h * dim_head, (h + 1) * dim_head)
            s = jnp.einsum('qd,kd->qk', q[:, sl], k[:, sl],
                           preferred_element_type=jnp.float32) + bias      # (Nq, Nk) f32
            s = s - jnp.max(s, axis=-1, keepdims=True)
            p = jnp.exp(s)
            p = p * pl.reciprocal(jnp.sum(p, axis=-1, keepdims=True), approx=True)
            outs.append(jnp.dot(p.astype(jnp.bfloat16), v[:, sl],
                                preferred_element_type=jnp.float32).astype(jnp.bfloat16))
        # Lane-aligned concat, then ONE output projection with K = heads*dim_head
        # (fills the 256-deep v6e/v7x MXU; no per-head f32 accumulation passes).
        o_cat = jnp.concatenate(outs, axis=-1)    # (Nq, inner) bf16
        return (jnp.dot(o_cat, wo_ref[0, idx], preferred_element_type=jnp.float32)
                + bo_ref[0, idx])

    def feed_forward(t, idx):
        g = fg_ref[0, idx]
        b = fb_ref[0, idx]
        n = layernorm(t, g, b).astype(jnp.bfloat16)                        # (N, D)
        h1 = jnp.dot(n, w1_ref[0, idx],
                     preferred_element_type=jnp.float32) + b1_ref[0, idx]
        # TODO(synk): tanh-approx GELU; PyTorch nn.GELU default is exact erf.
        h1 = jax.nn.gelu(h1)
        return jnp.dot(h1.astype(jnp.bfloat16), w2_ref[0, idx],
                       preferred_element_type=jnp.float32) + b2_ref[0, idx]

    qid_x = qid_x_ref[...]
    kval_x = kval_x_ref[...]
    qid_m = qid_m_ref[...]
    kval_m = kval_m_ref[...]

    # One ((attn, ff, msa_attn), (cross_attn, msa_ff, msa_cross_attn)) pair,
    # exactly mirroring SequentialSequence.forward (residuals fused).
    x = x_ref[...]
    m = m_ref[...]
    x = x + attend(x, x, qid_x, kval_x, 0)        # x = attn(x, mask) + x
    m = m + attend(m, m, qid_m, kval_m, 1)        # m = msa_attn(m, msa_mask) + m
    x = x + attend(x, m, qid_x, kval_m, 2)        # x = cross_attn(x, m, ctx=msa_mask) + x
    m = m + attend(m, x, qid_m, kval_x, 3)        # m = msa_cross_attn(m, x, ctx=mask) + m
    x = x + feed_forward(x, 0)                    # x = ff(x) + x
    m = m + feed_forward(m, 1)                    # m = msa_ff(m) + m
    x_ref[...] = x
    m_ref[...] = m


# ----------------------------------------------------------------------------
# Host-side helpers
# ----------------------------------------------------------------------------
def _mask_vectors(b, l, key_mask):
    """Tiny per-stream mask vectors for in-kernel bias generation."""
    bid = jnp.repeat(jnp.arange(b, dtype=jnp.float32), l)                  # (B*L,)
    qid = bid.reshape(-1, 1)                                               # (B*L, 1)
    kval = jnp.where(key_mask.reshape(-1), bid, -1.0).reshape(1, -1)       # (1, B*L)
    return qid, kval


def _vmem_limit_bytes(nx, nm, d, inner, hidden):
    """Explicit VMEM budget: 2x double-buffered per-layer weights + carried state +
    activation working set, with 2x headroom (catches v7x's 64 MiB ceiling at compile)."""
    bf, f = 2, 4
    w_layer = ((3 * d * inner + inner * d) * 4 * bf          # wq/wk/wv/wo, 4 attn blocks
               + (d * hidden + hidden * d) * 2 * bf          # w1/w2, 2 ff blocks
               + (4 * 3 * d + 2 * (2 * d + hidden)) * f)     # LN gammas/betas + biases
    state = (nx + nm) * d * f                                # carried x / m (f32)
    nmax = max(nx, nm)
    act = (4 * nmax * inner * bf                             # q, k, v, o_cat
           + 2 * nmax * nmax * f                             # scores / probs
           + nmax * hidden * f                               # ff hidden
           + 4 * nmax * d * f)                               # misc f32 temporaries
    need = 2 * w_layer + state + act
    return int(min(max(2 * need, 32 << 20), 100 << 20))


def sequential_sequence(x, m, packed, mask=None, msa_mask=None, *, heads, dim_head):
    """SequentialSequence.forward: the whole depth loop is ONE pallas_call."""
    B, Lx, D = x.shape
    if m is None:
        # TODO(synk): m=None branch (x-only attn+ff per layer) not implemented.
        raise NotImplementedError("fused kernel requires the MSA stream m")
    Lm = m.shape[1]
    if mask is None:
        mask = jnp.ones((B, Lx), dtype=bool)
    if msa_mask is None:
        msa_mask = jnp.ones((B, Lm), dtype=bool)

    depth = packed['wq'].shape[0]
    inner = packed['wq'].shape[-1]
    hidden = packed['w1'].shape[-1]
    Nx, Nm = B * Lx, B * Lm

    qid_x, kval_x = _mask_vectors(B, Lx, mask)
    qid_m, kval_m = _mask_vectors(B, Lm, msa_mask)

    x2 = x.reshape(Nx, D).astype(jnp.float32)
    m2 = m.reshape(Nm, D).astype(jnp.float32)

    kernel = partial(_fused_layer_kernel, heads=heads, dim_head=dim_head)
    c2 = lambda l: (0, 0)
    w3 = lambda l: (l, 0, 0)
    w4 = lambda l: (l, 0, 0, 0)

    x_out, m_out = pl.pallas_call(
        kernel,
        out_shape=(jax.ShapeDtypeStruct((Nx, D), jnp.float32),
                   jax.ShapeDtypeStruct((Nm, D), jnp.float32)),
        grid=(depth,),
        in_specs=[
            pl.BlockSpec((Nx, 1), c2),             # qid_x (tiny)
            pl.BlockSpec((1, Nx), c2),             # kval_x (tiny)
            pl.BlockSpec((Nm, 1), c2),             # qid_m (tiny)
            pl.BlockSpec((1, Nm), c2),             # kval_m (tiny)
            pl.BlockSpec(memory_space=pl.ANY),     # x input, stays in HBM (layer-0 DMA)
            pl.BlockSpec(memory_space=pl.ANY),     # m input, stays in HBM (layer-0 DMA)
            pl.BlockSpec((1, 4, D), w3),           # attn gamma
            pl.BlockSpec((1, 4, D), w3),           # attn beta
            pl.BlockSpec((1, 4, D, inner), w4),    # wq (scale pre-folded)
            pl.BlockSpec((1, 4, D, inner), w4),    # wk
            pl.BlockSpec((1, 4, D, inner), w4),    # wv
            pl.BlockSpec((1, 4, inner, D), w4),    # wo
            pl.BlockSpec((1, 4, D), w3),           # bo
            pl.BlockSpec((1, 2, D), w3),           # ff gamma
            pl.BlockSpec((1, 2, D), w3),           # ff beta
            pl.BlockSpec((1, 2, D, hidden), w4),   # w1
            pl.BlockSpec((1, 2, hidden), w3),      # b1
            pl.BlockSpec((1, 2, hidden, D), w4),   # w2
            pl.BlockSpec((1, 2, D), w3),           # b2
        ],
        out_specs=(pl.BlockSpec((Nx, D), c2),
                   pl.BlockSpec((Nm, D), c2)),
        scratch_shapes=[pltpu.SemaphoreType.DMA((2,))],
        compiler_params=pltpu.CompilerParams(
            dimension_semantics=("arbitrary",),    # layer axis carries x/m: sequential
            vmem_limit_bytes=_vmem_limit_bytes(Nx, Nm, D, inner, hidden)),
    )(qid_x, kval_x, qid_m, kval_m, x2, m2,
      packed['a_gamma'], packed['a_beta'],
      packed['wq'], packed['wk'], packed['wv'], packed['wo'], packed['bo'],
      packed['f_gamma'], packed['f_beta'],
      packed['w1'], packed['b1'], packed['w2'], packed['b2'])

    return x_out.reshape(B, Lx, D), m_out.reshape(B, Lm, D)


# ----------------------------------------------------------------------------
# Deterministic parameter initialization + packing (weights bf16, LN/bias f32)
# ----------------------------------------------------------------------------
def _dense(key, fan_in, shape):
    w = jax.random.normal(key, shape, jnp.float32) / jnp.sqrt(float(fan_in))
    return w.astype(jnp.bfloat16)


def init_attn_params(key, dim, inner):
    k = jax.random.split(key, 4)
    return dict(
        gamma=jnp.ones((dim,), jnp.float32),
        beta=jnp.zeros((dim,), jnp.float32),
        wq=_dense(k[0], dim, (dim, inner)),
        wk=_dense(k[1], dim, (dim, inner)),
        wv=_dense(k[2], dim, (dim, inner)),
        wo=_dense(k[3], inner, (inner, dim)),
        bo=jnp.zeros((dim,), jnp.float32),
    )


def init_ff_params(key, dim, mult):
    k = jax.random.split(key, 2)
    hidden = dim * mult
    return dict(
        gamma=jnp.ones((dim,), jnp.float32),
        beta=jnp.zeros((dim,), jnp.float32),
        w1=_dense(k[0], dim, (dim, hidden)),
        b1=jnp.zeros((hidden,), jnp.float32),
        w2=_dense(k[1], hidden, (hidden, dim)),
        b2=jnp.zeros((dim,), jnp.float32),
    )


def init_params(key, depth, dim, inner, mult):
    layers = []
    for i in range(depth):
        ks = jax.random.split(jax.random.fold_in(key, i), 6)
        layers.append(dict(
            attn=init_attn_params(ks[0], dim, inner),
            ff=init_ff_params(ks[1], dim, mult),
            msa_attn=init_attn_params(ks[2], dim, inner),
            cross_attn=init_attn_params(ks[3], dim, inner),
            msa_ff=init_ff_params(ks[4], dim, mult),
            msa_cross_attn=init_attn_params(ks[5], dim, inner),
        ))
    return layers


_ATTN_ORDER = ('attn', 'msa_attn', 'cross_attn', 'msa_cross_attn')
_FF_ORDER = ('ff', 'msa_ff')


def pack_params(layer_params, dim_head):
    """Stack per-layer / per-block params onto leading (depth, n_blocks) axes.
    The 1/sqrt(dim_head) attention scale is folded into wq here (one-time constant)."""
    scale = dim_head ** -0.5

    def stk(names, field):
        return jnp.stack([jnp.stack([lp[n][field] for n in names], axis=0)
                          for lp in layer_params], axis=0)

    wq = (stk(_ATTN_ORDER, 'wq').astype(jnp.float32) * scale).astype(jnp.bfloat16)
    return dict(
        a_gamma=stk(_ATTN_ORDER, 'gamma'), a_beta=stk(_ATTN_ORDER, 'beta'),
        wq=wq, wk=stk(_ATTN_ORDER, 'wk'),
        wv=stk(_ATTN_ORDER, 'wv'), wo=stk(_ATTN_ORDER, 'wo'),
        bo=stk(_ATTN_ORDER, 'bo'),
        f_gamma=stk(_FF_ORDER, 'gamma'), f_beta=stk(_FF_ORDER, 'beta'),
        w1=stk(_FF_ORDER, 'w1'), b1=stk(_FF_ORDER, 'b1'),
        w2=stk(_FF_ORDER, 'w2'), b2=stk(_FF_ORDER, 'b2'),
    )


# ----------------------------------------------------------------------------
if __name__ == "__main__":
    # Small but lane-dense shapes: D and heads*dim_head are multiples of 128.
    B, Lx, Lm, D = 2, 16, 8, 128
    HEADS, DIM_HEAD, FF_MULT, DEPTH = 4, 128, 4, 2

    key = jax.random.PRNGKey(0)
    kx, km, kp = jax.random.split(key, 3)
    x = jax.random.normal(kx, (B, Lx, D), jnp.float32)
    m = jax.random.normal(km, (B, Lm, D), jnp.float32)
    mask = jnp.ones((B, Lx), dtype=bool).at[:, -2:].set(False)
    msa_mask = jnp.ones((B, Lm), dtype=bool).at[:, -1:].set(False)

    params = init_params(kp, DEPTH, D, HEADS * DIM_HEAD, FF_MULT)
    packed = pack_params(params, DIM_HEAD)

    fwd = jax.jit(partial(sequential_sequence, heads=HEADS, dim_head=DIM_HEAD))
    x_out, m_out = fwd(x, m, packed, mask, msa_mask)
    jax.block_until_ready((x_out, m_out))

    assert x_out.shape == (B, Lx, D) and m_out.shape == (B, Lm, D)
    assert bool(jnp.all(jnp.isfinite(x_out))) and bool(jnp.all(jnp.isfinite(m_out)))
    print("KERNEL_OK")
</pallas_src>

<mosaic_0001>
module attributes {stable_mosaic.version = 11 : i64} {
  func.func @_fused_layer_kernel(%arg0: i32, %arg1: memref<32x1xf32, #tpu.memory_space<vmem>>, %arg2: memref<1x32xf32, #tpu.memory_space<vmem>>, %arg3: memref<16x1xf32, #tpu.memory_space<vmem>>, %arg4: memref<1x16xf32, #tpu.memory_space<vmem>>, %arg5: memref<32x128xf32, #tpu.memory_space<any>>, %arg6: memref<16x128xf32, #tpu.memory_space<any>>, %arg7: memref<1x4x128xf32, #tpu.memory_space<vmem>>, %arg8: memref<1x4x128xf32, #tpu.memory_space<vmem>>, %arg9: memref<1x4x128x512xbf16, #tpu.memory_space<vmem>>, %arg10: memref<1x4x128x512xbf16, #tpu.memory_space<vmem>>, %arg11: memref<1x4x128x512xbf16, #tpu.memory_space<vmem>>, %arg12: memref<1x4x512x128xbf16, #tpu.memory_space<vmem>>, %arg13: memref<1x4x128xf32, #tpu.memory_space<vmem>>, %arg14: memref<1x2x128xf32, #tpu.memory_space<vmem>>, %arg15: memref<1x2x128xf32, #tpu.memory_space<vmem>>, %arg16: memref<1x2x128x512xbf16, #tpu.memory_space<vmem>>, %arg17: memref<1x2x512xf32, #tpu.memory_space<vmem>>, %arg18: memref<1x2x512x128xbf16, #tpu.memory_space<vmem>>, %arg19: memref<1x2x128xf32, #tpu.memory_space<vmem>>, %arg20: memref<32x128xf32, #tpu.memory_space<vmem>>, %arg21: memref<16x128xf32, #tpu.memory_space<vmem>>, %arg22: memref<2x!tpu.dma_semaphore, #tpu.memory_space<semaphore_mem>>) attributes {dimension_semantics = [#tpu.dimension_semantics<arbitrary>], iteration_bounds = array<i64: 2>, scalar_prefetch = 0 : i64, scratch_operands = 1 : i64, tpu.core_type = #tpu.core_type<tc>, window_params = [{pipeline_mode = #tpu.pipeline_mode<synchronous>, transform_indices = @transform_0, window_bounds = array<i64: 32, 1>}, {pipeline_mode = #tpu.pipeline_mode<synchronous>, transform_indices = @transform_1, window_bounds = array<i64: 1, 32>}, {pipeline_mode = #tpu.pipeline_mode<synchronous>, transform_indices = @transform_2, window_bounds = array<i64: 16, 1>}, {pipeline_mode = #tpu.pipeline_mode<synchronous>, transform_indices = @transform_3, window_bounds = array<i64: 1, 16>}, {}, {}, {transform_indices = @transform_6, window_bounds = array<i64: 1, 4, 128>}, {transform_indices = @transform_7, window_bounds = array<i64: 1, 4, 128>}, {transform_indices = @transform_8, window_bounds = array<i64: 1, 4, 128, 512>}, {transform_indices = @transform_9, window_bounds = array<i64: 1, 4, 128, 512>}, {transform_indices = @transform_10, window_bounds = array<i64: 1, 4, 128, 512>}, {transform_indices = @transform_11, window_bounds = array<i64: 1, 4, 512, 128>}, {transform_indices = @transform_12, window_bounds = array<i64: 1, 4, 128>}, {transform_indices = @transform_13, window_bounds = array<i64: 1, 2, 128>}, {transform_indices = @transform_14, window_bounds = array<i64: 1, 2, 128>}, {transform_indices = @transform_15, window_bounds = array<i64: 1, 2, 128, 512>}, {transform_indices = @transform_16, window_bounds = array<i64: 1, 2, 512>}, {transform_indices = @transform_17, window_bounds = array<i64: 1, 2, 512, 128>}, {transform_indices = @transform_18, window_bounds = array<i64: 1, 2, 128>}, {pipeline_mode = #tpu.pipeline_mode<synchronous>, transform_indices = @transform_19, window_bounds = array<i64: 32, 128>}, {pipeline_mode = #tpu.pipeline_mode<synchronous>, transform_indices = @transform_20, window_bounds = array<i64: 16, 128>}]} {
    %c0_i32 = arith.constant 0 : i32
    %0 = arith.cmpi eq, %arg0, %c0_i32 : i32
    %1 = arith.extui %0 : i1 to i32
    %c0_i32_0 = arith.constant 0 : i32
    %2 = arith.cmpi ne, %1, %c0_i32_0 : i32
    scf.if %2 {
      %c0_i32_292 = arith.constant 0 : i32
      %697 = tpu.memref_slice %arg22[%c0_i32_292] : memref<2x!tpu.dma_semaphore, #tpu.memory_space<semaphore_mem>> -> memref<1x!tpu.dma_semaphore, #tpu.memory_space<semaphore_mem>>
      %698 = tpu.memref_squeeze %697 : memref<1x!tpu.dma_semaphore, #tpu.memory_space<semaphore_mem>> -> memref<!tpu.dma_semaphore, #tpu.memory_space<semaphore_mem>>
      tpu.enqueue_dma source(%arg5 : memref<32x128xf32, #tpu.memory_space<any>>) target(%arg20 : memref<32x128xf32, #tpu.memory_space<vmem>>) target_semaphore(%698 : memref<!tpu.dma_semaphore, #tpu.memory_space<semaphore_mem>>)
      %c1_i32 = arith.constant 1 : i32
      %699 = tpu.memref_slice %arg22[%c1_i32] : memref<2x!tpu.dma_semaphore, #tpu.memory_space<semaphore_mem>> -> memref<1x!tpu.dma_semaphore, #tpu.memory_space<semaphore_mem>>
      %700 = tpu.memref_squeeze %699 : memref<1x!tpu.dma_semaphore, #tpu.memory_space<semaphore_mem>> -> memref<!tpu.dma_semaphore, #tpu.memory_space<semaphore_mem>>
      tpu.enqueue_dma source(%arg6 : memref<16x128xf32, #tpu.memory_space<any>>) target(%arg21 : memref<16x128xf32, #tpu.memory_space<vmem>>) target_semaphore(%700 : memref<!tpu.dma_semaphore, #tpu.memory_space<semaphore_mem>>)
      %c0_i32_293 = arith.constant 0 : i32
      %701 = tpu.memref_slice %arg22[%c0_i32_293] : memref<2x!tpu.dma_semaphore, #tpu.memory_space<semaphore_mem>> -> memref<1x!tpu.dma_semaphore, #tpu.memory_space<semaphore_mem>>
      %702 = tpu.memref_squeeze %701 : memref<1x!tpu.dma_semaphore, #tpu.memory_space<semaphore_mem>> -> memref<!tpu.dma_semaphore, #tpu.memory_space<semaphore_mem>>
      tpu.wait_dma2 semaphore(%702 : memref<!tpu.dma_semaphore, #tpu.memory_space<semaphore_mem>>) src(%arg5 : memref<32x128xf32, #tpu.memory_space<any>>) dst(%arg20 : memref<32x128xf32, #tpu.memory_space<vmem>>)
      %c1_i32_294 = arith.constant 1 : i32
      %703 = tpu.memref_slice %arg22[%c1_i32_294] : memref<2x!tpu.dma_semaphore, #tpu.memory_space<semaphore_mem>> -> memref<1x!tpu.dma_semaphore, #tpu.memory_space<semaphore_mem>>
      %704 = tpu.memref_squeeze %703 : memref<1x!tpu.dma_semaphore, #tpu.memory_space<semaphore_mem>> -> memref<!tpu.dma_semaphore, #tpu.memory_space<semaphore_mem>>
      tpu.wait_dma2 semaphore(%704 : memref<!tpu.dma_semaphore, #tpu.memory_space<semaphore_mem>>) src(%arg6 : memref<16x128xf32, #tpu.memory_space<any>>) dst(%arg21 : memref<16x128xf32, #tpu.memory_space<vmem>>)
    } else {
    }
    %c0 = arith.constant 0 : index
    %c0_1 = arith.constant 0 : index
    %3 = vector.load %arg1[%c0, %c0_1] : memref<32x1xf32, #tpu.memory_space<vmem>>, vector<32x1xf32>
    %c0_2 = arith.constant 0 : index
    %c0_3 = arith.constant 0 : index
    %4 = vector.load %arg2[%c0_2, %c0_3] : memref<1x32xf32, #tpu.memory_space<vmem>>, vector<1x32xf32>
    %c0_4 = arith.constant 0 : index
    %c0_5 = arith.constant 0 : index
    %5 = vector.load %arg3[%c0_4, %c0_5] : memref<16x1xf32, #tpu.memory_space<vmem>>, vector<16x1xf32>
    %c0_6 = arith.constant 0 : index
    %c0_7 = arith.constant 0 : index
    %6 = vector.load %arg4[%c0_6, %c0_7] : memref<1x16xf32, #tpu.memory_space<vmem>>, vector<1x16xf32>
    %c0_8 = arith.constant 0 : index
    %c0_9 = arith.constant 0 : index
    %7 = vector.load %arg20[%c0_8, %c0_9] : memref<32x128xf32, #tpu.memory_space<vmem>>, vector<32x128xf32>
    %c0_10 = arith.constant 0 : index
    %c0_11 = arith.constant 0 : index
    %8 = vector.load %arg21[%c0_10, %c0_11] : memref<16x128xf32, #tpu.memory_space<vmem>>, vector<16x128xf32>
    %c0_12 = arith.constant 0 : index
    %c0_13 = arith.constant 0 : index
    %c0_14 = arith.constant 0 : index
    %9 = vector.load %arg7[%c0_12, %c0_13, %c0_14] : memref<1x4x128xf32, #tpu.memory_space<vmem>>, vector<1x1x128xf32>
    %10 = vector.shape_cast %9 : vector<1x1x128xf32> to vector<128xf32>
    %c0_15 = arith.constant 0 : index
    %c0_16 = arith.constant 0 : index
    %c0_17 = arith.constant 0 : index
    %11 = vector.load %arg8[%c0_15, %c0_16, %c0_17] : memref<1x4x128xf32, #tpu.memory_space<vmem>>, vector<1x1x128xf32>
    %12 = vector.shape_cast %11 : vector<1x1x128xf32> to vector<128xf32>
    %cst = arith.constant dense<0.000000e+00> : vector<32xf32>
    %13 = vector.multi_reduction <add>, %7, %cst [1] : vector<32x128xf32> to vector<32xf32>
    %14 = vector.shape_cast %13 : vector<32xf32> to vector<32x1xf32>
    %cst_18 = arith.constant 1.280000e+02 : f32
    %15 = vector.broadcast %cst_18 : f32 to vector<32x1xf32>
    %16 = arith.divf %14, %15 : vector<32x1xf32>
    %17 = vector.broadcast %16 : vector<32x1xf32> to vector<32x128xf32>
    %18 = arith.subf %7, %17 : vector<32x128xf32>
    %19 = arith.mulf %18, %18 : vector<32x128xf32>
    %cst_19 = arith.constant dense<0.000000e+00> : vector<32xf32>
    %20 = vector.multi_reduction <add>, %19, %cst_19 [1] : vector<32x128xf32> to vector<32xf32>
    %21 = vector.shape_cast %20 : vector<32xf32> to vector<32x1xf32>
    %cst_20 = arith.constant 1.280000e+02 : f32
    %22 = vector.broadcast %cst_20 : f32 to vector<32x1xf32>
    %23 = arith.divf %21, %22 : vector<32x1xf32>
    %24 = vector.broadcast %16 : vector<32x1xf32> to vector<32x128xf32>
    %25 = arith.subf %7, %24 : vector<32x128xf32>
    %cst_21 = arith.constant 9.99999974E-6 : f32
    %26 = vector.broadcast %cst_21 : f32 to vector<32x1xf32>
    %27 = arith.addf %23, %26 : vector<32x1xf32>
    %28 = math.rsqrt %27 : vector<32x1xf32>
    %29 = vector.broadcast %28 : vector<32x1xf32> to vector<32x128xf32>
    %30 = arith.mulf %25, %29 : vector<32x128xf32>
    %31 = vector.shape_cast %10 : vector<128xf32> to vector<1x128xf32>
    %32 = vector.broadcast %31 : vector<1x128xf32> to vector<32x128xf32>
    %33 = arith.mulf %30, %32 : vector<32x128xf32>
    %34 = vector.shape_cast %12 : vector<128xf32> to vector<1x128xf32>
    %35 = vector.broadcast %34 : vector<1x128xf32> to vector<32x128xf32>
    %36 = arith.addf %33, %35 : vector<32x128xf32>
    %37 = arith.truncf %36 : vector<32x128xf32> to vector<32x128xbf16>
    %38 = vector.broadcast %3 : vector<32x1xf32> to vector<32x32xf32>
    %39 = vector.broadcast %4 : vector<1x32xf32> to vector<32x32xf32>
    %40 = arith.cmpf oeq, %38, %39 : vector<32x32xf32>
    %cst_22 = arith.constant 0.000000e+00 : f32
    %cst_23 = arith.constant -1.000000e+09 : f32
    %41 = vector.broadcast %cst_22 : f32 to vector<32x32xf32>
    %42 = vector.broadcast %cst_23 : f32 to vector<32x32xf32>
    %43 = arith.select %40, %41, %42 : vector<32x32xi1>, vector<32x32xf32>
    %c0_24 = arith.constant 0 : index
    %c0_25 = arith.constant 0 : index
    %c0_26 = arith.constant 0 : index
    %c0_27 = arith.constant 0 : index
    %44 = vector.load %arg9[%c0_24, %c0_25, %c0_26, %c0_27] : memref<1x4x128x512xbf16, #tpu.memory_space<vmem>>, vector<1x1x128x512xbf16>
    %45 = vector.shape_cast %44 : vector<1x1x128x512xbf16> to vector<128x512xbf16>
    %cst_28 = arith.constant dense<0.000000e+00> : vector<32x512xf32>
    %46 = tpu.matmul %37, %45, %cst_28 {dimension_numbers = #tpu.dot_dimension_numbers<[1], [0], [0], [1], [0, 0, 1, 1], [], []>} : vector<32x128xbf16>, vector<128x512xbf16>, vector<32x512xf32> -> vector<32x512xf32>
    %47 = arith.truncf %46 : vector<32x512xf32> to vector<32x512xbf16>
    %c0_29 = arith.constant 0 : index
    %c0_30 = arith.constant 0 : index
    %c0_31 = arith.constant 0 : index
    %c0_32 = arith.constant 0 : index
    %48 = vector.load %arg10[%c0_29, %c0_30, %c0_31, %c0_32] : memref<1x4x128x512xbf16, #tpu.memory_space<vmem>>, vector<1x1x128x512xbf16>
    %49 = vector.shape_cast %48 : vector<1x1x128x512xbf16> to vector<128x512xbf16>
    %cst_33 = arith.constant dense<0.000000e+00> : vector<32x512xf32>
    %50 = tpu.matmul %37, %49, %cst_33 {dimension_numbers = #tpu.dot_dimension_numbers<[1], [0], [0], [1], [0, 0, 1, 1], [], []>} : vector<32x128xbf16>, vector<128x512xbf16>, vector<32x512xf32> -> vector<32x512xf32>
    %51 = arith.truncf %50 : vector<32x512xf32> to vector<32x512xbf16>
    %c0_34 = arith.constant 0 : index
    %c0_35 = arith.constant 0 : index
    %c0_36 = arith.constant 0 : index
    %c0_37 = arith.constant 0 : index
    %52 = vector.load %arg11[%c0_34, %c0_35, %c0_36, %c0_37] : memref<1x4x128x512xbf16, #tpu.memory_space<vmem>>, vector<1x1x128x512xbf16>
    %53 = vector.shape_cast %52 : vector<1x1x128x512xbf16> to vector<128x512xbf16>
    %cst_38 = arith.constant dense<0.000000e+00> : vector<32x512xf32>
    %54 = tpu.matmul %37, %53, %cst_38 {dimension_numbers = #tpu.dot_dimension_numbers<[1], [0], [0], [1], [0, 0, 1, 1], [], []>} : vector<32x128xbf16>, vector<128x512xbf16>, vector<32x512xf32> -> vector<32x512xf32>
    %55 = arith.truncf %54 : vector<32x512xf32> to vector<32x512xbf16>
    %56 = vector.extract_strided_slice %47 {offsets = [0, 0], sizes = [32, 128], strides = [1, 1]} : vector<32x512xbf16> to vector<32x128xbf16>
    %57 = vector.extract_strided_slice %51 {offsets = [0, 0], sizes = [32, 128], strides = [1, 1]} : vector<32x512xbf16> to vector<32x128xbf16>
    "tpu.trace_start"() <{level = 10 : i32, message = "qd,kd->qk"}> : () -> ()
    %cst_39 = arith.constant dense<0.000000e+00> : vector<32x32xf32>
    %58 = tpu.matmul %56, %57, %cst_39 {dimension_numbers = #tpu.dot_dimension_numbers<[1], [1], [0], [0], [0, 0, 1, 0], [], []>} : vector<32x128xbf16>, vector<32x128xbf16>, vector<32x32xf32> -> vector<32x32xf32>
    "tpu.trace_stop"() : () -> ()
    %59 = arith.addf %58, %43 : vector<32x32xf32>
    %cst_40 = arith.constant dense<0xFF800000> : vector<32xf32>
    %60 = vector.multi_reduction <maximumf>, %59, %cst_40 [1] : vector<32x32xf32> to vector<32xf32>
    %61 = vector.shape_cast %60 : vector<32xf32> to vector<32x1xf32>
    %62 = vector.broadcast %61 : vector<32x1xf32> to vector<32x32xf32>
    %63 = arith.subf %59, %62 : vector<32x32xf32>
    %64 = math.exp %63 : vector<32x32xf32>
    %cst_41 = arith.constant dense<0.000000e+00> : vector<32xf32>
    %65 = vector.multi_reduction <add>, %64, %cst_41 [1] : vector<32x32xf32> to vector<32xf32>
    %66 = vector.shape_cast %65 : vector<32xf32> to vector<32x1xf32>
    %67 = tpu.reciprocal %66 {approx = true} : vector<32x1xf32> -> vector<32x1xf32>
    %68 = vector.broadcast %67 : vector<32x1xf32> to vector<32x32xf32>
    %69 = arith.mulf %64, %68 : vector<32x32xf32>
    %70 = arith.truncf %69 : vector<32x32xf32> to vector<32x32xbf16>
    %71 = vector.extract_strided_slice %55 {offsets = [0, 0], sizes = [32, 128], strides = [1, 1]} : vector<32x512xbf16> to vector<32x128xbf16>
    %cst_42 = arith.constant dense<0.000000e+00> : vector<32x128xf32>
    %72 = tpu.matmul %70, %71, %cst_42 {dimension_numbers = #tpu.dot_dimension_numbers<[1], [0], [0], [1], [0, 0, 1, 1], [], []>} : vector<32x32xbf16>, vector<32x128xbf16>, vector<32x128xf32> -> vector<32x128xf32>
    %73 = arith.truncf %72 : vector<32x128xf32> to vector<32x128xbf16>
    %74 = vector.extract_strided_slice %47 {offsets = [0, 128], sizes = [32, 128], strides = [1, 1]} : vector<32x512xbf16> to vector<32x128xbf16>
    %75 = vector.extract_strided_slice %51 {offsets = [0, 128], sizes = [32, 128], strides = [1, 1]} : vector<32x512xbf16> to vector<32x128xbf16>
    "tpu.trace_start"() <{level = 10 : i32, message = "qd,kd->qk"}> : () -> ()
    %cst_43 = arith.constant dense<0.000000e+00> : vector<32x32xf32>
    %76 = tpu.matmul %74, %75, %cst_43 {dimension_numbers = #tpu.dot_dimension_numbers<[1], [1], [0], [0], [0, 0, 1, 0], [], []>} : vector<32x128xbf16>, vector<32x128xbf16>, vector<32x32xf32> -> vector<32x32xf32>
    "tpu.trace_stop"() : () -> ()
    %77 = arith.addf %76, %43 : vector<32x32xf32>
    %cst_44 = arith.constant dense<0xFF800000> : vector<32xf32>
    %78 = vector.multi_reduction <maximumf>, %77, %cst_44 [1] : vector<32x32xf32> to vector<32xf32>
    %79 = vector.shape_cast %78 : vector<32xf32> to vector<32x1xf32>
    %80 = vector.broadcast %79 : vector<32x1xf32> to vector<32x32xf32>
    %81 = arith.subf %77, %80 : vector<32x32xf32>
    %82 = math.exp %81 : vector<32x32xf32>
    %cst_45 = arith.constant dense<0.000000e+00> : vector<32xf32>
    %83 = vector.multi_reduction <add>, %82, %cst_45 [1] : vector<32x32xf32> to vector<32xf32>
    %84 = vector.shape_cast %83 : vector<32xf32> to vector<32x1xf32>
    %85 = tpu.reciprocal %84 {approx = true} : vector<32x1xf32> -> vector<32x1xf32>
    %86 = vector.broadcast %85 : vector<32x1xf32> to vector<32x32xf32>
    %87 = arith.mulf %82, %86 : vector<32x32xf32>
    %88 = arith.truncf %87 : vector<32x32xf32> to vector<32x32xbf16>
    %89 = vector.extract_strided_slice %55 {offsets = [0, 128], sizes = [32, 128], strides = [1, 1]} : vector<32x512xbf16> to vector<32x128xbf16>
    %cst_46 = arith.constant dense<0.000000e+00> : vector<32x128xf32>
    %90 = tpu.matmul %88, %89, %cst_46 {dimension_numbers = #tpu.dot_dimension_numbers<[1], [0], [0], [1], [0, 0, 1, 1], [], []>} : vector<32x32xbf16>, vector<32x128xbf16>, vector<32x128xf32> -> vector<32x128xf32>
    %91 = arith.truncf %90 : vector<32x128xf32> to vector<32x128xbf16>
    %92 = vector.extract_strided_slice %47 {offsets = [0, 256], sizes = [32, 128], strides = [1, 1]} : vector<32x512xbf16> to vector<32x128xbf16>
    %93 = vector.extract_strided_slice %51 {offsets = [0, 256], sizes = [32, 128], strides = [1, 1]} : vector<32x512xbf16> to vector<32x128xbf16>
    "tpu.trace_start"() <{level = 10 : i32, message = "qd,kd->qk"}> : () -> ()
    %cst_47 = arith.constant dense<0.000000e+00> : vector<32x32xf32>
    %94 = tpu.matmul %92, %93, %cst_47 {dimension_numbers = #tpu.dot_dimension_numbers<[1], [1], [0], [0], [0, 0, 1, 0], [], []>} : vector<32x128xbf16>, vector<32x128xbf16>, vector<32x32xf32> -> vector<32x32xf32>
    "tpu.trace_stop"() : () -> ()
    %95 = arith.addf %94, %43 : vector<32x32xf32>
    %cst_48 = arith.constant dense<0xFF800000> : vector<32xf32>
    %96 = vector.multi_reduction <maximumf>, %95, %cst_48 [1] : vector<32x32xf32> to vector<32xf32>
    %97 = vector.shape_cast %96 : vector<32xf32> to vector<32x1xf32>
    %98 = vector.broadcast %97 : vector<32x1xf32> to vector<32x32xf32>
    %99 = arith.subf %95, %98 : vector<32x32xf32>
    %100 = math.exp %99 : vector<32x32xf32>
    %cst_49 = arith.constant dense<0.000000e+00> : vector<32xf32>
    %101 = vector.multi_reduction <add>, %100, %cst_49 [1] : vector<32x32xf32> to vector<32xf32>
    %102 = vector.shape_cast %101 : vector<32xf32> to vector<32x1xf32>
    %103 = tpu.reciprocal %102 {approx = true} : vector<32x1xf32> -> vector<32x1xf32>
    %104 = vector.broadcast %103 : vector<32x1xf32> to vector<32x32xf32>
    %105 = arith.mulf %100, %104 : vector<32x32xf32>
    %106 = arith.truncf %105 : vector<32x32xf32> to vector<32x32xbf16>
    %107 = vector.extract_strided_slice %55 {offsets = [0, 256], sizes = [32, 128], strides = [1, 1]} : vector<32x512xbf16> to vector<32x128xbf16>
    %cst_50 = arith.constant dense<0.000000e+00> : vector<32x128xf32>
    %108 = tpu.matmul %106, %107, %cst_50 {dimension_numbers = #tpu.dot_dimension_numbers<[1], [0], [0], [1], [0, 0, 1, 1], [], []>} : vector<32x32xbf16>, vector<32x128xbf16>, vector<32x128xf32> -> vector<32x128xf32>
    %109 = arith.truncf %108 : vector<32x128xf32> to vector<32x128xbf16>
    %110 = vector.extract_strided_slice %47 {offsets = [0, 384], sizes = [32, 128], strides = [1, 1]} : vector<32x512xbf16> to vector<32x128xbf16>
    %111 = vector.extract_strided_slice %51 {offsets = [0, 384], sizes = [32, 128], strides = [1, 1]} : vector<32x512xbf16> to vector<32x128xbf16>
    "tpu.trace_start"() <{level = 10 : i32, message = "qd,kd->qk"}> : () -> ()
    %cst_51 = arith.constant dense<0.000000e+00> : vector<32x32xf32>
    %112 = tpu.matmul %110, %111, %cst_51 {dimension_numbers = #tpu.dot_dimension_numbers<[1], [1], [0], [0], [0, 0, 1, 0], [], []>} : vector<32x128xbf16>, vector<32x128xbf16>, vector<32x32xf32> -> vector<32x32xf32>
    "tpu.trace_stop"() : () -> ()
    %113 = arith.addf %112, %43 : vector<32x32xf32>
    %cst_52 = arith.constant dense<0xFF800000> : vector<32xf32>
    %114 = vector.multi_reduction <maximumf>, %113, %cst_52 [1] : vector<32x32xf32> to vector<32xf32>
    %115 = vector.shape_cast %114 : vector<32xf32> to vector<32x1xf32>
    %116 = vector.broadcast %115 : vector<32x1xf32> to vector<32x32xf32>
    %117 = arith.subf %113, %116 : vector<32x32xf32>
    %118 = math.exp %117 : vector<32x32xf32>
    %cst_53 = arith.constant dense<0.000000e+00> : vector<32xf32>
    %119 = vector.multi_reduction <add>, %118, %cst_53 [1] : vector<32x32xf32> to vector<32xf32>
    %120 = vector.shape_cast %119 : vector<32xf32> to vector<32x1xf32>
    %121 = tpu.reciprocal %120 {approx = true} : vector<32x1xf32> -> vector<32x1xf32>
    %122 = vector.broadcast %121 : vector<32x1xf32> to vector<32x32xf32>
    %123 = arith.mulf %118, %122 : vector<32x32xf32>
    %124 = arith.truncf %123 : vector<32x32xf32> to vector<32x32xbf16>
    %125 = vector.extract_strided_slice %55 {offsets = [0, 384], sizes = [32, 128], strides = [1, 1]} : vector<32x512xbf16> to vector<32x128xbf16>
    %cst_54 = arith.constant dense<0.000000e+00> : vector<32x128xf32>
    %126 = tpu.matmul %124, %125, %cst_54 {dimension_numbers = #tpu.dot_dimension_numbers<[1], [0], [0], [1], [0, 0, 1, 1], [], []>} : vector<32x32xbf16>, vector<32x128xbf16>, vector<32x128xf32> -> vector<32x128xf32>
    %127 = arith.truncf %126 : vector<32x128xf32> to vector<32x128xbf16>
    %128 = tpu.concatenate %73, %91, %109, %127 in 1 : vector<32x128xbf16>, vector<32x128xbf16>, vector<32x128xbf16>, vector<32x128xbf16> -> vector<32x512xbf16>
    %c0_55 = arith.constant 0 : index
    %c0_56 = arith.constant 0 : index
    %c0_57 = arith.constant 0 : index
    %c0_58 = arith.constant 0 : index
    %129 = vector.load %arg12[%c0_55, %c0_56, %c0_57, %c0_58] : memref<1x4x512x128xbf16, #tpu.memory_space<vmem>>, vector<1x1x512x128xbf16>
    %130 = vector.shape_cast %129 : vector<1x1x512x128xbf16> to vector<512x128xbf16>
    %cst_59 = arith.constant dense<0.000000e+00> : vector<32x128xf32>
    %131 = tpu.matmul %128, %130, %cst_59 {dimension_numbers = #tpu.dot_dimension_numbers<[1], [0], [0], [1], [0, 0, 1, 1], [], []>} : vector<32x512xbf16>, vector<512x128xbf16>, vector<32x128xf32> -> vector<32x128xf32>
    %c0_60 = arith.constant 0 : index
    %c0_61 = arith.constant 0 : index
    %c0_62 = arith.constant 0 : index
    %132 = vector.load %arg13[%c0_60, %c0_61, %c0_62] : memref<1x4x128xf32, #tpu.memory_space<vmem>>, vector<1x1x128xf32>
    %133 = vector.shape_cast %132 : vector<1x1x128xf32> to vector<128xf32>
    %134 = vector.shape_cast %133 : vector<128xf32> to vector<1x128xf32>
    %135 = vector.broadcast %134 : vector<1x128xf32> to vector<32x128xf32>
    %136 = arith.addf %131, %135 : vector<32x128xf32>
    %137 = arith.addf %7, %136 : vector<32x128xf32>
    %c0_63 = arith.constant 0 : index
    %c1 = arith.constant 1 : index
    %c0_64 = arith.constant 0 : index
    %138 = vector.load %arg7[%c0_63, %c1, %c0_64] : memref<1x4x128xf32, #tpu.memory_space<vmem>>, vector<1x1x128xf32>
    %139 = vector.shape_cast %138 : vector<1x1x128xf32> to vector<128xf32>
    %c0_65 = arith.constant 0 : index
    %c1_66 = arith.constant 1 : index
    %c0_67 = arith.constant 0 : index
    %140 = vector.load %arg8[%c0_65, %c1_66, %c0_67] : memref<1x4x128xf32, #tpu.memory_space<vmem>>, vector<1x1x128xf32>
    %141 = vector.shape_cast %140 : vector<1x1x128xf32> to vector<128xf32>
    %cst_68 = arith.constant dense<0.000000e+00> : vector<16xf32>
    %142 = vector.multi_reduction <add>, %8, %cst_68 [1] : vector<16x128xf32> to vector<16xf32>
    %143 = vector.shape_cast %142 : vector<16xf32> to vector<16x1xf32>
    %cst_69 = arith.constant 1.280000e+02 : f32
    %144 = vector.broadcast %cst_69 : f32 to vector<16x1xf32>
    %145 = arith.divf %143, %144 : vector<16x1xf32>
    %146 = vector.broadcast %145 : vector<16x1xf32> to vector<16x128xf32>
    %147 = arith.subf %8, %146 : vector<16x128xf32>
    %148 = arith.mulf %147, %147 : vector<16x128xf32>
    %cst_70 = arith.constant dense<0.000000e+00> : vector<16xf32>
    %149 = vector.multi_reduction <add>, %148, %cst_70 [1] : vector<16x128xf32> to vector<16xf32>
    %150 = vector.shape_cast %149 : vector<16xf32> to vector<16x1xf32>
    %cst_71 = arith.constant 1.280000e+02 : f32
    %151 = vector.broadcast %cst_71 : f32 to vector<16x1xf32>
    %152 = arith.divf %150, %151 : vector<16x1xf32>
    %153 = vector.broadcast %145 : vector<16x1xf32> to vector<16x128xf32>
    %154 = arith.subf %8, %153 : vector<16x128xf32>
    %cst_72 = arith.constant 9.99999974E-6 : f32
    %155 = vector.broadcast %cst_72 : f32 to vector<16x1xf32>
    %156 = arith.addf %152, %155 : vector<16x1xf32>
    %157 = math.rsqrt %156 : vector<16x1xf32>
    %158 = vector.broadcast %157 : vector<16x1xf32> to vector<16x128xf32>
    %159 = arith.mulf %154, %158 : vector<16x128xf32>
    %160 = vector.shape_cast %139 : vector<128xf32> to vector<1x128xf32>
    %161 = vector.broadcast %160 : vector<1x128xf32> to vector<16x128xf32>
    %162 = arith.mulf %159, %161 : vector<16x128xf32>
    %163 = vector.shape_cast %141 : vector<128xf32> to vector<1x128xf32>
    %164 = vector.broadcast %163 : vector<1x128xf32> to vector<16x128xf32>
    %165 = arith.addf %162, %164 : vector<16x128xf32>
    %166 = arith.truncf %165 : vector<16x128xf32> to vector<16x128xbf16>
    %167 = vector.broadcast %5 : vector<16x1xf32> to vector<16x16xf32>
    %168 = vector.broadcast %6 : vector<1x16xf32> to vector<16x16xf32>
    %169 = arith.cmpf oeq, %167, %168 : vector<16x16xf32>
    %cst_73 = arith.constant 0.000000e+00 : f32
    %cst_74 = arith.constant -1.000000e+09 : f32
    %170 = vector.broadcast %cst_73 : f32 to vector<16x16xf32>
    %171 = vector.broadcast %cst_74 : f32 to vector<16x16xf32>
    %172 = arith.select %169, %170, %171 : vector<16x16xi1>, vector<16x16xf32>
    %c0_75 = arith.constant 0 : index
    %c1_76 = arith.constant 1 : index
    %c0_77 = arith.constant 0 : index
    %c0_78 = arith.constant 0 : index
    %173 = vector.load %arg9[%c0_75, %c1_76, %c0_77, %c0_78] : memref<1x4x128x512xbf16, #tpu.memory_space<vmem>>, vector<1x1x128x512xbf16>
    %174 = vector.shape_cast %173 : vector<1x1x128x512xbf16> to vector<128x512xbf16>
    %cst_79 = arith.constant dense<0.000000e+00> : vector<16x512xf32>
    %175 = tpu.matmul %166, %174, %cst_79 {dimension_numbers = #tpu.dot_dimension_numbers<[1], [0], [0], [1], [0, 0, 1, 1], [], []>} : vector<16x128xbf16>, vector<128x512xbf16>, vector<16x512xf32> -> vector<16x512xf32>
    %176 = arith.truncf %175 : vector<16x512xf32> to vector<16x512xbf16>
    %c0_80 = arith.constant 0 : index
    %c1_81 = arith.constant 1 : index
    %c0_82 = arith.constant 0 : index
    %c0_83 = arith.constant 0 : index
    %177 = vector.load %arg10[%c0_80, %c1_81, %c0_82, %c0_83] : memref<1x4x128x512xbf16, #tpu.memory_space<vmem>>, vector<1x1x128x512xbf16>
    %178 = vector.shape_cast %177 : vector<1x1x128x512xbf16> to vector<128x512xbf16>
    %cst_84 = arith.constant dense<0.000000e+00> : vector<16x512xf32>
    %179 = tpu.matmul %166, %178, %cst_84 {dimension_numbers = #tpu.dot_dimension_numbers<[1], [0], [0], [1], [0, 0, 1, 1], [], []>} : vector<16x128xbf16>, vector<128x512xbf16>, vector<16x512xf32> -> vector<16x512xf32>
    %180 = arith.truncf %179 : vector<16x512xf32> to vector<16x512xbf16>
    %c0_85 = arith.constant 0 : index
    %c1_86 = arith.constant 1 : index
    %c0_87 = arith.constant 0 : index
    %c0_88 = arith.constant 0 : index
    %181 = vector.load %arg11[%c0_85, %c1_86, %c0_87, %c0_88] : memref<1x4x128x512xbf16, #tpu.memory_space<vmem>>, vector<1x1x128x512xbf16>
    %182 = vector.shape_cast %181 : vector<1x1x128x512xbf16> to vector<128x512xbf16>
    %cst_89 = arith.constant dense<0.000000e+00> : vector<16x512xf32>
    %183 = tpu.matmul %166, %182, %cst_89 {dimension_numbers = #tpu.dot_dimension_numbers<[1], [0], [0], [1], [0, 0, 1, 1], [], []>} : vector<16x128xbf16>, vector<128x512xbf16>, vector<16x512xf32> -> vector<16x512xf32>
    %184 = arith.truncf %183 : vector<16x512xf32> to vector<16x512xbf16>
    %185 = vector.extract_strided_slice %176 {offsets = [0, 0], sizes = [16, 128], strides = [1, 1]} : vector<16x512xbf16> to vector<16x128xbf16>
    %186 = vector.extract_strided_slice %180 {offsets = [0, 0], sizes = [16, 128], strides = [1, 1]} : vector<16x512xbf16> to vector<16x128xbf16>
    "tpu.trace_start"() <{level = 10 : i32, message = "qd,kd->qk"}> : () -> ()
    %cst_90 = arith.constant dense<0.000000e+00> : vector<16x16xf32>
    %187 = tpu.matmul %185, %186, %cst_90 {dimension_numbers = #tpu.dot_dimension_numbers<[1], [1], [0], [0], [0, 0, 1, 0], [], []>} : vector<16x128xbf16>, vector<16x128xbf16>, vector<16x16xf32> -> vector<16x16xf32>
    "tpu.trace_stop"() : () -> ()
    %188 = arith.addf %187, %172 : vector<16x16xf32>
    %cst_91 = arith.constant dense<0xFF800000> : vector<16xf32>
    %189 = vector.multi_reduction <maximumf>, %188, %cst_91 [1] : vector<16x16xf32> to vector<16xf32>
    %190 = vector.shape_cast %189 : vector<16xf32> to vector<16x1xf32>
    %191 = vector.broadcast %190 : vector<16x1xf32> to vector<16x16xf32>
    %192 = arith.subf %188, %191 : vector<16x16xf32>
    %193 = math.exp %192 : vector<16x16xf32>
    %cst_92 = arith.constant dense<0.000000e+00> : vector<16xf32>
    %194 = vector.multi_reduction <add>, %193, %cst_92 [1] : vector<16x16xf32> to vector<16xf32>
    %195 = vector.shape_cast %194 : vector<16xf32> to vector<16x1xf32>
    %196 = tpu.reciprocal %195 {approx = true} : vector<16x1xf32> -> vector<16x1xf32>
    %197 = vector.broadcast %196 : vector<16x1xf32> to vector<16x16xf32>
    %198 = arith.mulf %193, %197 : vector<16x16xf32>
    %199 = arith.truncf %198 : vector<16x16xf32> to vector<16x16xbf16>
    %200 = vector.extract_strided_slice %184 {offsets = [0, 0], sizes = [16, 128], strides = [1, 1]} : vector<16x512xbf16> to vector<16x128xbf16>
    %cst_93 = arith.constant dense<0.000000e+00> : vector<16x128xf32>
    %201 = tpu.matmul %199, %200, %cst_93 {dimension_numbers = #tpu.dot_dimension_numbers<[1], [0], [0], [1], [0, 0, 1, 1], [], []>} : vector<16x16xbf16>, vector<16x128xbf16>, vector<16x128xf32> -> vector<16x128xf32>
    %202 = arith.truncf %201 : vector<16x128xf32> to vector<16x128xbf16>
    %203 = vector.extract_strided_slice %176 {offsets = [0, 128], sizes = [16, 128], strides = [1, 1]} : vector<16x512xbf16> to vector<16x128xbf16>
    %204 = vector.extract_strided_slice %180 {offsets = [0, 128], sizes = [16, 128], strides = [1, 1]} : vector<16x512xbf16> to vector<16x128xbf16>
    "tpu.trace_start"() <{level = 10 : i32, message = "qd,kd->qk"}> : () -> ()
    %cst_94 = arith.constant dense<0.000000e+00> : vector<16x16xf32>
    %205 = tpu.matmul %203, %204, %cst_94 {dimension_numbers = #tpu.dot_dimension_numbers<[1], [1], [0], [0], [0, 0, 1, 0], [], []>} : vector<16x128xbf16>, vector<16x128xbf16>, vector<16x16xf32> -> vector<16x16xf32>
    "tpu.trace_stop"() : () -> ()
    %206 = arith.addf %205, %172 : vector<16x16xf32>
    %cst_95 = arith.constant dense<0xFF800000> : vector<16xf32>
    %207 = vector.multi_reduction <maximumf>, %206, %cst_95 [1] : vector<16x16xf32> to vector<16xf32>
    %208 = vector.shape_cast %207 : vector<16xf32> to vector<16x1xf32>
    %209 = vector.broadcast %208 : vector<16x1xf32> to vector<16x16xf32>
    %210 = arith.subf %206, %209 : vector<16x16xf32>
    %211 = math.exp %210 : vector<16x16xf32>
    %cst_96 = arith.constant dense<0.000000e+00> : vector<16xf32>
    %212 = vector.multi_reduction <add>, %211, %cst_96 [1] : vector<16x16xf32> to vector<16xf32>
    %213 = vector.shape_cast %212 : vector<16xf32> to vector<16x1xf32>
    %214 = tpu.reciprocal %213 {approx = true} : vector<16x1xf32> -> vector<16x1xf32>
    %215 = vector.broadcast %214 : vector<16x1xf32> to vector<16x16xf32>
    %216 = arith.mulf %211, %215 : vector<16x16xf32>
    %217 = arith.truncf %216 : vector<16x16xf32> to vector<16x16xbf16>
    %218 = vector.extract_strided_slice %184 {offsets = [0, 128], sizes = [16, 128], strides = [1, 1]} : vector<16x512xbf16> to vector<16x128xbf16>
    %cst_97 = arith.constant dense<0.000000e+00> : vector<16x128xf32>
    %219 = tpu.matmul %217, %218, %cst_97 {dimension_numbers = #tpu.dot_dimension_numbers<[1], [0], [0], [1], [0, 0, 1, 1], [], []>} : vector<16x16xbf16>, vector<16x128xbf16>, vector<16x128xf32> -> vector<16x128xf32>
    %220 = arith.truncf %219 : vector<16x128xf32> to vector<16x128xbf16>
    %221 = vector.extract_strided_slice %176 {offsets = [0, 256], sizes = [16, 128], strides = [1, 1]} : vector<16x512xbf16> to vector<16x128xbf16>
    %222 = vector.extract_strided_slice %180 {offsets = [0, 256], sizes = [16, 128], strides = [1, 1]} : vector<16x512xbf16> to vector<16x128xbf16>
    "tpu.trace_start"() <{level = 10 : i32, message = "qd,kd->qk"}> : () -> ()
    %cst_98 = arith.constant dense<0.000000e+00> : vector<16x16xf32>
    %223 = tpu.matmul %221, %222, %cst_98 {dimension_numbers = #tpu.dot_dimension_numbers<[1], [1], [0], [0], [0, 0, 1, 0], [], []>} : vector<16x128xbf16>, vector<16x128xbf16>, vector<16x16xf32> -> vector<16x16xf32>
    "tpu.trace_stop"() : () -> ()
    %224 = arith.addf %223, %172 : vector<16x16xf32>
    %cst_99 = arith.constant dense<0xFF800000> : vector<16xf32>
    %225 = vector.multi_reduction <maximumf>, %224, %cst_99 [1] : vector<16x16xf32> to vector<16xf32>
    %226 = vector.shape_cast %225 : vector<16xf32> to vector<16x1xf32>
    %227 = vector.broadcast %226 : vector<16x1xf32> to vector<16x16xf32>
    %228 = arith.subf %224, %227 : vector<16x16xf32>
    %229 = math.exp %228 : vector<16x16xf32>
    %cst_100 = arith.constant dense<0.000000e+00> : vector<16xf32>
    %230 = vector.multi_reduction <add>, %229, %cst_100 [1] : vector<16x16xf32> to vector<16xf32>
    %231 = vector.shape_cast %230 : vector<16xf32> to vector<16x1xf32>
    %232 = tpu.reciprocal %231 {approx = true} : vector<16x1xf32> -> vector<16x1xf32>
    %233 = vector.broadcast %232 : vector<16x1xf32> to vector<16x16xf32>
    %234 = arith.mulf %229, %233 : vector<16x16xf32>
    %235 = arith.truncf %234 : vector<16x16xf32> to vector<16x16xbf16>
    %236 = vector.extract_strided_slice %184 {offsets = [0, 256], sizes = [16, 128], strides = [1, 1]} : vector<16x512xbf16> to vector<16x128xbf16>
    %cst_101 = arith.constant dense<0.000000e+00> : vector<16x128xf32>
    %237 = tpu.matmul %235, %236, %cst_101 {dimension_numbers = #tpu.dot_dimension_numbers<[1], [0], [0], [1], [0, 0, 1, 1], [], []>} : vector<16x16xbf16>, vector<16x128xbf16>, vector<16x128xf32> -> vector<16x128xf32>
    %238 = arith.truncf %237 : vector<16x128xf32> to vector<16x128xbf16>
    %239 = vector.extract_strided_slice %176 {offsets = [0, 384], sizes = [16, 128], strides = [1, 1]} : vector<16x512xbf16> to vector<16x128xbf16>
    %240 = vector.extract_strided_slice %180 {offsets = [0, 384], sizes = [16, 128], strides = [1, 1]} : vector<16x512xbf16> to vector<16x128xbf16>
    "tpu.trace_start"() <{level = 10 : i32, message = "qd,kd->qk"}> : () -> ()
    %cst_102 = arith.constant dense<0.000000e+00> : vector<16x16xf32>
    %241 = tpu.matmul %239, %240, %cst_102 {dimension_numbers = #tpu.dot_dimension_numbers<[1], [1], [0], [0], [0, 0, 1, 0], [], []>} : vector<16x128xbf16>, vector<16x128xbf16>, vector<16x16xf32> -> vector<16x16xf32>
    "tpu.trace_stop"() : () -> ()
    %242 = arith.addf %241, %172 : vector<16x16xf32>
    %cst_103 = arith.constant dense<0xFF800000> : vector<16xf32>
    %243 = vector.multi_reduction <maximumf>, %242, %cst_103 [1] : vector<16x16xf32> to vector<16xf32>
    %244 = vector.shape_cast %243 : vector<16xf32> to vector<16x1xf32>
    %245 = vector.broadcast %244 : vector<16x1xf32> to vector<16x16xf32>
    %246 = arith.subf %242, %245 : vector<16x16xf32>
    %247 = math.exp %246 : vector<16x16xf32>
    %cst_104 = arith.constant dense<0.000000e+00> : vector<16xf32>
    %248 = vector.multi_reduction <add>, %247, %cst_104 [1] : vector<16x16xf32> to vector<16xf32>
    %249 = vector.shape_cast %248 : vector<16xf32> to vector<16x1xf32>
    %250 = tpu.reciprocal %249 {approx = true} : vector<16x1xf32> -> vector<16x1xf32>
    %251 = vector.broadcast %250 : vector<16x1xf32> to vector<16x16xf32>
    %252 = arith.mulf %247, %251 : vector<16x16xf32>
    %253 = arith.truncf %252 : vector<16x16xf32> to vector<16x16xbf16>
    %254 = vector.extract_strided_slice %184 {offsets = [0, 384], sizes = [16, 128], strides = [1, 1]} : vector<16x512xbf16> to vector<16x128xbf16>
    %cst_105 = arith.constant dense<0.000000e+00> : vector<16x128xf32>
    %255 = tpu.matmul %253, %254, %cst_105 {dimension_numbers = #tpu.dot_dimension_numbers<[1], [0], [0], [1], [0, 0, 1, 1], [], []>} : vector<16x16xbf16>, vector<16x128xbf16>, vector<16x128xf32> -> vector<16x128xf32>
    %256 = arith.truncf %255 : vector<16x128xf32> to vector<16x128xbf16>
    %257 = tpu.concatenate %202, %220, %238, %256 in 1 : vector<16x128xbf16>, vector<16x128xbf16>, vector<16x128xbf16>, vector<16x128xbf16> -> vector<16x512xbf16>
    %c0_106 = arith.constant 0 : index
    %c1_107 = arith.constant 1 : index
    %c0_108 = arith.constant 0 : index
    %c0_109 = arith.constant 0 : index
    %258 = vector.load %arg12[%c0_106, %c1_107, %c0_108, %c0_109] : memref<1x4x512x128xbf16, #tpu.memory_space<vmem>>, vector<1x1x512x128xbf16>
    %259 = vector.shape_cast %258 : vector<1x1x512x128xbf16> to vector<512x128xbf16>
    %cst_110 = arith.constant dense<0.000000e+00> : vector<16x128xf32>
    %260 = tpu.matmul %257, %259, %cst_110 {dimension_numbers = #tpu.dot_dimension_numbers<[1], [0], [0], [1], [0, 0, 1, 1], [], []>} : vector<16x512xbf16>, vector<512x128xbf16>, vector<16x128xf32> -> vector<16x128xf32>
    %c0_111 = arith.constant 0 : index
    %c1_112 = arith.constant 1 : index
    %c0_113 = arith.constant 0 : index
    %261 = vector.load %arg13[%c0_111, %c1_112, %c0_113] : memref<1x4x128xf32, #tpu.memory_space<vmem>>, vector<1x1x128xf32>
    %262 = vector.shape_cast %261 : vector<1x1x128xf32> to vector<128xf32>
    %263 = vector.shape_cast %262 : vector<128xf32> to vector<1x128xf32>
    %264 = vector.broadcast %263 : vector<1x128xf32> to vector<16x128xf32>
    %265 = arith.addf %260, %264 : vector<16x128xf32>
    %266 = arith.addf %8, %265 : vector<16x128xf32>
    %c0_114 = arith.constant 0 : index
    %c2 = arith.constant 2 : index
    %c0_115 = arith.constant 0 : index
    %267 = vector.load %arg7[%c0_114, %c2, %c0_115] : memref<1x4x128xf32, #tpu.memory_space<vmem>>, vector<1x1x128xf32>
    %268 = vector.shape_cast %267 : vector<1x1x128xf32> to vector<128xf32>
    %c0_116 = arith.constant 0 : index
    %c2_117 = arith.constant 2 : index
    %c0_118 = arith.constant 0 : index
    %269 = vector.load %arg8[%c0_116, %c2_117, %c0_118] : memref<1x4x128xf32, #tpu.memory_space<vmem>>, vector<1x1x128xf32>
    %270 = vector.shape_cast %269 : vector<1x1x128xf32> to vector<128xf32>
    %cst_119 = arith.constant dense<0.000000e+00> : vector<32xf32>
    %271 = vector.multi_reduction <add>, %137, %cst_119 [1] : vector<32x128xf32> to vector<32xf32>
    %272 = vector.shape_cast %271 : vector<32xf32> to vector<32x1xf32>
    %cst_120 = arith.constant 1.280000e+02 : f32
    %273 = vector.broadcast %cst_120 : f32 to vector<32x1xf32>
    %274 = arith.divf %272, %273 : vector<32x1xf32>
    %275 = vector.broadcast %274 : vector<32x1xf32> to vector<32x128xf32>
    %276 = arith.subf %137, %275 : vector<32x128xf32>
    %277 = arith.mulf %276, %276 : vector<32x128xf32>
    %cst_121 = arith.constant dense<0.000000e+00> : vector<32xf32>
    %278 = vector.multi_reduction <add>, %277, %cst_121 [1] : vector<32x128xf32> to vector<32xf32>
    %279 = vector.shape_cast %278 : vector<32xf32> to vector<32x1xf32>
    %cst_122 = arith.constant 1.280000e+02 : f32
    %280 = vector.broadcast %cst_122 : f32 to vector<32x1xf32>
    %281 = arith.divf %279, %280 : vector<32x1xf32>
    %282 = vector.broadcast %274 : vector<32x1xf32> to vector<32x128xf32>
    %283 = arith.subf %137, %282 : vector<32x128xf32>
    %cst_123 = arith.constant 9.99999974E-6 : f32
    %284 = vector.broadcast %cst_123 : f32 to vector<32x1xf32>
    %285 = arith.addf %281, %284 : vector<32x1xf32>
    %286 = math.rsqrt %285 : vector<32x1xf32>
    %287 = vector.broadcast %286 : vector<32x1xf32> to vector<32x128xf32>
    %288 = arith.mulf %283, %287 : vector<32x128xf32>
    %289 = vector.shape_cast %268 : vector<128xf32> to vector<1x128xf32>
    %290 = vector.broadcast %289 : vector<1x128xf32> to vector<32x128xf32>
    %291 = arith.mulf %288, %290 : vector<32x128xf32>
    %292 = vector.shape_cast %270 : vector<128xf32> to vector<1x128xf32>
    %293 = vector.broadcast %292 : vector<1x128xf32> to vector<32x128xf32>
    %294 = arith.addf %291, %293 : vector<32x128xf32>
    %295 = arith.truncf %294 : vector<32x128xf32> to vector<32x128xbf16>
    %cst_124 = arith.constant dense<0.000000e+00> : vector<16xf32>
    %296 = vector.multi_reduction <add>, %266, %cst_124 [1] : vector<16x128xf32> to vector<16xf32>
    %297 = vector.shape_cast %296 : vector<16xf32> to vector<16x1xf32>
    %cst_125 = arith.constant 1.280000e+02 : f32
    %298 = vector.broadcast %cst_125 : f32 to vector<16x1xf32>
    %299 = arith.divf %297, %298 : vector<16x1xf32>
    %300 = vector.broadcast %299 : vector<16x1xf32> to vector<16x128xf32>
    %301 = arith.subf %266, %300 : vector<16x128xf32>
    %302 = arith.mulf %301, %301 : vector<16x128xf32>
    %cst_126 = arith.constant dense<0.000000e+00> : vector<16xf32>
    %303 = vector.multi_reduction <add>, %302, %cst_126 [1] : vector<16x128xf32> to vector<16xf32>
    %304 = vector.shape_cast %303 : vector<16xf32> to vector<16x1xf32>
    %cst_127 = arith.constant 1.280000e+02 : f32
    %305 = vector.broadcast %cst_127 : f32 to vector<16x1xf32>
    %306 = arith.divf %304, %305 : vector<16x1xf32>
    %307 = vector.broadcast %299 : vector<16x1xf32> to vector<16x128xf32>
    %308 = arith.subf %266, %307 : vector<16x128xf32>
    %cst_128 = arith.constant 9.99999974E-6 : f32
    %309 = vector.broadcast %cst_128 : f32 to vector<16x1xf32>
    %310 = arith.addf %306, %309 : vector<16x1xf32>
    %311 = math.rsqrt %310 : vector<16x1xf32>
    %312 = vector.broadcast %311 : vector<16x1xf32> to vector<16x128xf32>
    %313 = arith.mulf %308, %312 : vector<16x128xf32>
    %314 = vector.shape_cast %268 : vector<128xf32> to vector<1x128xf32>
    %315 = vector.broadcast %314 : vector<1x128xf32> to vector<16x128xf32>
    %316 = arith.mulf %313, %315 : vector<16x128xf32>
    %317 = vector.shape_cast %270 : vector<128xf32> to vector<1x128xf32>
    %318 = vector.broadcast %317 : vector<1x128xf32> to vector<16x128xf32>
    %319 = arith.addf %316, %318 : vector<16x128xf32>
    %320 = arith.truncf %319 : vector<16x128xf32> to vector<16x128xbf16>
    %321 = vector.broadcast %3 : vector<32x1xf32> to vector<32x16xf32>
    %322 = vector.broadcast %6 : vector<1x16xf32> to vector<32x16xf32>
    %323 = arith.cmpf oeq, %321, %322 : vector<32x16xf32>
    %cst_129 = arith.constant 0.000000e+00 : f32
    %cst_130 = arith.constant -1.000000e+09 : f32
    %324 = vector.broadcast %cst_129 : f32 to vector<32x16xf32>
    %325 = vector.broadcast %cst_130 : f32 to vector<32x16xf32>
    %326 = arith.select %323, %324, %325 : vector<32x16xi1>, vector<32x16xf32>
    %c0_131 = arith.constant 0 : index
    %c2_132 = arith.constant 2 : index
    %c0_133 = arith.constant 0 : index
    %c0_134 = arith.constant 0 : index
    %327 = vector.load %arg9[%c0_131, %c2_132, %c0_133, %c0_134] : memref<1x4x128x512xbf16, #tpu.memory_space<vmem>>, vector<1x1x128x512xbf16>
    %328 = vector.shape_cast %327 : vector<1x1x128x512xbf16> to vector<128x512xbf16>
    %cst_135 = arith.constant dense<0.000000e+00> : vector<32x512xf32>
    %329 = tpu.matmul %295, %328, %cst_135 {dimension_numbers = #tpu.dot_dimension_numbers<[1], [0], [0], [1], [0, 0, 1, 1], [], []>} : vector<32x128xbf16>, vector<128x512xbf16>, vector<32x512xf32> -> vector<32x512xf32>
    %330 = arith.truncf %329 : vector<32x512xf32> to vector<32x512xbf16>
    %c0_136 = arith.constant 0 : index
    %c2_137 = arith.constant 2 : index
    %c0_138 = arith.constant 0 : index
    %c0_139 = arith.constant 0 : index
    %331 = vector.load %arg10[%c0_136, %c2_137, %c0_138, %c0_139] : memref<1x4x128x512xbf16, #tpu.memory_space<vmem>>, vector<1x1x128x512xbf16>
    %332 = vector.shape_cast %331 : vector<1x1x128x512xbf16> to vector<128x512xbf16>
    %cst_140 = arith.constant dense<0.000000e+00> : vector<16x512xf32>
    %333 = tpu.matmul %320, %332, %cst_140 {dimension_numbers = #tpu.dot_dimension_numbers<[1], [0], [0], [1], [0, 0, 1, 1], [], []>} : vector<16x128xbf16>, vector<128x512xbf16>, vector<16x512xf32> -> vector<16x512xf32>
    %334 = arith.truncf %333 : vector<16x512xf32> to vector<16x512xbf16>
    %c0_141 = arith.constant 0 : index
    %c2_142 = arith.constant 2 : index
    %c0_143 = arith.constant 0 : index
    %c0_144 = arith.constant 0 : index
    %335 = vector.load %arg11[%c0_141, %c2_142, %c0_143, %c0_144] : memref<1x4x128x512xbf16, #tpu.memory_space<vmem>>, vector<1x1x128x512xbf16>
    %336 = vector.shape_cast %335 : vector<1x1x128x512xbf16> to vector<128x512xbf16>
    %cst_145 = arith.constant dense<0.000000e+00> : vector<16x512xf32>
    %337 = tpu.matmul %320, %336, %cst_145 {dimension_numbers = #tpu.dot_dimension_numbers<[1], [0], [0], [1], [0, 0, 1, 1], [], []>} : vector<16x128xbf16>, vector<128x512xbf16>, vector<16x512xf32> -> vector<16x512xf32>
    %338 = arith.truncf %337 : vector<16x512xf32> to vector<16x512xbf16>
    %339 = vector.extract_strided_slice %330 {offsets = [0, 0], sizes = [32, 128], strides = [1, 1]} : vector<32x512xbf16> to vector<32x128xbf16>
    %340 = vector.extract_strided_slice %334 {offsets = [0, 0], sizes = [16, 128], strides = [1, 1]} : vector<16x512xbf16> to vector<16x128xbf16>
    "tpu.trace_start"() <{level = 10 : i32, message = "qd,kd->qk"}> : () -> ()
    %cst_146 = arith.constant dense<0.000000e+00> : vector<32x16xf32>
    %341 = tpu.matmul %339, %340, %cst_146 {dimension_numbers = #tpu.dot_dimension_numbers<[1], [1], [0], [0], [0, 0, 1, 0], [], []>} : vector<32x128xbf16>, vector<16x128xbf16>, vector<32x16xf32> -> vector<32x16xf32>
    "tpu.trace_stop"() : () -> ()
    %342 = arith.addf %341, %326 : vector<32x16xf32>
    %cst_147 = arith.constant dense<0xFF800000> : vector<32xf32>
    %343 = vector.multi_reduction <maximumf>, %342, %cst_147 [1] : vector<32x16xf32> to vector<32xf32>
    %344 = vector.shape_cast %343 : vector<32xf32> to vector<32x1xf32>
    %345 = vector.broadcast %344 : vector<32x1xf32> to vector<32x16xf32>
    %346 = arith.subf %342, %345 : vector<32x16xf32>
    %347 = math.exp %346 : vector<32x16xf32>
    %cst_148 = arith.constant dense<0.000000e+00> : vector<32xf32>
    %348 = vector.multi_reduction <add>, %347, %cst_148 [1] : vector<32x16xf32> to vector<32xf32>
    %349 = vector.shape_cast %348 : vector<32xf32> to vector<32x1xf32>
    %350 = tpu.reciprocal %349 {approx = true} : vector<32x1xf32> -> vector<32x1xf32>
    %351 = vector.broadcast %350 : vector<32x1xf32> to vector<32x16xf32>
    %352 = arith.mulf %347, %351 : vector<32x16xf32>
    %353 = arith.truncf %352 : vector<32x16xf32> to vector<32x16xbf16>
    %354 = vector.extract_strided_slice %338 {offsets = [0, 0], sizes = [16, 128], strides = [1, 1]} : vector<16x512xbf16> to vector<16x128xbf16>
    %cst_149 = arith.constant dense<0.000000e+00> : vector<32x128xf32>
    %355 = tpu.matmul %353, %354, %cst_149 {dimension_numbers = #tpu.dot_dimension_numbers<[1], [0], [0], [1], [0, 0, 1, 1], [], []>} : vector<32x16xbf16>, vector<16x128xbf16>, vector<32x128xf32> -> vector<32x128xf32>
    %356 = arith.truncf %355 : vector<32x128xf32> to vector<32x128xbf16>
    %357 = vector.extract_strided_slice %330 {offsets = [0, 128], sizes = [32, 128], strides = [1, 1]} : vector<32x512xbf16> to vector<32x128xbf16>
    %358 = vector.extract_strided_slice %334 {offsets = [0, 128], sizes = [16, 128], strides = [1, 1]} : vector<16x512xbf16> to vector<16x128xbf16>
    "tpu.trace_start"() <{level = 10 : i32, message = "qd,kd->qk"}> : () -> ()
    %cst_150 = arith.constant dense<0.000000e+00> : vector<32x16xf32>
    %359 = tpu.matmul %357, %358, %cst_150 {dimension_numbers = #tpu.dot_dimension_numbers<[1], [1], [0], [0], [0, 0, 1, 0], [], []>} : vector<32x128xbf16>, vector<16x128xbf16>, vector<32x16xf32> -> vector<32x16xf32>
    "tpu.trace_stop"() : () -> ()
    %360 = arith.addf %359, %326 : vector<32x16xf32>
    %cst_151 = arith.constant dense<0xFF800000> : vector<32xf32>
    %361 = vector.multi_reduction <maximumf>, %360, %cst_151 [1] : vector<32x16xf32> to vector<32xf32>
    %362 = vector.shape_cast %361 : vector<32xf32> to vector<32x1xf32>
    %363 = vector.broadcast %362 : vector<32x1xf32> to vector<32x16xf32>
    %364 = arith.subf %360, %363 : vector<32x16xf32>
    %365 = math.exp %364 : vector<32x16xf32>
    %cst_152 = arith.constant dense<0.000000e+00> : vector<32xf32>
    %366 = vector.multi_reduction <add>, %365, %cst_152 [1] : vector<32x16xf32> to vector<32xf32>
    %367 = vector.shape_cast %366 : vector<32xf32> to vector<32x1xf32>
    %368 = tpu.reciprocal %367 {approx = true} : vector<32x1xf32> -> vector<32x1xf32>
    %369 = vector.broadcast %368 : vector<32x1xf32> to vector<32x16xf32>
    %370 = arith.mulf %365, %369 : vector<32x16xf32>
    %371 = arith.truncf %370 : vector<32x16xf32> to vector<32x16xbf16>
    %372 = vector.extract_strided_slice %338 {offsets = [0, 128], sizes = [16, 128], strides = [1, 1]} : vector<16x512xbf16> to vector<16x128xbf16>
    %cst_153 = arith.constant dense<0.000000e+00> : vector<32x128xf32>
    %373 = tpu.matmul %371, %372, %cst_153 {dimension_numbers = #tpu.dot_dimension_numbers<[1], [0], [0], [1], [0, 0, 1, 1], [], []>} : vector<32x16xbf16>, vector<16x128xbf16>, vector<32x128xf32> -> vector<32x128xf32>
    %374 = arith.truncf %373 : vector<32x128xf32> to vector<32x128xbf16>
    %375 = vector.extract_strided_slice %330 {offsets = [0, 256], sizes = [32, 128], strides = [1, 1]} : vector<32x512xbf16> to vector<32x128xbf16>
    %376 = vector.extract_strided_slice %334 {offsets = [0, 256], sizes = [16, 128], strides = [1, 1]} : vector<16x512xbf16> to vector<16x128xbf16>
    "tpu.trace_start"() <{level = 10 : i32, message = "qd,kd->qk"}> : () -> ()
    %cst_154 = arith.constant dense<0.000000e+00> : vector<32x16xf32>
    %377 = tpu.matmul %375, %376, %cst_154 {dimension_numbers = #tpu.dot_dimension_numbers<[1], [1], [0], [0], [0, 0, 1, 0], [], []>} : vector<32x128xbf16>, vector<16x128xbf16>, vector<32x16xf32> -> vector<32x16xf32>
    "tpu.trace_stop"() : () -> ()
    %378 = arith.addf %377, %326 : vector<32x16xf32>
    %cst_155 = arith.constant dense<0xFF800000> : vector<32xf32>
    %379 = vector.multi_reduction <maximumf>, %378, %cst_155 [1] : vector<32x16xf32> to vector<32xf32>
    %380 = vector.shape_cast %379 : vector<32xf32> to vector<32x1xf32>
    %381 = vector.broadcast %380 : vector<32x1xf32> to vector<32x16xf32>
    %382 = arith.subf %378, %381 : vector<32x16xf32>
    %383 = math.exp %382 : vector<32x16xf32>
    %cst_156 = arith.constant dense<0.000000e+00> : vector<32xf32>
    %384 = vector.multi_reduction <add>, %383, %cst_156 [1] : vector<32x16xf32> to vector<32xf32>
    %385 = vector.shape_cast %384 : vector<32xf32> to vector<32x1xf32>
    %386 = tpu.reciprocal %385 {approx = true} : vector<32x1xf32> -> vector<32x1xf32>
    %387 = vector.broadcast %386 : vector<32x1xf32> to vector<32x16xf32>
    %388 = arith.mulf %383, %387 : vector<32x16xf32>
    %389 = arith.truncf %388 : vector<32x16xf32> to vector<32x16xbf16>
    %390 = vector.extract_strided_slice %338 {offsets = [0, 256], sizes = [16, 128], strides = [1, 1]} : vector<16x512xbf16> to vector<16x128xbf16>
    %cst_157 = arith.constant dense<0.000000e+00> : vector<32x128xf32>
    %391 = tpu.matmul %389, %390, %cst_157 {dimension_numbers = #tpu.dot_dimension_numbers<[1], [0], [0], [1], [0, 0, 1, 1], [], []>} : vector<32x16xbf16>, vector<16x128xbf16>, vector<32x128xf32> -> vector<32x128xf32>
    %392 = arith.truncf %391 : vector<32x128xf32> to vector<32x128xbf16>
    %393 = vector.extract_strided_slice %330 {offsets = [0, 384], sizes = [32, 128], strides = [1, 1]} : vector<32x512xbf16> to vector<32x128xbf16>
    %394 = vector.extract_strided_slice %334 {offsets = [0, 384], sizes = [16, 128], strides = [1, 1]} : vector<16x512xbf16> to vector<16x128xbf16>
    "tpu.trace_start"() <{level = 10 : i32, message = "qd,kd->qk"}> : () -> ()
    %cst_158 = arith.constant dense<0.000000e+00> : vector<32x16xf32>
    %395 = tpu.matmul %393, %394, %cst_158 {dimension_numbers = #tpu.dot_dimension_numbers<[1], [1], [0], [0], [0, 0, 1, 0], [], []>} : vector<32x128xbf16>, vector<16x128xbf16>, vector<32x16xf32> -> vector<32x16xf32>
    "tpu.trace_stop"() : () -> ()
    %396 = arith.addf %395, %326 : vector<32x16xf32>
    %cst_159 = arith.constant dense<0xFF800000> : vector<32xf32>
    %397 = vector.multi_reduction <maximumf>, %396, %cst_159 [1] : vector<32x16xf32> to vector<32xf32>
    %398 = vector.shape_cast %397 : vector<32xf32> to vector<32x1xf32>
    %399 = vector.broadcast %398 : vector<32x1xf32> to vector<32x16xf32>
    %400 = arith.subf %396, %399 : vector<32x16xf32>
    %401 = math.exp %400 : vector<32x16xf32>
    %cst_160 = arith.constant dense<0.000000e+00> : vector<32xf32>
    %402 = vector.multi_reduction <add>, %401, %cst_160 [1] : vector<32x16xf32> to vector<32xf32>
    %403 = vector.shape_cast %402 : vector<32xf32> to vector<32x1xf32>
    %404 = tpu.reciprocal %403 {approx = true} : vector<32x1xf32> -> vector<32x1xf32>
    %405 = vector.broadcast %404 : vector<32x1xf32> to vector<32x16xf32>
    %406 = arith.mulf %401, %405 : vector<32x16xf32>
    %407 = arith.truncf %406 : vector<32x16xf32> to vector<32x16xbf16>
    %408 = vector.extract_strided_slice %338 {offsets = [0, 384], sizes = [16, 128], strides = [1, 1]} : vector<16x512xbf16> to vector<16x128xbf16>
    %cst_161 = arith.constant dense<0.000000e+00> : vector<32x128xf32>
    %409 = tpu.matmul %407, %408, %cst_161 {dimension_numbers = #tpu.dot_dimension_numbers<[1], [0], [0], [1], [0, 0, 1, 1], [], []>} : vector<32x16xbf16>, vector<16x128xbf16>, vector<32x128xf32> -> vector<32x128xf32>
    %410 = arith.truncf %409 : vector<32x128xf32> to vector<32x128xbf16>
    %411 = tpu.concatenate %356, %374, %392, %410 in 1 : vector<32x128xbf16>, vector<32x128xbf16>, vector<32x128xbf16>, vector<32x128xbf16> -> vector<32x512xbf16>
    %c0_162 = arith.constant 0 : index
    %c2_163 = arith.constant 2 : index
    %c0_164 = arith.constant 0 : index
    %c0_165 = arith.constant 0 : index
    %412 = vector.load %arg12[%c0_162, %c2_163, %c0_164, %c0_165] : memref<1x4x512x128xbf16, #tpu.memory_space<vmem>>, vector<1x1x512x128xbf16>
    %413 = vector.shape_cast %412 : vector<1x1x512x128xbf16> to vector<512x128xbf16>
    %cst_166 = arith.constant dense<0.000000e+00> : vector<32x128xf32>
    %414 = tpu.matmul %411, %413, %cst_166 {dimension_numbers = #tpu.dot_dimension_numbers<[1], [0], [0], [1], [0, 0, 1, 1], [], []>} : vector<32x512xbf16>, vector<512x128xbf16>, vector<32x128xf32> -> vector<32x128xf32>
    %c0_167 = arith.constant 0 : index
    %c2_168 = arith.constant 2 : index
    %c0_169 = arith.constant 0 : index
    %415 = vector.load %arg13[%c0_167, %c2_168, %c0_169] : memref<1x4x128xf32, #tpu.memory_space<vmem>>, vector<1x1x128xf32>
    %416 = vector.shape_cast %415 : vector<1x1x128xf32> to vector<128xf32>
    %417 = vector.shape_cast %416 : vector<128xf32> to vector<1x128xf32>
    %418 = vector.broadcast %417 : vector<1x128xf32> to vector<32x128xf32>
    %419 = arith.addf %414, %418 : vector<32x128xf32>
    %420 = arith.addf %137, %419 : vector<32x128xf32>
    %c0_170 = arith.constant 0 : index
    %c3 = arith.constant 3 : index
    %c0_171 = arith.constant 0 : index
    %421 = vector.load %arg7[%c0_170, %c3, %c0_171] : memref<1x4x128xf32, #tpu.memory_space<vmem>>, vector<1x1x128xf32>
    %422 = vector.shape_cast %421 : vector<1x1x128xf32> to vector<128xf32>
    %c0_172 = arith.constant 0 : index
    %c3_173 = arith.constant 3 : index
    %c0_174 = arith.constant 0 : index
    %423 = vector.load %arg8[%c0_172, %c3_173, %c0_174] : memref<1x4x128xf32, #tpu.memory_space<vmem>>, vector<1x1x128xf32>
    %424 = vector.shape_cast %423 : vector<1x1x128xf32> to vector<128xf32>
    %cst_175 = arith.constant dense<0.000000e+00> : vector<16xf32>
    %425 = vector.multi_reduction <add>, %266, %cst_175 [1] : vector<16x128xf32> to vector<16xf32>
    %426 = vector.shape_cast %425 : vector<16xf32> to vector<16x1xf32>
    %cst_176 = arith.constant 1.280000e+02 : f32
    %427 = vector.broadcast %cst_176 : f32 to vector<16x1xf32>
    %428 = arith.divf %426, %427 : vector<16x1xf32>
    %429 = vector.broadcast %428 : vector<16x1xf32> to vector<16x128xf32>
    %430 = arith.subf %266, %429 : vector<16x128xf32>
    %431 = arith.mulf %430, %430 : vector<16x128xf32>
    %cst_177 = arith.constant dense<0.000000e+00> : vector<16xf32>
    %432 = vector.multi_reduction <add>, %431, %cst_177 [1] : vector<16x128xf32> to vector<16xf32>
    %433 = vector.shape_cast %432 : vector<16xf32> to vector<16x1xf32>
    %cst_178 = arith.constant 1.280000e+02 : f32
    %434 = vector.broadcast %cst_178 : f32 to vector<16x1xf32>
    %435 = arith.divf %433, %434 : vector<16x1xf32>
    %436 = vector.broadcast %428 : vector<16x1xf32> to vector<16x128xf32>
    %437 = arith.subf %266, %436 : vector<16x128xf32>
    %cst_179 = arith.constant 9.99999974E-6 : f32
    %438 = vector.broadcast %cst_179 : f32 to vector<16x1xf32>
    %439 = arith.addf %435, %438 : vector<16x1xf32>
    %440 = math.rsqrt %439 : vector<16x1xf32>
    %441 = vector.broadcast %440 : vector<16x1xf32> to vector<16x128xf32>
    %442 = arith.mulf %437, %441 : vector<16x128xf32>
    %443 = vector.shape_cast %422 : vector<128xf32> to vector<1x128xf32>
    %444 = vector.broadcast %443 : vector<1x128xf32> to vector<16x128xf32>
    %445 = arith.mulf %442, %444 : vector<16x128xf32>
    %446 = vector.shape_cast %424 : vector<128xf32> to vector<1x128xf32>
    %447 = vector.broadcast %446 : vector<1x128xf32> to vector<16x128xf32>
    %448 = arith.addf %445, %447 : vector<16x128xf32>
    %449 = arith.truncf %448 : vector<16x128xf32> to vector<16x128xbf16>
    %cst_180 = arith.constant dense<0.000000e+00> : vector<32xf32>
    %450 = vector.multi_reduction <add>, %420, %cst_180 [1] : vector<32x128xf32> to vector<32xf32>
    %451 = vector.shape_cast %450 : vector<32xf32> to vector<32x1xf32>
    %cst_181 = arith.constant 1.280000e+02 : f32
    %452 = vector.broadcast %cst_181 : f32 to vector<32x1xf32>
    %453 = arith.divf %451, %452 : vector<32x1xf32>
    %454 = vector.broadcast %453 : vector<32x1xf32> to vector<32x128xf32>
    %455 = arith.subf %420, %454 : vector<32x128xf32>
    %456 = arith.mulf %455, %455 : vector<32x128xf32>
    %cst_182 = arith.constant dense<0.000000e+00> : vector<32xf32>
    %457 = vector.multi_reduction <add>, %456, %cst_182 [1] : vector<32x128xf32> to vector<32xf32>
    %458 = vector.shape_cast %457 : vector<32xf32> to vector<32x1xf32>
    %cst_183 = arith.constant 1.280000e+02 : f32
    %459 = vector.broadcast %cst_183 : f32 to vector<32x1xf32>
    %460 = arith.divf %458, %459 : vector<32x1xf32>
    %461 = vector.broadcast %453 : vector<32x1xf32> to vector<32x128xf32>
    %462 = arith.subf %420, %461 : vector<32x128xf32>
    %cst_184 = arith.constant 9.99999974E-6 : f32
    %463 = vector.broadcast %cst_184 : f32 to vector<32x1xf32>
    %464 = arith.addf %460, %463 : vector<32x1xf32>
    %465 = math.rsqrt %464 : vector<32x1xf32>
    %466 = vector.broadcast %465 : vector<32x1xf32> to vector<32x128xf32>
    %467 = arith.mulf %462, %466 : vector<32x128xf32>
    %468 = vector.shape_cast %422 : vector<128xf32> to vector<1x128xf32>
    %469 = vector.broadcast %468 : vector<1x128xf32> to vector<32x128xf32>
    %470 = arith.mulf %467, %469 : vector<32x128xf32>
    %471 = vector.shape_cast %424 : vector<128xf32> to vector<1x128xf32>
    %472 = vector.broadcast %471 : vector<1x128xf32> to vector<32x128xf32>
    %473 = arith.addf %470, %472 : vector<32x128xf32>
    %474 = arith.truncf %473 : vector<32x128xf32> to vector<32x128xbf16>
    %475 = vector.broadcast %5 : vector<16x1xf32> to vector<16x32xf32>
    %476 = vector.broadcast %4 : vector<1x32xf32> to vector<16x32xf32>
    %477 = arith.cmpf oeq, %475, %476 : vector<16x32xf32>
    %cst_185 = arith.constant 0.000000e+00 : f32
    %cst_186 = arith.constant -1.000000e+09 : f32
    %478 = vector.broadcast %cst_185 : f32 to vector<16x32xf32>
    %479 = vector.broadcast %cst_186 : f32 to vector<16x32xf32>
    %480 = arith.select %477, %478, %479 : vector<16x32xi1>, vector<16x32xf32>
    %c0_187 = arith.constant 0 : index
    %c3_188 = arith.constant 3 : index
    %c0_189 = arith.constant 0 : index
    %c0_190 = arith.constant 0 : index
    %481 = vector.load %arg9[%c0_187, %c3_188, %c0_189, %c0_190] : memref<1x4x128x512xbf16, #tpu.memory_space<vmem>>, vector<1x1x128x512xbf16>
    %482 = vector.shape_cast %481 : vector<1x1x128x512xbf16> to vector<128x512xbf16>
    %cst_191 = arith.constant dense<0.000000e+00> : vector<16x512xf32>
    %483 = tpu.matmul %449, %482, %cst_191 {dimension_numbers = #tpu.dot_dimension_numbers<[1], [0], [0], [1], [0, 0, 1, 1], [], []>} : vector<16x128xbf16>, vector<128x512xbf16>, vector<16x512xf32> -> vector<16x512xf32>
    %484 = arith.truncf %483 : vector<16x512xf32> to vector<16x512xbf16>
    %c0_192 = arith.constant 0 : index
    %c3_193 = arith.constant 3 : index
    %c0_194 = arith.constant 0 : index
    %c0_195 = arith.constant 0 : index
    %485 = vector.load %arg10[%c0_192, %c3_193, %c0_194, %c0_195] : memref<1x4x128x512xbf16, #tpu.memory_space<vmem>>, vector<1x1x128x512xbf16>
    %486 = vector.shape_cast %485 : vector<1x1x128x512xbf16> to vector<128x512xbf16>
    %cst_196 = arith.constant dense<0.000000e+00> : vector<32x512xf32>
    %487 = tpu.matmul %474, %486, %cst_196 {dimension_numbers = #tpu.dot_dimension_numbers<[1], [0], [0], [1], [0, 0, 1, 1], [], []>} : vector<32x128xbf16>, vector<128x512xbf16>, vector<32x512xf32> -> vector<32x512xf32>
    %488 = arith.truncf %487 : vector<32x512xf32> to vector<32x512xbf16>
    %c0_197 = arith.constant 0 : index
    %c3_198 = arith.constant 3 : index
    %c0_199 = arith.constant 0 : index
    %c0_200 = arith.constant 0 : index
    %489 = vector.load %arg11[%c0_197, %c3_198, %c0_199, %c0_200] : memref<1x4x128x512xbf16, #tpu.memory_space<vmem>>, vector<1x1x128x512xbf16>
    %490 = vector.shape_cast %489 : vector<1x1x128x512xbf16> to vector<128x512xbf16>
    %cst_201 = arith.constant dense<0.000000e+00> : vector<32x512xf32>
    %491 = tpu.matmul %474, %490, %cst_201 {dimension_numbers = #tpu.dot_dimension_numbers<[1], [0], [0], [1], [0, 0, 1, 1], [], []>} : vector<32x128xbf16>, vector<128x512xbf16>, vector<32x512xf32> -> vector<32x512xf32>
    %492 = arith.truncf %491 : vector<32x512xf32> to vector<32x512xbf16>
    %493 = vector.extract_strided_slice %484 {offsets = [0, 0], sizes = [16, 128], strides = [1, 1]} : vector<16x512xbf16> to vector<16x128xbf16>
    %494 = vector.extract_strided_slice %488 {offsets = [0, 0], sizes = [32, 128], strides = [1, 1]} : vector<32x512xbf16> to vector<32x128xbf16>
    "tpu.trace_start"() <{level = 10 : i32, message = "qd,kd->qk"}> : () -> ()
    %cst_202 = arith.constant dense<0.000000e+00> : vector<16x32xf32>
    %495 = tpu.matmul %493, %494, %cst_202 {dimension_numbers = #tpu.dot_dimension_numbers<[1], [1], [0], [0], [0, 0, 1, 0], [], []>} : vector<16x128xbf16>, vector<32x128xbf16>, vector<16x32xf32> -> vector<16x32xf32>
    "tpu.trace_stop"() : () -> ()
    %496 = arith.addf %495, %480 : vector<16x32xf32>
    %cst_203 = arith.constant dense<0xFF800000> : vector<16xf32>
    %497 = vector.multi_reduction <maximumf>, %496, %cst_203 [1] : vector<16x32xf32> to vector<16xf32>
    %498 = vector.shape_cast %497 : vector<16xf32> to vector<16x1xf32>
    %499 = vector.broadcast %498 : vector<16x1xf32> to vector<16x32xf32>
    %500 = arith.subf %496, %499 : vector<16x32xf32>
    %501 = math.exp %500 : vector<16x32xf32>
    %cst_204 = arith.constant dense<0.000000e+00> : vector<16xf32>
    %502 = vector.multi_reduction <add>, %501, %cst_204 [1] : vector<16x32xf32> to vector<16xf32>
    %503 = vector.shape_cast %502 : vector<16xf32> to vector<16x1xf32>
    %504 = tpu.reciprocal %503 {approx = true} : vector<16x1xf32> -> vector<16x1xf32>
    %505 = vector.broadcast %504 : vector<16x1xf32> to vector<16x32xf32>
    %506 = arith.mulf %501, %505 : vector<16x32xf32>
    %507 = arith.truncf %506 : vector<16x32xf32> to vector<16x32xbf16>
    %508 = vector.extract_strided_slice %492 {offsets = [0, 0], sizes = [32, 128], strides = [1, 1]} : vector<32x512xbf16> to vector<32x128xbf16>
    %cst_205 = arith.constant dense<0.000000e+00> : vector<16x128xf32>
    %509 = tpu.matmul %507, %508, %cst_205 {dimension_numbers = #tpu.dot_dimension_numbers<[1], [0], [0], [1], [0, 0, 1, 1], [], []>} : vector<16x32xbf16>, vector<32x128xbf16>, vector<16x128xf32> -> vector<16x128xf32>
    %510 = arith.truncf %509 : vector<16x128xf32> to vector<16x128xbf16>
    %511 = vector.extract_strided_slice %484 {offsets = [0, 128], sizes = [16, 128], strides = [1, 1]} : vector<16x512xbf16> to vector<16x128xbf16>
    %512 = vector.extract_strided_slice %488 {offsets = [0, 128], sizes = [32, 128], strides = [1, 1]} : vector<32x512xbf16> to vector<32x128xbf16>
    "tpu.trace_start"() <{level = 10 : i32, message = "qd,kd->qk"}> : () -> ()
    %cst_206 = arith.constant dense<0.000000e+00> : vector<16x32xf32>
    %513 = tpu.matmul %511, %512, %cst_206 {dimension_numbers = #tpu.dot_dimension_numbers<[1], [1], [0], [0], [0, 0, 1, 0], [], []>} : vector<16x128xbf16>, vector<32x128xbf16>, vector<16x32xf32> -> vector<16x32xf32>
    "tpu.trace_stop"() : () -> ()
    %514 = arith.addf %513, %480 : vector<16x32xf32>
    %cst_207 = arith.constant dense<0xFF800000> : vector<16xf32>
    %515 = vector.multi_reduction <maximumf>, %514, %cst_207 [1] : vector<16x32xf32> to vector<16xf32>
    %516 = vector.shape_cast %515 : vector<16xf32> to vector<16x1xf32>
    %517 = vector.broadcast %516 : vector<16x1xf32> to vector<16x32xf32>
    %518 = arith.subf %514, %517 : vector<16x32xf32>
    %519 = math.exp %518 : vector<16x32xf32>
    %cst_208 = arith.constant dense<0.000000e+00> : vector<16xf32>
    %520 = vector.multi_reduction <add>, %519, %cst_208 [1] : vector<16x32xf32> to vector<16xf32>
    %521 = vector.shape_cast %520 : vector<16xf32> to vector<16x1xf32>
    %522 = tpu.reciprocal %521 {approx = true} : vector<16x1xf32> -> vector<16x1xf32>
    %523 = vector.broadcast %522 : vector<16x1xf32> to vector<16x32xf32>
    %524 = arith.mulf %519, %523 : vector<16x32xf32>
    %525 = arith.truncf %524 : vector<16x32xf32> to vector<16x32xbf16>
    %526 = vector.extract_strided_slice %492 {offsets = [0, 128], sizes = [32, 128], strides = [1, 1]} : vector<32x512xbf16> to vector<32x128xbf16>
    %cst_209 = arith.constant dense<0.000000e+00> : vector<16x128xf32>
    %527 = tpu.matmul %525, %526, %cst_209 {dimension_numbers = #tpu.dot_dimension_numbers<[1], [0], [0], [1], [0, 0, 1, 1], [], []>} : vector<16x32xbf16>, vector<32x128xbf16>, vector<16x128xf32> -> vector<16x128xf32>
    %528 = arith.truncf %527 : vector<16x128xf32> to vector<16x128xbf16>
    %529 = vector.extract_strided_slice %484 {offsets = [0, 256], sizes = [16, 128], strides = [1, 1]} : vector<16x512xbf16> to vector<16x128xbf16>
    %530 = vector.extract_strided_slice %488 {offsets = [0, 256], sizes = [32, 128], strides = [1, 1]} : vector<32x512xbf16> to vector<32x128xbf16>
    "tpu.trace_start"() <{level = 10 : i32, message = "qd,kd->qk"}> : () -> ()
    %cst_210 = arith.constant dense<0.000000e+00> : vector<16x32xf32>
    %531 = tpu.matmul %529, %530, %cst_210 {dimension_numbers = #tpu.dot_dimension_numbers<[1], [1], [0], [0], [0, 0, 1, 0], [], []>} : vector<16x128xbf16>, vector<32x128xbf16>, vector<16x32xf32> -> vector<16x32xf32>
    "tpu.trace_stop"() : () -> ()
    %532 = arith.addf %531, %480 : vector<16x32xf32>
    %cst_211 = arith.constant dense<0xFF800000> : vector<16xf32>
    %533 = vector.multi_reduction <maximumf>, %532, %cst_211 [1] : vector<16x32xf32> to vector<16xf32>
    %534 = vector.shape_cast %533 : vector<16xf32> to vector<16x1xf32>
    %535 = vector.broadcast %534 : vector<16x1xf32> to vector<16x32xf32>
    %536 = arith.subf %532, %535 : vector<16x32xf32>
    %537 = math.exp %536 : vector<16x32xf32>
    %cst_212 = arith.constant dense<0.000000e+00> : vector<16xf32>
    %538 = vector.multi_reduction <add>, %537, %cst_212 [1] : vector<16x32xf32> to vector<16xf32>
    %539 = vector.shape_cast %538 : vector<16xf32> to vector<16x1xf32>
    %540 = tpu.reciprocal %539 {approx = true} : vector<16x1xf32> -> vector<16x1xf32>
    %541 = vector.broadcast %540 : vector<16x1xf32> to vector<16x32xf32>
    %542 = arith.mulf %537, %541 : vector<16x32xf32>
    %543 = arith.truncf %542 : vector<16x32xf32> to vector<16x32xbf16>
    %544 = vector.extract_strided_slice %492 {offsets = [0, 256], sizes = [32, 128], strides = [1, 1]} : vector<32x512xbf16> to vector<32x128xbf16>
    %cst_213 = arith.constant dense<0.000000e+00> : vector<16x128xf32>
    %545 = tpu.matmul %543, %544, %cst_213 {dimension_numbers = #tpu.dot_dimension_numbers<[1], [0], [0], [1], [0, 0, 1, 1], [], []>} : vector<16x32xbf16>, vector<32x128xbf16>, vector<16x128xf32> -> vector<16x128xf32>
    %546 = arith.truncf %545 : vector<16x128xf32> to vector<16x128xbf16>
    %547 = vector.extract_strided_slice %484 {offsets = [0, 384], sizes = [16, 128], strides = [1, 1]} : vector<16x512xbf16> to vector<16x128xbf16>
    %548 = vector.extract_strided_slice %488 {offsets = [0, 384], sizes = [32, 128], strides = [1, 1]} : vector<32x512xbf16> to vector<32x128xbf16>
    "tpu.trace_start"() <{level = 10 : i32, message = "qd,kd->qk"}> : () -> ()
    %cst_214 = arith.constant dense<0.000000e+00> : vector<16x32xf32>
    %549 = tpu.matmul %547, %548, %cst_214 {dimension_numbers = #tpu.dot_dimension_numbers<[1], [1], [0], [0], [0, 0, 1, 0], [], []>} : vector<16x128xbf16>, vector<32x128xbf16>, vector<16x32xf32> -> vector<16x32xf32>
    "tpu.trace_stop"() : () -> ()
    %550 = arith.addf %549, %480 : vector<16x32xf32>
    %cst_215 = arith.constant dense<0xFF800000> : vector<16xf32>
    %551 = vector.multi_reduction <maximumf>, %550, %cst_215 [1] : vector<16x32xf32> to vector<16xf32>
    %552 = vector.shape_cast %551 : vector<16xf32> to vector<16x1xf32>
    %553 = vector.broadcast %552 : vector<16x1xf32> to vector<16x32xf32>
    %554 = arith.subf %550, %553 : vector<16x32xf32>
    %555 = math.exp %554 : vector<16x32xf32>
    %cst_216 = arith.constant dense<0.000000e+00> : vector<16xf32>
    %556 = vector.multi_reduction <add>, %555, %cst_216 [1] : vector<16x32xf32> to vector<16xf32>
    %557 = vector.shape_cast %556 : vector<16xf32> to vector<16x1xf32>
    %558 = tpu.reciprocal %557 {approx = true} : vector<16x1xf32> -> vector<16x1xf32>
    %559 = vector.broadcast %558 : vector<16x1xf32> to vector<16x32xf32>
    %560 = arith.mulf %555, %559 : vector<16x32xf32>
    %561 = arith.truncf %560 : vector<16x32xf32> to vector<16x32xbf16>
    %562 = vector.extract_strided_slice %492 {offsets = [0, 384], sizes = [32, 128], strides = [1, 1]} : vector<32x512xbf16> to vector<32x128xbf16>
    %cst_217 = arith.constant dense<0.000000e+00> : vector<16x128xf32>
    %563 = tpu.matmul %561, %562, %cst_217 {dimension_numbers = #tpu.dot_dimension_numbers<[1], [0], [0], [1], [0, 0, 1, 1], [], []>} : vector<16x32xbf16>, vector<32x128xbf16>, vector<16x128xf32> -> vector<16x128xf32>
    %564 = arith.truncf %563 : vector<16x128xf32> to vector<16x128xbf16>
    %565 = tpu.concatenate %510, %528, %546, %564 in 1 : vector<16x128xbf16>, vector<16x128xbf16>, vector<16x128xbf16>, vector<16x128xbf16> -> vector<16x512xbf16>
    %c0_218 = arith.constant 0 : index
    %c3_219 = arith.constant 3 : index
    %c0_220 = arith.constant 0 : index
    %c0_221 = arith.constant 0 : index
    %566 = vector.load %arg12[%c0_218, %c3_219, %c0_220, %c0_221] : memref<1x4x512x128xbf16, #tpu.memory_space<vmem>>, vector<1x1x512x128xbf16>
    %567 = vector.shape_cast %566 : vector<1x1x512x128xbf16> to vector<512x128xbf16>
    %cst_222 = arith.constant dense<0.000000e+00> : vector<16x128xf32>
    %568 = tpu.matmul %565, %567, %cst_222 {dimension_numbers = #tpu.dot_dimension_numbers<[1], [0], [0], [1], [0, 0, 1, 1], [], []>} : vector<16x512xbf16>, vector<512x128xbf16>, vector<16x128xf32> -> vector<16x128xf32>
    %c0_223 = arith.constant 0 : index
    %c3_224 = arith.constant 3 : index
    %c0_225 = arith.constant 0 : index
    %569 = vector.load %arg13[%c0_223, %c3_224, %c0_225] : memref<1x4x128xf32, #tpu.memory_space<vmem>>, vector<1x1x128xf32>
    %570 = vector.shape_cast %569 : vector<1x1x128xf32> to vector<128xf32>
    %571 = vector.shape_cast %570 : vector<128xf32> to vector<1x128xf32>
    %572 = vector.broadcast %571 : vector<1x128xf32> to vector<16x128xf32>
    %573 = arith.addf %568, %572 : vector<16x128xf32>
    %574 = arith.addf %266, %573 : vector<16x128xf32>
    %c0_226 = arith.constant 0 : index
    %c0_227 = arith.constant 0 : index
    %c0_228 = arith.constant 0 : index
    %575 = vector.load %arg14[%c0_226, %c0_227, %c0_228] : memref<1x2x128xf32, #tpu.memory_space<vmem>>, vector<1x1x128xf32>
    %576 = vector.shape_cast %575 : vector<1x1x128xf32> to vector<128xf32>
    %c0_229 = arith.constant 0 : index
    %c0_230 = arith.constant 0 : index
    %c0_231 = arith.constant 0 : index
    %577 = vector.load %arg15[%c0_229, %c0_230, %c0_231] : memref<1x2x128xf32, #tpu.memory_space<vmem>>, vector<1x1x128xf32>
    %578 = vector.shape_cast %577 : vector<1x1x128xf32> to vector<128xf32>
    %cst_232 = arith.constant dense<0.000000e+00> : vector<32xf32>
    %579 = vector.multi_reduction <add>, %420, %cst_232 [1] : vector<32x128xf32> to vector<32xf32>
    %580 = vector.shape_cast %579 : vector<32xf32> to vector<32x1xf32>
    %cst_233 = arith.constant 1.280000e+02 : f32
    %581 = vector.broadcast %cst_233 : f32 to vector<32x1xf32>
    %582 = arith.divf %580, %581 : vector<32x1xf32>
    %583 = vector.broadcast %582 : vector<32x1xf32> to vector<32x128xf32>
    %584 = arith.subf %420, %583 : vector<32x128xf32>
    %585 = arith.mulf %584, %584 : vector<32x128xf32>
    %cst_234 = arith.constant dense<0.000000e+00> : vector<32xf32>
    %586 = vector.multi_reduction <add>, %585, %cst_234 [1] : vector<32x128xf32> to vector<32xf32>
    %587 = vector.shape_cast %586 : vector<32xf32> to vector<32x1xf32>
    %cst_235 = arith.constant 1.280000e+02 : f32
    %588 = vector.broadcast %cst_235 : f32 to vector<32x1xf32>
    %589 = arith.divf %587, %588 : vector<32x1xf32>
    %590 = vector.broadcast %582 : vector<32x1xf32> to vector<32x128xf32>
    %591 = arith.subf %420, %590 : vector<32x128xf32>
    %cst_236 = arith.constant 9.99999974E-6 : f32
    %592 = vector.broadcast %cst_236 : f32 to vector<32x1xf32>
    %593 = arith.addf %589, %592 : vector<32x1xf32>
    %594 = math.rsqrt %593 : vector<32x1xf32>
    %595 = vector.broadcast %594 : vector<32x1xf32> to vector<32x128xf32>
    %596 = arith.mulf %591, %595 : vector<32x128xf32>
    %597 = vector.shape_cast %576 : vector<128xf32> to vector<1x128xf32>
    %598 = vector.broadcast %597 : vector<1x128xf32> to vector<32x128xf32>
    %599 = arith.mulf %596, %598 : vector<32x128xf32>
    %600 = vector.shape_cast %578 : vector<128xf32> to vector<1x128xf32>
    %601 = vector.broadcast %600 : vector<1x128xf32> to vector<32x128xf32>
    %602 = arith.addf %599, %601 : vector<32x128xf32>
    %603 = arith.truncf %602 : vector<32x128xf32> to vector<32x128xbf16>
    %c0_237 = arith.constant 0 : index
    %c0_238 = arith.constant 0 : index
    %c0_239 = arith.constant 0 : index
    %c0_240 = arith.constant 0 : index
    %604 = vector.load %arg16[%c0_237, %c0_238, %c0_239, %c0_240] : memref<1x2x128x512xbf16, #tpu.memory_space<vmem>>, vector<1x1x128x512xbf16>
    %605 = vector.shape_cast %604 : vector<1x1x128x512xbf16> to vector<128x512xbf16>
    %cst_241 = arith.constant dense<0.000000e+00> : vector<32x512xf32>
    %606 = tpu.matmul %603, %605, %cst_241 {dimension_numbers = #tpu.dot_dimension_numbers<[1], [0], [0], [1], [0, 0, 1, 1], [], []>} : vector<32x128xbf16>, vector<128x512xbf16>, vector<32x512xf32> -> vector<32x512xf32>
    %c0_242 = arith.constant 0 : index
    %c0_243 = arith.constant 0 : index
    %c0_244 = arith.constant 0 : index
    %607 = vector.load %arg17[%c0_242, %c0_243, %c0_244] : memref<1x2x512xf32, #tpu.memory_space<vmem>>, vector<1x1x512xf32>
    %608 = vector.shape_cast %607 : vector<1x1x512xf32> to vector<512xf32>
    %609 = vector.shape_cast %608 : vector<512xf32> to vector<1x512xf32>
    %610 = vector.broadcast %609 : vector<1x512xf32> to vector<32x512xf32>
    %611 = arith.addf %606, %610 : vector<32x512xf32>
    %612 = arith.mulf %611, %611 : vector<32x512xf32>
    %613 = arith.mulf %611, %612 : vector<32x512xf32>
    %cst_245 = arith.constant 4.471500e-02 : f32
    %614 = vector.broadcast %cst_245 : f32 to vector<32x512xf32>
    %615 = arith.mulf %614, %613 : vector<32x512xf32>
    %616 = arith.addf %611, %615 : vector<32x512xf32>
    %cst_246 = arith.constant 0.797884583 : f32
    %617 = vector.broadcast %cst_246 : f32 to vector<32x512xf32>
    %618 = arith.mulf %617, %616 : vector<32x512xf32>
    %619 = math.tanh %618 : vector<32x512xf32>
    %cst_247 = arith.constant 1.000000e+00 : f32
    %620 = vector.broadcast %cst_247 : f32 to vector<32x512xf32>
    %621 = arith.addf %620, %619 : vector<32x512xf32>
    %cst_248 = arith.constant 5.000000e-01 : f32
    %622 = vector.broadcast %cst_248 : f32 to vector<32x512xf32>
    %623 = arith.mulf %622, %621 : vector<32x512xf32>
    %624 = arith.mulf %611, %623 : vector<32x512xf32>
    %625 = arith.truncf %624 : vector<32x512xf32> to vector<32x512xbf16>
    %c0_249 = arith.constant 0 : index
    %c0_250 = arith.constant 0 : index
    %c0_251 = arith.constant 0 : index
    %c0_252 = arith.constant 0 : index
    %626 = vector.load %arg18[%c0_249, %c0_250, %c0_251, %c0_252] : memref<1x2x512x128xbf16, #tpu.memory_space<vmem>>, vector<1x1x512x128xbf16>
    %627 = vector.shape_cast %626 : vector<1x1x512x128xbf16> to vector<512x128xbf16>
    %cst_253 = arith.constant dense<0.000000e+00> : vector<32x128xf32>
    %628 = tpu.matmul %625, %627, %cst_253 {dimension_numbers = #tpu.dot_dimension_numbers<[1], [0], [0], [1], [0, 0, 1, 1], [], []>} : vector<32x512xbf16>, vector<512x128xbf16>, vector<32x128xf32> -> vector<32x128xf32>
    %c0_254 = arith.constant 0 : index
    %c0_255 = arith.constant 0 : index
    %c0_256 = arith.constant 0 : index
    %629 = vector.load %arg19[%c0_254, %c0_255, %c0_256] : memref<1x2x128xf32, #tpu.memory_space<vmem>>, vector<1x1x128xf32>
    %630 = vector.shape_cast %629 : vector<1x1x128xf32> to vector<128xf32>
    %631 = vector.shape_cast %630 : vector<128xf32> to vector<1x128xf32>
    %632 = vector.broadcast %631 : vector<1x128xf32> to vector<32x128xf32>
    %633 = arith.addf %628, %632 : vector<32x128xf32>
    %634 = arith.addf %420, %633 : vector<32x128xf32>
    %c0_257 = arith.constant 0 : index
    %c1_258 = arith.constant 1 : index
    %c0_259 = arith.constant 0 : index
    %635 = vector.load %arg14[%c0_257, %c1_258, %c0_259] : memref<1x2x128xf32, #tpu.memory_space<vmem>>, vector<1x1x128xf32>
    %636 = vector.shape_cast %635 : vector<1x1x128xf32> to vector<128xf32>
    %c0_260 = arith.constant 0 : index
    %c1_261 = arith.constant 1 : index
    %c0_262 = arith.constant 0 : index
    %637 = vector.load %arg15[%c0_260, %c1_261, %c0_262] : memref<1x2x128xf32, #tpu.memory_space<vmem>>, vector<1x1x128xf32>
    %638 = vector.shape_cast %637 : vector<1x1x128xf32> to vector<128xf32>
    %cst_263 = arith.constant dense<0.000000e+00> : vector<16xf32>
    %639 = vector.multi_reduction <add>, %574, %cst_263 [1] : vector<16x128xf32> to vector<16xf32>
    %640 = vector.shape_cast %639 : vector<16xf32> to vector<16x1xf32>
    %cst_264 = arith.constant 1.280000e+02 : f32
    %641 = vector.broadcast %cst_264 : f32 to vector<16x1xf32>
    %642 = arith.divf %640, %641 : vector<16x1xf32>
    %643 = vector.broadcast %642 : vector<16x1xf32> to vector<16x128xf32>
    %644 = arith.subf %574, %643 : vector<16x128xf32>
    %645 = arith.mulf %644, %644 : vector<16x128xf32>
    %cst_265 = arith.constant dense<0.000000e+00> : vector<16xf32>
    %646 = vector.multi_reduction <add>, %645, %cst_265 [1] : vector<16x128xf32> to vector<16xf32>
    %647 = vector.shape_cast %646 : vector<16xf32> to vector<16x1xf32>
    %cst_266 = arith.constant 1.280000e+02 : f32
    %648 = vector.broadcast %cst_266 : f32 to vector<16x1xf32>
    %649 = arith.divf %647, %648 : vector<16x1xf32>
    %650 = vector.broadcast %642 : vector<16x1xf32> to vector<16x128xf32>
    %651 = arith.subf %574, %650 : vector<16x128xf32>
    %cst_267 = arith.constant 9.99999974E-6 : f32
    %652 = vector.broadcast %cst_267 : f32 to vector<16x1xf32>
    %653 = arith.addf %649, %652 : vector<16x1xf32>
    %654 = math.rsqrt %653 : vector<16x1xf32>
    %655 = vector.broadcast %654 : vector<16x1xf32> to vector<16x128xf32>
    %656 = arith.mulf %651, %655 : vector<16x128xf32>
    %657 = vector.shape_cast %636 : vector<128xf32> to vector<1x128xf32>
    %658 = vector.broadcast %657 : vector<1x128xf32> to vector<16x128xf32>
    %659 = arith.mulf %656, %658 : vector<16x128xf32>
    %660 = vector.shape_cast %638 : vector<128xf32> to vector<1x128xf32>
    %661 = vector.broadcast %660 : vector<1x128xf32> to vector<16x128xf32>
    %662 = arith.addf %659, %661 : vector<16x128xf32>
    %663 = arith.truncf %662 : vector<16x128xf32> to vector<16x128xbf16>
    %c0_268 = arith.constant 0 : index
    %c1_269 = arith.constant 1 : index
    %c0_270 = arith.constant 0 : index
    %c0_271 = arith.constant 0 : index
    %664 = vector.load %arg16[%c0_268, %c1_269, %c0_270, %c0_271] : memref<1x2x128x512xbf16, #tpu.memory_space<vmem>>, vector<1x1x128x512xbf16>
    %665 = vector.shape_cast %664 : vector<1x1x128x512xbf16> to vector<128x512xbf16>
    %cst_272 = arith.constant dense<0.000000e+00> : vector<16x512xf32>
    %666 = tpu.matmul %663, %665, %cst_272 {dimension_numbers = #tpu.dot_dimension_numbers<[1], [0], [0], [1], [0, 0, 1, 1], [], []>} : vector<16x128xbf16>, vector<128x512xbf16>, vector<16x512xf32> -> vector<16x512xf32>
    %c0_273 = arith.constant 0 : index
    %c1_274 = arith.constant 1 : index
    %c0_275 = arith.constant 0 : index
    %667 = vector.load %arg17[%c0_273, %c1_274, %c0_275] : memref<1x2x512xf32, #tpu.memory_space<vmem>>, vector<1x1x512xf32>
    %668 = vector.shape_cast %667 : vector<1x1x512xf32> to vector<512xf32>
    %669 = vector.shape_cast %668 : vector<512xf32> to vector<1x512xf32>
    %670 = vector.broadcast %669 : vector<1x512xf32> to vector<16x512xf32>
    %671 = arith.addf %666, %670 : vector<16x512xf32>
    %672 = arith.mulf %671, %671 : vector<16x512xf32>
    %673 = arith.mulf %671, %672 : vector<16x512xf32>
    %cst_276 = arith.constant 4.471500e-02 : f32
    %674 = vector.broadcast %cst_276 : f32 to vector<16x512xf32>
    %675 = arith.mulf %674, %673 : vector<16x512xf32>
    %676 = arith.addf %671, %675 : vector<16x512xf32>
    %cst_277 = arith.constant 0.797884583 : f32
    %677 = vector.broadcast %cst_277 : f32 to vector<16x512xf32>
    %678 = arith.mulf %677, %676 : vector<16x512xf32>
    %679 = math.tanh %678 : vector<16x512xf32>
    %cst_278 = arith.constant 1.000000e+00 : f32
    %680 = vector.broadcast %cst_278 : f32 to vector<16x512xf32>
    %681 = arith.addf %680, %679 : vector<16x512xf32>
    %cst_279 = arith.constant 5.000000e-01 : f32
    %682 = vector.broadcast %cst_279 : f32 to vector<16x512xf32>
    %683 = arith.mulf %682, %681 : vector<16x512xf32>
    %684 = arith.mulf %671, %683 : vector<16x512xf32>
    %685 = arith.truncf %684 : vector<16x512xf32> to vector<16x512xbf16>
    %c0_280 = arith.constant 0 : index
    %c1_281 = arith.constant 1 : index
    %c0_282 = arith.constant 0 : index
    %c0_283 = arith.constant 0 : index
    %686 = vector.load %arg18[%c0_280, %c1_281, %c0_282, %c0_283] : memref<1x2x512x128xbf16, #tpu.memory_space<vmem>>, vector<1x1x512x128xbf16>
    %687 = vector.shape_cast %686 : vector<1x1x512x128xbf16> to vector<512x128xbf16>
    %cst_284 = arith.constant dense<0.000000e+00> : vector<16x128xf32>
    %688 = tpu.matmul %685, %687, %cst_284 {dimension_numbers = #tpu.dot_dimension_numbers<[1], [0], [0], [1], [0, 0, 1, 1], [], []>} : vector<16x512xbf16>, vector<512x128xbf16>, vector<16x128xf32> -> vector<16x128xf32>
    %c0_285 = arith.constant 0 : index
    %c1_286 = arith.constant 1 : index
    %c0_287 = arith.constant 0 : index
    %689 = vector.load %arg19[%c0_285, %c1_286, %c0_287] : memref<1x2x128xf32, #tpu.memory_space<vmem>>, vector<1x1x128xf32>
    %690 = vector.shape_cast %689 : vector<1x1x128xf32> to vector<128xf32>
    %691 = vector.shape_cast %690 : vector<128xf32> to vector<1x128xf32>
    %692 = vector.broadcast %691 : vector<1x128xf32> to vector<16x128xf32>
    %693 = arith.addf %688, %692 : vector<16x128xf32>
    %694 = arith.addf %574, %693 : vector<16x128xf32>
    %c0_288 = arith.constant 0 : index
    %c0_289 = arith.constant 0 : index
    %695 = vector.load %arg20[%c0_288, %c0_289] : memref<32x128xf32, #tpu.memory_space<vmem>>, vector<32x128xf32>
    tpu.vector_store %arg20[%c0_288, %c0_289], %634 {strides = array<i32>} : memref<32x128xf32, #tpu.memory_space<vmem>>, vector<32x128xf32>,
    %c0_290 = arith.constant 0 : index
    %c0_291 = arith.constant 0 : index
    %696 = vector.load %arg21[%c0_290, %c0_291] : memref<16x128xf32, #tpu.memory_space<vmem>>, vector<16x128xf32>
    tpu.vector_store %arg21[%c0_290, %c0_291], %694 {strides = array<i32>} : memref<16x128xf32, #tpu.memory_space<vmem>>, vector<16x128xf32>,
    return
  }
  func.func @transform_0(%arg0: i32) -> (i32, i32) {
    %c0_i32 = arith.constant 0 : i32
    %c0_i32_0 = arith.constant 0 : i32
    %c0_i32_1 = arith.constant 0 : i32
    return %c0_i32, %c0_i32_0 : i32, i32
  }
  func.func @transform_1(%arg0: i32) -> (i32, i32) {
    %c0_i32 = arith.constant 0 : i32
    %c0_i32_0 = arith.constant 0 : i32
    %c0_i32_1 = arith.constant 0 : i32
    return %c0_i32, %c0_i32_0 : i32, i32
  }
  func.func @transform_2(%arg0: i32) -> (i32, i32) {
    %c0_i32 = arith.constant 0 : i32
    %c0_i32_0 = arith.constant 0 : i32
    %c0_i32_1 = arith.constant 0 : i32
    return %c0_i32, %c0_i32_0 : i32, i32
  }
  func.func @transform_3(%arg0: i32) -> (i32, i32) {
    %c0_i32 = arith.constant 0 : i32
    %c0_i32_0 = arith.constant 0 : i32
    %c0_i32_1 = arith.constant 0 : i32
    return %c0_i32, %c0_i32_0 : i32, i32
  }
  func.func @transform_6(%arg0: i32) -> (i32, i32, i32) {
    %c0_i32 = arith.constant 0 : i32
    %c0_i32_0 = arith.constant 0 : i32
    %c0_i32_1 = arith.constant 0 : i32
    return %arg0, %c0_i32, %c0_i32_0 : i32, i32, i32
  }
  func.func @transform_7(%arg0: i32) -> (i32, i32, i32) {
    %c0_i32 = arith.constant 0 : i32
    %c0_i32_0 = arith.constant 0 : i32
    %c0_i32_1 = arith.constant 0 : i32
    return %arg0, %c0_i32, %c0_i32_0 : i32, i32, i32
  }
  func.func @transform_8(%arg0: i32) -> (i32, i32, i32, i32) {
    %c0_i32 = arith.constant 0 : i32
    %c0_i32_0 = arith.constant 0 : i32
    %c0_i32_1 = arith.constant 0 : i32
    %c0_i32_2 = arith.constant 0 : i32
    return %arg0, %c0_i32, %c0_i32_0, %c0_i32_1 : i32, i32, i32, i32
  }
  func.func @transform_9(%arg0: i32) -> (i32, i32, i32, i32) {
    %c0_i32 = arith.constant 0 : i32
    %c0_i32_0 = arith.constant 0 : i32
    %c0_i32_1 = arith.constant 0 : i32
    %c0_i32_2 = arith.constant 0 : i32
    return %arg0, %c0_i32, %c0_i32_0, %c0_i32_1 : i32, i32, i32, i32
  }
  func.func @transform_10(%arg0: i32) -> (i32, i32, i32, i32) {
    %c0_i32 = arith.constant 0 : i32
    %c0_i32_0 = arith.constant 0 : i32
    %c0_i32_1 = arith.constant 0 : i32
    %c0_i32_2 = arith.constant 0 : i32
    return %arg0, %c0_i32, %c0_i32_0, %c0_i32_1 : i32, i32, i32, i32
  }
  func.func @transform_11(%arg0: i32) -> (i32, i32, i32, i32) {
    %c0_i32 = arith.constant 0 : i32
    %c0_i32_0 = arith.constant 0 : i32
    %c0_i32_1 = arith.constant 0 : i32
    %c0_i32_2 = arith.constant 0 : i32
    return %arg0, %c0_i32, %c0_i32_0, %c0_i32_1 : i32, i32, i32, i32
  }
  func.func @transform_12(%arg0: i32) -> (i32, i32, i32) {
    %c0_i32 = arith.constant 0 : i32
    %c0_i32_0 = arith.constant 0 : i32
    %c0_i32_1 = arith.constant 0 : i32
    return %arg0, %c0_i32, %c0_i32_0 : i32, i32, i32
  }
  func.func @transform_13(%arg0: i32) -> (i32, i32, i32) {
    %c0_i32 = arith.constant 0 : i32
    %c0_i32_0 = arith.constant 0 : i32
    %c0_i32_1 = arith.constant 0 : i32
    return %arg0, %c0_i32, %c0_i32_0 : i32, i32, i32
  }
  func.func @transform_14(%arg0: i32) -> (i32, i32, i32) {
    %c0_i32 = arith.constant 0 : i32
    %c0_i32_0 = arith.constant 0 : i32
    %c0_i32_1 = arith.constant 0 : i32
    return %arg0, %c0_i32, %c0_i32_0 : i32, i32, i32
  }
  func.func @transform_15(%arg0: i32) -> (i32, i32, i32, i32) {
    %c0_i32 = arith.constant 0 : i32
    %c0_i32_0 = arith.constant 0 : i32
    %c0_i32_1 = arith.constant 0 : i32
    %c0_i32_2 = arith.constant 0 : i32
    return %arg0, %c0_i32, %c0_i32_0, %c0_i32_1 : i32, i32, i32, i32
  }
  func.func @transform_16(%arg0: i32) -> (i32, i32, i32) {
    %c0_i32 = arith.constant 0 : i32
    %c0_i32_0 = arith.constant 0 : i32
    %c0_i32_1 = arith.constant 0 : i32
    return %arg0, %c0_i32, %c0_i32_0 : i32, i32, i32
  }
  func.func @transform_17(%arg0: i32) -> (i32, i32, i32, i32) {
    %c0_i32 = arith.constant 0 : i32
    %c0_i32_0 = arith.constant 0 : i32
    %c0_i32_1 = arith.constant 0 : i32
    %c0_i32_2 = arith.constant 0 : i32
    return %arg0, %c0_i32, %c0_i32_0, %c0_i32_1 : i32, i32, i32, i32
  }
  func.func @transform_18(%arg0: i32) -> (i32, i32, i32) {
    %c0_i32 = arith.constant 0 : i32
    %c0_i32_0 = arith.constant 0 : i32
    %c0_i32_1 = arith.constant 0 : i32
    return %arg0, %c0_i32, %c0_i32_0 : i32, i32, i32
  }
  func.func @transform_19(%arg0: i32) -> (i32, i32) {
    %c0_i32 = arith.constant 0 : i32
    %c0_i32_0 = arith.constant 0 : i32
    %c0_i32_1 = arith.constant 0 : i32
    return %c0_i32, %c0_i32_0 : i32, i32
  }
  func.func @transform_20(%arg0: i32) -> (i32, i32) {
    %c0_i32 = arith.constant 0 : i32
    %c0_i32_0 = arith.constant 0 : i32
    %c0_i32_1 = arith.constant 0 : i32
    return %c0_i32, %c0_i32_0 : i32, i32
  }
}

</mosaic_0001>

<llo_original>
// kernel: sequential_sequence.1
$region0: #{sequential_sequence.1}
  #allocation0 [shape = 'u32[]', space=smem, size = 0x4, offset = 0x4, fixed_abs, tag = 'smem constant byte address 0x4 - core index']
  #allocation1 [shape = 'u32[72,128]{1,0:T(1,128)}', space=vmem, size = 0x9000, scoped, tag = 'internal scratch']
  #allocation2 [shape = 's32[2]{0}', space=sflag, size = 0x8, scoped, tag = 'scratch operand']
  #allocation21 [shape = 's32[]', space=sflag, size = 0x4, offset = 0, fixed_abs, tag = 'sflag constant byte address 0x0 - dummy sync flag']
  #allocation22 [shape = 's32[]', space=sflag, size = 0x4, offset = 0, fixed_abs, tag = 'sflag constant byte address 0x0 - dummy sync flag']
  %s0 = inlined_call_operand.vmem [shape: f32[32,1], index: 0, kind: input, shape index: {}]
  %s1 = inlined_call_operand.vmem [shape: f32[1,32], index: 1, kind: input, shape index: {}]
  %s2 = inlined_call_operand.vmem [shape: f32[16,1], index: 2, kind: input, shape index: {}]
  %s3 = inlined_call_operand.vmem [shape: f32[1,16], index: 3, kind: input, shape index: {}]
  %s4 = inlined_call_operand.vmem [shape: f32[32,128], index: 4, kind: input, shape index: {}]
  %s5 = inlined_call_operand.vmem [shape: f32[16,128], index: 5, kind: input, shape index: {}]
  %s6 = inlined_call_operand.vmem [shape: f32[2,4,128], index: 6, kind: input, shape index: {}]
  %s7 = inlined_call_operand.hbm [shape: f32[2,4,128], index: 7, kind: input, shape index: {}]
  %s8 = inlined_call_operand.hbm [shape: bf16[2,4,128,512], index: 8, kind: input, shape index: {}]
  %s9 = inlined_call_operand.hbm [shape: bf16[2,4,128,512], index: 9, kind: input, shape index: {}]
  %s10 = inlined_call_operand.hbm [shape: bf16[2,4,128,512], index: 10, kind: input, shape index: {}]
  %s11 = inlined_call_operand.hbm [shape: bf16[2,4,512,128], index: 11, kind: input, shape index: {}]
  %s12 = inlined_call_operand.hbm [shape: f32[2,4,128], index: 12, kind: input, shape index: {}]
  %s13 = inlined_call_operand.vmem [shape: f32[2,2,128], index: 13, kind: input, shape index: {}]
  %s14 = inlined_call_operand.vmem [shape: f32[2,2,128], index: 14, kind: input, shape index: {}]
  %s15 = inlined_call_operand.hbm [shape: bf16[2,2,128,512], index: 15, kind: input, shape index: {}]
  %s16 = inlined_call_operand.hbm [shape: f32[2,2,512], index: 16, kind: input, shape index: {}]
  %s17 = inlined_call_operand.hbm [shape: bf16[2,2,512,128], index: 17, kind: input, shape index: {}]
  %s18 = inlined_call_operand.vmem [shape: f32[2,2,128], index: 18, kind: input, shape index: {}]
  %s19 = inlined_call_operand.hbm [shape: f32[32,128], index: 19, kind: output, shape index: {0}]
  %s20 = inlined_call_operand.hbm [shape: f32[16,128], index: 20, kind: output, shape index: {1}]
  %21 = xla_tuple %s19, %s20
  %s22 = sld [smem:[#allocation0]]
  $region187: #{sequential_sequence.1} parent=0
    _
  %s24 = ssub.s32 1, %s22
  %s25 = scalar_select 0, %s24, %s22
  $region1: #{sequential_sequence.1} parent=0
    #allocation3 [shape = 'u8[4096]{0}', space=vmem, size = 0x1000, scoped, tag = 'input window, operand 7']
    #allocation4 [shape = 's32[2]{0}', space=sflag, size = 0x8, scoped, tag = 'scoped memory for sequential_sequence.1']
    #allocation5 [shape = 's32[2]{0}', space=sflag, size = 0x8, scoped, tag = 'scoped memory for sequential_sequence.1']
    #allocation6 [shape = 'u8[1048576]{0}', space=vmem, size = 0x100000, scoped, tag = 'input window, operand 8']
    #allocation7 [shape = 's32[2]{0}', space=sflag, size = 0x8, scoped, tag = 'scoped memory for sequential_sequence.1']
    #allocation8 [shape = 'u8[1048576]{0}', space=vmem, size = 0x100000, scoped, tag = 'input window, operand 9']
    #allocation9 [shape = 'u8[1048576]{0}', space=vmem, size = 0x100000, scoped, tag = 'input window, operand 10']
    #allocation10 [shape = 's32[2]{0}', space=sflag, size = 0x8, scoped, tag = 'scoped memory for sequential_sequence.1']
    #allocation11 [shape = 'u8[1048576]{0}', space=vmem, size = 0x100000, scoped, tag = 'input window, operand 11']
    #allocation12 [shape = 'u8[4096]{0}', space=vmem, size = 0x1000, scoped, tag = 'input window, operand 12']
    #allocation13 [shape = 's32[2]{0}', space=sflag, size = 0x8, scoped, tag = 'scoped memory for sequential_sequence.1']
    #allocation14 [shape = 'u8[524288]{0}', space=vmem, size = 0x80000, scoped, tag = 'input window, operand 15']
    #allocation15 [shape = 'u8[8192]{0}', space=vmem, size = 0x2000, scoped, tag = 'input window, operand 16']
    #allocation16 [shape = 's32[2]{0}', space=sflag, size = 0x8, scoped, tag = 'scoped memory for sequential_sequence.1']
    #allocation17 [shape = 'u8[524288]{0}', space=vmem, size = 0x80000, scoped, tag = 'input window, operand 17']
    #allocation18 [shape = 'u8[16384]{0}', space=vmem, size = 0x4000, scoped, tag = 'output window, operand 0, single buffered']
    #allocation19 [shape = 'u8[8192]{0}', space=vmem, size = 0x2000, scoped, tag = 'output window, operand 1, single buffered']
    #allocation20 [shape = 's32[1]{0}', space=sflag, size = 0x4, scoped, tag = 'scoped memory for sequential_sequence.1']
    %26 = vsyncpa [#allocation4], 0
    %s27 = scalar_lea.sflag [#allocation4], 1
    %28 = vsyncpa %s27, 0
    %29 = vsyncpa [#allocation7], 0
    %s30 = scalar_lea.sflag [#allocation7], 1
    %31 = vsyncpa %s30, 0
    %32 = vsyncpa [#allocation10], 0
    %s33 = scalar_lea.sflag [#allocation10], 1
    %34 = vsyncpa %s33, 0
    %35 = vsyncpa [#allocation13], 0
    %s36 = scalar_lea.sflag [#allocation13], 1
    %37 = vsyncpa %s36, 0
    %38 = vsyncpa [#allocation16], 0
    %s39 = scalar_lea.sflag [#allocation16], 1
    %40 = vsyncpa %s39, 0
    %41 = vsyncpa [#allocation5], 0
    %42 = vsyncpa [#allocation20], 0
    loop: start=0, step=1, limit=4
    $region2: #{sequential_sequence.1} parent=1 // loop_pre_header
      _
    $region3: #{sequential_sequence.1} parent=1 // loop_header
      %s44 = sphi 0, %s48
      %p45 = scmp.ge.s32.totalorder %s44, 4
      %s52 = sphi 0, %s52
      %s54 = sphi 0, %s52
      %s55 = sphi 0, %s54
      %s69 = sphi 0, %s55
      %s73 = sphi 0, %s73
      %s75 = sphi 0, %s73
      %s76 = sphi 0, %s75
      %s90 = sphi 0, %s76
      %s94 = sphi 0, %s94
      %s96 = sphi 0, %s94
      %s97 = sphi 0, %s96
      %s111 = sphi 0, %s97
      %s115 = sphi 0, %s115
      %s117 = sphi 0, %s115
      %s118 = sphi 0, %s117
      %s132 = sphi 0, %s118
      %s138 = sphi 0, %s140
      %s141 = sphi 0, %s138
      %s142 = sphi 0, %s141
      %s158 = sphi 0, %s142
      %s164 = sphi 0, %s166
      %s167 = sphi 0, %s164
      %s168 = sphi 0, %s167
      %s184 = sphi 0, %s168
      %s190 = sphi 0, %s192
      %s193 = sphi 0, %s190
      %s194 = sphi 0, %s193
      %s210 = sphi 0, %s194
      %s216 = sphi 0, %s218
      %s219 = sphi 0, %s216
      %s220 = sphi 0, %s219
      %s236 = sphi 0, %s220
      %s242 = sphi 0, %s244
      %s245 = sphi 0, %s242
      %s246 = sphi 0, %s245
      %s262 = sphi 0, %s246
      %s268 = sphi 0, %s270
      %s271 = sphi 0, %s268
      %s272 = sphi 0, %s271
      %s288 = sphi 0, %s272
      %s294 = sphi 0, %s296
      %s297 = sphi 0, %s294
      %s298 = sphi 0, %s297
      %s314 = sphi 0, %s298
      %s320 = sphi 0, %s322
      %s323 = sphi 0, %s320
      %s324 = sphi 0, %s323
      %s340 = sphi 0, %s324
      %s346 = sphi 0, %s348
      %s349 = sphi 0, %s346
      %s350 = sphi 0, %s349
      %s366 = sphi 0, %s350
      %s372 = sphi 0, %s374
      %s375 = sphi 0, %s372
      %s376 = sphi 0, %s375
      %s392 = sphi 0, %s376
      %s398 = sphi 0, %s400
      %s401 = sphi 0, %s398
      %s402 = sphi 0, %s401
      %s418 = sphi 0, %s402
      %s424 = sphi 0, %s426
      %s427 = sphi 0, %s424
      %s428 = sphi 0, %s427
      %s444 = sphi 0, %s428
      %s450 = sphi 0, %s452
      %s453 = sphi 0, %s450
      %s454 = sphi 0, %s453
      %s470 = sphi 0, %s454
      %s474 = sphi 0, %s474
      %s476 = sphi 0, %s474
      %s477 = sphi 0, %s476
      %s491 = sphi 0, %s477
      %s495 = sphi 0, %s495
      %s497 = sphi 0, %s495
      %s498 = sphi 0, %s497
      %s512 = sphi 0, %s498
    $region4: #{sequential_sequence.1} parent=1 // loop_header_branch
      %47 = sbr.rel (%p45) target = $region8
    $region5: #{sequential_sequence.1} parent=1 // loop_body
      %s49 = ssub.s32 %s44, 1
      %s50 = ssub.s32 %s44, 2
      %s51 = sadd.s32 %s44, 1
      %s53 = sadd.s32 %s52, 1
      %p56 = scmp.eq.s32.totalorder %s44, 1
      %p57 = scmp.ne.s32.totalorder %s52, %s54
      %p58 = scmp.eq.s32.totalorder %s44, 0
      %p59 = por %p57, %p58
      %p60 = scmp.ne.s32.totalorder %s52, %s54
      %p61 = scmp.eq.s32.totalorder %s49, 1
      %p62 = por %p60, %p61
      %p63 = scmp.ne.s32.totalorder %s54, %s55
      %p64 = scmp.eq.s32.totalorder %s49, 0
      %p65 = por %p63, %p64
      %p66 = scmp.ne.s32.totalorder %s54, %s55
      %p67 = scmp.eq.s32.totalorder %s50, 1
      %p68 = por %p66, %p67
      %p70 = scmp.ne.s32.totalorder %s55, %s69
      %p71 = scmp.eq.s32.totalorder %s50, 0
      %p72 = por %p70, %p71
      %s74 = sadd.s32 %s73, 1
      %p77 = scmp.eq.s32.totalorder %s44, 1
      %p78 = scmp.ne.s32.totalorder %s73, %s75
      %p79 = scmp.eq.s32.totalorder %s44, 0
      %p80 = por %p78, %p79
      %p81 = scmp.ne.s32.totalorder %s73, %s75
      %p82 = scmp.eq.s32.totalorder %s49, 1
      %p83 = por %p81, %p82
      %p84 = scmp.ne.s32.totalorder %s75, %s76
      %p85 = scmp.eq.s32.totalorder %s49, 0
      %p86 = por %p84, %p85
      %p87 = scmp.ne.s32.totalorder %s75, %s76
      %p88 = scmp.eq.s32.totalorder %s50, 1
      %p89 = por %p87, %p88
      %p91 = scmp.ne.s32.totalorder %s76, %s90
      %p92 = scmp.eq.s32.totalorder %s50, 0
      %p93 = por %p91, %p92
      %s95 = sadd.s32 %s94, 1
      %p98 = scmp.eq.s32.totalorder %s44, 1
      %p99 = scmp.ne.s32.totalorder %s94, %s96
      %p100 = scmp.eq.s32.totalorder %s44, 0
      %p101 = por %p99, %p100
      %p102 = scmp.ne.s32.totalorder %s94, %s96
      %p103 = scmp.eq.s32.totalorder %s49, 1
      %p104 = por %p102, %p103
      %p105 = scmp.ne.s32.totalorder %s96, %s97
      %p106 = scmp.eq.s32.totalorder %s49, 0
      %p107 = por %p105, %p106
      %p108 = scmp.ne.s32.totalorder %s96, %s97
      %p109 = scmp.eq.s32.totalorder %s50, 1
      %p110 = por %p108, %p109
      %p112 = scmp.ne.s32.totalorder %s97, %s111
      %p113 = scmp.eq.s32.totalorder %s50, 0
      %p114 = por %p112, %p113
      %s116 = sadd.s32 %s115, 1
      %p119 = scmp.eq.s32.totalorder %s44, 1
      %p120 = scmp.ne.s32.totalorder %s115, %s117
      %p121 = scmp.eq.s32.totalorder %s44, 0
      %p122 = por %p120, %p121
      %p123 = scmp.ne.s32.totalorder %s115, %s117
      %p124 = scmp.eq.s32.totalorder %s49, 1
      %p125 = por %p123, %p124
      %p126 = scmp.ne.s32.totalorder %s117, %s118
      %p127 = scmp.eq.s32.totalorder %s49, 0
      %p128 = por %p126, %p127
      %p129 = scmp.ne.s32.totalorder %s117, %s118
      %p130 = scmp.eq.s32.totalorder %s50, 1
      %p131 = por %p129, %p130
      %p133 = scmp.ne.s32.totalorder %s118, %s132
      %p134 = scmp.eq.s32.totalorder %s50, 0
      %p135 = por %p133, %p134
      %s136 = ssub.s32 %s44, %s51
      %p137 = scmp.eq.s32.totalorder %s136, 0
      %s139 = sadd.s32 %s138, 1
      %s140 = scalar_select %p137, %s138, %s139
      %p143 = pneg %p137
      %p144 = scmp.eq.s32.totalorder %s44, 1
      %p145 = por %p143, %p144
      %p146 = scmp.ne.s32.totalorder %s138, %s141
      %p147 = scmp.eq.s32.totalorder %s44, 0
      %p148 = por %p146, %p147
      %p149 = scmp.ne.s32.totalorder %s138, %s141
      %p150 = scmp.eq.s32.totalorder %s49, 1
      %p151 = por %p149, %p150
      %p152 = scmp.ne.s32.totalorder %s141, %s142
      %p153 = scmp.eq.s32.totalorder %s49, 0
      %p154 = por %p152, %p153
      %p155 = scmp.ne.s32.totalorder %s141, %s142
      %p156 = scmp.eq.s32.totalorder %s50, 1
      %p157 = por %p155, %p156
      %p159 = scmp.ne.s32.totalorder %s142, %s158
      %p160 = scmp.eq.s32.totalorder %s50, 0
      %p161 = por %p159, %p160
      %s162 = ssub.s32 %s44, %s51
      %p163 = scmp.eq.s32.totalorder %s162, 0
      %s165 = sadd.s32 %s164, 1
      %s166 = scalar_select %p163, %s164, %s165
      %p169 = pneg %p163
      %p170 = scmp.eq.s32.totalorder %s44, 1
      %p171 = por %p169, %p170
      %p172 = scmp.ne.s32.totalorder %s164, %s167
      %p173 = scmp.eq.s32.totalorder %s44, 0
      %p174 = por %p172, %p173
      %p175 = scmp.ne.s32.totalorder %s164, %s167
      %p176 = scmp.eq.s32.totalorder %s49, 1
      %p177 = por %p175, %p176
      %p178 = scmp.ne.s32.totalorder %s167, %s168
      %p179 = scmp.eq.s32.totalorder %s49, 0
      %p180 = por %p178, %p179
      %p181 = scmp.ne.s32.totalorder %s167, %s168
      %p182 = scmp.eq.s32.totalorder %s50, 1
      %p183 = por %p181, %p182
      %p185 = scmp.ne.s32.totalorder %s168, %s184
      %p186 = scmp.eq.s32.totalorder %s50, 0
      %p187 = por %p185, %p186
      %s188 = ssub.s32 %s44, %s51
      %p189 = scmp.eq.s32.totalorder %s188, 0
      %s191 = sadd.s32 %s190, 1
      %s192 = scalar_select %p189, %s190, %s191
      %p195 = pneg %p189
      %p196 = scmp.eq.s32.totalorder %s44, 1
      %p197 = por %p195, %p196
      %p198 = scmp.ne.s32.totalorder %s190, %s193
      %p199 = scmp.eq.s32.totalorder %s44, 0
      %p200 = por %p198, %p199
      %p201 = scmp.ne.s32.totalorder %s190, %s193
      %p202 = scmp.eq.s32.totalorder %s49, 1
      %p203 = por %p201, %p202
      %p204 = scmp.ne.s32.totalorder %s193, %s194
      %p205 = scmp.eq.s32.totalorder %s49, 0
      %p206 = por %p204, %p205
      %p207 = scmp.ne.s32.totalorder %s193, %s194
      %p208 = scmp.eq.s32.totalorder %s50, 1
      %p209 = por %p207, %p208
      %p211 = scmp.ne.s32.totalorder %s194, %s210
      %p212 = scmp.eq.s32.totalorder %s50, 0
      %p213 = por %p211, %p212
      %s214 = ssub.s32 %s44, %s51
      %p215 = scmp.eq.s32.totalorder %s214, 0
      %s217 = sadd.s32 %s216, 1
      %s218 = scalar_select %p215, %s216, %s217
      %p221 = pneg %p215
      %p222 = scmp.eq.s32.totalorder %s44, 1
      %p223 = por %p221, %p222
      %p224 = scmp.ne.s32.totalorder %s216, %s219
      %p225 = scmp.eq.s32.totalorder %s44, 0
      %p226 = por %p224, %p225
      %p227 = scmp.ne.s32.totalorder %s216, %s219
      %p228 = scmp.eq.s32.totalorder %s49, 1
      %p229 = por %p227, %p228
      %p230 = scmp.ne.s32.totalorder %s219, %s220
      %p231 = scmp.eq.s32.totalorder %s49, 0
      %p232 = por %p230, %p231
      %p233 = scmp.ne.s32.totalorder %s219, %s220
      %p234 = scmp.eq.s32.totalorder %s50, 1
      %p235 = por %p233, %p234
      %p237 = scmp.ne.s32.totalorder %s220, %s236
      %p238 = scmp.eq.s32.totalorder %s50, 0
      %p239 = por %p237, %p238
      %s240 = ssub.s32 %s44, %s51
      %p241 = scmp.eq.s32.totalorder %s240, 0
      %s243 = sadd.s32 %s242, 1
      %s244 = scalar_select %p241, %s242, %s243
      %p247 = pneg %p241
      %p248 = scmp.eq.s32.totalorder %s44, 1
      %p249 = por %p247, %p248
      %p250 = scmp.ne.s32.totalorder %s242, %s245
      %p251 = scmp.eq.s32.totalorder %s44, 0
      %p252 = por %p250, %p251
      %p253 = scmp.ne.s32.totalorder %s242, %s245
      %p254 = scmp.eq.s32.totalorder %s49, 1
      %p255 = por %p253, %p254
      %p256 = scmp.ne.s32.totalorder %s245, %s246
      %p257 = scmp.eq.s32.totalorder %s49, 0
      %p258 = por %p256, %p257
      %p259 = scmp.ne.s32.totalorder %s245, %s246
      %p260 = scmp.eq.s32.totalorder %s50, 1
      %p261 = por %p259, %p260
      %p263 = scmp.ne.s32.totalorder %s246, %s262
      %p264 = scmp.eq.s32.totalorder %s50, 0
      %p265 = por %p263, %p264
      %s266 = ssub.s32 %s44, %s51
      %p267 = scmp.eq.s32.totalorder %s266, 0
      %s269 = sadd.s32 %s268, 1
      %s270 = scalar_select %p267, %s268, %s269
      %p273 = pneg %p267
      %p274 = scmp.eq.s32.totalorder %s44, 1
      %p275 = por %p273, %p274
      %p276 = scmp.ne.s32.totalorder %s268, %s271
      %p277 = scmp.eq.s32.totalorder %s44, 0
      %p278 = por %p276, %p277
      %p279 = scmp.ne.s32.totalorder %s268, %s271
      %p280 = scmp.eq.s32.totalorder %s49, 1
      %p281 = por %p279, %p280
      %p282 = scmp.ne.s32.totalorder %s271, %s272
      %p283 = scmp.eq.s32.totalorder %s49, 0
      %p284 = por %p282, %p283
      %p285 = scmp.ne.s32.totalorder %s271, %s272
      %p286 = scmp.eq.s32.totalorder %s50, 1
      %p287 = por %p285, %p286
      %p289 = scmp.ne.s32.totalorder %s272, %s288
      %p290 = scmp.eq.s32.totalorder %s50, 0
      %p291 = por %p289, %p290
      %s292 = ssub.s32 %s44, %s51
      %p293 = scmp.eq.s32.totalorder %s292, 0
      %s295 = sadd.s32 %s294, 1
      %s296 = scalar_select %p293, %s294, %s295
      %p299 = pneg %p293
      %p300 = scmp.eq.s32.totalorder %s44, 1
      %p301 = por %p299, %p300
      %p302 = scmp.ne.s32.totalorder %s294, %s297
      %p303 = scmp.eq.s32.totalorder %s44, 0
      %p304 = por %p302, %p303
      %p305 = scmp.ne.s32.totalorder %s294, %s297
      %p306 = scmp.eq.s32.totalorder %s49, 1
      %p307 = por %p305, %p306
      %p308 = scmp.ne.s32.totalorder %s297, %s298
      %p309 = scmp.eq.s32.totalorder %s49, 0
      %p310 = por %p308, %p309
      %p311 = scmp.ne.s32.totalorder %s297, %s298
      %p312 = scmp.eq.s32.totalorder %s50, 1
      %p313 = por %p311, %p312
      %p315 = scmp.ne.s32.totalorder %s298, %s314
      %p316 = scmp.eq.s32.totalorder %s50, 0
      %p317 = por %p315, %p316
      %s318 = ssub.s32 %s44, %s51
      %p319 = scmp.eq.s32.totalorder %s318, 0
      %s321 = sadd.s32 %s320, 1
      %s322 = scalar_select %p319, %s320, %s321
      %p325 = pneg %p319
      %p326 = scmp.eq.s32.totalorder %s44, 1
      %p327 = por %p325, %p326
      %p328 = scmp.ne.s32.totalorder %s320, %s323
      %p329 = scmp.eq.s32.totalorder %s44, 0
      %p330 = por %p328, %p329
      %p331 = scmp.ne.s32.totalorder %s320, %s323
      %p332 = scmp.eq.s32.totalorder %s49, 1
      %p333 = por %p331, %p332
      %p334 = scmp.ne.s32.totalorder %s323, %s324
      %p335 = scmp.eq.s32.totalorder %s49, 0
      %p336 = por %p334, %p335
      %p337 = scmp.ne.s32.totalorder %s323, %s324
      %p338 = scmp.eq.s32.totalorder %s50, 1
      %p339 = por %p337, %p338
      %p341 = scmp.ne.s32.totalorder %s324, %s340
      %p342 = scmp.eq.s32.totalorder %s50, 0
      %p343 = por %p341, %p342
      %s344 = ssub.s32 %s44, %s51
      %p345 = scmp.eq.s32.totalorder %s344, 0
      %s347 = sadd.s32 %s346, 1
      %s348 = scalar_select %p345, %s346, %s347
      %p351 = pneg %p345
      %p352 = scmp.eq.s32.totalorder %s44, 1
      %p353 = por %p351, %p352
      %p354 = scmp.ne.s32.totalorder %s346, %s349
      %p355 = scmp.eq.s32.totalorder %s44, 0
      %p356 = por %p354, %p355
      %p357 = scmp.ne.s32.totalorder %s346, %s349
      %p358 = scmp.eq.s32.totalorder %s49, 1
      %p359 = por %p357, %p358
      %p360 = scmp.ne.s32.totalorder %s349, %s350
      %p361 = scmp.eq.s32.totalorder %s49, 0
      %p362 = por %p360, %p361
      %p363 = scmp.ne.s32.totalorder %s349, %s350
      %p364 = scmp.eq.s32.totalorder %s50, 1
      %p365 = por %p363, %p364
      %p367 = scmp.ne.s32.totalorder %s350, %s366
      %p368 = scmp.eq.s32.totalorder %s50, 0
      %p369 = por %p367, %p368
      %s370 = ssub.s32 %s44, %s51
      %p371 = scmp.eq.s32.totalorder %s370, 0
      %s373 = sadd.s32 %s372, 1
      %s374 = scalar_select %p371, %s372, %s373
      %p377 = pneg %p371
      %p378 = scmp.eq.s32.totalorder %s44, 1
      %p379 = por %p377, %p378
      %p380 = scmp.ne.s32.totalorder %s372, %s375
      %p381 = scmp.eq.s32.totalorder %s44, 0
      %p382 = por %p380, %p381
      %p383 = scmp.ne.s32.totalorder %s372, %s375
      %p384 = scmp.eq.s32.totalorder %s49, 1
      %p385 = por %p383, %p384
      %p386 = scmp.ne.s32.totalorder %s375, %s376
      %p387 = scmp.eq.s32.totalorder %s49, 0
      %p388 = por %p386, %p387
      %p389 = scmp.ne.s32.totalorder %s375, %s376
      %p390 = scmp.eq.s32.totalorder %s50, 1
      %p391 = por %p389, %p390
      %p393 = scmp.ne.s32.totalorder %s376, %s392
      %p394 = scmp.eq.s32.totalorder %s50, 0
      %p395 = por %p393, %p394
      %s396 = ssub.s32 %s44, %s51
      %p397 = scmp.eq.s32.totalorder %s396, 0
      %s399 = sadd.s32 %s398, 1
      %s400 = scalar_select %p397, %s398, %s399
      %p403 = pneg %p397
      %p404 = scmp.eq.s32.totalorder %s44, 1
      %p405 = por %p403, %p404
      %p406 = scmp.ne.s32.totalorder %s398, %s401
      %p407 = scmp.eq.s32.totalorder %s44, 0
      %p408 = por %p406, %p407
      %p409 = scmp.ne.s32.totalorder %s398, %s401
      %p410 = scmp.eq.s32.totalorder %s49, 1
      %p411 = por %p409, %p410
      %p412 = scmp.ne.s32.totalorder %s401, %s402
      %p413 = scmp.eq.s32.totalorder %s49, 0
      %p414 = por %p412, %p413
      %p415 = scmp.ne.s32.totalorder %s401, %s402
      %p416 = scmp.eq.s32.totalorder %s50, 1
      %p417 = por %p415, %p416
      %p419 = scmp.ne.s32.totalorder %s402, %s418
      %p420 = scmp.eq.s32.totalorder %s50, 0
      %p421 = por %p419, %p420
      %s422 = ssub.s32 %s44, %s51
      %p423 = scmp.eq.s32.totalorder %s422, 0
      %s425 = sadd.s32 %s424, 1
      %s426 = scalar_select %p423, %s424, %s425
      %p429 = pneg %p423
      %p430 = scmp.eq.s32.totalorder %s44, 1
      %p431 = por %p429, %p430
      %p432 = scmp.ne.s32.totalorder %s424, %s427
      %p433 = scmp.eq.s32.totalorder %s44, 0
      %p434 = por %p432, %p433
      %p435 = scmp.ne.s32.totalorder %s424, %s427
      %p436 = scmp.eq.s32.totalorder %s49, 1
      %p437 = por %p435, %p436
      %p438 = scmp.ne.s32.totalorder %s427, %s428
      %p439 = scmp.eq.s32.totalorder %s49, 0
      %p440 = por %p438, %p439
      %p441 = scmp.ne.s32.totalorder %s427, %s428
      %p442 = scmp.eq.s32.totalorder %s50, 1
      %p443 = por %p441, %p442
      %p445 = scmp.ne.s32.totalorder %s428, %s444
      %p446 = scmp.eq.s32.totalorder %s50, 0
      %p447 = por %p445, %p446
      %s448 = ssub.s32 %s44, %s51
      %p449 = scmp.eq.s32.totalorder %s448, 0
      %s451 = sadd.s32 %s450, 1
      %s452 = scalar_select %p449, %s450, %s451
      %p455 = pneg %p449
      %p456 = scmp.eq.s32.totalorder %s44, 1
      %p457 = por %p455, %p456
      %p458 = scmp.ne.s32.totalorder %s450, %s453
      %p459 = scmp.eq.s32.totalorder %s44, 0
      %p460 = por %p458, %p459
      %p461 = scmp.ne.s32.totalorder %s450, %s453
      %p462 = scmp.eq.s32.totalorder %s49, 1
      %p463 = por %p461, %p462
      %p464 = scmp.ne.s32.totalorder %s453, %s454
      %p465 = scmp.eq.s32.totalorder %s49, 0
      %p466 = por %p464, %p465
      %p467 = scmp.ne.s32.totalorder %s453, %s454
      %p468 = scmp.eq.s32.totalorder %s50, 1
      %p469 = por %p467, %p468
      %p471 = scmp.ne.s32.totalorder %s454, %s470
      %p472 = scmp.eq.s32.totalorder %s50, 0
      %p473 = por %p471, %p472
      %s475 = sadd.s32 %s474, 1
      %p478 = scmp.eq.s32.totalorder %s44, 1
      %p479 = scmp.ne.s32.totalorder %s474, %s476
      %p480 = scmp.eq.s32.totalorder %s44, 0
      %p481 = por %p479, %p480
      %p482 = scmp.ne.s32.totalorder %s474, %s476
      %p483 = scmp.eq.s32.totalorder %s49, 1
      %p484 = por %p482, %p483
      %p485 = scmp.ne.s32.totalorder %s476, %s477
      %p486 = scmp.eq.s32.totalorder %s49, 0
      %p487 = por %p485, %p486
      %p488 = scmp.ne.s32.totalorder %s476, %s477
      %p489 = scmp.eq.s32.totalorder %s50, 1
      %p490 = por %p488, %p489
      %p492 = scmp.ne.s32.totalorder %s477, %s491
      %p493 = scmp.eq.s32.totalorder %s50, 0
      %p494 = por %p492, %p493
      %s496 = sadd.s32 %s495, 1
      %p499 = scmp.eq.s32.totalorder %s44, 1
      %p500 = scmp.ne.s32.totalorder %s495, %s497
      %p501 = scmp.eq.s32.totalorder %s44, 0
      %p502 = por %p500, %p501
      %p503 = scmp.ne.s32.totalorder %s495, %s497
      %p504 = scmp.eq.s32.totalorder %s49, 1
      %p505 = por %p503, %p504
      %p506 = scmp.ne.s32.totalorder %s497, %s498
      %p507 = scmp.eq.s32.totalorder %s49, 0
      %p508 = por %p506, %p507
      %p509 = scmp.ne.s32.totalorder %s497, %s498
      %p510 = scmp.eq.s32.totalorder %s50, 1
      %p511 = por %p509, %p510
      %p513 = scmp.ne.s32.totalorder %s498, %s512
      %p514 = scmp.eq.s32.totalorder %s50, 0
      %p515 = por %p513, %p514
      %p516 = scmp.le.s32.totalorder 1, %s44
      %p517 = scmp.lt.s32.totalorder %s44, 3
      %p518 = pnand %p516, %p517
      %p519 = pneg %p518
      // Predicated region
      $region9: #{sequential_sequence.1} parent=5 // pred_check
        _
      $region10: #{sequential_sequence.1} parent=5 // pred_check_branch
        %521 = sbr.rel (%p518) target = $region12
      $region11: #{sequential_sequence.1} parent=5 // pred_region
        %s522 = ssub.s32 %s44, 1
        // Predicated region
        $region13: #{sequential_sequence.1} parent=11 // pred_check
          %p523 = pneg %p65
        $region14: #{sequential_sequence.1} parent=11 // pred_check_branch
          %525 = sbr.rel (%p523) target = $region16
        $region15: #{sequential_sequence.1} parent=11 // pred_region
          _
        $region16: #{sequential_sequence.1} parent=11 // pred_fallthru
          _
        // Predicated region
        $region17: #{sequential_sequence.1} parent=11 // pred_check
          %p526 = pneg %p86
        $region18: #{sequential_sequence.1} parent=11 // pred_check_branch
          %528 = sbr.rel (%p526) target = $region20
        $region19: #{sequential_sequence.1} parent=11 // pred_region
          _
        $region20: #{sequential_sequence.1} parent=11 // pred_fallthru
          _
        // Predicated region
        $region21: #{sequential_sequence.1} parent=11 // pred_check
          %p529 = pneg %p107
        $region22: #{sequential_sequence.1} parent=11 // pred_check_branch
          %531 = sbr.rel (%p529) target = $region24
        $region23: #{sequential_sequence.1} parent=11 // pred_region
          _
        $region24: #{sequential_sequence.1} parent=11 // pred_fallthru
          _
        // Predicated region
        $region25: #{sequential_sequence.1} parent=11 // pred_check
          %p532 = pneg %p128
        $region26: #{sequential_sequence.1} parent=11 // pred_check_branch
          %534 = sbr.rel (%p532) target = $region28
        $region27: #{sequential_sequence.1} parent=11 // pred_region
          _
        $region28: #{sequential_sequence.1} parent=11 // pred_fallthru
          _
      $region12: #{sequential_sequence.1} parent=5 // pred_fallthru
        _
      %p535 = scmp.lt.s32.totalorder %s44, 2
      // Predicated region
      $region29: #{sequential_sequence.1} parent=5 // pred_check
        %p536 = pneg %p535
      $region30: #{sequential_sequence.1} parent=5 // pred_check_branch
        %538 = sbr.rel (%p536) target = $region32
      $region31: #{sequential_sequence.1} parent=5 // pred_region
        // Predicated region
        $region33: #{sequential_sequence.1} parent=31 // pred_check
          %p539 = pneg %p148
        $region34: #{sequential_sequence.1} parent=31 // pred_check_branch
          %541 = sbr.rel (%p539) target = $region36
        $region35: #{sequential_sequence.1} parent=31 // pred_region
          %p542 = scmp.lt.s32.totalorder %s44, 1
          %s543 = scalar_select %p542, %s44, 1
          %s544 = smul.addr %s543, 4
          %s545 = scalar_lea.vmem %s6, %s544
        $region36: #{sequential_sequence.1} parent=31 // pred_fallthru
          _
        // Predicated region
        $region37: #{sequential_sequence.1} parent=31 // pred_check
          %p546 = pneg %p174
        $region38: #{sequential_sequence.1} parent=31 // pred_check_branch
          %548 = sbr.rel (%p546) target = $region40
        $region39: #{sequential_sequence.1} parent=31 // pred_region
          %s549 = sand.u32 %s164, 1
          %s550 = scalar_lea.sflag [#allocation4], %s549
          %s551 = sand.u32 %s164, 1
          %s552 = smul.addr %s551, 4
          %s553 = scalar_lea.vmem [#allocation3], %s552
          %555 = vsyncadd %s550, 0
          %s556 = smul.addr %s44, 4
          %s557 = scalar_lea.hbm %s7, %s556
          %s559 = sshll.u32 %s557, 4
          %s560 = int_to_ptr.hbm [resolvable:$true] %s559
          %s561 = sshll.u32 %s553, 4
          %s562 = int_to_ptr.vmem [resolvable:$true] %s561
          %564 = dma.hbm_to_vmem [thread:$0]  %s560, 64, %s562, %s550
        $region40: #{sequential_sequence.1} parent=31 // pred_fallthru
          _
        // Predicated region
        $region41: #{sequential_sequence.1} parent=31 // pred_check
          %p565 = pneg %p200
        $region42: #{sequential_sequence.1} parent=31 // pred_check_branch
          %567 = sbr.rel (%p565) target = $region44
        $region43: #{sequential_sequence.1} parent=31 // pred_region
          %s568 = sand.u32 %s44, 1
          %s569 = scalar_lea.sflag [#allocation7], %s568
          %s570 = sand.u32 %s190, 1
          %s571 = smul.addr %s570, 1024
          %s572 = scalar_lea.vmem [#allocation6], %s571
          %574 = vsyncadd %s569, 0
          %s575 = smul.addr %s44, 256
          %s576 = smul.addr %s575, 4
          %s577 = scalar_lea.hbm %s8, %s576
          %s578 = sshll.u32 %s577, 4
          %s579 = int_to_ptr.hbm [resolvable:$true] %s578
          %s580 = sshll.u32 %s572, 4
          %s581 = int_to_ptr.vmem [resolvable:$true] %s580
          %586 = dma.hbm_to_vmem [thread:$0]  %s579, 16384, %s581, %s569, 256, 256, 16
        $region44: #{sequential_sequence.1} parent=31 // pred_fallthru
          _
        // Predicated region
        $region45: #{sequential_sequence.1} parent=31 // pred_check
          %p587 = pneg %p226
        $region46: #{sequential_sequence.1} parent=31 // pred_check_branch
          %589 = sbr.rel (%p587) target = $region48
        $region47: #{sequential_sequence.1} parent=31 // pred_region
          %s590 = sand.u32 %s44, 1
          %s591 = scalar_lea.sflag [#allocation7], %s590
          %s592 = sand.u32 %s216, 1
          %s593 = smul.addr %s592, 1024
          %s594 = scalar_lea.vmem [#allocation8], %s593
          %596 = vsyncadd %s591, 0
          %s597 = smul.addr %s44, 256
          %s598 = smul.addr %s597, 4
          %s599 = scalar_lea.hbm %s9, %s598
          %s600 = sshll.u32 %s599, 4
          %s601 = int_to_ptr.hbm [resolvable:$true] %s600
          %s602 = sshll.u32 %s594, 4
          %s603 = int_to_ptr.vmem [resolvable:$true] %s602
          %608 = dma.hbm_to_vmem [thread:$0]  %s601, 16384, %s603, %s591, 256, 256, 16
        $region48: #{sequential_sequence.1} parent=31 // pred_fallthru
          _
        // Predicated region
        $region49: #{sequential_sequence.1} parent=31 // pred_check
          %p609 = pneg %p252
        $region50: #{sequential_sequence.1} parent=31 // pred_check_branch
          %611 = sbr.rel (%p609) target = $region52
        $region51: #{sequential_sequence.1} parent=31 // pred_region
          %s612 = sand.u32 %s44, 1
          %s613 = scalar_lea.sflag [#allocation10], %s612
          %s614 = sand.u32 %s242, 1
          %s615 = smul.addr %s614, 1024
          %s616 = scalar_lea.vmem [#allocation9], %s615
          %618 = vsyncadd %s613, 0
          %s619 = smul.addr %s44, 256
          %s620 = smul.addr %s619, 4
          %s621 = scalar_lea.hbm %s10, %s620
          %s622 = sshll.u32 %s621, 4
          %s623 = int_to_ptr.hbm [resolvable:$true] %s622
          %s624 = sshll.u32 %s616, 4
          %s625 = int_to_ptr.vmem [resolvable:$true] %s624
          %630 = dma.hbm_to_vmem [thread:$0]  %s623, 16384, %s625, %s613, 256, 256, 16
        $region52: #{sequential_sequence.1} parent=31 // pred_fallthru
          _
        // Predicated region
        $region53: #{sequential_sequence.1} parent=31 // pred_check
          %p631 = pneg %p278
        $region54: #{sequential_sequence.1} parent=31 // pred_check_branch
          %633 = sbr.rel (%p631) target = $region56
        $region55: #{sequential_sequence.1} parent=31 // pred_region
          %s634 = sand.u32 %s44, 1
          %s635 = scalar_lea.sflag [#allocation10], %s634
          %s636 = sand.u32 %s268, 1
          %s637 = smul.addr %s636, 1024
          %s638 = scalar_lea.vmem [#allocation11], %s637
          %640 = vsyncadd %s635, 0
          %s641 = smul.addr %s44, 256
          %s642 = smul.addr %s641, 4
          %s643 = scalar_lea.hbm %s11, %s642
          %s644 = sshll.u32 %s643, 4
          %s645 = int_to_ptr.hbm [resolvable:$true] %s644
          %s646 = sshll.u32 %s638, 4
          %s647 = int_to_ptr.vmem [resolvable:$true] %s646
          %652 = dma.hbm_to_vmem [thread:$0]  %s645, 16384, %s647, %s635, 64, 64, 4
        $region56: #{sequential_sequence.1} parent=31 // pred_fallthru
          _
        // Predicated region
        $region57: #{sequential_sequence.1} parent=31 // pred_check
          %p653 = pneg %p304
        $region58: #{sequential_sequence.1} parent=31 // pred_check_branch
          %655 = sbr.rel (%p653) target = $region60
        $region59: #{sequential_sequence.1} parent=31 // pred_region
          %s656 = sand.u32 %s44, 1
          %s657 = scalar_lea.sflag [#allocation13], %s656
          %s658 = sand.u32 %s294, 1
          %s659 = smul.addr %s658, 4
          %s660 = scalar_lea.vmem [#allocation12], %s659
          %662 = vsyncadd %s657, 0
          %s663 = smul.addr %s44, 4
          %s664 = scalar_lea.hbm %s12, %s663
          %s666 = sshll.u32 %s664, 4
          %s667 = int_to_ptr.hbm [resolvable:$true] %s666
          %s668 = sshll.u32 %s660, 4
          %s669 = int_to_ptr.vmem [resolvable:$true] %s668
          %671 = dma.hbm_to_vmem [thread:$0]  %s667, 64, %s669, %s657
        $region60: #{sequential_sequence.1} parent=31 // pred_fallthru
          _
        // Predicated region
        $region61: #{sequential_sequence.1} parent=31 // pred_check
          %p672 = pneg %p330
        $region62: #{sequential_sequence.1} parent=31 // pred_check_branch
          %674 = sbr.rel (%p672) target = $region64
        $region63: #{sequential_sequence.1} parent=31 // pred_region
          %p675 = scmp.lt.s32.totalorder %s44, 1
          %s676 = scalar_select %p675, %s44, 1
          %s677 = smul.addr %s676, 2
          %s678 = scalar_lea.vmem %s13, %s677
        $region64: #{sequential_sequence.1} parent=31 // pred_fallthru
          _
        // Predicated region
        $region65: #{sequential_sequence.1} parent=31 // pred_check
          %p679 = pneg %p356
        $region66: #{sequential_sequence.1} parent=31 // pred_check_branch
          %681 = sbr.rel (%p679) target = $region68
        $region67: #{sequential_sequence.1} parent=31 // pred_region
          %p682 = scmp.lt.s32.totalorder %s44, 1
          %s683 = scalar_select %p682, %s44, 1
          %s684 = smul.addr %s683, 2
          %s685 = scalar_lea.vmem %s14, %s684
        $region68: #{sequential_sequence.1} parent=31 // pred_fallthru
          _
        // Predicated region
        $region69: #{sequential_sequence.1} parent=31 // pred_check
          %p686 = pneg %p382
        $region70: #{sequential_sequence.1} parent=31 // pred_check_branch
          %688 = sbr.rel (%p686) target = $region72
        $region71: #{sequential_sequence.1} parent=31 // pred_region
          %s689 = sand.u32 %s44, 1
          %s690 = scalar_lea.sflag [#allocation13], %s689
          %s691 = sand.u32 %s372, 1
          %s692 = smul.addr %s691, 512
          %s693 = scalar_lea.vmem [#allocation14], %s692
          %695 = vsyncadd %s690, 0
          %s696 = smul.addr %s44, 128
          %s697 = smul.addr %s696, 4
          %s698 = scalar_lea.hbm %s15, %s697
          %s699 = sshll.u32 %s698, 4
          %s700 = int_to_ptr.hbm [resolvable:$true] %s699
          %s701 = sshll.u32 %s693, 4
          %s702 = int_to_ptr.vmem [resolvable:$true] %s701
          %707 = dma.hbm_to_vmem [thread:$0]  %s700, 8192, %s702, %s690, 256, 256, 16
        $region72: #{sequential_sequence.1} parent=31 // pred_fallthru
          _
        // Predicated region
        $region73: #{sequential_sequence.1} parent=31 // pred_check
          %p708 = pneg %p408
        $region74: #{sequential_sequence.1} parent=31 // pred_check_branch
          %710 = sbr.rel (%p708) target = $region76
        $region75: #{sequential_sequence.1} parent=31 // pred_region
          %s711 = sand.u32 %s44, 1
          %s712 = scalar_lea.sflag [#allocation16], %s711
          %s713 = sand.u32 %s398, 1
          %s714 = smul.addr %s713, 8
          %s715 = scalar_lea.vmem [#allocation15], %s714
          %717 = vsyncadd %s712, 0
          %s718 = smul.addr %s44, 4
          %s719 = smul.addr %s718, 2
          %s720 = scalar_lea.hbm %s16, %s719
          %s722 = sshll.u32 %s720, 4
          %s723 = int_to_ptr.hbm [resolvable:$true] %s722
          %s724 = sshll.u32 %s715, 4
          %s725 = int_to_ptr.vmem [resolvable:$true] %s724
          %727 = dma.hbm_to_vmem [thread:$0]  %s723, 128, %s725, %s712
        $region76: #{sequential_sequence.1} parent=31 // pred_fallthru
          _
        // Predicated region
        $region77: #{sequential_sequence.1} parent=31 // pred_check
          %p728 = pneg %p434
        $region78: #{sequential_sequence.1} parent=31 // pred_check_branch
          %730 = sbr.rel (%p728) target = $region80
        $region79: #{sequential_sequence.1} parent=31 // pred_region
          %s731 = sand.u32 %s44, 1
          %s732 = scalar_lea.sflag [#allocation16], %s731
          %s733 = sand.u32 %s424, 1
          %s734 = smul.addr %s733, 512
          %s735 = scalar_lea.vmem [#allocation17], %s734
          %737 = vsyncadd %s732, 0
          %s738 = smul.addr %s44, 128
          %s739 = smul.addr %s738, 4
          %s740 = scalar_lea.hbm %s17, %s739
          %s741 = sshll.u32 %s740, 4
          %s742 = int_to_ptr.hbm [resolvable:$true] %s741
          %s743 = sshll.u32 %s735, 4
          %s744 = int_to_ptr.vmem [resolvable:$true] %s743
          %749 = dma.hbm_to_vmem [thread:$0]  %s742, 8192, %s744, %s732, 64, 64, 4
        $region80: #{sequential_sequence.1} parent=31 // pred_fallthru
          _
        // Predicated region
        $region81: #{sequential_sequence.1} parent=31 // pred_check
          %p750 = pneg %p460
        $region82: #{sequential_sequence.1} parent=31 // pred_check_branch
          %752 = sbr.rel (%p750) target = $region84
        $region83: #{sequential_sequence.1} parent=31 // pred_region
          %p753 = scmp.lt.s32.totalorder %s44, 1
          %s754 = scalar_select %p753, %s44, 1
          %s755 = smul.addr %s754, 2
          %s756 = scalar_lea.vmem %s18, %s755
        $region84: #{sequential_sequence.1} parent=31 // pred_fallthru
          _
      $region32: #{sequential_sequence.1} parent=5 // pred_fallthru
        _
      %p757 = scmp.le.s32.totalorder 1, %s44
      %p758 = scmp.lt.s32.totalorder %s44, 3
      %p759 = pnand %p757, %p758
      %p760 = pneg %p759
      // Predicated region
      $region85: #{sequential_sequence.1} parent=5 // pred_check
        _
      $region86: #{sequential_sequence.1} parent=5 // pred_check_branch
        %762 = sbr.rel (%p759) target = $region88
      $region87: #{sequential_sequence.1} parent=5 // pred_region
        %s763 = ssub.s32 %s44, 1
        %s764 = sand.u32 %s167, 1
        %s765 = scalar_lea.sflag [#allocation4], %s764
        %s766 = sand.u32 %s167, 1
        %s767 = smul.addr %s766, 4
        %s768 = scalar_lea.vmem [#allocation3], %s767
        // Predicated region
        $region89: #{sequential_sequence.1} parent=87 // pred_check
          %p769 = pneg %p180
        $region90: #{sequential_sequence.1} parent=87 // pred_check_branch
          %771 = sbr.rel (%p769) target = $region92
        $region91: #{sequential_sequence.1} parent=87 // pred_region
          %773 = dma.done %s765, 64
        $region92: #{sequential_sequence.1} parent=87 // pred_fallthru
          _
        %s774 = sand.u32 %s49, 1
        %s775 = scalar_lea.sflag [#allocation7], %s774
        %s776 = sand.u32 %s193, 1
        %s777 = smul.addr %s776, 1024
        %s778 = scalar_lea.vmem [#allocation6], %s777
        // Predicated region
        $region93: #{sequential_sequence.1} parent=87 // pred_check
          %p779 = pneg %p206
        $region94: #{sequential_sequence.1} parent=87 // pred_check_branch
          %781 = sbr.rel (%p779) target = $region96
        $region95: #{sequential_sequence.1} parent=87 // pred_region
          %783 = dma.done %s775, 16384
        $region96: #{sequential_sequence.1} parent=87 // pred_fallthru
          _
        %s784 = sand.u32 %s49, 1
        %s785 = scalar_lea.sflag [#allocation7], %s784
        %s786 = sand.u32 %s219, 1
        %s787 = smul.addr %s786, 1024
        %s788 = scalar_lea.vmem [#allocation8], %s787
        // Predicated region
        $region97: #{sequential_sequence.1} parent=87 // pred_check
          %p789 = pneg %p232
        $region98: #{sequential_sequence.1} parent=87 // pred_check_branch
          %791 = sbr.rel (%p789) target = $region100
        $region99: #{sequential_sequence.1} parent=87 // pred_region
          %793 = dma.done %s785, 16384
        $region100: #{sequential_sequence.1} parent=87 // pred_fallthru
          _
        %s794 = sand.u32 %s49, 1
        %s795 = scalar_lea.sflag [#allocation10], %s794
        %s796 = sand.u32 %s245, 1
        %s797 = smul.addr %s796, 1024
        %s798 = scalar_lea.vmem [#allocation9], %s797
        // Predicated region
        $region101: #{sequential_sequence.1} parent=87 // pred_check
          %p799 = pneg %p258
        $region102: #{sequential_sequence.1} parent=87 // pred_check_branch
          %801 = sbr.rel (%p799) target = $region104
        $region103: #{sequential_sequence.1} parent=87 // pred_region
          %803 = dma.done %s795, 16384
        $region104: #{sequential_sequence.1} parent=87 // pred_fallthru
          _
        %s804 = sand.u32 %s49, 1
        %s805 = scalar_lea.sflag [#allocation10], %s804
        %s806 = sand.u32 %s271, 1
        %s807 = smul.addr %s806, 1024
        %s808 = scalar_lea.vmem [#allocation11], %s807
        // Predicated region
        $region105: #{sequential_sequence.1} parent=87 // pred_check
          %p809 = pneg %p284
        $region106: #{sequential_sequence.1} parent=87 // pred_check_branch
          %811 = sbr.rel (%p809) target = $region108
        $region107: #{sequential_sequence.1} parent=87 // pred_region
          %813 = dma.done %s805, 16384
        $region108: #{sequential_sequence.1} parent=87 // pred_fallthru
          _
        %s814 = sand.u32 %s49, 1
        %s815 = scalar_lea.sflag [#allocation13], %s814
        %s816 = sand.u32 %s297, 1
        %s817 = smul.addr %s816, 4
        %s818 = scalar_lea.vmem [#allocation12], %s817
        // Predicated region
        $region109: #{sequential_sequence.1} parent=87 // pred_check
          %p819 = pneg %p310
        $region110: #{sequential_sequence.1} parent=87 // pred_check_branch
          %821 = sbr.rel (%p819) target = $region112
        $region111: #{sequential_sequence.1} parent=87 // pred_region
          %823 = dma.done %s815, 64
        $region112: #{sequential_sequence.1} parent=87 // pred_fallthru
          _
        %s824 = sand.u32 %s49, 1
        %s825 = scalar_lea.sflag [#allocation13], %s824
        %s826 = sand.u32 %s375, 1
        %s827 = smul.addr %s826, 512
        %s828 = scalar_lea.vmem [#allocation14], %s827
        // Predicated region
        $region113: #{sequential_sequence.1} parent=87 // pred_check
          %p829 = pneg %p388
        $region114: #{sequential_sequence.1} parent=87 // pred_check_branch
          %831 = sbr.rel (%p829) target = $region116
        $region115: #{sequential_sequence.1} parent=87 // pred_region
          %833 = dma.done %s825, 8192
        $region116: #{sequential_sequence.1} parent=87 // pred_fallthru
          _
        %s834 = sand.u32 %s49, 1
        %s835 = scalar_lea.sflag [#allocation16], %s834
        %s836 = sand.u32 %s401, 1
        %s837 = smul.addr %s836, 8
        %s838 = scalar_lea.vmem [#allocation15], %s837
        // Predicated region
        $region117: #{sequential_sequence.1} parent=87 // pred_check
          %p839 = pneg %p414
        $region118: #{sequential_sequence.1} parent=87 // pred_check_branch
          %841 = sbr.rel (%p839) target = $region120
        $region119: #{sequential_sequence.1} parent=87 // pred_region
          %843 = dma.done %s835, 128
        $region120: #{sequential_sequence.1} parent=87 // pred_fallthru
          _
        %s844 = sand.u32 %s49, 1
        %s845 = scalar_lea.sflag [#allocation16], %s844
        %s846 = sand.u32 %s427, 1
        %s847 = smul.addr %s846, 512
        %s848 = scalar_lea.vmem [#allocation17], %s847
        // Predicated region
        $region121: #{sequential_sequence.1} parent=87 // pred_check
          %p849 = pneg %p440
        $region122: #{sequential_sequence.1} parent=87 // pred_check_branch
          %851 = sbr.rel (%p849) target = $region124
        $region123: #{sequential_sequence.1} parent=87 // pred_region
          %853 = dma.done %s845, 8192
        $region124: #{sequential_sequence.1} parent=87 // pred_fallthru
          _
        %p854 = pneg %p65
        %p855 = pneg %p62
        %p856 = pneg %p86
        %p857 = pneg %p83
        %p858 = pneg %p107
        %p859 = pneg %p104
        %p860 = pneg %p128
        %p861 = pneg %p125
        %p862 = scmp.lt.s32.totalorder %s49, 1
        %s863 = scalar_select %p862, %s49, 1
        %s864 = smul.addr %s863, 4
        %s865 = scalar_lea.vmem %s6, %s864
        %p866 = pneg %p154
        %p867 = pneg %p151
        %s868 = sand.u32 %s167, 1
        %s869 = scalar_lea.sflag [#allocation4], %s868
        %s870 = sand.u32 %s167, 1
        %s871 = smul.addr %s870, 4
        %s872 = scalar_lea.vmem [#allocation3], %s871
        %p873 = pneg %p180
        %p874 = pneg %p177
        %s875 = sand.u32 %s49, 1
        %s876 = scalar_lea.sflag [#allocation7], %s875
        %s877 = sand.u32 %s193, 1
        %s878 = smul.addr %s877, 1024
        %s879 = scalar_lea.vmem [#allocation6], %s878
        %p880 = pneg %p206
        %p881 = pneg %p203
        %s882 = sand.u32 %s49, 1
        %s883 = scalar_lea.sflag [#allocation7], %s882
        %s884 = sand.u32 %s219, 1
        %s885 = smul.addr %s884, 1024
        %s886 = scalar_lea.vmem [#allocation8], %s885
        %p887 = pneg %p232
        %p888 = pneg %p229
        %s889 = sand.u32 %s49, 1
        %s890 = scalar_lea.sflag [#allocation10], %s889
        %s891 = sand.u32 %s245, 1
        %s892 = smul.addr %s891, 1024
        %s893 = scalar_lea.vmem [#allocation9], %s892
        %p894 = pneg %p258
        %p895 = pneg %p255
        %s896 = sand.u32 %s49, 1
        %s897 = scalar_lea.sflag [#allocation10], %s896
        %s898 = sand.u32 %s271, 1
        %s899 = smul.addr %s898, 1024
        %s900 = scalar_lea.vmem [#allocation11], %s899
        %p901 = pneg %p284
        %p902 = pneg %p281
        %s903 = sand.u32 %s49, 1
        %s904 = scalar_lea.sflag [#allocation13], %s903
        %s905 = sand.u32 %s297, 1
        %s906 = smul.addr %s905, 4
        %s907 = scalar_lea.vmem [#allocation12], %s906
        %p908 = pneg %p310
        %p909 = pneg %p307
        %p910 = scmp.lt.s32.totalorder %s49, 1
        %s911 = scalar_select %p910, %s49, 1
        %s912 = smul.addr %s911, 2
        %s913 = scalar_lea.vmem %s13, %s912
        %p914 = pneg %p336
        %p915 = pneg %p333
        %p916 = scmp.lt.s32.totalorder %s49, 1
        %s917 = scalar_select %p916, %s49, 1
        %s918 = smul.addr %s917, 2
        %s919 = scalar_lea.vmem %s14, %s918
        %p920 = pneg %p362
        %p921 = pneg %p359
        %s922 = sand.u32 %s49, 1
        %s923 = scalar_lea.sflag [#allocation13], %s922
        %s924 = sand.u32 %s375, 1
        %s925 = smul.addr %s924, 512
        %s926 = scalar_lea.vmem [#allocation14], %s925
        %p927 = pneg %p388
        %p928 = pneg %p385
        %s929 = sand.u32 %s49, 1
        %s930 = scalar_lea.sflag [#allocation16], %s929
        %s931 = sand.u32 %s401, 1
        %s932 = smul.addr %s931, 8
        %s933 = scalar_lea.vmem [#allocation15], %s932
        %p934 = pneg %p414
        %p935 = pneg %p411
        %s936 = sand.u32 %s49, 1
        %s937 = scalar_lea.sflag [#allocation16], %s936
        %s938 = sand.u32 %s427, 1
        %s939 = smul.addr %s938, 512
        %s940 = scalar_lea.vmem [#allocation17], %s939
        %p941 = pneg %p440
        %p942 = pneg %p437
        %p943 = scmp.lt.s32.totalorder %s49, 1
        %s944 = scalar_select %p943, %s49, 1
        %s945 = smul.addr %s944, 2
        %s946 = scalar_lea.vmem %s18, %s945
        %p947 = pneg %p466
        %p948 = pneg %p463
        %p949 = pneg %p487
        %p950 = pneg %p484
        %p951 = pneg %p508
        %p952 = pneg %p505
        %p953 = scmp.lt.s32.totalorder %s49, 1
        %s954 = scalar_select %p953, %s49, 1
        %s955 = smul.addr %s954, 4
        %s956 = scalar_lea.vmem %s6, %s955
        %p957 = scmp.lt.s32.totalorder %s49, 1
        %s958 = scalar_select %p957, %s49, 1
        %s959 = smul.addr %s958, 2
        %s960 = scalar_lea.vmem %s13, %s959
        %p961 = scmp.lt.s32.totalorder %s49, 1
        %s962 = scalar_select %p961, %s49, 1
        %s963 = smul.addr %s962, 2
        %s964 = scalar_lea.vmem %s14, %s963
        %p965 = scmp.lt.s32.totalorder %s49, 1
        %s966 = scalar_select %p965, %s49, 1
        %s967 = smul.addr %s966, 2
        %s968 = scalar_lea.vmem %s18, %s967
        %p970 = scmp.eq.s32.totalorder %s49, 0
        // Predicated region
        $region125: #{sequential_sequence.1} parent=87 // pred_check
          %p971 = pneg %p970
        $region126: #{sequential_sequence.1} parent=87 // pred_check_branch
          %973 = sbr.rel (%p971) target = $region128
        $region127: #{sequential_sequence.1} parent=87 // pred_region
          // Predicated region
          $region129: #{sequential_sequence.1} parent=127 // pred_check
            _
          $region130: #{sequential_sequence.1} parent=127 // pred_check_branch
            %975 = sbr.rel (0) target = $region132
          $region131: #{sequential_sequence.1} parent=127 // pred_region
            loop: start=0, step=1, limit=1
            $region133: #{sequential_sequence.1} parent=131 // loop_pre_header
              _
            $region134: #{sequential_sequence.1} parent=131 // loop_header
              %s977 = sphi 0, %s981
              %p978 = scmp.ge.s32.totalorder %s977, 1
              %s982 = sphi %s4, %s4
              %s983 = sphi [#allocation18], [#allocation18]
            $region135: #{sequential_sequence.1} parent=131 // loop_header_branch
              %980 = sbr.rel (%p978) target = $region139
            $region136: #{sequential_sequence.1} parent=131 // loop_body
              %v984 = vld [vmem:[%s982] sm:$0xff]
              %985 = vst [vmem:[%s983] sm:$0xff] %v984
              %v986 = vld [vmem:[%s982 + $0x8] sm:$0xff]
              %987 = vst [vmem:[%s983 + $0x8] sm:$0xff] %v986
              %v988 = vld [vmem:[%s982 + $0x10] sm:$0xff]
              %989 = vst [vmem:[%s983 + $0x10] sm:$0xff] %v988
              %v990 = vld [vmem:[%s982 + $0x18] sm:$0xff]
              %991 = vst [vmem:[%s983 + $0x18] sm:$0xff] %v990
            $region137: #{sequential_sequence.1} parent=131 // loop_footer
              %s981 = sadd.s32 1, %s977
            $region138: #{sequential_sequence.1} parent=131 // loop_footer_branch
              %976 = sbr.rel target = $region134
            $region139: #{sequential_sequence.1} parent=131 // loop_exit
              _
          $region132: #{sequential_sequence.1} parent=127 // pred_fallthru
            _
          // Predicated region
          $region140: #{sequential_sequence.1} parent=127 // pred_check
            _
          $region141: #{sequential_sequence.1} parent=127 // pred_check_branch
            %993 = sbr.rel target = $region143
          $region142: #{sequential_sequence.1} parent=127 // pred_region
            _
          $region143: #{sequential_sequence.1} parent=127 // pred_fallthru
            _
          // Predicated region
          $region144: #{sequential_sequence.1} parent=127 // pred_check
            _
          $region145: #{sequential_sequence.1} parent=127 // pred_check_branch
            %996 = sbr.rel (0) target = $region147
          $region146: #{sequential_sequence.1} parent=127 // pred_region
            %997 = vsyncadd [#allocation2], 512
          $region147: #{sequential_sequence.1} parent=127 // pred_fallthru
            _
          %s998 = scalar_lea.sflag [#allocation2], 1
          // Predicated region
          $region148: #{sequential_sequence.1} parent=127 // pred_check
            _
          $region149: #{sequential_sequence.1} parent=127 // pred_check_branch
            %1000 = sbr.rel (0) target = $region151
          $region150: #{sequential_sequence.1} parent=127 // pred_region
            loop: start=0, step=1, limit=1
            $region152: #{sequential_sequence.1} parent=150 // loop_pre_header
              _
            $region153: #{sequential_sequence.1} parent=150 // loop_header
              %s1002 = sphi 0, %s1006
              %p1003 = scmp.ge.s32.totalorder %s1002, 1
              %s1007 = sphi %s5, %s5
              %s1008 = sphi [#allocation19], [#allocation19]
            $region154: #{sequential_sequence.1} parent=150 // loop_header_branch
              %1005 = sbr.rel (%p1003) target = $region158
            $region155: #{sequential_sequence.1} parent=150 // loop_body
              %v1009 = vld [vmem:[%s1007] sm:$0xff]
              %1010 = vst [vmem:[%s1008] sm:$0xff] %v1009
              %v1011 = vld [vmem:[%s1007 + $0x8] sm:$0xff]
              %1012 = vst [vmem:[%s1008 + $0x8] sm:$0xff] %v1011
            $region156: #{sequential_sequence.1} parent=150 // loop_footer
              %s1006 = sadd.s32 1, %s1002
            $region157: #{sequential_sequence.1} parent=150 // loop_footer_branch
              %1001 = sbr.rel target = $region153
            $region158: #{sequential_sequence.1} parent=150 // loop_exit
              _
          $region151: #{sequential_sequence.1} parent=127 // pred_fallthru
            _
          // Predicated region
          $region159: #{sequential_sequence.1} parent=127 // pred_check
            _
          $region160: #{sequential_sequence.1} parent=127 // pred_check_branch
            %1014 = sbr.rel target = $region162
          $region161: #{sequential_sequence.1} parent=127 // pred_region
            _
          $region162: #{sequential_sequence.1} parent=127 // pred_fallthru
            _
          // Predicated region
          $region163: #{sequential_sequence.1} parent=127 // pred_check
            _
          $region164: #{sequential_sequence.1} parent=127 // pred_check_branch
            %1017 = sbr.rel (0) target = $region166
          $region165: #{sequential_sequence.1} parent=127 // pred_region
            %1018 = vsyncadd %s998, 256
          $region166: #{sequential_sequence.1} parent=127 // pred_fallthru
            _
          %s1019 = smul.u32 32, 1
          %s1020 = sshll.u32 %s1019, 4
          %1021 = dma.done [#allocation2], %s1020
          %s1022 = smul.u32 16, 1
          %s1023 = sshll.u32 %s1022, 4
          %1024 = dma.done %s998, %s1023
        $region128: #{sequential_sequence.1} parent=87 // pred_fallthru
          _
        %v1025 = vld [vmem:[%s0] sm:$0xff]
        %v1026 = vld [vmem:[%s0 + $0x8] sm:$0xff]
        %v1027 = vld [vmem:[%s0 + $0x10] sm:$0xff]
        %v1028 = vld [vmem:[%s0 + $0x18] sm:$0xff]
        %v1029 = vld [vmem:[%s1] sm:$0x1]
        %v1030 = vld [vmem:[%s2] sm:$0xff]
        %v1031 = vld [vmem:[%s2 + $0x8] sm:$0xff]
        %v1032 = vld [vmem:[%s3] sm:$0x1]
        %v1033 = vld [vmem:[#allocation18] sm:$0xff]
        %v1034 = vld [vmem:[#allocation18 + $0x8] sm:$0xff]
        %v1035 = vld [vmem:[#allocation18 + $0x10] sm:$0xff]
        %v1036 = vld [vmem:[#allocation18 + $0x18] sm:$0xff]
        %v1037 = vld [vmem:[#allocation19] sm:$0xff]
        %v1038 = vld [vmem:[#allocation19 + $0x8] sm:$0xff]
        %v1039 = vld [vmem:[%s956] sm:$0x1]
        %v1040 = vld [vmem:[%s768] sm:$0x1]
        %1041 = vadd.xlane.f32.xlu0 %v1033
        %v1042 = vpop.xlane.xlu0 %1041
        %1043 = vadd.xlane.f32.xlu0 %v1034
        %v1044 = vpop.xlane.xlu0 %1043
        %1045 = vadd.xlane.f32.xlu0 %v1035
        %v1046 = vpop.xlane.xlu0 %1045
        %1047 = vadd.xlane.f32.xlu0 %v1036
        %v1048 = vpop.xlane.xlu0 %1047
        %v1049 = vrcp.pop 128.0
        %v1050 = vmul.f32 128.0, %v1049
        %v1051 = vsub.f32 1.0, %v1050
        %v1052 = vmul.f32 %v1049, %v1051
        %v1053 = vadd.f32 %v1049, %v1052
        %vm1054 = vweird.f32 %v1049
        %v1055 = vsel %vm1054, %v1049, %v1053
        %v1056 = vmul.f32 %v1042, %v1055
        %v1057 = vmul.f32 %v1044, %v1055
        %v1058 = vmul.f32 %v1046, %v1055
        %v1059 = vmul.f32 %v1048, %v1055
        %v1060 = vsub.f32 %v1033, %v1056
        %v1061 = vsub.f32 %v1034, %v1057
        %v1062 = vsub.f32 %v1035, %v1058
        %v1063 = vsub.f32 %v1036, %v1059
        %v1064 = vmul.f32 %v1060, %v1060
        %v1065 = vmul.f32 %v1061, %v1061
        %v1066 = vmul.f32 %v1062, %v1062
        %v1067 = vmul.f32 %v1063, %v1063
        %1068 = vadd.xlane.f32.xlu0 %v1064
        %v1069 = vpop.xlane.xlu0 %1068
        %1070 = vadd.xlane.f32.xlu0 %v1065
        %v1071 = vpop.xlane.xlu0 %1070
        %1072 = vadd.xlane.f32.xlu0 %v1066
        %v1073 = vpop.xlane.xlu0 %1072
        %1074 = vadd.xlane.f32.xlu0 %v1067
        %v1075 = vpop.xlane.xlu0 %1074
        %v1076 = vmul.f32 %v1069, %v1055
        %v1077 = vmul.f32 %v1071, %v1055
        %v1078 = vmul.f32 %v1073, %v1055
        %v1079 = vmul.f32 %v1075, %v1055
        %v1080 = vadd.f32 %v1076, 1e-05
        %v1081 = vadd.f32 %v1077, 1e-05
        %v1082 = vadd.f32 %v1078, 1e-05
        %v1083 = vadd.f32 %v1079, 1e-05
        %v1084 = vrsqrt.pop %v1080
        %v1085 = vmul.f32 %v1084, %v1080
        %v1086 = vmul.f32 %v1085, %v1084
        %v1087 = vmul.f32 0.5, %v1086
        %v1088 = vsub.f32 1.5, %v1087
        %v1089 = vmul.f32 %v1084, %v1088
        %vm1090 = vweird.f32 %v1080
        %vm1091 = vweird.f32 %v1084
        %vm1092 = vmor %vm1090, %vm1091
        %v1093 = vsel %vm1092, %v1084, %v1089
        %v1094 = vrsqrt.pop %v1081
        %v1095 = vmul.f32 %v1094, %v1081
        %v1096 = vmul.f32 %v1095, %v1094
        %v1097 = vmul.f32 0.5, %v1096
        %v1098 = vsub.f32 1.5, %v1097
        %v1099 = vmul.f32 %v1094, %v1098
        %vm1100 = vweird.f32 %v1081
        %vm1101 = vweird.f32 %v1094
        %vm1102 = vmor %vm1100, %vm1101
        %v1103 = vsel %vm1102, %v1094, %v1099
        %v1104 = vrsqrt.pop %v1082
        %v1105 = vmul.f32 %v1104, %v1082
        %v1106 = vmul.f32 %v1105, %v1104
        %v1107 = vmul.f32 0.5, %v1106
        %v1108 = vsub.f32 1.5, %v1107
        %v1109 = vmul.f32 %v1104, %v1108
        %vm1110 = vweird.f32 %v1082
        %vm1111 = vweird.f32 %v1104
        %vm1112 = vmor %vm1110, %vm1111
        %v1113 = vsel %vm1112, %v1104, %v1109
        %v1114 = vrsqrt.pop %v1083
        %v1115 = vmul.f32 %v1114, %v1083
        %v1116 = vmul.f32 %v1115, %v1114
        %v1117 = vmul.f32 0.5, %v1116
        %v1118 = vsub.f32 1.5, %v1117
        %v1119 = vmul.f32 %v1114, %v1118
        %vm1120 = vweird.f32 %v1083
        %vm1121 = vweird.f32 %v1114
        %vm1122 = vmor %vm1120, %vm1121
        %v1123 = vsel %vm1122, %v1114, %v1119
        %v1124 = vmul.f32 %v1060, %v1093
        %v1125 = vmul.f32 %v1061, %v1103
        %v1126 = vmul.f32 %v1062, %v1113
        %v1127 = vmul.f32 %v1063, %v1123
        %v1128 = vperm.slane %v1039, 0
        %v1129 = vmul.f32 %v1124, %v1128
        %v1130 = vmul.f32 %v1125, %v1128
        %v1131 = vmul.f32 %v1126, %v1128
        %v1132 = vmul.f32 %v1127, %v1128
        %v1133 = vperm.slane %v1040, 0
        %v1134 = vadd.f32 %v1129, %v1133
        %v1135 = vadd.f32 %v1130, %v1133
        %v1136 = vadd.f32 %v1131, %v1133
        %v1137 = vadd.f32 %v1132, %v1133
        %v1138 = vpack.c.bf16 %v1135, %v1134
        %v1139 = vpack.c.bf16 %v1137, %v1136
        %1141 = vset.pattern.permute.xlu0 0
        %1142 = vperm.xlu0 %1141, %v1025
        %v1143 = vpop.permute.xlu0 %1142
        %1146 = vset.pattern.permute.xlu0 0
        %1147 = vperm.xlu0 %1146, %v1026
        %v1148 = vpop.permute.xlu0 %1147
        %1151 = vset.pattern.permute.xlu0 0
        %1152 = vperm.xlu0 %1151, %v1027
        %v1153 = vpop.permute.xlu0 %1152
        %1156 = vset.pattern.permute.xlu0 0
        %1157 = vperm.xlu0 %1156, %v1028
        %v1158 = vpop.permute.xlu0 %1157
        %v1161 = vperm.slane %v1029, 0
        %vm1163 = vcmp.eq.f32.partialorder %v1143, %v1161
        %vm1164 = vcmp.eq.f32.partialorder %v1148, %v1161
        %vm1165 = vcmp.eq.f32.partialorder %v1153, %v1161
        %vm1166 = vcmp.eq.f32.partialorder %v1158, %v1161
        %v1167 = vsel %vm1163, 0.0, -1e+09
        %v1168 = vsel %vm1164, 0.0, -1e+09
        %v1169 = vsel %vm1165, 0.0, -1e+09
        %v1170 = vsel %vm1166, 0.0, -1e+09
        %v1171 = vld [vmem:[%s778] sm:$0xff]
        %v1172 = vld [vmem:[%s778 + $0x8] sm:$0xff]
        %v1173 = vld [vmem:[%s778 + $0x10] sm:$0xff]
        %v1174 = vld [vmem:[%s778 + $0x18] sm:$0xff]
        %v1175 = vld [vmem:[%s778 + $0x20] sm:$0xff]
        %v1176 = vld [vmem:[%s778 + $0x28] sm:$0xff]
        %v1177 = vld [vmem:[%s778 + $0x30] sm:$0xff]
        %v1178 = vld [vmem:[%s778 + $0x38] sm:$0xff]
        %v1179 = vld [vmem:[%s778 + $0x40] sm:$0xff]
        %v1180 = vld [vmem:[%s778 + $0x48] sm:$0xff]
        %v1181 = vld [vmem:[%s778 + $0x50] sm:$0xff]
        %v1182 = vld [vmem:[%s778 + $0x58] sm:$0xff]
        %v1183 = vld [vmem:[%s778 + $0x60] sm:$0xff]
        %v1184 = vld [vmem:[%s778 + $0x68] sm:$0xff]
        %v1185 = vld [vmem:[%s778 + $0x70] sm:$0xff]
        %v1186 = vld [vmem:[%s778 + $0x78] sm:$0xff]
        %v1187 = vld [vmem:[%s778 + $0x80] sm:$0xff]
        %v1188 = vld [vmem:[%s778 + $0x88] sm:$0xff]
        %v1189 = vld [vmem:[%s778 + $0x90] sm:$0xff]
        %v1190 = vld [vmem:[%s778 + $0x98] sm:$0xff]
        %v1191 = vld [vmem:[%s778 + $0xa0] sm:$0xff]
        %v1192 = vld [vmem:[%s778 + $0xa8] sm:$0xff]
        %v1193 = vld [vmem:[%s778 + $0xb0] sm:$0xff]
        %v1194 = vld [vmem:[%s778 + $0xb8] sm:$0xff]
        %v1195 = vld [vmem:[%s778 + $0xc0] sm:$0xff]
        %v1196 = vld [vmem:[%s778 + $0xc8] sm:$0xff]
        %v1197 = vld [vmem:[%s778 + $0xd0] sm:$0xff]
        %v1198 = vld [vmem:[%s778 + $0xd8] sm:$0xff]
        %v1199 = vld [vmem:[%s778 + $0xe0] sm:$0xff]
        %v1200 = vld [vmem:[%s778 + $0xe8] sm:$0xff]
        %v1201 = vld [vmem:[%s778 + $0xf0] sm:$0xff]
        %v1202 = vld [vmem:[%s778 + $0xf8] sm:$0xff]
        %v1235 = vunpack.c.l.b16 %v1171
        %v1236 = vunpack.c.h.b16 %v1171
        %v1237 = vunpack.c.l.b16 %v1172
        %v1238 = vunpack.c.h.b16 %v1172
        %v1239 = vunpack.c.l.b16 %v1173
        %v1240 = vunpack.c.h.b16 %v1173
        %v1241 = vunpack.c.l.b16 %v1174
        %v1242 = vunpack.c.h.b16 %v1174
        %v1243 = vunpack.c.l.b16 %v1175
        %v1244 = vunpack.c.h.b16 %v1175
        %v1245 = vunpack.c.l.b16 %v1176
        %v1246 = vunpack.c.h.b16 %v1176
        %v1247 = vunpack.c.l.b16 %v1177
        %v1248 = vunpack.c.h.b16 %v1177
        %v1249 = vunpack.c.l.b16 %v1178
        %v1250 = vunpack.c.h.b16 %v1178
        %v1251 = vunpack.c.l.b16 %v1179
        %v1252 = vunpack.c.h.b16 %v1179
        %v1253 = vunpack.c.l.b16 %v1180
        %v1254 = vunpack.c.h.b16 %v1180
        %v1255 = vunpack.c.l.b16 %v1181
        %v1256 = vunpack.c.h.b16 %v1181
        %v1257 = vunpack.c.l.b16 %v1182
        %v1258 = vunpack.c.h.b16 %v1182
        %v1259 = vunpack.c.l.b16 %v1183
        %v1260 = vunpack.c.h.b16 %v1183
        %v1261 = vunpack.c.l.b16 %v1184
        %v1262 = vunpack.c.h.b16 %v1184
        %v1263 = vunpack.c.l.b16 %v1185
        %v1264 = vunpack.c.h.b16 %v1185
        %v1265 = vunpack.c.l.b16 %v1186
        %v1266 = vunpack.c.h.b16 %v1186
        %v1267 = vunpack.c.l.b16 %v1187
        %v1268 = vunpack.c.h.b16 %v1187
        %v1269 = vunpack.c.l.b16 %v1188
        %v1270 = vunpack.c.h.b16 %v1188
        %v1271 = vunpack.c.l.b16 %v1189
        %v1272 = vunpack.c.h.b16 %v1189
        %v1273 = vunpack.c.l.b16 %v1190
        %v1274 = vunpack.c.h.b16 %v1190
        %v1275 = vunpack.c.l.b16 %v1191
        %v1276 = vunpack.c.h.b16 %v1191
        %v1277 = vunpack.c.l.b16 %v1192
        %v1278 = vunpack.c.h.b16 %v1192
        %v1279 = vunpack.c.l.b16 %v1193
        %v1280 = vunpack.c.h.b16 %v1193
        %v1281 = vunpack.c.l.b16 %v1194
        %v1282 = vunpack.c.h.b16 %v1194
        %v1283 = vunpack.c.l.b16 %v1195
        %v1284 = vunpack.c.h.b16 %v1195
        %v1285 = vunpack.c.l.b16 %v1196
        %v1286 = vunpack.c.h.b16 %v1196
        %v1287 = vunpack.c.l.b16 %v1197
        %v1288 = vunpack.c.h.b16 %v1197
        %v1289 = vunpack.c.l.b16 %v1198
        %v1290 = vunpack.c.h.b16 %v1198
        %v1291 = vunpack.c.l.b16 %v1199
        %v1292 = vunpack.c.h.b16 %v1199
        %v1293 = vunpack.c.l.b16 %v1200
        %v1294 = vunpack.c.h.b16 %v1200
        %v1295 = vunpack.c.l.b16 %v1201
        %v1296 = vunpack.c.h.b16 %v1201
        %v1297 = vunpack.c.l.b16 %v1202
        %v1298 = vunpack.c.h.b16 %v1202
        %v1299 = vpack.c.b16 %v1239, %v1235
        %v1300 = vpack.c.b16 %v1240, %v1236
        %v1301 = vpack.c.b16 %v1241, %v1237
        %v1302 = vpack.c.b16 %v1242, %v1238
        %v1303 = vpack.c.b16 %v1247, %v1243
        %v1304 = vpack.c.b16 %v1248, %v1244
        %v1305 = vpack.c.b16 %v1249, %v1245
        %v1306 = vpack.c.b16 %v1250, %v1246
        %v1307 = vpack.c.b16 %v1255, %v1251
        %v1308 = vpack.c.b16 %v1256, %v1252
        %v1309 = vpack.c.b16 %v1257, %v1253
        %v1310 = vpack.c.b16 %v1258, %v1254
        %v1311 = vpack.c.b16 %v1263, %v1259
        %v1312 = vpack.c.b16 %v1264, %v1260
        %v1313 = vpack.c.b16 %v1265, %v1261
        %v1314 = vpack.c.b16 %v1266, %v1262
        %v1315 = vpack.c.b16 %v1271, %v1267
        %v1316 = vpack.c.b16 %v1272, %v1268
        %v1317 = vpack.c.b16 %v1273, %v1269
        %v1318 = vpack.c.b16 %v1274, %v1270
        %v1319 = vpack.c.b16 %v1279, %v1275
        %v1320 = vpack.c.b16 %v1280, %v1276
        %v1321 = vpack.c.b16 %v1281, %v1277
        %v1322 = vpack.c.b16 %v1282, %v1278
        %v1323 = vpack.c.b16 %v1287, %v1283
        %v1324 = vpack.c.b16 %v1288, %v1284
        %v1325 = vpack.c.b16 %v1289, %v1285
        %v1326 = vpack.c.b16 %v1290, %v1286
        %v1327 = vpack.c.b16 %v1295, %v1291
        %v1328 = vpack.c.b16 %v1296, %v1292
        %v1329 = vpack.c.b16 %v1297, %v1293
        %v1330 = vpack.c.b16 %v1298, %v1294
        %1363 = vmatpush.bf16.msra.mxu0 %v1327
        %1364 = vmatpush.bf16.msra.mxu0 %v1323
        %1365 = vmatpush.bf16.msra.mxu0 %v1319
        %1366 = vmatpush.bf16.msra.mxu0 %v1315
        %1367 = vmatpush.bf16.msra.mxu0 %v1311
        %1368 = vmatpush.bf16.msra.mxu0 %v1307
        %1369 = vmatpush.bf16.msra.mxu0 %v1303
        %1370 = vmatpush.bf16.msra.mxu0 %v1299
        %1371 = vmatmul.bf16.gmra.mxu0 %v1138
        %v1372 = vpop.f32.mrf.mxu0
        %v1373 = vadd.f32 0.0, %v1372
        %v1374 = vpop.f32.mrf.mxu0
        %v1375 = vadd.f32 0.0, %v1374
        %1376 = vmatmul.bf16.gmra.mxu0 %v1139
        %v1377 = vpop.f32.mrf.mxu0
        %v1378 = vadd.f32 0.0, %v1377
        %v1379 = vpop.f32.mrf.mxu0
        %v1380 = vadd.f32 0.0, %v1379
        %1381 = vdwg.mxu0
        %1382 = vmatpush.bf16.msra.mxu0 %v1328
        %1383 = vmatpush.bf16.msra.mxu0 %v1324
        %1384 = vmatpush.bf16.msra.mxu0 %v1320
        %1385 = vmatpush.bf16.msra.mxu0 %v1316
        %1386 = vmatpush.bf16.msra.mxu0 %v1312
        %1387 = vmatpush.bf16.msra.mxu0 %v1308
        %1388 = vmatpush.bf16.msra.mxu0 %v1304
        %1389 = vmatpush.bf16.msra.mxu0 %v1300
        %1390 = vmatmul.bf16.gmra.mxu0 %v1138
        %v1391 = vpop.f32.mrf.mxu0
        %v1392 = vadd.f32 0.0, %v1391
        %v1393 = vpop.f32.mrf.mxu0
        %v1394 = vadd.f32 0.0, %v1393
        %1395 = vmatmul.bf16.gmra.mxu0 %v1139
        %v1396 = vpop.f32.mrf.mxu0
        %v1397 = vadd.f32 0.0, %v1396
        %v1398 = vpop.f32.mrf.mxu0
        %v1399 = vadd.f32 0.0, %v1398
        %1400 = vdwg.mxu0
        %1401 = vmatpush.bf16.msra.mxu0 %v1329
        %1402 = vmatpush.bf16.msra.mxu0 %v1325
        %1403 = vmatpush.bf16.msra.mxu0 %v1321
        %1404 = vmatpush.bf16.msra.mxu0 %v1317
        %1405 = vmatpush.bf16.msra.mxu0 %v1313
        %1406 = vmatpush.bf16.msra.mxu0 %v1309
        %1407 = vmatpush.bf16.msra.mxu0 %v1305
        %1408 = vmatpush.bf16.msra.mxu0 %v1301
        %1409 = vmatmul.bf16.gmra.mxu0 %v1138
        %v1410 = vpop.f32.mrf.mxu0
        %v1411 = vadd.f32 0.0, %v1410
        %v1412 = vpop.f32.mrf.mxu0
        %v1413 = vadd.f32 0.0, %v1412
        %1414 = vmatmul.bf16.gmra.mxu0 %v1139
        %v1415 = vpop.f32.mrf.mxu0
        %v1416 = vadd.f32 0.0, %v1415
        %v1417 = vpop.f32.mrf.mxu0
        %v1418 = vadd.f32 0.0, %v1417
        %1419 = vdwg.mxu0
        %1420 = vmatpush.bf16.msra.mxu0 %v1330
        %1421 = vmatpush.bf16.msra.mxu0 %v1326
        %1422 = vmatpush.bf16.msra.mxu0 %v1322
        %1423 = vmatpush.bf16.msra.mxu0 %v1318
        %1424 = vmatpush.bf16.msra.mxu0 %v1314
        %1425 = vmatpush.bf16.msra.mxu0 %v1310
        %1426 = vmatpush.bf16.msra.mxu0 %v1306
        %1427 = vmatpush.bf16.msra.mxu0 %v1302
        %1428 = vmatmul.bf16.gmra.mxu0 %v1138
        %v1429 = vpop.f32.mrf.mxu0
        %v1430 = vadd.f32 0.0, %v1429
        %v1431 = vpop.f32.mrf.mxu0
        %v1432 = vadd.f32 0.0, %v1431
        %1433 = vmatmul.bf16.gmra.mxu0 %v1139
        %v1434 = vpop.f32.mrf.mxu0
        %v1435 = vadd.f32 0.0, %v1434
        %v1436 = vpop.f32.mrf.mxu0
        %v1437 = vadd.f32 0.0, %v1436
        %1438 = vdwg.mxu0
        %v1439 = vpack.c.bf16 %v1392, %v1373
        %v1440 = vpack.c.bf16 %v1430, %v1411
        %v1441 = vpack.c.bf16 %v1394, %v1375
        %v1442 = vpack.c.bf16 %v1432, %v1413
        %v1443 = vpack.c.bf16 %v1397, %v1378
        %v1444 = vpack.c.bf16 %v1435, %v1416
        %v1445 = vpack.c.bf16 %v1399, %v1380
        %v1446 = vpack.c.bf16 %v1437, %v1418
        %v1447 = vld [vmem:[%s788] sm:$0xff]
        %v1448 = vld [vmem:[%s788 + $0x8] sm:$0xff]
        %v1449 = vld [vmem:[%s788 + $0x10] sm:$0xff]
        %v1450 = vld [vmem:[%s788 + $0x18] sm:$0xff]
        %v1451 = vld [vmem:[%s788 + $0x20] sm:$0xff]
        %v1452 = vld [vmem:[%s788 + $0x28] sm:$0xff]
        %v1453 = vld [vmem:[%s788 + $0x30] sm:$0xff]
        %v1454 = vld [vmem:[%s788 + $0x38] sm:$0xff]
        %v1455 = vld [vmem:[%s788 + $0x40] sm:$0xff]
        %v1456 = vld [vmem:[%s788 + $0x48] sm:$0xff]
        %v1457 = vld [vmem:[%s788 + $0x50] sm:$0xff]
        %v1458 = vld [vmem:[%s788 + $0x58] sm:$0xff]
        %v1459 = vld [vmem:[%s788 + $0x60] sm:$0xff]
        %v1460 = vld [vmem:[%s788 + $0x68] sm:$0xff]
        %v1461 = vld [vmem:[%s788 + $0x70] sm:$0xff]
        %v1462 = vld [vmem:[%s788 + $0x78] sm:$0xff]
        %v1463 = vld [vmem:[%s788 + $0x80] sm:$0xff]
        %v1464 = vld [vmem:[%s788 + $0x88] sm:$0xff]
        %v1465 = vld [vmem:[%s788 + $0x90] sm:$0xff]
        %v1466 = vld [vmem:[%s788 + $0x98] sm:$0xff]
        %v1467 = vld [vmem:[%s788 + $0xa0] sm:$0xff]
        %v1468 = vld [vmem:[%s788 + $0xa8] sm:$0xff]
        %v1469 = vld [vmem:[%s788 + $0xb0] sm:$0xff]
        %v1470 = vld [vmem:[%s788 + $0xb8] sm:$0xff]
        %v1471 = vld [vmem:[%s788 + $0xc0] sm:$0xff]
        %v1472 = vld [vmem:[%s788 + $0xc8] sm:$0xff]
        %v1473 = vld [vmem:[%s788 + $0xd0] sm:$0xff]
        %v1474 = vld [vmem:[%s788 + $0xd8] sm:$0xff]
        %v1475 = vld [vmem:[%s788 + $0xe0] sm:$0xff]
        %v1476 = vld [vmem:[%s788 + $0xe8] sm:$0xff]
        %v1477 = vld [vmem:[%s788 + $0xf0] sm:$0xff]
        %v1478 = vld [vmem:[%s788 + $0xf8] sm:$0xff]
        %v1511 = vunpack.c.l.b16 %v1447
        %v1512 = vunpack.c.h.b16 %v1447
        %v1513 = vunpack.c.l.b16 %v1448
        %v1514 = vunpack.c.h.b16 %v1448
        %v1515 = vunpack.c.l.b16 %v1449
        %v1516 = vunpack.c.h.b16 %v1449
        %v1517 = vunpack.c.l.b16 %v1450
        %v1518 = vunpack.c.h.b16 %v1450
        %v1519 = vunpack.c.l.b16 %v1451
        %v1520 = vunpack.c.h.b16 %v1451
        %v1521 = vunpack.c.l.b16 %v1452
        %v1522 = vunpack.c.h.b16 %v1452
        %v1523 = vunpack.c.l.b16 %v1453
        %v1524 = vunpack.c.h.b16 %v1453
        %v1525 = vunpack.c.l.b16 %v1454
        %v1526 = vunpack.c.h.b16 %v1454
        %v1527 = vunpack.c.l.b16 %v1455
        %v1528 = vunpack.c.h.b16 %v1455
        %v1529 = vunpack.c.l.b16 %v1456
        %v1530 = vunpack.c.h.b16 %v1456
        %v1531 = vunpack.c.l.b16 %v1457
        %v1532 = vunpack.c.h.b16 %v1457
        %v1533 = vunpack.c.l.b16 %v1458
        %v1534 = vunpack.c.h.b16 %v1458
        %v1535 = vunpack.c.l.b16 %v1459
        %v1536 = vunpack.c.h.b16 %v1459
        %v1537 = vunpack.c.l.b16 %v1460
        %v1538 = vunpack.c.h.b16 %v1460
        %v1539 = vunpack.c.l.b16 %v1461
        %v1540 = vunpack.c.h.b16 %v1461
        %v1541 = vunpack.c.l.b16 %v1462
        %v1542 = vunpack.c.h.b16 %v1462
        %v1543 = vunpack.c.l.b16 %v1463
        %v1544 = vunpack.c.h.b16 %v1463
        %v1545 = vunpack.c.l.b16 %v1464
        %v1546 = vunpack.c.h.b16 %v1464
        %v1547 = vunpack.c.l.b16 %v1465
        %v1548 = vunpack.c.h.b16 %v1465
        %v1549 = vunpack.c.l.b16 %v1466
        %v1550 = vunpack.c.h.b16 %v1466
        %v1551 = vunpack.c.l.b16 %v1467
        %v1552 = vunpack.c.h.b16 %v1467
        %v1553 = vunpack.c.l.b16 %v1468
        %v1554 = vunpack.c.h.b16 %v1468
        %v1555 = vunpack.c.l.b16 %v1469
        %v1556 = vunpack.c.h.b16 %v1469
        %v1557 = vunpack.c.l.b16 %v1470
        %v1558 = vunpack.c.h.b16 %v1470
        %v1559 = vunpack.c.l.b16 %v1471
        %v1560 = vunpack.c.h.b16 %v1471
        %v1561 = vunpack.c.l.b16 %v1472
        %v1562 = vunpack.c.h.b16 %v1472
        %v1563 = vunpack.c.l.b16 %v1473
        %v1564 = vunpack.c.h.b16 %v1473
        %v1565 = vunpack.c.l.b16 %v1474
        %v1566 = vunpack.c.h.b16 %v1474
        %v1567 = vunpack.c.l.b16 %v1475
        %v1568 = vunpack.c.h.b16 %v1475
        %v1569 = vunpack.c.l.b16 %v1476
        %v1570 = vunpack.c.h.b16 %v1476
        %v1571 = vunpack.c.l.b16 %v1477
        %v1572 = vunpack.c.h.b16 %v1477
        %v1573 = vunpack.c.l.b16 %v1478
        %v1574 = vunpack.c.h.b16 %v1478
        %v1575 = vpack.c.b16 %v1515, %v1511
        %v1576 = vpack.c.b16 %v1516, %v1512
        %v1577 = vpack.c.b16 %v1517, %v1513
        %v1578 = vpack.c.b16 %v1518, %v1514
        %v1579 = vpack.c.b16 %v1523, %v1519
        %v1580 = vpack.c.b16 %v1524, %v1520
        %v1581 = vpack.c.b16 %v1525, %v1521
        %v1582 = vpack.c.b16 %v1526, %v1522
        %v1583 = vpack.c.b16 %v1531, %v1527
        %v1584 = vpack.c.b16 %v1532, %v1528
        %v1585 = vpack.c.b16 %v1533, %v1529
        %v1586 = vpack.c.b16 %v1534, %v1530
        %v1587 = vpack.c.b16 %v1539, %v1535
        %v1588 = vpack.c.b16 %v1540, %v1536
        %v1589 = vpack.c.b16 %v1541, %v1537
        %v1590 = vpack.c.b16 %v1542, %v1538
        %v1591 = vpack.c.b16 %v1547, %v1543
        %v1592 = vpack.c.b16 %v1548, %v1544
        %v1593 = vpack.c.b16 %v1549, %v1545
        %v1594 = vpack.c.b16 %v1550, %v1546
        %v1595 = vpack.c.b16 %v1555, %v1551
        %v1596 = vpack.c.b16 %v1556, %v1552
        %v1597 = vpack.c.b16 %v1557, %v1553
        %v1598 = vpack.c.b16 %v1558, %v1554
        %v1599 = vpack.c.b16 %v1563, %v1559
        %v1600 = vpack.c.b16 %v1564, %v1560
        %v1601 = vpack.c.b16 %v1565, %v1561
        %v1602 = vpack.c.b16 %v1566, %v1562
        %v1603 = vpack.c.b16 %v1571, %v1567
        %v1604 = vpack.c.b16 %v1572, %v1568
        %v1605 = vpack.c.b16 %v1573, %v1569
        %v1606 = vpack.c.b16 %v1574, %v1570
        %1639 = vmatpush.bf16.msra.mxu0 %v1603
        %1640 = vmatpush.bf16.msra.mxu0 %v1599
        %1641 = vmatpush.bf16.msra.mxu0 %v1595
        %1642 = vmatpush.bf16.msra.mxu0 %v1591
        %1643 = vmatpush.bf16.msra.mxu0 %v1587
        %1644 = vmatpush.bf16.msra.mxu0 %v1583
        %1645 = vmatpush.bf16.msra.mxu0 %v1579
        %1646 = vmatpush.bf16.msra.mxu0 %v1575
        %1647 = vmatmul.bf16.gmra.mxu0 %v1138
        %v1648 = vpop.f32.mrf.mxu0
        %v1649 = vadd.f32 0.0, %v1648
        %v1650 = vpop.f32.mrf.mxu0
        %v1651 = vadd.f32 0.0, %v1650
        %1652 = vmatmul.bf16.gmra.mxu0 %v1139
        %v1653 = vpop.f32.mrf.mxu0
        %v1654 = vadd.f32 0.0, %v1653
        %v1655 = vpop.f32.mrf.mxu0
        %v1656 = vadd.f32 0.0, %v1655
        %1657 = vdwg.mxu0
        %1658 = vmatpush.bf16.msra.mxu0 %v1604
        %1659 = vmatpush.bf16.msra.mxu0 %v1600
        %1660 = vmatpush.bf16.msra.mxu0 %v1596
        %1661 = vmatpush.bf16.msra.mxu0 %v1592
        %1662 = vmatpush.bf16.msra.mxu0 %v1588
        %1663 = vmatpush.bf16.msra.mxu0 %v1584
        %1664 = vmatpush.bf16.msra.mxu0 %v1580
        %1665 = vmatpush.bf16.msra.mxu0 %v1576
        %1666 = vmatmul.bf16.gmra.mxu0 %v1138
        %v1667 = vpop.f32.mrf.mxu0
        %v1668 = vadd.f32 0.0, %v1667
        %v1669 = vpop.f32.mrf.mxu0
        %v1670 = vadd.f32 0.0, %v1669
        %1671 = vmatmul.bf16.gmra.mxu0 %v1139
        %v1672 = vpop.f32.mrf.mxu0
        %v1673 = vadd.f32 0.0, %v1672
        %v1674 = vpop.f32.mrf.mxu0
        %v1675 = vadd.f32 0.0, %v1674
        %1676 = vdwg.mxu0
        %1677 = vmatpush.bf16.msra.mxu0 %v1605
        %1678 = vmatpush.bf16.msra.mxu0 %v1601
        %1679 = vmatpush.bf16.msra.mxu0 %v1597
        %1680 = vmatpush.bf16.msra.mxu0 %v1593
        %1681 = vmatpush.bf16.msra.mxu0 %v1589
        %1682 = vmatpush.bf16.msra.mxu0 %v1585
        %1683 = vmatpush.bf16.msra.mxu0 %v1581
        %1684 = vmatpush.bf16.msra.mxu0 %v1577
        %1685 = vmatmul.bf16.gmra.mxu0 %v1138
        %v1686 = vpop.f32.mrf.mxu0
        %v1687 = vadd.f32 0.0, %v1686
        %v1688 = vpop.f32.mrf.mxu0
        %v1689 = vadd.f32 0.0, %v1688
        %1690 = vmatmul.bf16.gmra.mxu0 %v1139
        %v1691 = vpop.f32.mrf.mxu0
        %v1692 = vadd.f32 0.0, %v1691
        %v1693 = vpop.f32.mrf.mxu0
        %v1694 = vadd.f32 0.0, %v1693
        %1695 = vdwg.mxu0
        %1696 = vmatpush.bf16.msra.mxu0 %v1606
        %1697 = vmatpush.bf16.msra.mxu0 %v1602
        %1698 = vmatpush.bf16.msra.mxu0 %v1598
        %1699 = vmatpush.bf16.msra.mxu0 %v1594
        %1700 = vmatpush.bf16.msra.mxu0 %v1590
        %1701 = vmatpush.bf16.msra.mxu0 %v1586
        %1702 = vmatpush.bf16.msra.mxu0 %v1582
        %1703 = vmatpush.bf16.msra.mxu0 %v1578
        %1704 = vmatmul.bf16.gmra.mxu0 %v1138
        %v1705 = vpop.f32.mrf.mxu0
        %v1706 = vadd.f32 0.0, %v1705
        %v1707 = vpop.f32.mrf.mxu0
        %v1708 = vadd.f32 0.0, %v1707
        %1709 = vmatmul.bf16.gmra.mxu0 %v1139
        %v1710 = vpop.f32.mrf.mxu0
        %v1711 = vadd.f32 0.0, %v1710
        %v1712 = vpop.f32.mrf.mxu0
        %v1713 = vadd.f32 0.0, %v1712
        %1714 = vdwg.mxu0
        %v1715 = vpack.c.bf16 %v1668, %v1649
        %v1716 = vpack.c.bf16 %v1706, %v1687
        %v1717 = vpack.c.bf16 %v1670, %v1651
        %v1718 = vpack.c.bf16 %v1708, %v1689
        %v1719 = vpack.c.bf16 %v1673, %v1654
        %v1720 = vpack.c.bf16 %v1711, %v1692
        %v1721 = vpack.c.bf16 %v1675, %v1656
        %v1722 = vpack.c.bf16 %v1713, %v1694
        %v1723 = vld [vmem:[%s798] sm:$0xff]
        %v1724 = vld [vmem:[%s798 + $0x8] sm:$0xff]
        %v1725 = vld [vmem:[%s798 + $0x10] sm:$0xff]
        %v1726 = vld [vmem:[%s798 + $0x18] sm:$0xff]
        %v1727 = vld [vmem:[%s798 + $0x20] sm:$0xff]
        %v1728 = vld [vmem:[%s798 + $0x28] sm:$0xff]
        %v1729 = vld [vmem:[%s798 + $0x30] sm:$0xff]
        %v1730 = vld [vmem:[%s798 + $0x38] sm:$0xff]
        %v1731 = vld [vmem:[%s798 + $0x40] sm:$0xff]
        %v1732 = vld [vmem:[%s798 + $0x48] sm:$0xff]
        %v1733 = vld [vmem:[%s798 + $0x50] sm:$0xff]
        %v1734 = vld [vmem:[%s798 + $0x58] sm:$0xff]
        %v1735 = vld [vmem:[%s798 + $0x60] sm:$0xff]
        %v1736 = vld [vmem:[%s798 + $0x68] sm:$0xff]
        %v1737 = vld [vmem:[%s798 + $0x70] sm:$0xff]
        %v1738 = vld [vmem:[%s798 + $0x78] sm:$0xff]
        %v1739 = vld [vmem:[%s798 + $0x80] sm:$0xff]
        %v1740 = vld [vmem:[%s798 + $0x88] sm:$0xff]
        %v1741 = vld [vmem:[%s798 + $0x90] sm:$0xff]
        %v1742 = vld [vmem:[%s798 + $0x98] sm:$0xff]
        %v1743 = vld [vmem:[%s798 + $0xa0] sm:$0xff]
        %v1744 = vld [vmem:[%s798 + $0xa8] sm:$0xff]
        %v1745 = vld [vmem:[%s798 + $0xb0] sm:$0xff]
        %v1746 = vld [vmem:[%s798 + $0xb8] sm:$0xff]
        %v1747 = vld [vmem:[%s798 + $0xc0] sm:$0xff]
        %v1748 = vld [vmem:[%s798 + $0xc8] sm:$0xff]
        %v1749 = vld [vmem:[%s798 + $0xd0] sm:$0xff]
        %v1750 = vld [vmem:[%s798 + $0xd8] sm:$0xff]
        %v1751 = vld [vmem:[%s798 + $0xe0] sm:$0xff]
        %v1752 = vld [vmem:[%s798 + $0xe8] sm:$0xff]
        %v1753 = vld [vmem:[%s798 + $0xf0] sm:$0xff]
        %v1754 = vld [vmem:[%s798 + $0xf8] sm:$0xff]
        %v1787 = vunpack.c.l.b16 %v1723
        %v1788 = vunpack.c.h.b16 %v1723
        %v1789 = vunpack.c.l.b16 %v1724
        %v1790 = vunpack.c.h.b16 %v1724
        %v1791 = vunpack.c.l.b16 %v1725
        %v1792 = vunpack.c.h.b16 %v1725
        %v1793 = vunpack.c.l.b16 %v1726
        %v1794 = vunpack.c.h.b16 %v1726
        %v1795 = vunpack.c.l.b16 %v1727
        %v1796 = vunpack.c.h.b16 %v1727
        %v1797 = vunpack.c.l.b16 %v1728
        %v1798 = vunpack.c.h.b16 %v1728
        %v1799 = vunpack.c.l.b16 %v1729
        %v1800 = vunpack.c.h.b16 %v1729
        %v1801 = vunpack.c.l.b16 %v1730
        %v1802 = vunpack.c.h.b16 %v1730
        %v1803 = vunpack.c.l.b16 %v1731
        %v1804 = vunpack.c.h.b16 %v1731
        %v1805 = vunpack.c.l.b16 %v1732
        %v1806 = vunpack.c.h.b16 %v1732
        %v1807 = vunpack.c.l.b16 %v1733
        %v1808 = vunpack.c.h.b16 %v1733
        %v1809 = vunpack.c.l.b16 %v1734
        %v1810 = vunpack.c.h.b16 %v1734
        %v1811 = vunpack.c.l.b16 %v1735
        %v1812 = vunpack.c.h.b16 %v1735
        %v1813 = vunpack.c.l.b16 %v1736
        %v1814 = vunpack.c.h.b16 %v1736
        %v1815 = vunpack.c.l.b16 %v1737
        %v1816 = vunpack.c.h.b16 %v1737
        %v1817 = vunpack.c.l.b16 %v1738
        %v1818 = vunpack.c.h.b16 %v1738
        %v1819 = vunpack.c.l.b16 %v1739
        %v1820 = vunpack.c.h.b16 %v1739
        %v1821 = vunpack.c.l.b16 %v1740
        %v1822 = vunpack.c.h.b16 %v1740
        %v1823 = vunpack.c.l.b16 %v1741
        %v1824 = vunpack.c.h.b16 %v1741
        %v1825 = vunpack.c.l.b16 %v1742
        %v1826 = vunpack.c.h.b16 %v1742
        %v1827 = vunpack.c.l.b16 %v1743
        %v1828 = vunpack.c.h.b16 %v1743
        %v1829 = vunpack.c.l.b16 %v1744
        %v1830 = vunpack.c.h.b16 %v1744
        %v1831 = vunpack.c.l.b16 %v1745
        %v1832 = vunpack.c.h.b16 %v1745
        %v1833 = vunpack.c.l.b16 %v1746
        %v1834 = vunpack.c.h.b16 %v1746
        %v1835 = vunpack.c.l.b16 %v1747
        %v1836 = vunpack.c.h.b16 %v1747
        %v1837 = vunpack.c.l.b16 %v1748
        %v1838 = vunpack.c.h.b16 %v1748
        %v1839 = vunpack.c.l.b16 %v1749
        %v1840 = vunpack.c.h.b16 %v1749
        %v1841 = vunpack.c.l.b16 %v1750
        %v1842 = vunpack.c.h.b16 %v1750
        %v1843 = vunpack.c.l.b16 %v1751
        %v1844 = vunpack.c.h.b16 %v1751
        %v1845 = vunpack.c.l.b16 %v1752
        %v1846 = vunpack.c.h.b16 %v1752
        %v1847 = vunpack.c.l.b16 %v1753
        %v1848 = vunpack.c.h.b16 %v1753
        %v1849 = vunpack.c.l.b16 %v1754
        %v1850 = vunpack.c.h.b16 %v1754
        %v1851 = vpack.c.b16 %v1791, %v1787
        %v1852 = vpack.c.b16 %v1792, %v1788
        %v1853 = vpack.c.b16 %v1793, %v1789
        %v1854 = vpack.c.b16 %v1794, %v1790
        %v1855 = vpack.c.b16 %v1799, %v1795
        %v1856 = vpack.c.b16 %v1800, %v1796
        %v1857 = vpack.c.b16 %v1801, %v1797
        %v1858 = vpack.c.b16 %v1802, %v1798
        %v1859 = vpack.c.b16 %v1807, %v1803
        %v1860 = vpack.c.b16 %v1808, %v1804
        %v1861 = vpack.c.b16 %v1809, %v1805
        %v1862 = vpack.c.b16 %v1810, %v1806
        %v1863 = vpack.c.b16 %v1815, %v1811
        %v1864 = vpack.c.b16 %v1816, %v1812
        %v1865 = vpack.c.b16 %v1817, %v1813
        %v1866 = vpack.c.b16 %v1818, %v1814
        %v1867 = vpack.c.b16 %v1823, %v1819
        %v1868 = vpack.c.b16 %v1824, %v1820
        %v1869 = vpack.c.b16 %v1825, %v1821
        %v1870 = vpack.c.b16 %v1826, %v1822
        %v1871 = vpack.c.b16 %v1831, %v1827
        %v1872 = vpack.c.b16 %v1832, %v1828
        %v1873 = vpack.c.b16 %v1833, %v1829
        %v1874 = vpack.c.b16 %v1834, %v1830
        %v1875 = vpack.c.b16 %v1839, %v1835
        %v1876 = vpack.c.b16 %v1840, %v1836
        %v1877 = vpack.c.b16 %v1841, %v1837
        %v1878 = vpack.c.b16 %v1842, %v1838
        %v1879 = vpack.c.b16 %v1847, %v1843
        %v1880 = vpack.c.b16 %v1848, %v1844
        %v1881 = vpack.c.b16 %v1849, %v1845
        %v1882 = vpack.c.b16 %v1850, %v1846
        %1915 = vmatpush.bf16.msra.mxu0 %v1879
        %1916 = vmatpush.bf16.msra.mxu0 %v1875
        %1917 = vmatpush.bf16.msra.mxu0 %v1871
        %1918 = vmatpush.bf16.msra.mxu0 %v1867
        %1919 = vmatpush.bf16.msra.mxu0 %v1863
        %1920 = vmatpush.bf16.msra.mxu0 %v1859
        %1921 = vmatpush.bf16.msra.mxu0 %v1855
        %1922 = vmatpush.bf16.msra.mxu0 %v1851
        %1923 = vmatmul.bf16.gmra.mxu0 %v1138
        %v1924 = vpop.f32.mrf.mxu0
        %v1925 = vadd.f32 0.0, %v1924
        %v1926 = vpop.f32.mrf.mxu0
        %v1927 = vadd.f32 0.0, %v1926
        %1928 = vmatmul.bf16.gmra.mxu0 %v1139
        %v1929 = vpop.f32.mrf.mxu0
        %v1930 = vadd.f32 0.0, %v1929
        %v1931 = vpop.f32.mrf.mxu0
        %v1932 = vadd.f32 0.0, %v1931
        %1933 = vdwg.mxu0
        %1934 = vmatpush.bf16.msra.mxu0 %v1880
        %1935 = vmatpush.bf16.msra.mxu0 %v1876
        %1936 = vmatpush.bf16.msra.mxu0 %v1872
        %1937 = vmatpush.bf16.msra.mxu0 %v1868
        %1938 = vmatpush.bf16.msra.mxu0 %v1864
        %1939 = vmatpush.bf16.msra.mxu0 %v1860
        %1940 = vmatpush.bf16.msra.mxu0 %v1856
        %1941 = vmatpush.bf16.msra.mxu0 %v1852
        %1942 = vmatmul.bf16.gmra.mxu0 %v1138
        %v1943 = vpop.f32.mrf.mxu0
        %v1944 = vadd.f32 0.0, %v1943
        %v1945 = vpop.f32.mrf.mxu0
        %v1946 = vadd.f32 0.0, %v1945
        %1947 = vmatmul.bf16.gmra.mxu0 %v1139
        %v1948 = vpop.f32.mrf.mxu0
        %v1949 = vadd.f32 0.0, %v1948
        %v1950 = vpop.f32.mrf.mxu0
        %v1951 = vadd.f32 0.0, %v1950
        %1952 = vdwg.mxu0
        %1953 = vmatpush.bf16.msra.mxu0 %v1881
        %1954 = vmatpush.bf16.msra.mxu0 %v1877
        %1955 = vmatpush.bf16.msra.mxu0 %v1873
        %1956 = vmatpush.bf16.msra.mxu0 %v1869
        %1957 = vmatpush.bf16.msra.mxu0 %v1865
        %1958 = vmatpush.bf16.msra.mxu0 %v1861
        %1959 = vmatpush.bf16.msra.mxu0 %v1857
        %1960 = vmatpush.bf16.msra.mxu0 %v1853
        %1961 = vmatmul.bf16.gmra.mxu0 %v1138
        %v1962 = vpop.f32.mrf.mxu0
        %v1963 = vadd.f32 0.0, %v1962
        %v1964 = vpop.f32.mrf.mxu0
        %v1965 = vadd.f32 0.0, %v1964
        %1966 = vmatmul.bf16.gmra.mxu0 %v1139
        %v1967 = vpop.f32.mrf.mxu0
        %v1968 = vadd.f32 0.0, %v1967
        %v1969 = vpop.f32.mrf.mxu0
        %v1970 = vadd.f32 0.0, %v1969
        %1971 = vdwg.mxu0
        %1972 = vmatpush.bf16.msra.mxu0 %v1882
        %1973 = vmatpush.bf16.msra.mxu0 %v1878
        %1974 = vmatpush.bf16.msra.mxu0 %v1874
        %1975 = vmatpush.bf16.msra.mxu0 %v1870
        %1976 = vmatpush.bf16.msra.mxu0 %v1866
        %1977 = vmatpush.bf16.msra.mxu0 %v1862
        %1978 = vmatpush.bf16.msra.mxu0 %v1858
        %1979 = vmatpush.bf16.msra.mxu0 %v1854
        %1980 = vmatmul.bf16.gmra.mxu0 %v1138
        %v1981 = vpop.f32.mrf.mxu0
        %v1982 = vadd.f32 0.0, %v1981
        %v1983 = vpop.f32.mrf.mxu0
        %v1984 = vadd.f32 0.0, %v1983
        %1985 = vmatmul.bf16.gmra.mxu0 %v1139
        %v1986 = vpop.f32.mrf.mxu0
        %v1987 = vadd.f32 0.0, %v1986
        %v1988 = vpop.f32.mrf.mxu0
        %v1989 = vadd.f32 0.0, %v1988
        %1990 = vdwg.mxu0
        %v1991 = vpack.c.bf16 %v1944, %v1925
        %v1992 = vpack.c.bf16 %v1982, %v1963
        %v1993 = vpack.c.bf16 %v1946, %v1927
        %v1994 = vpack.c.bf16 %v1984, %v1965
        %v1995 = vpack.c.bf16 %v1949, %v1930
        %v1996 = vpack.c.bf16 %v1987, %v1968
        %v1997 = vpack.c.bf16 %v1951, %v1932
        %v1998 = vpack.c.bf16 %v1989, %v1970
        %v2003 = vunpack.c.l.b16 %v1439
        %v2004 = vunpack.c.l.b16 %v1441
        %v2005 = vunpack.c.l.b16 %v1443
        %v2006 = vunpack.c.l.b16 %v1445
        %v2007 = vpack.c.b16 %v2004, %v2003
        %v2008 = vpack.c.b16 %v2006, %v2005
        %v2015 = vunpack.c.l.b16 %v1715
        %v2016 = vunpack.c.l.b16 %v1717
        %v2017 = vunpack.c.l.b16 %v1719
        %v2018 = vunpack.c.l.b16 %v1721
        %v2019 = vpack.c.b16 %v2016, %v2015
        %v2020 = vpack.c.b16 %v2018, %v2017
        %2023 = vmatpush.bf16.xpose.msra.mxu0 0
        %2024 = vmatpush.bf16.xpose.msra.mxu0 0
        %2025 = vmatpush.bf16.xpose.msra.mxu0 0
        %2026 = vmatpush.bf16.xpose.msra.mxu0 0
        %2027 = vmatpush.bf16.xpose.msra.mxu0 0
        %2028 = vmatpush.bf16.xpose.msra.mxu0 0
        %2029 = vmatpush.bf16.xpose.msra.mxu0 %v2020
        %2030 = vmatpush.bf16.xpose.msra.mxu0 %v2019
        %2031 = vmatmul.bf16.gmra.mxu0 %v2007
        %v2032 = vpop.f32.mrf.mxu0
        %v2033 = vadd.f32 %v1167, %v2032
        %v2034 = vpop.f32.mrf.mxu0
        %v2035 = vadd.f32 %v1168, %v2034
        %2036 = vmatmul.bf16.gmra.mxu0 %v2008
        %v2037 = vpop.f32.mrf.mxu0
        %v2038 = vadd.f32 %v1169, %v2037
        %v2039 = vpop.f32.mrf.mxu0
        %v2040 = vadd.f32 %v1170, %v2039
        %2041 = vdwg.mxu0
        %vm2042 = vcmask 261120
        %v2043 = vsel %vm2042, %v2033, -inf
        %2044 = vmax.xlane.f32.xlu0 %v2043
        %v2045 = vpop.xlane.xlu0 %2044
        %v2046 = vsel %vm2042, %v2035, -inf
        %2047 = vmax.xlane.f32.xlu0 %v2046
        %v2048 = vpop.xlane.xlu0 %2047
        %v2049 = vsel %vm2042, %v2038, -inf
        %2050 = vmax.xlane.f32.xlu0 %v2049
        %v2051 = vpop.xlane.xlu0 %2050
        %v2052 = vsel %vm2042, %v2040, -inf
        %2053 = vmax.xlane.f32.xlu0 %v2052
        %v2054 = vpop.xlane.xlu0 %2053
        %v2055 = vsub.f32 %v2033, %v2045
        %v2056 = vsub.f32 %v2035, %v2048
        %v2057 = vsub.f32 %v2038, %v2051
        %v2058 = vsub.f32 %v2040, %v2054
        %v2059 = vmul.f32 %v2055, 1.442695
        %v2060 = vpow.pop %v2059
        %v2061 = vmul.f32 %v2056, 1.442695
        %v2062 = vpow.pop %v2061
        %v2063 = vmul.f32 %v2057, 1.442695
        %v2064 = vpow.pop %v2063
        %v2065 = vmul.f32 %v2058, 1.442695
        %v2066 = vpow.pop %v2065
        %v2067 = vsel %vm2042, %v2060, 0.0
        %2068 = vadd.xlane.f32.xlu0 %v2067
        %v2069 = vpop.xlane.xlu0 %2068
        %v2070 = vsel %vm2042, %v2062, 0.0
        %2071 = vadd.xlane.f32.xlu0 %v2070
        %v2072 = vpop.xlane.xlu0 %2071
        %v2073 = vsel %vm2042, %v2064, 0.0
        %2074 = vadd.xlane.f32.xlu0 %v2073
        %v2075 = vpop.xlane.xlu0 %2074
        %v2076 = vsel %vm2042, %v2066, 0.0
        %2077 = vadd.xlane.f32.xlu0 %v2076
        %v2078 = vpop.xlane.xlu0 %2077
        %v2079 = vrcp.pop %v2069
        %v2080 = vrcp.pop %v2072
        %v2081 = vrcp.pop %v2075
        %v2082 = vrcp.pop %v2078
        %v2083 = vmul.f32 %v2060, %v2079
        %v2084 = vmul.f32 %v2062, %v2080
        %v2085 = vmul.f32 %v2064, %v2081
        %v2086 = vmul.f32 %v2066, %v2082
        %v2087 = vpack.c.bf16 %v2084, %v2083
        %v2088 = vpack.c.bf16 %v2086, %v2085
        %v2093 = vunpack.c.l.b16 %v1991
        %v2094 = vunpack.c.l.b16 %v1993
        %v2095 = vunpack.c.l.b16 %v1995
        %v2096 = vunpack.c.l.b16 %v1997
        %v2097 = vpack.c.b16 %v2094, %v2093
        %v2098 = vpack.c.b16 %v2096, %v2095
        %v2102 = vsel %vm2042, %v2087, 0
        %v2105 = vsel %vm2042, %v2088, 0
        %2107 = vmatpush.bf16.msra.mxu0 0
        %2108 = vmatpush.bf16.msra.mxu0 0
        %2109 = vmatpush.bf16.msra.mxu0 0
        %2110 = vmatpush.bf16.msra.mxu0 0
        %2111 = vmatpush.bf16.msra.mxu0 0
        %2112 = vmatpush.bf16.msra.mxu0 0
        %2113 = vmatpush.bf16.msra.mxu0 %v2098
        %2114 = vmatpush.bf16.msra.mxu0 %v2097
        %2115 = vmatmul.bf16.gmra.mxu0 %v2102
        %v2116 = vpop.f32.mrf.mxu0
        %v2117 = vadd.f32 0.0, %v2116
        %v2118 = vpop.f32.mrf.mxu0
        %v2119 = vadd.f32 0.0, %v2118
        %2120 = vmatmul.bf16.gmra.mxu0 %v2105
        %v2121 = vpop.f32.mrf.mxu0
        %v2122 = vadd.f32 0.0, %v2121
        %v2123 = vpop.f32.mrf.mxu0
        %v2124 = vadd.f32 0.0, %v2123
        %2125 = vdwg.mxu0
        %v2126 = vpack.c.bf16 %v2117, %v2117
        %v2127 = vpack.c.bf16 %v2119, %v2119
        %v2128 = vpack.c.bf16 %v2122, %v2122
        %v2129 = vpack.c.bf16 %v2124, %v2124
        %v2130 = vunpack.c.h.b16 %v1439
        %v2131 = vunpack.c.h.b16 %v1441
        %v2132 = vunpack.c.h.b16 %v1443
        %v2133 = vunpack.c.h.b16 %v1445
        %v2134 = vpack.c.b16 %v2131, %v2130
        %v2135 = vpack.c.b16 %v2133, %v2132
        %v2138 = vunpack.c.h.b16 %v1715
        %v2139 = vunpack.c.h.b16 %v1717
        %v2140 = vunpack.c.h.b16 %v1719
        %v2141 = vunpack.c.h.b16 %v1721
        %v2142 = vpack.c.b16 %v2139, %v2138
        %v2143 = vpack.c.b16 %v2141, %v2140
        %2146 = vmatpush.bf16.xpose.msra.mxu0 0
        %2147 = vmatpush.bf16.xpose.msra.mxu0 0
        %2148 = vmatpush.bf16.xpose.msra.mxu0 0
        %2149 = vmatpush.bf16.xpose.msra.mxu0 0
        %2150 = vmatpush.bf16.xpose.msra.mxu0 0
        %2151 = vmatpush.bf16.xpose.msra.mxu0 0
        %2152 = vmatpush.bf16.xpose.msra.mxu0 %v2143
        %2153 = vmatpush.bf16.xpose.msra.mxu0 %v2142
        %2154 = vmatmul.bf16.gmra.mxu0 %v2134
        %v2155 = vpop.f32.mrf.mxu0
        %v2156 = vadd.f32 %v1167, %v2155
        %v2157 = vpop.f32.mrf.mxu0
        %v2158 = vadd.f32 %v1168, %v2157
        %2159 = vmatmul.bf16.gmra.mxu0 %v2135
        %v2160 = vpop.f32.mrf.mxu0
        %v2161 = vadd.f32 %v1169, %v2160
        %v2162 = vpop.f32.mrf.mxu0
        %v2163 = vadd.f32 %v1170, %v2162
        %2164 = vdwg.mxu0
        %v2165 = vsel %vm2042, %v2156, -inf
        %2166 = vmax.xlane.f32.xlu0 %v2165
        %v2167 = vpop.xlane.xlu0 %2166
        %v2168 = vsel %vm2042, %v2158, -inf
        %2169 = vmax.xlane.f32.xlu0 %v2168
        %v2170 = vpop.xlane.xlu0 %2169
        %v2171 = vsel %vm2042, %v2161, -inf
        %2172 = vmax.xlane.f32.xlu0 %v2171
        %v2173 = vpop.xlane.xlu0 %2172
        %v2174 = vsel %vm2042, %v2163, -inf
        %2175 = vmax.xlane.f32.xlu0 %v2174
        %v2176 = vpop.xlane.xlu0 %2175
        %v2177 = vsub.f32 %v2156, %v2167
        %v2178 = vsub.f32 %v2158, %v2170
        %v2179 = vsub.f32 %v2161, %v2173
        %v2180 = vsub.f32 %v2163, %v2176
        %v2181 = vmul.f32 %v2177, 1.442695
        %v2182 = vpow.pop %v2181
        %v2183 = vmul.f32 %v2178, 1.442695
        %v2184 = vpow.pop %v2183
        %v2185 = vmul.f32 %v2179, 1.442695
        %v2186 = vpow.pop %v2185
        %v2187 = vmul.f32 %v2180, 1.442695
        %v2188 = vpow.pop %v2187
        %v2189 = vsel %vm2042, %v2182, 0.0
        %2190 = vadd.xlane.f32.xlu0 %v2189
        %v2191 = vpop.xlane.xlu0 %2190
        %v2192 = vsel %vm2042, %v2184, 0.0
        %2193 = vadd.xlane.f32.xlu0 %v2192
        %v2194 = vpop.xlane.xlu0 %2193
        %v2195 = vsel %vm2042, %v2186, 0.0
        %2196 = vadd.xlane.f32.xlu0 %v2195
        %v2197 = vpop.xlane.xlu0 %2196
        %v2198 = vsel %vm2042, %v2188, 0.0
        %2199 = vadd.xlane.f32.xlu0 %v2198
        %v2200 = vpop.xlane.xlu0 %2199
        %v2201 = vrcp.pop %v2191
        %v2202 = vrcp.pop %v2194
        %v2203 = vrcp.pop %v2197
        %v2204 = vrcp.pop %v2200
        %v2205 = vmul.f32 %v2182, %v2201
        %v2206 = vmul.f32 %v2184, %v2202
        %v2207 = vmul.f32 %v2186, %v2203
        %v2208 = vmul.f32 %v2188, %v2204
        %v2209 = vpack.c.bf16 %v2206, %v2205
        %v2210 = vpack.c.bf16 %v2208, %v2207
        %v2211 = vunpack.c.h.b16 %v1991
        %v2212 = vunpack.c.h.b16 %v1993
        %v2213 = vunpack.c.h.b16 %v1995
        %v2214 = vunpack.c.h.b16 %v1997
        %v2215 = vpack.c.b16 %v2212, %v2211
        %v2216 = vpack.c.b16 %v2214, %v2213
        %v2220 = vsel %vm2042, %v2209, 0
        %v2223 = vsel %vm2042, %v2210, 0
        %2225 = vmatpush.bf16.msra.mxu0 0
        %2226 = vmatpush.bf16.msra.mxu0 0
        %2227 = vmatpush.bf16.msra.mxu0 0
        %2228 = vmatpush.bf16.msra.mxu0 0
        %2229 = vmatpush.bf16.msra.mxu0 0
        %2230 = vmatpush.bf16.msra.mxu0 0
        %2231 = vmatpush.bf16.msra.mxu0 %v2216
        %2232 = vmatpush.bf16.msra.mxu0 %v2215
        %2233 = vmatmul.bf16.gmra.mxu0 %v2220
        %v2234 = vpop.f32.mrf.mxu0
        %v2235 = vadd.f32 0.0, %v2234
        %v2236 = vpop.f32.mrf.mxu0
        %v2237 = vadd.f32 0.0, %v2236
        %2238 = vmatmul.bf16.gmra.mxu0 %v2223
        %v2239 = vpop.f32.mrf.mxu0
        %v2240 = vadd.f32 0.0, %v2239
        %v2241 = vpop.f32.mrf.mxu0
        %v2242 = vadd.f32 0.0, %v2241
        %2243 = vdwg.mxu0
        %v2244 = vpack.c.bf16 %v2235, %v2235
        %v2245 = vpack.c.bf16 %v2237, %v2237
        %v2246 = vpack.c.bf16 %v2240, %v2240
        %v2247 = vpack.c.bf16 %v2242, %v2242
        %v2252 = vunpack.c.l.b16 %v1440
        %v2253 = vunpack.c.l.b16 %v1442
        %v2254 = vunpack.c.l.b16 %v1444
        %v2255 = vunpack.c.l.b16 %v1446
        %v2256 = vpack.c.b16 %v2253, %v2252
        %v2257 = vpack.c.b16 %v2255, %v2254
        %v2264 = vunpack.c.l.b16 %v1716
        %v2265 = vunpack.c.l.b16 %v1718
        %v2266 = vunpack.c.l.b16 %v1720
        %v2267 = vunpack.c.l.b16 %v1722
        %v2268 = vpack.c.b16 %v2265, %v2264
        %v2269 = vpack.c.b16 %v2267, %v2266
        %2272 = vmatpush.bf16.xpose.msra.mxu0 0
        %2273 = vmatpush.bf16.xpose.msra.mxu0 0
        %2274 = vmatpush.bf16.xpose.msra.mxu0 0
        %2275 = vmatpush.bf16.xpose.msra.mxu0 0
        %2276 = vmatpush.bf16.xpose.msra.mxu0 0
        %2277 = vmatpush.bf16.xpose.msra.mxu0 0
        %2278 = vmatpush.bf16.xpose.msra.mxu0 %v2269
        %2279 = vmatpush.bf16.xpose.msra.mxu0 %v2268
        %2280 = vmatmul.bf16.gmra.mxu0 %v2256
        %v2281 = vpop.f32.mrf.mxu0
        %v2282 = vadd.f32 %v1167, %v2281
        %v2283 = vpop.f32.mrf.mxu0
        %v2284 = vadd.f32 %v1168, %v2283
        %2285 = vmatmul.bf16.gmra.mxu0 %v2257
        %v2286 = vpop.f32.mrf.mxu0
        %v2287 = vadd.f32 %v1169, %v2286
        %v2288 = vpop.f32.mrf.mxu0
        %v2289 = vadd.f32 %v1170, %v2288
        %2290 = vdwg.mxu0
        %v2291 = vsel %vm2042, %v2282, -inf
        %2292 = vmax.xlane.f32.xlu0 %v2291
        %v2293 = vpop.xlane.xlu0 %2292
        %v2294 = vsel %vm2042, %v2284, -inf
        %2295 = vmax.xlane.f32.xlu0 %v2294
        %v2296 = vpop.xlane.xlu0 %2295
        %v2297 = vsel %vm2042, %v2287, -inf
        %2298 = vmax.xlane.f32.xlu0 %v2297
        %v2299 = vpop.xlane.xlu0 %2298
        %v2300 = vsel %vm2042, %v2289, -inf
        %2301 = vmax.xlane.f32.xlu0 %v2300
        %v2302 = vpop.xlane.xlu0 %2301
        %v2303 = vsub.f32 %v2282, %v2293
        %v2304 = vsub.f32 %v2284, %v2296
        %v2305 = vsub.f32 %v2287, %v2299
        %v2306 = vsub.f32 %v2289, %v2302
        %v2307 = vmul.f32 %v2303, 1.442695
        %v2308 = vpow.pop %v2307
        %v2309 = vmul.f32 %v2304, 1.442695
        %v2310 = vpow.pop %v2309
        %v2311 = vmul.f32 %v2305, 1.442695
        %v2312 = vpow.pop %v2311
        %v2313 = vmul.f32 %v2306, 1.442695
        %v2314 = vpow.pop %v2313
        %v2315 = vsel %vm2042, %v2308, 0.0
        %2316 = vadd.xlane.f32.xlu0 %v2315
        %v2317 = vpop.xlane.xlu0 %2316
        %v2318 = vsel %vm2042, %v2310, 0.0
        %2319 = vadd.xlane.f32.xlu0 %v2318
        %v2320 = vpop.xlane.xlu0 %2319
        %v2321 = vsel %vm2042, %v2312, 0.0
        %2322 = vadd.xlane.f32.xlu0 %v2321
        %v2323 = vpop.xlane.xlu0 %2322
        %v2324 = vsel %vm2042, %v2314, 0.0
        %2325 = vadd.xlane.f32.xlu0 %v2324
        %v2326 = vpop.xlane.xlu0 %2325
        %v2327 = vrcp.pop %v2317
        %v2328 = vrcp.pop %v2320
        %v2329 = vrcp.pop %v2323
        %v2330 = vrcp.pop %v2326
        %v2331 = vmul.f32 %v2308, %v2327
        %v2332 = vmul.f32 %v2310, %v2328
        %v2333 = vmul.f32 %v2312, %v2329
        %v2334 = vmul.f32 %v2314, %v2330
        %v2335 = vpack.c.bf16 %v2332, %v2331
        %v2336 = vpack.c.bf16 %v2334, %v2333
        %v2341 = vunpack.c.l.b16 %v1992
        %v2342 = vunpack.c.l.b16 %v1994
        %v2343 = vunpack.c.l.b16 %v1996
        %v2344 = vunpack.c.l.b16 %v1998
        %v2345 = vpack.c.b16 %v2342, %v2341
        %v2346 = vpack.c.b16 %v2344, %v2343
        %v2350 = vsel %vm2042, %v2335, 0
        %v2353 = vsel %vm2042, %v2336, 0
        %2355 = vmatpush.bf16.msra.mxu0 0
        %2356 = vmatpush.bf16.msra.mxu0 0
        %2357 = vmatpush.bf16.msra.mxu0 0
        %2358 = vmatpush.bf16.msra.mxu0 0
        %2359 = vmatpush.bf16.msra.mxu0 0
        %2360 = vmatpush.bf16.msra.mxu0 0
        %2361 = vmatpush.bf16.msra.mxu0 %v2346
        %2362 = vmatpush.bf16.msra.mxu0 %v2345
        %2363 = vmatmul.bf16.gmra.mxu0 %v2350
        %v2364 = vpop.f32.mrf.mxu0
        %v2365 = vadd.f32 0.0, %v2364
        %v2366 = vpop.f32.mrf.mxu0
        %v2367 = vadd.f32 0.0, %v2366
        %2368 = vmatmul.bf16.gmra.mxu0 %v2353
        %v2369 = vpop.f32.mrf.mxu0
        %v2370 = vadd.f32 0.0, %v2369
        %v2371 = vpop.f32.mrf.mxu0
        %v2372 = vadd.f32 0.0, %v2371
        %2373 = vdwg.mxu0
        %v2374 = vpack.c.bf16 %v2365, %v2365
        %v2375 = vpack.c.bf16 %v2367, %v2367
        %v2376 = vpack.c.bf16 %v2370, %v2370
        %v2377 = vpack.c.bf16 %v2372, %v2372
        %v2378 = vunpack.c.h.b16 %v1440
        %v2379 = vunpack.c.h.b16 %v1442
        %v2380 = vunpack.c.h.b16 %v1444
        %v2381 = vunpack.c.h.b16 %v1446
        %v2382 = vpack.c.b16 %v2379, %v2378
        %v2383 = vpack.c.b16 %v2381, %v2380
        %v2386 = vunpack.c.h.b16 %v1716
        %v2387 = vunpack.c.h.b16 %v1718
        %v2388 = vunpack.c.h.b16 %v1720
        %v2389 = vunpack.c.h.b16 %v1722
        %v2390 = vpack.c.b16 %v2387, %v2386
        %v2391 = vpack.c.b16 %v2389, %v2388
        %2394 = vmatpush.bf16.xpose.msra.mxu0 0
        %2395 = vmatpush.bf16.xpose.msra.mxu0 0
        %2396 = vmatpush.bf16.xpose.msra.mxu0 0
        %2397 = vmatpush.bf16.xpose.msra.mxu0 0
        %2398 = vmatpush.bf16.xpose.msra.mxu0 0
        %2399 = vmatpush.bf16.xpose.msra.mxu0 0
        %2400 = vmatpush.bf16.xpose.msra.mxu0 %v2391
        %2401 = vmatpush.bf16.xpose.msra.mxu0 %v2390
        %2402 = vmatmul.bf16.gmra.mxu0 %v2382
        %v2403 = vpop.f32.mrf.mxu0
        %v2404 = vadd.f32 %v1167, %v2403
        %v2405 = vpop.f32.mrf.mxu0
        %v2406 = vadd.f32 %v1168, %v2405
        %2407 = vmatmul.bf16.gmra.mxu0 %v2383
        %v2408 = vpop.f32.mrf.mxu0
        %v2409 = vadd.f32 %v1169, %v2408
        %v2410 = vpop.f32.mrf.mxu0
        %v2411 = vadd.f32 %v1170, %v2410
        %2412 = vdwg.mxu0
        %v2413 = vsel %vm2042, %v2404, -inf
        %2414 = vmax.xlane.f32.xlu0 %v2413
        %v2415 = vpop.xlane.xlu0 %2414
        %v2416 = vsel %vm2042, %v2406, -inf
        %2417 = vmax.xlane.f32.xlu0 %v2416
        %v2418 = vpop.xlane.xlu0 %2417
        %v2419 = vsel %vm2042, %v2409, -inf
        %2420 = vmax.xlane.f32.xlu0 %v2419
        %v2421 = vpop.xlane.xlu0 %2420
        %v2422 = vsel %vm2042, %v2411, -inf
        %2423 = vmax.xlane.f32.xlu0 %v2422
        %v2424 = vpop.xlane.xlu0 %2423
        %v2425 = vsub.f32 %v2404, %v2415
        %v2426 = vsub.f32 %v2406, %v2418
        %v2427 = vsub.f32 %v2409, %v2421
        %v2428 = vsub.f32 %v2411, %v2424
        %v2429 = vmul.f32 %v2425, 1.442695
        %v2430 = vpow.pop %v2429
        %v2431 = vmul.f32 %v2426, 1.442695
        %v2432 = vpow.pop %v2431
        %v2433 = vmul.f32 %v2427, 1.442695
        %v2434 = vpow.pop %v2433
        %v2435 = vmul.f32 %v2428, 1.442695
        %v2436 = vpow.pop %v2435
        %v2437 = vsel %vm2042, %v2430, 0.0
        %2438 = vadd.xlane.f32.xlu0 %v2437
        %v2439 = vpop.xlane.xlu0 %2438
        %v2440 = vsel %vm2042, %v2432, 0.0
        %2441 = vadd.xlane.f32.xlu0 %v2440
        %v2442 = vpop.xlane.xlu0 %2441
        %v2443 = vsel %vm2042, %v2434, 0.0
        %2444 = vadd.xlane.f32.xlu0 %v2443
        %v2445 = vpop.xlane.xlu0 %2444
        %v2446 = vsel %vm2042, %v2436, 0.0
        %2447 = vadd.xlane.f32.xlu0 %v2446
        %v2448 = vpop.xlane.xlu0 %2447
        %v2449 = vrcp.pop %v2439
        %v2450 = vrcp.pop %v2442
        %v2451 = vrcp.pop %v2445
        %v2452 = vrcp.pop %v2448
        %v2453 = vmul.f32 %v2430, %v2449
        %v2454 = vmul.f32 %v2432, %v2450
        %v2455 = vmul.f32 %v2434, %v2451
        %v2456 = vmul.f32 %v2436, %v2452
        %v2457 = vpack.c.bf16 %v2454, %v2453
        %v2458 = vpack.c.bf16 %v2456, %v2455
        %v2459 = vunpack.c.h.b16 %v1992
        %v2460 = vunpack.c.h.b16 %v1994
        %v2461 = vunpack.c.h.b16 %v1996
        %v2462 = vunpack.c.h.b16 %v1998
        %v2463 = vpack.c.b16 %v2460, %v2459
        %v2464 = vpack.c.b16 %v2462, %v2461
        %v2468 = vsel %vm2042, %v2457, 0
        %v2471 = vsel %vm2042, %v2458, 0
        %2473 = vmatpush.bf16.msra.mxu0 0
        %2474 = vmatpush.bf16.msra.mxu0 0
        %2475 = vmatpush.bf16.msra.mxu0 0
        %2476 = vmatpush.bf16.msra.mxu0 0
        %2477 = vmatpush.bf16.msra.mxu0 0
        %2478 = vmatpush.bf16.msra.mxu0 0
        %2479 = vmatpush.bf16.msra.mxu0 %v2464
        %2480 = vmatpush.bf16.msra.mxu0 %v2463
        %2481 = vmatmul.bf16.gmra.mxu0 %v2468
        %v2482 = vpop.f32.mrf.mxu0
        %v2483 = vadd.f32 0.0, %v2482
        %v2484 = vpop.f32.mrf.mxu0
        %v2485 = vadd.f32 0.0, %v2484
        %2486 = vmatmul.bf16.gmra.mxu0 %v2471
        %v2487 = vpop.f32.mrf.mxu0
        %v2488 = vadd.f32 0.0, %v2487
        %v2489 = vpop.f32.mrf.mxu0
        %v2490 = vadd.f32 0.0, %v2489
        %2491 = vdwg.mxu0
        %v2492 = vpack.c.bf16 %v2483, %v2483
        %v2493 = vpack.c.bf16 %v2485, %v2485
        %v2494 = vpack.c.bf16 %v2488, %v2488
        %v2495 = vpack.c.bf16 %v2490, %v2490
        %v2500 = vunpack.c.l.b16 %v2126
        %v2501 = vunpack.c.l.b16 %v2127
        %v2502 = vunpack.c.l.b16 %v2128
        %v2503 = vunpack.c.l.b16 %v2129
        %v2504 = vpack.c.b16 %v2501, %v2500
        %v2505 = vpack.c.b16 %v2503, %v2502
        %v2512 = vunpack.c.l.b16 %v2244
        %v2513 = vunpack.c.l.b16 %v2245
        %v2514 = vunpack.c.l.b16 %v2246
        %v2515 = vunpack.c.l.b16 %v2247
        %v2516 = vpack.c.b16 %v2513, %v2512
        %v2517 = vpack.c.b16 %v2515, %v2514
        %v2524 = vunpack.c.l.b16 %v2374
        %v2525 = vunpack.c.l.b16 %v2375
        %v2526 = vunpack.c.l.b16 %v2376
        %v2527 = vunpack.c.l.b16 %v2377
        %v2528 = vpack.c.b16 %v2525, %v2524
        %v2529 = vpack.c.b16 %v2527, %v2526
        %v2536 = vunpack.c.l.b16 %v2492
        %v2537 = vunpack.c.l.b16 %v2493
        %v2538 = vunpack.c.l.b16 %v2494
        %v2539 = vunpack.c.l.b16 %v2495
        %v2540 = vpack.c.b16 %v2537, %v2536
        %v2541 = vpack.c.b16 %v2539, %v2538
        %v2544 = vld [vmem:[%s808] sm:$0xf]
        %v2545 = vld [vmem:[%s808 + $0x4] sm:$0xf]
        %v2546 = vld [vmem:[%s808 + $0x8] sm:$0xf]
        %v2547 = vld [vmem:[%s808 + $0xc] sm:$0xf]
        %v2548 = vld [vmem:[%s808 + $0x10] sm:$0xf]
        %v2549 = vld [vmem:[%s808 + $0x14] sm:$0xf]
        %v2550 = vld [vmem:[%s808 + $0x18] sm:$0xf]
        %v2551 = vld [vmem:[%s808 + $0x1c] sm:$0xf]
        %v2552 = vld [vmem:[%s808 + $0x20] sm:$0xf]
        %v2553 = vld [vmem:[%s808 + $0x24] sm:$0xf]
        %v2554 = vld [vmem:[%s808 + $0x28] sm:$0xf]
        %v2555 = vld [vmem:[%s808 + $0x2c] sm:$0xf]
        %v2556 = vld [vmem:[%s808 + $0x30] sm:$0xf]
        %v2557 = vld [vmem:[%s808 + $0x34] sm:$0xf]
        %v2558 = vld [vmem:[%s808 + $0x38] sm:$0xf]
        %v2559 = vld [vmem:[%s808 + $0x3c] sm:$0xf]
        %v2560 = vld [vmem:[%s808 + $0x40] sm:$0xf]
        %v2561 = vld [vmem:[%s808 + $0x44] sm:$0xf]
        %v2562 = vld [vmem:[%s808 + $0x48] sm:$0xf]
        %v2563 = vld [vmem:[%s808 + $0x4c] sm:$0xf]
        %v2564 = vld [vmem:[%s808 + $0x50] sm:$0xf]
        %v2565 = vld [vmem:[%s808 + $0x54] sm:$0xf]
        %v2566 = vld [vmem:[%s808 + $0x58] sm:$0xf]
        %v2567 = vld [vmem:[%s808 + $0x5c] sm:$0xf]
        %v2568 = vld [vmem:[%s808 + $0x60] sm:$0xf]
        %v2569 = vld [vmem:[%s808 + $0x64] sm:$0xf]
        %v2570 = vld [vmem:[%s808 + $0x68] sm:$0xf]
        %v2571 = vld [vmem:[%s808 + $0x6c] sm:$0xf]
        %v2572 = vld [vmem:[%s808 + $0x70] sm:$0xf]
        %v2573 = vld [vmem:[%s808 + $0x74] sm:$0xf]
        %v2574 = vld [vmem:[%s808 + $0x78] sm:$0xf]
        %v2575 = vld [vmem:[%s808 + $0x7c] sm:$0xf]
        %v2576 = vld [vmem:[%s808 + $0x80] sm:$0xf]
        %v2577 = vld [vmem:[%s808 + $0x84] sm:$0xf]
        %v2578 = vld [vmem:[%s808 + $0x88] sm:$0xf]
        %v2579 = vld [vmem:[%s808 + $0x8c] sm:$0xf]
        %v2580 = vld [vmem:[%s808 + $0x90] sm:$0xf]
        %v2581 = vld [vmem:[%s808 + $0x94] sm:$0xf]
        %v2582 = vld [vmem:[%s808 + $0x98] sm:$0xf]
        %v2583 = vld [vmem:[%s808 + $0x9c] sm:$0xf]
        %v2584 = vld [vmem:[%s808 + $0xa0] sm:$0xf]
        %v2585 = vld [vmem:[%s808 + $0xa4] sm:$0xf]
        %v2586 = vld [vmem:[%s808 + $0xa8] sm:$0xf]
        %v2587 = vld [vmem:[%s808 + $0xac] sm:$0xf]
        %v2588 = vld [vmem:[%s808 + $0xb0] sm:$0xf]
        %v2589 = vld [vmem:[%s808 + $0xb4] sm:$0xf]
        %v2590 = vld [vmem:[%s808 + $0xb8] sm:$0xf]
        %v2591 = vld [vmem:[%s808 + $0xbc] sm:$0xf]
        %v2592 = vld [vmem:[%s808 + $0xc0] sm:$0xf]
        %v2593 = vld [vmem:[%s808 + $0xc4] sm:$0xf]
        %v2594 = vld [vmem:[%s808 + $0xc8] sm:$0xf]
        %v2595 = vld [vmem:[%s808 + $0xcc] sm:$0xf]
        %v2596 = vld [vmem:[%s808 + $0xd0] sm:$0xf]
        %v2597 = vld [vmem:[%s808 + $0xd4] sm:$0xf]
        %v2598 = vld [vmem:[%s808 + $0xd8] sm:$0xf]
        %v2599 = vld [vmem:[%s808 + $0xdc] sm:$0xf]
        %v2600 = vld [vmem:[%s808 + $0xe0] sm:$0xf]
        %v2601 = vld [vmem:[%s808 + $0xe4] sm:$0xf]
        %v2602 = vld [vmem:[%s808 + $0xe8] sm:$0xf]
        %v2603 = vld [vmem:[%s808 + $0xec] sm:$0xf]
        %v2604 = vld [vmem:[%s808 + $0xf0] sm:$0xf]
        %v2605 = vld [vmem:[%s808 + $0xf4] sm:$0xf]
        %v2606 = vld [vmem:[%s808 + $0xf8] sm:$0xf]
        %v2607 = vld [vmem:[%s808 + $0xfc] sm:$0xf]
        %v2608 = vld [vmem:[%s818] sm:$0x1]
        %v2609 = vperm.slane %v2608, 0
        %v2674 = vunpack.c.l.b16 %v2544
        %v2675 = vunpack.c.l.b16 %v2545
        %v2676 = vunpack.c.l.b16 %v2546
        %v2677 = vunpack.c.l.b16 %v2547
        %v2678 = vunpack.c.l.b16 %v2548
        %v2679 = vunpack.c.l.b16 %v2549
        %v2680 = vunpack.c.l.b16 %v2550
        %v2681 = vunpack.c.l.b16 %v2551
        %v2682 = vunpack.c.l.b16 %v2552
        %v2683 = vunpack.c.l.b16 %v2553
        %v2684 = vunpack.c.l.b16 %v2554
        %v2685 = vunpack.c.l.b16 %v2555
        %v2686 = vunpack.c.l.b16 %v2556
        %v2687 = vunpack.c.l.b16 %v2557
        %v2688 = vunpack.c.l.b16 %v2558
        %v2689 = vunpack.c.l.b16 %v2559
        %v2690 = vunpack.c.l.b16 %v2560
        %v2691 = vunpack.c.l.b16 %v2561
        %v2692 = vunpack.c.l.b16 %v2562
        %v2693 = vunpack.c.l.b16 %v2563
        %v2694 = vunpack.c.l.b16 %v2564
        %v2695 = vunpack.c.l.b16 %v2565
        %v2696 = vunpack.c.l.b16 %v2566
        %v2697 = vunpack.c.l.b16 %v2567
        %v2698 = vunpack.c.l.b16 %v2568
        %v2699 = vunpack.c.l.b16 %v2569
        %v2700 = vunpack.c.l.b16 %v2570
        %v2701 = vunpack.c.l.b16 %v2571
        %v2702 = vunpack.c.l.b16 %v2572
        %v2703 = vunpack.c.l.b16 %v2573
        %v2704 = vunpack.c.l.b16 %v2574
        %v2705 = vunpack.c.l.b16 %v2575
        %v2706 = vunpack.c.l.b16 %v2576
        %v2707 = vunpack.c.l.b16 %v2577
        %v2708 = vunpack.c.l.b16 %v2578
        %v2709 = vunpack.c.l.b16 %v2579
        %v2710 = vunpack.c.l.b16 %v2580
        %v2711 = vunpack.c.l.b16 %v2581
        %v2712 = vunpack.c.l.b16 %v2582
        %v2713 = vunpack.c.l.b16 %v2583
        %v2714 = vunpack.c.l.b16 %v2584
        %v2715 = vunpack.c.l.b16 %v2585
        %v2716 = vunpack.c.l.b16 %v2586
        %v2717 = vunpack.c.l.b16 %v2587
        %v2718 = vunpack.c.l.b16 %v2588
        %v2719 = vunpack.c.l.b16 %v2589
        %v2720 = vunpack.c.l.b16 %v2590
        %v2721 = vunpack.c.l.b16 %v2591
        %v2722 = vunpack.c.l.b16 %v2592
        %v2723 = vunpack.c.l.b16 %v2593
        %v2724 = vunpack.c.l.b16 %v2594
        %v2725 = vunpack.c.l.b16 %v2595
        %v2726 = vunpack.c.l.b16 %v2596
        %v2727 = vunpack.c.l.b16 %v2597
        %v2728 = vunpack.c.l.b16 %v2598
        %v2729 = vunpack.c.l.b16 %v2599
        %v2730 = vunpack.c.l.b16 %v2600
        %v2731 = vunpack.c.l.b16 %v2601
        %v2732 = vunpack.c.l.b16 %v2602
        %v2733 = vunpack.c.l.b16 %v2603
        %v2734 = vunpack.c.l.b16 %v2604
        %v2735 = vunpack.c.l.b16 %v2605
        %v2736 = vunpack.c.l.b16 %v2606
        %v2737 = vunpack.c.l.b16 %v2607
        %v2738 = vpack.c.b16 %v2675, %v2674
        %v2739 = vpack.c.b16 %v2677, %v2676
        %v2740 = vpack.c.b16 %v2679, %v2678
        %v2741 = vpack.c.b16 %v2681, %v2680
        %v2742 = vpack.c.b16 %v2683, %v2682
        %v2743 = vpack.c.b16 %v2685, %v2684
        %v2744 = vpack.c.b16 %v2687, %v2686
        %v2745 = vpack.c.b16 %v2689, %v2688
        %v2746 = vpack.c.b16 %v2691, %v2690
        %v2747 = vpack.c.b16 %v2693, %v2692
        %v2748 = vpack.c.b16 %v2695, %v2694
        %v2749 = vpack.c.b16 %v2697, %v2696
        %v2750 = vpack.c.b16 %v2699, %v2698
        %v2751 = vpack.c.b16 %v2701, %v2700
        %v2752 = vpack.c.b16 %v2703, %v2702
        %v2753 = vpack.c.b16 %v2705, %v2704
        %v2754 = vpack.c.b16 %v2707, %v2706
        %v2755 = vpack.c.b16 %v2709, %v2708
        %v2756 = vpack.c.b16 %v2711, %v2710
        %v2757 = vpack.c.b16 %v2713, %v2712
        %v2758 = vpack.c.b16 %v2715, %v2714
        %v2759 = vpack.c.b16 %v2717, %v2716
        %v2760 = vpack.c.b16 %v2719, %v2718
        %v2761 = vpack.c.b16 %v2721, %v2720
        %v2762 = vpack.c.b16 %v2723, %v2722
        %v2763 = vpack.c.b16 %v2725, %v2724
        %v2764 = vpack.c.b16 %v2727, %v2726
        %v2765 = vpack.c.b16 %v2729, %v2728
        %v2766 = vpack.c.b16 %v2731, %v2730
        %v2767 = vpack.c.b16 %v2733, %v2732
        %v2768 = vpack.c.b16 %v2735, %v2734
        %v2769 = vpack.c.b16 %v2737, %v2736
        %2802 = vmatpush.bf16.msra.mxu0 %v2745
        %2803 = vmatpush.bf16.msra.mxu0 %v2744
        %2804 = vmatpush.bf16.msra.mxu0 %v2743
        %2805 = vmatpush.bf16.msra.mxu0 %v2742
        %2806 = vmatpush.bf16.msra.mxu0 %v2741
        %2807 = vmatpush.bf16.msra.mxu0 %v2740
        %2808 = vmatpush.bf16.msra.mxu0 %v2739
        %2809 = vmatpush.bf16.msra.mxu0 %v2738
        %2810 = vmatmul.bf16.gmra.mxu0 %v2504
        %v2811 = vpop.f32.mrf.mxu0
        %v2812 = vadd.f32 %v2609, %v2811
        %v2813 = vpop.f32.mrf.mxu0
        %v2814 = vadd.f32 %v2609, %v2813
        %2815 = vmatmul.bf16.gmra.mxu0 %v2505
        %v2816 = vpop.f32.mrf.mxu0
        %v2817 = vadd.f32 %v2609, %v2816
        %v2818 = vpop.f32.mrf.mxu0
        %v2819 = vadd.f32 %v2609, %v2818
        %2820 = vdwg.mxu0
        %2821 = vmatpush.bf16.msra.mxu0 %v2753
        %2822 = vmatpush.bf16.msra.mxu0 %v2752
        %2823 = vmatpush.bf16.msra.mxu0 %v2751
        %2824 = vmatpush.bf16.msra.mxu0 %v2750
        %2825 = vmatpush.bf16.msra.mxu0 %v2749
        %2826 = vmatpush.bf16.msra.mxu0 %v2748
        %2827 = vmatpush.bf16.msra.mxu0 %v2747
        %2828 = vmatpush.bf16.msra.mxu0 %v2746
        %2829 = vmatmul.bf16.gmra.mxu0 %v2516
        %v2830 = vpop.f32.mrf.mxu0
        %v2831 = vadd.f32 %v2812, %v2830
        %v2832 = vpop.f32.mrf.mxu0
        %v2833 = vadd.f32 %v2814, %v2832
        %2834 = vmatmul.bf16.gmra.mxu0 %v2517
        %v2835 = vpop.f32.mrf.mxu0
        %v2836 = vadd.f32 %v2817, %v2835
        %v2837 = vpop.f32.mrf.mxu0
        %v2838 = vadd.f32 %v2819, %v2837
        %2839 = vdwg.mxu0
        %2840 = vmatpush.bf16.msra.mxu0 %v2761
        %2841 = vmatpush.bf16.msra.mxu0 %v2760
        %2842 = vmatpush.bf16.msra.mxu0 %v2759
        %2843 = vmatpush.bf16.msra.mxu0 %v2758
        %2844 = vmatpush.bf16.msra.mxu0 %v2757
        %2845 = vmatpush.bf16.msra.mxu0 %v2756
        %2846 = vmatpush.bf16.msra.mxu0 %v2755
        %2847 = vmatpush.bf16.msra.mxu0 %v2754
        %2848 = vmatmul.bf16.gmra.mxu0 %v2528
        %v2849 = vpop.f32.mrf.mxu0
        %v2850 = vadd.f32 %v2831, %v2849
        %v2851 = vpop.f32.mrf.mxu0
        %v2852 = vadd.f32 %v2833, %v2851
        %2853 = vmatmul.bf16.gmra.mxu0 %v2529
        %v2854 = vpop.f32.mrf.mxu0
        %v2855 = vadd.f32 %v2836, %v2854
        %v2856 = vpop.f32.mrf.mxu0
        %v2857 = vadd.f32 %v2838, %v2856
        %2858 = vdwg.mxu0
        %2859 = vmatpush.bf16.msra.mxu0 %v2769
        %2860 = vmatpush.bf16.msra.mxu0 %v2768
        %2861 = vmatpush.bf16.msra.mxu0 %v2767
        %2862 = vmatpush.bf16.msra.mxu0 %v2766
        %2863 = vmatpush.bf16.msra.mxu0 %v2765
        %2864 = vmatpush.bf16.msra.mxu0 %v2764
        %2865 = vmatpush.bf16.msra.mxu0 %v2763
        %2866 = vmatpush.bf16.msra.mxu0 %v2762
        %2867 = vmatmul.bf16.gmra.mxu0 %v2540
        %v2868 = vpop.f32.mrf.mxu0
        %v2869 = vadd.f32 %v2850, %v2868
        %v2870 = vpop.f32.mrf.mxu0
        %v2871 = vadd.f32 %v2852, %v2870
        %2872 = vmatmul.bf16.gmra.mxu0 %v2541
        %v2873 = vpop.f32.mrf.mxu0
        %v2874 = vadd.f32 %v2855, %v2873
        %v2875 = vpop.f32.mrf.mxu0
        %v2876 = vadd.f32 %v2857, %v2875
        %2877 = vdwg.mxu0
        %v2878 = vadd.f32 %v1033, %v2869
        %v2879 = vadd.f32 %v1034, %v2871
        %v2880 = vadd.f32 %v1035, %v2874
        %v2881 = vadd.f32 %v1036, %v2876
        %v2882 = vld [vmem:[%s956 + $0x1] sm:$0x1]
        %v2883 = vld [vmem:[%s768 + $0x1] sm:$0x1]
        %2884 = vadd.xlane.f32.xlu0 %v1037
        %v2885 = vpop.xlane.xlu0 %2884
        %2886 = vadd.xlane.f32.xlu0 %v1038
        %v2887 = vpop.xlane.xlu0 %2886
        %v2888 = vmul.f32 %v2885, %v1055
        %v2889 = vmul.f32 %v2887, %v1055
        %v2890 = vsub.f32 %v1037, %v2888
        %v2891 = vsub.f32 %v1038, %v2889
        %v2892 = vmul.f32 %v2890, %v2890
        %v2893 = vmul.f32 %v2891, %v2891
        %2894 = vadd.xlane.f32.xlu0 %v2892
        %v2895 = vpop.xlane.xlu0 %2894
        %2896 = vadd.xlane.f32.xlu0 %v2893
        %v2897 = vpop.xlane.xlu0 %2896
        %v2898 = vmul.f32 %v2895, %v1055
        %v2899 = vmul.f32 %v2897, %v1055
        %v2900 = vadd.f32 %v2898, 1e-05
        %v2901 = vadd.f32 %v2899, 1e-05
        %v2902 = vrsqrt.pop %v2900
        %v2903 = vmul.f32 %v2902, %v2900
        %v2904 = vmul.f32 %v2903, %v2902
        %v2905 = vmul.f32 0.5, %v2904
        %v2906 = vsub.f32 1.5, %v2905
        %v2907 = vmul.f32 %v2902, %v2906
        %vm2908 = vweird.f32 %v2900
        %vm2909 = vweird.f32 %v2902
        %vm2910 = vmor %vm2908, %vm2909
        %v2911 = vsel %vm2910, %v2902, %v2907
        %v2912 = vrsqrt.pop %v2901
        %v2913 = vmul.f32 %v2912, %v2901
        %v2914 = vmul.f32 %v2913, %v2912
        %v2915 = vmul.f32 0.5, %v2914
        %v2916 = vsub.f32 1.5, %v2915
        %v2917 = vmul.f32 %v2912, %v2916
        %vm2918 = vweird.f32 %v2901
        %vm2919 = vweird.f32 %v2912
        %vm2920 = vmor %vm2918, %vm2919
        %v2921 = vsel %vm2920, %v2912, %v2917
        %v2922 = vmul.f32 %v2890, %v2911
        %v2923 = vmul.f32 %v2891, %v2921
        %v2924 = vperm.slane %v2882, 0
        %v2925 = vmul.f32 %v2922, %v2924
        %v2926 = vmul.f32 %v2923, %v2924
        %v2927 = vperm.slane %v2883, 0
        %v2928 = vadd.f32 %v2925, %v2927
        %v2929 = vadd.f32 %v2926, %v2927
        %v2930 = vpack.c.bf16 %v2929, %v2928
        %2932 = vset.pattern.permute.xlu0 0
        %2933 = vperm.xlu0 %2932, %v1030
        %v2934 = vpop.permute.xlu0 %2933
        %2937 = vset.pattern.permute.xlu0 0
        %2938 = vperm.xlu0 %2937, %v1031
        %v2939 = vpop.permute.xlu0 %2938
        %v2942 = vperm.slane %v1032, 0
        %vm2944 = vcmp.eq.f32.partialorder %v2934, %v2942
        %vm2945 = vcmp.eq.f32.partialorder %v2939, %v2942
        %v2946 = vsel %vm2944, 0.0, -1e+09
        %v2947 = vsel %vm2945, 0.0, -1e+09
        %s2948 = scalar_lea.vmem %s778, 256 [#allocation6]
        %v2949 = vld [vmem:[%s2948] sm:$0xff]
        %v2950 = vld [vmem:[%s2948 + $0x8] sm:$0xff]
        %v2951 = vld [vmem:[%s2948 + $0x10] sm:$0xff]
        %v2952 = vld [vmem:[%s2948 + $0x18] sm:$0xff]
        %v2953 = vld [vmem:[%s2948 + $0x20] sm:$0xff]
        %v2954 = vld [vmem:[%s2948 + $0x28] sm:$0xff]
        %v2955 = vld [vmem:[%s2948 + $0x30] sm:$0xff]
        %v2956 = vld [vmem:[%s2948 + $0x38] sm:$0xff]
        %v2957 = vld [vmem:[%s2948 + $0x40] sm:$0xff]
        %v2958 = vld [vmem:[%s2948 + $0x48] sm:$0xff]
        %v2959 = vld [vmem:[%s2948 + $0x50] sm:$0xff]
        %v2960 = vld [vmem:[%s2948 + $0x58] sm:$0xff]
        %v2961 = vld [vmem:[%s2948 + $0x60] sm:$0xff]
        %v2962 = vld [vmem:[%s2948 + $0x68] sm:$0xff]
        %v2963 = vld [vmem:[%s2948 + $0x70] sm:$0xff]
        %v2964 = vld [vmem:[%s2948 + $0x78] sm:$0xff]
        %v2965 = vld [vmem:[%s2948 + $0x80] sm:$0xff]
        %v2966 = vld [vmem:[%s2948 + $0x88] sm:$0xff]
        %v2967 = vld [vmem:[%s2948 + $0x90] sm:$0xff]
        %v2968 = vld [vmem:[%s2948 + $0x98] sm:$0xff]
        %v2969 = vld [vmem:[%s2948 + $0xa0] sm:$0xff]
        %v2970 = vld [vmem:[%s2948 + $0xa8] sm:$0xff]
        %v2971 = vld [vmem:[%s2948 + $0xb0] sm:$0xff]
        %v2972 = vld [vmem:[%s2948 + $0xb8] sm:$0xff]
        %v2973 = vld [vmem:[%s2948 + $0xc0] sm:$0xff]
        %v2974 = vld [vmem:[%s2948 + $0xc8] sm:$0xff]
        %v2975 = vld [vmem:[%s2948 + $0xd0] sm:$0xff]
        %v2976 = vld [vmem:[%s2948 + $0xd8] sm:$0xff]
        %v2977 = vld [vmem:[%s2948 + $0xe0] sm:$0xff]
        %v2978 = vld [vmem:[%s2948 + $0xe8] sm:$0xff]
        %v2979 = vld [vmem:[%s2948 + $0xf0] sm:$0xff]
        %v2980 = vld [vmem:[%s2948 + $0xf8] sm:$0xff]
        %v3013 = vunpack.c.l.b16 %v2949
        %v3014 = vunpack.c.h.b16 %v2949
        %v3015 = vunpack.c.l.b16 %v2950
        %v3016 = vunpack.c.h.b16 %v2950
        %v3017 = vunpack.c.l.b16 %v2951
        %v3018 = vunpack.c.h.b16 %v2951
        %v3019 = vunpack.c.l.b16 %v2952
        %v3020 = vunpack.c.h.b16 %v2952
        %v3021 = vunpack.c.l.b16 %v2953
        %v3022 = vunpack.c.h.b16 %v2953
        %v3023 = vunpack.c.l.b16 %v2954
        %v3024 = vunpack.c.h.b16 %v2954
        %v3025 = vunpack.c.l.b16 %v2955
        %v3026 = vunpack.c.h.b16 %v2955
        %v3027 = vunpack.c.l.b16 %v2956
        %v3028 = vunpack.c.h.b16 %v2956
        %v3029 = vunpack.c.l.b16 %v2957
        %v3030 = vunpack.c.h.b16 %v2957
        %v3031 = vunpack.c.l.b16 %v2958
        %v3032 = vunpack.c.h.b16 %v2958
        %v3033 = vunpack.c.l.b16 %v2959
        %v3034 = vunpack.c.h.b16 %v2959
        %v3035 = vunpack.c.l.b16 %v2960
        %v3036 = vunpack.c.h.b16 %v2960
        %v3037 = vunpack.c.l.b16 %v2961
        %v3038 = vunpack.c.h.b16 %v2961
        %v3039 = vunpack.c.l.b16 %v2962
        %v3040 = vunpack.c.h.b16 %v2962
        %v3041 = vunpack.c.l.b16 %v2963
        %v3042 = vunpack.c.h.b16 %v2963
        %v3043 = vunpack.c.l.b16 %v2964
        %v3044 = vunpack.c.h.b16 %v2964
        %v3045 = vunpack.c.l.b16 %v2965
        %v3046 = vunpack.c.h.b16 %v2965
        %v3047 = vunpack.c.l.b16 %v2966
        %v3048 = vunpack.c.h.b16 %v2966
        %v3049 = vunpack.c.l.b16 %v2967
        %v3050 = vunpack.c.h.b16 %v2967
        %v3051 = vunpack.c.l.b16 %v2968
        %v3052 = vunpack.c.h.b16 %v2968
        %v3053 = vunpack.c.l.b16 %v2969
        %v3054 = vunpack.c.h.b16 %v2969
        %v3055 = vunpack.c.l.b16 %v2970
        %v3056 = vunpack.c.h.b16 %v2970
        %v3057 = vunpack.c.l.b16 %v2971
        %v3058 = vunpack.c.h.b16 %v2971
        %v3059 = vunpack.c.l.b16 %v2972
        %v3060 = vunpack.c.h.b16 %v2972
        %v3061 = vunpack.c.l.b16 %v2973
        %v3062 = vunpack.c.h.b16 %v2973
        %v3063 = vunpack.c.l.b16 %v2974
        %v3064 = vunpack.c.h.b16 %v2974
        %v3065 = vunpack.c.l.b16 %v2975
        %v3066 = vunpack.c.h.b16 %v2975
        %v3067 = vunpack.c.l.b16 %v2976
        %v3068 = vunpack.c.h.b16 %v2976
        %v3069 = vunpack.c.l.b16 %v2977
        %v3070 = vunpack.c.h.b16 %v2977
        %v3071 = vunpack.c.l.b16 %v2978
        %v3072 = vunpack.c.h.b16 %v2978
        %v3073 = vunpack.c.l.b16 %v2979
        %v3074 = vunpack.c.h.b16 %v2979
        %v3075 = vunpack.c.l.b16 %v2980
        %v3076 = vunpack.c.h.b16 %v2980
        %v3077 = vpack.c.b16 %v3017, %v3013
        %v3078 = vpack.c.b16 %v3018, %v3014
        %v3079 = vpack.c.b16 %v3019, %v3015
        %v3080 = vpack.c.b16 %v3020, %v3016
        %v3081 = vpack.c.b16 %v3025, %v3021
        %v3082 = vpack.c.b16 %v3026, %v3022
        %v3083 = vpack.c.b16 %v3027, %v3023
        %v3084 = vpack.c.b16 %v3028, %v3024
        %v3085 = vpack.c.b16 %v3033, %v3029
        %v3086 = vpack.c.b16 %v3034, %v3030
        %v3087 = vpack.c.b16 %v3035, %v3031
        %v3088 = vpack.c.b16 %v3036, %v3032
        %v3089 = vpack.c.b16 %v3041, %v3037
        %v3090 = vpack.c.b16 %v3042, %v3038
        %v3091 = vpack.c.b16 %v3043, %v3039
        %v3092 = vpack.c.b16 %v3044, %v3040
        %v3093 = vpack.c.b16 %v3049, %v3045
        %v3094 = vpack.c.b16 %v3050, %v3046
        %v3095 = vpack.c.b16 %v3051, %v3047
        %v3096 = vpack.c.b16 %v3052, %v3048
        %v3097 = vpack.c.b16 %v3057, %v3053
        %v3098 = vpack.c.b16 %v3058, %v3054
        %v3099 = vpack.c.b16 %v3059, %v3055
        %v3100 = vpack.c.b16 %v3060, %v3056
        %v3101 = vpack.c.b16 %v3065, %v3061
        %v3102 = vpack.c.b16 %v3066, %v3062
        %v3103 = vpack.c.b16 %v3067, %v3063
        %v3104 = vpack.c.b16 %v3068, %v3064
        %v3105 = vpack.c.b16 %v3073, %v3069
        %v3106 = vpack.c.b16 %v3074, %v3070
        %v3107 = vpack.c.b16 %v3075, %v3071
        %v3108 = vpack.c.b16 %v3076, %v3072
        %3141 = vmatpush.bf16.msra.mxu0 %v3105
        %3142 = vmatpush.bf16.msra.mxu0 %v3101
        %3143 = vmatpush.bf16.msra.mxu0 %v3097
        %3144 = vmatpush.bf16.msra.mxu0 %v3093
        %3145 = vmatpush.bf16.msra.mxu0 %v3089
        %3146 = vmatpush.bf16.msra.mxu0 %v3085
        %3147 = vmatpush.bf16.msra.mxu0 %v3081
        %3148 = vmatpush.bf16.msra.mxu0 %v3077
        %3149 = vmatmul.bf16.gmra.mxu0 %v2930
        %v3150 = vpop.f32.mrf.mxu0
        %v3151 = vadd.f32 0.0, %v3150
        %v3152 = vpop.f32.mrf.mxu0
        %v3153 = vadd.f32 0.0, %v3152
        %3154 = vdwg.mxu0
        %3155 = vmatpush.bf16.msra.mxu0 %v3106
        %3156 = vmatpush.bf16.msra.mxu0 %v3102
        %3157 = vmatpush.bf16.msra.mxu0 %v3098
        %3158 = vmatpush.bf16.msra.mxu0 %v3094
        %3159 = vmatpush.bf16.msra.mxu0 %v3090
        %3160 = vmatpush.bf16.msra.mxu0 %v3086
        %3161 = vmatpush.bf16.msra.mxu0 %v3082
        %3162 = vmatpush.bf16.msra.mxu0 %v3078
        %3163 = vmatmul.bf16.gmra.mxu0 %v2930
        %v3164 = vpop.f32.mrf.mxu0
        %v3165 = vadd.f32 0.0, %v3164
        %v3166 = vpop.f32.mrf.mxu0
        %v3167 = vadd.f32 0.0, %v3166
        %3168 = vdwg.mxu0
        %3169 = vmatpush.bf16.msra.mxu0 %v3107
        %3170 = vmatpush.bf16.msra.mxu0 %v3103
        %3171 = vmatpush.bf16.msra.mxu0 %v3099
        %3172 = vmatpush.bf16.msra.mxu0 %v3095
        %3173 = vmatpush.bf16.msra.mxu0 %v3091
        %3174 = vmatpush.bf16.msra.mxu0 %v3087
        %3175 = vmatpush.bf16.msra.mxu0 %v3083
        %3176 = vmatpush.bf16.msra.mxu0 %v3079
        %3177 = vmatmul.bf16.gmra.mxu0 %v2930
        %v3178 = vpop.f32.mrf.mxu0
        %v3179 = vadd.f32 0.0, %v3178
        %v3180 = vpop.f32.mrf.mxu0
        %v3181 = vadd.f32 0.0, %v3180
        %3182 = vdwg.mxu0
        %3183 = vmatpush.bf16.msra.mxu0 %v3108
        %3184 = vmatpush.bf16.msra.mxu0 %v3104
        %3185 = vmatpush.bf16.msra.mxu0 %v3100
        %3186 = vmatpush.bf16.msra.mxu0 %v3096
        %3187 = vmatpush.bf16.msra.mxu0 %v3092
        %3188 = vmatpush.bf16.msra.mxu0 %v3088
        %3189 = vmatpush.bf16.msra.mxu0 %v3084
        %3190 = vmatpush.bf16.msra.mxu0 %v3080
        %3191 = vmatmul.bf16.gmra.mxu0 %v2930
        %v3192 = vpop.f32.mrf.mxu0
        %v3193 = vadd.f32 0.0, %v3192
        %v3194 = vpop.f32.mrf.mxu0
        %v3195 = vadd.f32 0.0, %v3194
        %3196 = vdwg.mxu0
        %v3197 = vpack.c.bf16 %v3165, %v3151
        %v3198 = vpack.c.bf16 %v3193, %v3179
        %v3199 = vpack.c.bf16 %v3167, %v3153
        %v3200 = vpack.c.bf16 %v3195, %v3181
        %s3201 = scalar_lea.vmem %s788, 256 [#allocation8]
        %v3202 = vld [vmem:[%s3201] sm:$0xff]
        %v3203 = vld [vmem:[%s3201 + $0x8] sm:$0xff]
        %v3204 = vld [vmem:[%s3201 + $0x10] sm:$0xff]
        %v3205 = vld [vmem:[%s3201 + $0x18] sm:$0xff]
        %v3206 = vld [vmem:[%s3201 + $0x20] sm:$0xff]
        %v3207 = vld [vmem:[%s3201 + $0x28] sm:$0xff]
        %v3208 = vld [vmem:[%s3201 + $0x30] sm:$0xff]
        %v3209 = vld [vmem:[%s3201 + $0x38] sm:$0xff]
        %v3210 = vld [vmem:[%s3201 + $0x40] sm:$0xff]
        %v3211 = vld [vmem:[%s3201 + $0x48] sm:$0xff]
        %v3212 = vld [vmem:[%s3201 + $0x50] sm:$0xff]
        %v3213 = vld [vmem:[%s3201 + $0x58] sm:$0xff]
        %v3214 = vld [vmem:[%s3201 + $0x60] sm:$0xff]
        %v3215 = vld [vmem:[%s3201 + $0x68] sm:$0xff]
        %v3216 = vld [vmem:[%s3201 + $0x70] sm:$0xff]
        %v3217 = vld [vmem:[%s3201 + $0x78] sm:$0xff]
        %v3218 = vld [vmem:[%s3201 + $0x80] sm:$0xff]
        %v3219 = vld [vmem:[%s3201 + $0x88] sm:$0xff]
        %v3220 = vld [vmem:[%s3201 + $0x90] sm:$0xff]
        %v3221 = vld [vmem:[%s3201 + $0x98] sm:$0xff]
        %v3222 = vld [vmem:[%s3201 + $0xa0] sm:$0xff]
        %v3223 = vld [vmem:[%s3201 + $0xa8] sm:$0xff]
        %v3224 = vld [vmem:[%s3201 + $0xb0] sm:$0xff]
        %v3225 = vld [vmem:[%s3201 + $0xb8] sm:$0xff]
        %v3226 = vld [vmem:[%s3201 + $0xc0] sm:$0xff]
        %v3227 = vld [vmem:[%s3201 + $0xc8] sm:$0xff]
        %v3228 = vld [vmem:[%s3201 + $0xd0] sm:$0xff]
        %v3229 = vld [vmem:[%s3201 + $0xd8] sm:$0xff]
        %v3230 = vld [vmem:[%s3201 + $0xe0] sm:$0xff]
        %v3231 = vld [vmem:[%s3201 + $0xe8] sm:$0xff]
        %v3232 = vld [vmem:[%s3201 + $0xf0] sm:$0xff]
        %v3233 = vld [vmem:[%s3201 + $0xf8] sm:$0xff]
        %v3266 = vunpack.c.l.b16 %v3202
        %v3267 = vunpack.c.h.b16 %v3202
        %v3268 = vunpack.c.l.b16 %v3203
        %v3269 = vunpack.c.h.b16 %v3203
        %v3270 = vunpack.c.l.b16 %v3204
        %v3271 = vunpack.c.h.b16 %v3204
        %v3272 = vunpack.c.l.b16 %v3205
        %v3273 = vunpack.c.h.b16 %v3205
        %v3274 = vunpack.c.l.b16 %v3206
        %v3275 = vunpack.c.h.b16 %v3206
        %v3276 = vunpack.c.l.b16 %v3207
        %v3277 = vunpack.c.h.b16 %v3207
        %v3278 = vunpack.c.l.b16 %v3208
        %v3279 = vunpack.c.h.b16 %v3208
        %v3280 = vunpack.c.l.b16 %v3209
        %v3281 = vunpack.c.h.b16 %v3209
        %v3282 = vunpack.c.l.b16 %v3210
        %v3283 = vunpack.c.h.b16 %v3210
        %v3284 = vunpack.c.l.b16 %v3211
        %v3285 = vunpack.c.h.b16 %v3211
        %v3286 = vunpack.c.l.b16 %v3212
        %v3287 = vunpack.c.h.b16 %v3212
        %v3288 = vunpack.c.l.b16 %v3213
        %v3289 = vunpack.c.h.b16 %v3213
        %v3290 = vunpack.c.l.b16 %v3214
        %v3291 = vunpack.c.h.b16 %v3214
        %v3292 = vunpack.c.l.b16 %v3215
        %v3293 = vunpack.c.h.b16 %v3215
        %v3294 = vunpack.c.l.b16 %v3216
        %v3295 = vunpack.c.h.b16 %v3216
        %v3296 = vunpack.c.l.b16 %v3217
        %v3297 = vunpack.c.h.b16 %v3217
        %v3298 = vunpack.c.l.b16 %v3218
        %v3299 = vunpack.c.h.b16 %v3218
        %v3300 = vunpack.c.l.b16 %v3219
        %v3301 = vunpack.c.h.b16 %v3219
        %v3302 = vunpack.c.l.b16 %v3220
        %v3303 = vunpack.c.h.b16 %v3220
        %v3304 = vunpack.c.l.b16 %v3221
        %v3305 = vunpack.c.h.b16 %v3221
        %v3306 = vunpack.c.l.b16 %v3222
        %v3307 = vunpack.c.h.b16 %v3222
        %v3308 = vunpack.c.l.b16 %v3223
        %v3309 = vunpack.c.h.b16 %v3223
        %v3310 = vunpack.c.l.b16 %v3224
        %v3311 = vunpack.c.h.b16 %v3224
        %v3312 = vunpack.c.l.b16 %v3225
        %v3313 = vunpack.c.h.b16 %v3225
        %v3314 = vunpack.c.l.b16 %v3226
        %v3315 = vunpack.c.h.b16 %v3226
        %v3316 = vunpack.c.l.b16 %v3227
        %v3317 = vunpack.c.h.b16 %v3227
        %v3318 = vunpack.c.l.b16 %v3228
        %v3319 = vunpack.c.h.b16 %v3228
        %v3320 = vunpack.c.l.b16 %v3229
        %v3321 = vunpack.c.h.b16 %v3229
        %v3322 = vunpack.c.l.b16 %v3230
        %v3323 = vunpack.c.h.b16 %v3230
        %v3324 = vunpack.c.l.b16 %v3231
        %v3325 = vunpack.c.h.b16 %v3231
        %v3326 = vunpack.c.l.b16 %v3232
        %v3327 = vunpack.c.h.b16 %v3232
        %v3328 = vunpack.c.l.b16 %v3233
        %v3329 = vunpack.c.h.b16 %v3233
        %v3330 = vpack.c.b16 %v3270, %v3266
        %v3331 = vpack.c.b16 %v3271, %v3267
        %v3332 = vpack.c.b16 %v3272, %v3268
        %v3333 = vpack.c.b16 %v3273, %v3269
        %v3334 = vpack.c.b16 %v3278, %v3274
        %v3335 = vpack.c.b16 %v3279, %v3275
        %v3336 = vpack.c.b16 %v3280, %v3276
        %v3337 = vpack.c.b16 %v3281, %v3277
        %v3338 = vpack.c.b16 %v3286, %v3282
        %v3339 = vpack.c.b16 %v3287, %v3283
        %v3340 = vpack.c.b16 %v3288, %v3284
        %v3341 = vpack.c.b16 %v3289, %v3285
        %v3342 = vpack.c.b16 %v3294, %v3290
        %v3343 = vpack.c.b16 %v3295, %v3291
        %v3344 = vpack.c.b16 %v3296, %v3292
        %v3345 = vpack.c.b16 %v3297, %v3293
        %v3346 = vpack.c.b16 %v3302, %v3298
        %v3347 = vpack.c.b16 %v3303, %v3299
        %v3348 = vpack.c.b16 %v3304, %v3300
        %v3349 = vpack.c.b16 %v3305, %v3301
        %v3350 = vpack.c.b16 %v3310, %v3306
        %v3351 = vpack.c.b16 %v3311, %v3307
        %v3352 = vpack.c.b16 %v3312, %v3308
        %v3353 = vpack.c.b16 %v3313, %v3309
        %v3354 = vpack.c.b16 %v3318, %v3314
        %v3355 = vpack.c.b16 %v3319, %v3315
        %v3356 = vpack.c.b16 %v3320, %v3316
        %v3357 = vpack.c.b16 %v3321, %v3317
        %v3358 = vpack.c.b16 %v3326, %v3322
        %v3359 = vpack.c.b16 %v3327, %v3323
        %v3360 = vpack.c.b16 %v3328, %v3324
        %v3361 = vpack.c.b16 %v3329, %v3325
        %3394 = vmatpush.bf16.msra.mxu0 %v3358
        %3395 = vmatpush.bf16.msra.mxu0 %v3354
        %3396 = vmatpush.bf16.msra.mxu0 %v3350
        %3397 = vmatpush.bf16.msra.mxu0 %v3346
        %3398 = vmatpush.bf16.msra.mxu0 %v3342
        %3399 = vmatpush.bf16.msra.mxu0 %v3338
        %3400 = vmatpush.bf16.msra.mxu0 %v3334
        %3401 = vmatpush.bf16.msra.mxu0 %v3330
        %3402 = vmatmul.bf16.gmra.mxu0 %v2930
        %v3403 = vpop.f32.mrf.mxu0
        %v3404 = vadd.f32 0.0, %v3403
        %v3405 = vpop.f32.mrf.mxu0
        %v3406 = vadd.f32 0.0, %v3405
        %3407 = vdwg.mxu0
        %3408 = vmatpush.bf16.msra.mxu0 %v3359
        %3409 = vmatpush.bf16.msra.mxu0 %v3355
        %3410 = vmatpush.bf16.msra.mxu0 %v3351
        %3411 = vmatpush.bf16.msra.mxu0 %v3347
        %3412 = vmatpush.bf16.msra.mxu0 %v3343
        %3413 = vmatpush.bf16.msra.mxu0 %v3339
        %3414 = vmatpush.bf16.msra.mxu0 %v3335
        %3415 = vmatpush.bf16.msra.mxu0 %v3331
        %3416 = vmatmul.bf16.gmra.mxu0 %v2930
        %v3417 = vpop.f32.mrf.mxu0
        %v3418 = vadd.f32 0.0, %v3417
        %v3419 = vpop.f32.mrf.mxu0
        %v3420 = vadd.f32 0.0, %v3419
        %3421 = vdwg.mxu0
        %3422 = vmatpush.bf16.msra.mxu0 %v3360
        %3423 = vmatpush.bf16.msra.mxu0 %v3356
        %3424 = vmatpush.bf16.msra.mxu0 %v3352
        %3425 = vmatpush.bf16.msra.mxu0 %v3348
        %3426 = vmatpush.bf16.msra.mxu0 %v3344
        %3427 = vmatpush.bf16.msra.mxu0 %v3340
        %3428 = vmatpush.bf16.msra.mxu0 %v3336
        %3429 = vmatpush.bf16.msra.mxu0 %v3332
        %3430 = vmatmul.bf16.gmra.mxu0 %v2930
        %v3431 = vpop.f32.mrf.mxu0
        %v3432 = vadd.f32 0.0, %v3431
        %v3433 = vpop.f32.mrf.mxu0
        %v3434 = vadd.f32 0.0, %v3433
        %3435 = vdwg.mxu0
        %3436 = vmatpush.bf16.msra.mxu0 %v3361
        %3437 = vmatpush.bf16.msra.mxu0 %v3357
        %3438 = vmatpush.bf16.msra.mxu0 %v3353
        %3439 = vmatpush.bf16.msra.mxu0 %v3349
        %3440 = vmatpush.bf16.msra.mxu0 %v3345
        %3441 = vmatpush.bf16.msra.mxu0 %v3341
        %3442 = vmatpush.bf16.msra.mxu0 %v3337
        %3443 = vmatpush.bf16.msra.mxu0 %v3333
        %3444 = vmatmul.bf16.gmra.mxu0 %v2930
        %v3445 = vpop.f32.mrf.mxu0
        %v3446 = vadd.f32 0.0, %v3445
        %v3447 = vpop.f32.mrf.mxu0
        %v3448 = vadd.f32 0.0, %v3447
        %3449 = vdwg.mxu0
        %v3450 = vpack.c.bf16 %v3418, %v3404
        %v3451 = vpack.c.bf16 %v3446, %v3432
        %v3452 = vpack.c.bf16 %v3420, %v3406
        %v3453 = vpack.c.bf16 %v3448, %v3434
        %s3454 = scalar_lea.vmem %s798, 256 [#allocation9]
        %v3455 = vld [vmem:[%s3454] sm:$0xff]
        %v3456 = vld [vmem:[%s3454 + $0x8] sm:$0xff]
        %v3457 = vld [vmem:[%s3454 + $0x10] sm:$0xff]
        %v3458 = vld [vmem:[%s3454 + $0x18] sm:$0xff]
        %v3459 = vld [vmem:[%s3454 + $0x20] sm:$0xff]
        %v3460 = vld [vmem:[%s3454 + $0x28] sm:$0xff]
        %v3461 = vld [vmem:[%s3454 + $0x30] sm:$0xff]
        %v3462 = vld [vmem:[%s3454 + $0x38] sm:$0xff]
        %v3463 = vld [vmem:[%s3454 + $0x40] sm:$0xff]
        %v3464 = vld [vmem:[%s3454 + $0x48] sm:$0xff]
        %v3465 = vld [vmem:[%s3454 + $0x50] sm:$0xff]
        %v3466 = vld [vmem:[%s3454 + $0x58] sm:$0xff]
        %v3467 = vld [vmem:[%s3454 + $0x60] sm:$0xff]
        %v3468 = vld [vmem:[%s3454 + $0x68] sm:$0xff]
        %v3469 = vld [vmem:[%s3454 + $0x70] sm:$0xff]
        %v3470 = vld [vmem:[%s3454 + $0x78] sm:$0xff]
        %v3471 = vld [vmem:[%s3454 + $0x80] sm:$0xff]
        %v3472 = vld [vmem:[%s3454 + $0x88] sm:$0xff]
        %v3473 = vld [vmem:[%s3454 + $0x90] sm:$0xff]
        %v3474 = vld [vmem:[%s3454 + $0x98] sm:$0xff]
        %v3475 = vld [vmem:[%s3454 + $0xa0] sm:$0xff]
        %v3476 = vld [vmem:[%s3454 + $0xa8] sm:$0xff]
        %v3477 = vld [vmem:[%s3454 + $0xb0] sm:$0xff]
        %v3478 = vld [vmem:[%s3454 + $0xb8] sm:$0xff]
        %v3479 = vld [vmem:[%s3454 + $0xc0] sm:$0xff]
        %v3480 = vld [vmem:[%s3454 + $0xc8] sm:$0xff]
        %v3481 = vld [vmem:[%s3454 + $0xd0] sm:$0xff]
        %v3482 = vld [vmem:[%s3454 + $0xd8] sm:$0xff]
        %v3483 = vld [vmem:[%s3454 + $0xe0] sm:$0xff]
        %v3484 = vld [vmem:[%s3454 + $0xe8] sm:$0xff]
        %v3485 = vld [vmem:[%s3454 + $0xf0] sm:$0xff]
        %v3486 = vld [vmem:[%s3454 + $0xf8] sm:$0xff]
        %v3519 = vunpack.c.l.b16 %v3455
        %v3520 = vunpack.c.h.b16 %v3455
        %v3521 = vunpack.c.l.b16 %v3456
        %v3522 = vunpack.c.h.b16 %v3456
        %v3523 = vunpack.c.l.b16 %v3457
        %v3524 = vunpack.c.h.b16 %v3457
        %v3525 = vunpack.c.l.b16 %v3458
        %v3526 = vunpack.c.h.b16 %v3458
        %v3527 = vunpack.c.l.b16 %v3459
        %v3528 = vunpack.c.h.b16 %v3459
        %v3529 = vunpack.c.l.b16 %v3460
        %v3530 = vunpack.c.h.b16 %v3460
        %v3531 = vunpack.c.l.b16 %v3461
        %v3532 = vunpack.c.h.b16 %v3461
        %v3533 = vunpack.c.l.b16 %v3462
        %v3534 = vunpack.c.h.b16 %v3462
        %v3535 = vunpack.c.l.b16 %v3463
        %v3536 = vunpack.c.h.b16 %v3463
        %v3537 = vunpack.c.l.b16 %v3464
        %v3538 = vunpack.c.h.b16 %v3464
        %v3539 = vunpack.c.l.b16 %v3465
        %v3540 = vunpack.c.h.b16 %v3465
        %v3541 = vunpack.c.l.b16 %v3466
        %v3542 = vunpack.c.h.b16 %v3466
        %v3543 = vunpack.c.l.b16 %v3467
        %v3544 = vunpack.c.h.b16 %v3467
        %v3545 = vunpack.c.l.b16 %v3468
        %v3546 = vunpack.c.h.b16 %v3468
        %v3547 = vunpack.c.l.b16 %v3469
        %v3548 = vunpack.c.h.b16 %v3469
        %v3549 = vunpack.c.l.b16 %v3470
        %v3550 = vunpack.c.h.b16 %v3470
        %v3551 = vunpack.c.l.b16 %v3471
        %v3552 = vunpack.c.h.b16 %v3471
        %v3553 = vunpack.c.l.b16 %v3472
        %v3554 = vunpack.c.h.b16 %v3472
        %v3555 = vunpack.c.l.b16 %v3473
        %v3556 = vunpack.c.h.b16 %v3473
        %v3557 = vunpack.c.l.b16 %v3474
        %v3558 = vunpack.c.h.b16 %v3474
        %v3559 = vunpack.c.l.b16 %v3475
        %v3560 = vunpack.c.h.b16 %v3475
        %v3561 = vunpack.c.l.b16 %v3476
        %v3562 = vunpack.c.h.b16 %v3476
        %v3563 = vunpack.c.l.b16 %v3477
        %v3564 = vunpack.c.h.b16 %v3477
        %v3565 = vunpack.c.l.b16 %v3478
        %v3566 = vunpack.c.h.b16 %v3478
        %v3567 = vunpack.c.l.b16 %v3479
        %v3568 = vunpack.c.h.b16 %v3479
        %v3569 = vunpack.c.l.b16 %v3480
        %v3570 = vunpack.c.h.b16 %v3480
        %v3571 = vunpack.c.l.b16 %v3481
        %v3572 = vunpack.c.h.b16 %v3481
        %v3573 = vunpack.c.l.b16 %v3482
        %v3574 = vunpack.c.h.b16 %v3482
        %v3575 = vunpack.c.l.b16 %v3483
        %v3576 = vunpack.c.h.b16 %v3483
        %v3577 = vunpack.c.l.b16 %v3484
        %v3578 = vunpack.c.h.b16 %v3484
        %v3579 = vunpack.c.l.b16 %v3485
        %v3580 = vunpack.c.h.b16 %v3485
        %v3581 = vunpack.c.l.b16 %v3486
        %v3582 = vunpack.c.h.b16 %v3486
        %v3583 = vpack.c.b16 %v3523, %v3519
        %v3584 = vpack.c.b16 %v3524, %v3520
        %v3585 = vpack.c.b16 %v3525, %v3521
        %v3586 = vpack.c.b16 %v3526, %v3522
        %v3587 = vpack.c.b16 %v3531, %v3527
        %v3588 = vpack.c.b16 %v3532, %v3528
        %v3589 = vpack.c.b16 %v3533, %v3529
        %v3590 = vpack.c.b16 %v3534, %v3530
        %v3591 = vpack.c.b16 %v3539, %v3535
        %v3592 = vpack.c.b16 %v3540, %v3536
        %v3593 = vpack.c.b16 %v3541, %v3537
        %v3594 = vpack.c.b16 %v3542, %v3538
        %v3595 = vpack.c.b16 %v3547, %v3543
        %v3596 = vpack.c.b16 %v3548, %v3544
        %v3597 = vpack.c.b16 %v3549, %v3545
        %v3598 = vpack.c.b16 %v3550, %v3546
        %v3599 = vpack.c.b16 %v3555, %v3551
        %v3600 = vpack.c.b16 %v3556, %v3552
        %v3601 = vpack.c.b16 %v3557, %v3553
        %v3602 = vpack.c.b16 %v3558, %v3554
        %v3603 = vpack.c.b16 %v3563, %v3559
        %v3604 = vpack.c.b16 %v3564, %v3560
        %v3605 = vpack.c.b16 %v3565, %v3561
        %v3606 = vpack.c.b16 %v3566, %v3562
        %v3607 = vpack.c.b16 %v3571, %v3567
        %v3608 = vpack.c.b16 %v3572, %v3568
        %v3609 = vpack.c.b16 %v3573, %v3569
        %v3610 = vpack.c.b16 %v3574, %v3570
        %v3611 = vpack.c.b16 %v3579, %v3575
        %v3612 = vpack.c.b16 %v3580, %v3576
        %v3613 = vpack.c.b16 %v3581, %v3577
        %v3614 = vpack.c.b16 %v3582, %v3578
        %3647 = vmatpush.bf16.msra.mxu0 %v3611
        %3648 = vmatpush.bf16.msra.mxu0 %v3607
        %3649 = vmatpush.bf16.msra.mxu0 %v3603
        %3650 = vmatpush.bf16.msra.mxu0 %v3599
        %3651 = vmatpush.bf16.msra.mxu0 %v3595
        %3652 = vmatpush.bf16.msra.mxu0 %v3591
        %3653 = vmatpush.bf16.msra.mxu0 %v3587
        %3654 = vmatpush.bf16.msra.mxu0 %v3583
        %3655 = vmatmul.bf16.gmra.mxu0 %v2930
        %v3656 = vpop.f32.mrf.mxu0
        %v3657 = vadd.f32 0.0, %v3656
        %v3658 = vpop.f32.mrf.mxu0
        %v3659 = vadd.f32 0.0, %v3658
        %3660 = vdwg.mxu0
        %3661 = vmatpush.bf16.msra.mxu0 %v3612
        %3662 = vmatpush.bf16.msra.mxu0 %v3608
        %3663 = vmatpush.bf16.msra.mxu0 %v3604
        %3664 = vmatpush.bf16.msra.mxu0 %v3600
        %3665 = vmatpush.bf16.msra.mxu0 %v3596
        %3666 = vmatpush.bf16.msra.mxu0 %v3592
        %3667 = vmatpush.bf16.msra.mxu0 %v3588
        %3668 = vmatpush.bf16.msra.mxu0 %v3584
        %3669 = vmatmul.bf16.gmra.mxu0 %v2930
        %v3670 = vpop.f32.mrf.mxu0
        %v3671 = vadd.f32 0.0, %v3670
        %v3672 = vpop.f32.mrf.mxu0
        %v3673 = vadd.f32 0.0, %v3672
        %3674 = vdwg.mxu0
        %3675 = vmatpush.bf16.msra.mxu0 %v3613
        %3676 = vmatpush.bf16.msra.mxu0 %v3609
        %3677 = vmatpush.bf16.msra.mxu0 %v3605
        %3678 = vmatpush.bf16.msra.mxu0 %v3601
        %3679 = vmatpush.bf16.msra.mxu0 %v3597
        %3680 = vmatpush.bf16.msra.mxu0 %v3593
        %3681 = vmatpush.bf16.msra.mxu0 %v3589
        %3682 = vmatpush.bf16.msra.mxu0 %v3585
        %3683 = vmatmul.bf16.gmra.mxu0 %v2930
        %v3684 = vpop.f32.mrf.mxu0
        %v3685 = vadd.f32 0.0, %v3684
        %v3686 = vpop.f32.mrf.mxu0
        %v3687 = vadd.f32 0.0, %v3686
        %3688 = vdwg.mxu0
        %3689 = vmatpush.bf16.msra.mxu0 %v3614
        %3690 = vmatpush.bf16.msra.mxu0 %v3610
        %3691 = vmatpush.bf16.msra.mxu0 %v3606
        %3692 = vmatpush.bf16.msra.mxu0 %v3602
        %3693 = vmatpush.bf16.msra.mxu0 %v3598
        %3694 = vmatpush.bf16.msra.mxu0 %v3594
        %3695 = vmatpush.bf16.msra.mxu0 %v3590
        %3696 = vmatpush.bf16.msra.mxu0 %v3586
        %3697 = vmatmul.bf16.gmra.mxu0 %v2930
        %v3698 = vpop.f32.mrf.mxu0
        %v3699 = vadd.f32 0.0, %v3698
        %v3700 = vpop.f32.mrf.mxu0
        %v3701 = vadd.f32 0.0, %v3700
        %3702 = vdwg.mxu0
        %v3703 = vpack.c.bf16 %v3671, %v3657
        %v3704 = vpack.c.bf16 %v3699, %v3685
        %v3705 = vpack.c.bf16 %v3673, %v3659
        %v3706 = vpack.c.bf16 %v3701, %v3687
        %v3709 = vunpack.c.l.b16 %v3197
        %v3710 = vunpack.c.l.b16 %v3199
        %v3711 = vpack.c.b16 %v3710, %v3709
        %v3715 = vunpack.c.l.b16 %v3450
        %v3716 = vunpack.c.l.b16 %v3452
        %v3717 = vpack.c.b16 %v3716, %v3715
        %3719 = vmatpush.bf16.xpose.msra.mxu0 0
        %3720 = vmatpush.bf16.xpose.msra.mxu0 0
        %3721 = vmatpush.bf16.xpose.msra.mxu0 0
        %3722 = vmatpush.bf16.xpose.msra.mxu0 0
        %3723 = vmatpush.bf16.xpose.msra.mxu0 0
        %3724 = vmatpush.bf16.xpose.msra.mxu0 0
        %3725 = vmatpush.bf16.xpose.msra.mxu0 0
        %3726 = vmatpush.bf16.xpose.msra.mxu0 %v3717
        %3727 = vmatmul.bf16.gmra.mxu0 %v3711
        %v3728 = vpop.f32.mrf.mxu0
        %v3729 = vadd.f32 %v2946, %v3728
        %v3730 = vpop.f32.mrf.mxu0
        %v3731 = vadd.f32 %v2947, %v3730
        %3732 = vdwg.mxu0
        %vm3733 = vcmask 130048
        %v3734 = vsel %vm3733, %v3729, -inf
        %3735 = vmax.xlane.f32.xlu0 %v3734
        %v3736 = vpop.xlane.xlu0 %3735
        %v3737 = vsel %vm3733, %v3731, -inf
        %3738 = vmax.xlane.f32.xlu0 %v3737
        %v3739 = vpop.xlane.xlu0 %3738
        %v3740 = vsub.f32 %v3729, %v3736
        %v3741 = vsub.f32 %v3731, %v3739
        %v3742 = vmul.f32 %v3740, 1.442695
        %v3743 = vpow.pop %v3742
        %v3744 = vmul.f32 %v3741, 1.442695
        %v3745 = vpow.pop %v3744
        %v3746 = vsel %vm3733, %v3743, 0.0
        %3747 = vadd.xlane.f32.xlu0 %v3746
        %v3748 = vpop.xlane.xlu0 %3747
        %v3749 = vsel %vm3733, %v3745, 0.0
        %3750 = vadd.xlane.f32.xlu0 %v3749
        %v3751 = vpop.xlane.xlu0 %3750
        %v3752 = vrcp.pop %v3748
        %v3753 = vrcp.pop %v3751
        %v3754 = vmul.f32 %v3743, %v3752
        %v3755 = vmul.f32 %v3745, %v3753
        %v3756 = vpack.c.bf16 %v3755, %v3754
        %v3759 = vunpack.c.l.b16 %v3703
        %v3760 = vunpack.c.l.b16 %v3705
        %v3761 = vpack.c.b16 %v3760, %v3759
        %v3764 = vsel %vm3733, %v3756, 0
        %3766 = vmatpush.bf16.msra.mxu0 0
        %3767 = vmatpush.bf16.msra.mxu0 0
        %3768 = vmatpush.bf16.msra.mxu0 0
        %3769 = vmatpush.bf16.msra.mxu0 0
        %3770 = vmatpush.bf16.msra.mxu0 0
        %3771 = vmatpush.bf16.msra.mxu0 0
        %3772 = vmatpush.bf16.msra.mxu0 0
        %3773 = vmatpush.bf16.msra.mxu0 %v3761
        %3774 = vmatmul.bf16.gmra.mxu0 %v3764
        %v3775 = vpop.f32.mrf.mxu0
        %v3776 = vadd.f32 0.0, %v3775
        %v3777 = vpop.f32.mrf.mxu0
        %v3778 = vadd.f32 0.0, %v3777
        %3779 = vdwg.mxu0
        %v3780 = vpack.c.bf16 %v3776, %v3776
        %v3781 = vpack.c.bf16 %v3778, %v3778
        %v3782 = vunpack.c.h.b16 %v3197
        %v3783 = vunpack.c.h.b16 %v3199
        %v3784 = vpack.c.b16 %v3783, %v3782
        %v3786 = vunpack.c.h.b16 %v3450
        %v3787 = vunpack.c.h.b16 %v3452
        %v3788 = vpack.c.b16 %v3787, %v3786
        %3790 = vmatpush.bf16.xpose.msra.mxu0 0
        %3791 = vmatpush.bf16.xpose.msra.mxu0 0
        %3792 = vmatpush.bf16.xpose.msra.mxu0 0
        %3793 = vmatpush.bf16.xpose.msra.mxu0 0
        %3794 = vmatpush.bf16.xpose.msra.mxu0 0
        %3795 = vmatpush.bf16.xpose.msra.mxu0 0
        %3796 = vmatpush.bf16.xpose.msra.mxu0 0
        %3797 = vmatpush.bf16.xpose.msra.mxu0 %v3788
        %3798 = vmatmul.bf16.gmra.mxu0 %v3784
        %v3799 = vpop.f32.mrf.mxu0
        %v3800 = vadd.f32 %v2946, %v3799
        %v3801 = vpop.f32.mrf.mxu0
        %v3802 = vadd.f32 %v2947, %v3801
        %3803 = vdwg.mxu0
        %v3804 = vsel %vm3733, %v3800, -inf
        %3805 = vmax.xlane.f32.xlu0 %v3804
        %v3806 = vpop.xlane.xlu0 %3805
        %v3807 = vsel %vm3733, %v3802, -inf
        %3808 = vmax.xlane.f32.xlu0 %v3807
        %v3809 = vpop.xlane.xlu0 %3808
        %v3810 = vsub.f32 %v3800, %v3806
        %v3811 = vsub.f32 %v3802, %v3809
        %v3812 = vmul.f32 %v3810, 1.442695
        %v3813 = vpow.pop %v3812
        %v3814 = vmul.f32 %v3811, 1.442695
        %v3815 = vpow.pop %v3814
        %v3816 = vsel %vm3733, %v3813, 0.0
        %3817 = vadd.xlane.f32.xlu0 %v3816
        %v3818 = vpop.xlane.xlu0 %3817
        %v3819 = vsel %vm3733, %v3815, 0.0
        %3820 = vadd.xlane.f32.xlu0 %v3819
        %v3821 = vpop.xlane.xlu0 %3820
        %v3822 = vrcp.pop %v3818
        %v3823 = vrcp.pop %v3821
        %v3824 = vmul.f32 %v3813, %v3822
        %v3825 = vmul.f32 %v3815, %v3823
        %v3826 = vpack.c.bf16 %v3825, %v3824
        %v3827 = vunpack.c.h.b16 %v3703
        %v3828 = vunpack.c.h.b16 %v3705
        %v3829 = vpack.c.b16 %v3828, %v3827
        %v3832 = vsel %vm3733, %v3826, 0
        %3834 = vmatpush.bf16.msra.mxu0 0
        %3835 = vmatpush.bf16.msra.mxu0 0
        %3836 = vmatpush.bf16.msra.mxu0 0
        %3837 = vmatpush.bf16.msra.mxu0 0
        %3838 = vmatpush.bf16.msra.mxu0 0
        %3839 = vmatpush.bf16.msra.mxu0 0
        %3840 = vmatpush.bf16.msra.mxu0 0
        %3841 = vmatpush.bf16.msra.mxu0 %v3829
        %3842 = vmatmul.bf16.gmra.mxu0 %v3832
        %v3843 = vpop.f32.mrf.mxu0
        %v3844 = vadd.f32 0.0, %v3843
        %v3845 = vpop.f32.mrf.mxu0
        %v3846 = vadd.f32 0.0, %v3845
        %3847 = vdwg.mxu0
        %v3848 = vpack.c.bf16 %v3844, %v3844
        %v3849 = vpack.c.bf16 %v3846, %v3846
        %v3852 = vunpack.c.l.b16 %v3198
        %v3853 = vunpack.c.l.b16 %v3200
        %v3854 = vpack.c.b16 %v3853, %v3852
        %v3858 = vunpack.c.l.b16 %v3451
        %v3859 = vunpack.c.l.b16 %v3453
        %v3860 = vpack.c.b16 %v3859, %v3858
        %3862 = vmatpush.bf16.xpose.msra.mxu0 0
        %3863 = vmatpush.bf16.xpose.msra.mxu0 0
        %3864 = vmatpush.bf16.xpose.msra.mxu0 0
        %3865 = vmatpush.bf16.xpose.msra.mxu0 0
        %3866 = vmatpush.bf16.xpose.msra.mxu0 0
        %3867 = vmatpush.bf16.xpose.msra.mxu0 0
        %3868 = vmatpush.bf16.xpose.msra.mxu0 0
        %3869 = vmatpush.bf16.xpose.msra.mxu0 %v3860
        %3870 = vmatmul.bf16.gmra.mxu0 %v3854
        %v3871 = vpop.f32.mrf.mxu0
        %v3872 = vadd.f32 %v2946, %v3871
        %v3873 = vpop.f32.mrf.mxu0
        %v3874 = vadd.f32 %v2947, %v3873
        %3875 = vdwg.mxu0
        %v3876 = vsel %vm3733, %v3872, -inf
        %3877 = vmax.xlane.f32.xlu0 %v3876
        %v3878 = vpop.xlane.xlu0 %3877
        %v3879 = vsel %vm3733, %v3874, -inf
        %3880 = vmax.xlane.f32.xlu0 %v3879
        %v3881 = vpop.xlane.xlu0 %3880
        %v3882 = vsub.f32 %v3872, %v3878
        %v3883 = vsub.f32 %v3874, %v3881
        %v3884 = vmul.f32 %v3882, 1.442695
        %v3885 = vpow.pop %v3884
        %v3886 = vmul.f32 %v3883, 1.442695
        %v3887 = vpow.pop %v3886
        %v3888 = vsel %vm3733, %v3885, 0.0
        %3889 = vadd.xlane.f32.xlu0 %v3888
        %v3890 = vpop.xlane.xlu0 %3889
        %v3891 = vsel %vm3733, %v3887, 0.0
        %3892 = vadd.xlane.f32.xlu0 %v3891
        %v3893 = vpop.xlane.xlu0 %3892
        %v3894 = vrcp.pop %v3890
        %v3895 = vrcp.pop %v3893
        %v3896 = vmul.f32 %v3885, %v3894
        %v3897 = vmul.f32 %v3887, %v3895
        %v3898 = vpack.c.bf16 %v3897, %v3896
        %v3901 = vunpack.c.l.b16 %v3704
        %v3902 = vunpack.c.l.b16 %v3706
        %v3903 = vpack.c.b16 %v3902, %v3901
        %v3906 = vsel %vm3733, %v3898, 0
        %3908 = vmatpush.bf16.msra.mxu0 0
        %3909 = vmatpush.bf16.msra.mxu0 0
        %3910 = vmatpush.bf16.msra.mxu0 0
        %3911 = vmatpush.bf16.msra.mxu0 0
        %3912 = vmatpush.bf16.msra.mxu0 0
        %3913 = vmatpush.bf16.msra.mxu0 0
        %3914 = vmatpush.bf16.msra.mxu0 0
        %3915 = vmatpush.bf16.msra.mxu0 %v3903
        %3916 = vmatmul.bf16.gmra.mxu0 %v3906
        %v3917 = vpop.f32.mrf.mxu0
        %v3918 = vadd.f32 0.0, %v3917
        %v3919 = vpop.f32.mrf.mxu0
        %v3920 = vadd.f32 0.0, %v3919
        %3921 = vdwg.mxu0
        %v3922 = vpack.c.bf16 %v3918, %v3918
        %v3923 = vpack.c.bf16 %v3920, %v3920
        %v3924 = vunpack.c.h.b16 %v3198
        %v3925 = vunpack.c.h.b16 %v3200
        %v3926 = vpack.c.b16 %v3925, %v3924
        %v3928 = vunpack.c.h.b16 %v3451
        %v3929 = vunpack.c.h.b16 %v3453
        %v3930 = vpack.c.b16 %v3929, %v3928
        %3932 = vmatpush.bf16.xpose.msra.mxu0 0
        %3933 = vmatpush.bf16.xpose.msra.mxu0 0
        %3934 = vmatpush.bf16.xpose.msra.mxu0 0
        %3935 = vmatpush.bf16.xpose.msra.mxu0 0
        %3936 = vmatpush.bf16.xpose.msra.mxu0 0
        %3937 = vmatpush.bf16.xpose.msra.mxu0 0
        %3938 = vmatpush.bf16.xpose.msra.mxu0 0
        %3939 = vmatpush.bf16.xpose.msra.mxu0 %v3930
        %3940 = vmatmul.bf16.gmra.mxu0 %v3926
        %v3941 = vpop.f32.mrf.mxu0
        %v3942 = vadd.f32 %v2946, %v3941
        %v3943 = vpop.f32.mrf.mxu0
        %v3944 = vadd.f32 %v2947, %v3943
        %3945 = vdwg.mxu0
        %v3946 = vsel %vm3733, %v3942, -inf
        %3947 = vmax.xlane.f32.xlu0 %v3946
        %v3948 = vpop.xlane.xlu0 %3947
        %v3949 = vsel %vm3733, %v3944, -inf
        %3950 = vmax.xlane.f32.xlu0 %v3949
        %v3951 = vpop.xlane.xlu0 %3950
        %v3952 = vsub.f32 %v3942, %v3948
        %v3953 = vsub.f32 %v3944, %v3951
        %v3954 = vmul.f32 %v3952, 1.442695
        %v3955 = vpow.pop %v3954
        %v3956 = vmul.f32 %v3953, 1.442695
        %v3957 = vpow.pop %v3956
        %v3958 = vsel %vm3733, %v3955, 0.0
        %3959 = vadd.xlane.f32.xlu0 %v3958
        %v3960 = vpop.xlane.xlu0 %3959
        %v3961 = vsel %vm3733, %v3957, 0.0
        %3962 = vadd.xlane.f32.xlu0 %v3961
        %v3963 = vpop.xlane.xlu0 %3962
        %v3964 = vrcp.pop %v3960
        %v3965 = vrcp.pop %v3963
        %v3966 = vmul.f32 %v3955, %v3964
        %v3967 = vmul.f32 %v3957, %v3965
        %v3968 = vpack.c.bf16 %v3967, %v3966
        %v3969 = vunpack.c.h.b16 %v3704
        %v3970 = vunpack.c.h.b16 %v3706
        %v3971 = vpack.c.b16 %v3970, %v3969
        %v3974 = vsel %vm3733, %v3968, 0
        %3976 = vmatpush.bf16.msra.mxu0 0
        %3977 = vmatpush.bf16.msra.mxu0 0
        %3978 = vmatpush.bf16.msra.mxu0 0
        %3979 = vmatpush.bf16.msra.mxu0 0
        %3980 = vmatpush.bf16.msra.mxu0 0
        %3981 = vmatpush.bf16.msra.mxu0 0
        %3982 = vmatpush.bf16.msra.mxu0 0
        %3983 = vmatpush.bf16.msra.mxu0 %v3971
        %3984 = vmatmul.bf16.gmra.mxu0 %v3974
        %v3985 = vpop.f32.mrf.mxu0
        %v3986 = vadd.f32 0.0, %v3985
        %v3987 = vpop.f32.mrf.mxu0
        %v3988 = vadd.f32 0.0, %v3987
        %3989 = vdwg.mxu0
        %v3990 = vpack.c.bf16 %v3986, %v3986
        %v3991 = vpack.c.bf16 %v3988, %v3988
        %v3994 = vunpack.c.l.b16 %v3780
        %v3995 = vunpack.c.l.b16 %v3781
        %v3996 = vpack.c.b16 %v3995, %v3994
        %v4000 = vunpack.c.l.b16 %v3848
        %v4001 = vunpack.c.l.b16 %v3849
        %v4002 = vpack.c.b16 %v4001, %v4000
        %v4006 = vunpack.c.l.b16 %v3922
        %v4007 = vunpack.c.l.b16 %v3923
        %v4008 = vpack.c.b16 %v4007, %v4006
        %v4012 = vunpack.c.l.b16 %v3990
        %v4013 = vunpack.c.l.b16 %v3991
        %v4014 = vpack.c.b16 %v4013, %v4012
        %s4016 = scalar_lea.vmem %s808, 256 [#allocation11]
        %v4017 = vld [vmem:[%s4016] sm:$0xf]
        %v4018 = vld [vmem:[%s4016 + $0x4] sm:$0xf]
        %v4019 = vld [vmem:[%s4016 + $0x8] sm:$0xf]
        %v4020 = vld [vmem:[%s4016 + $0xc] sm:$0xf]
        %v4021 = vld [vmem:[%s4016 + $0x10] sm:$0xf]
        %v4022 = vld [vmem:[%s4016 + $0x14] sm:$0xf]
        %v4023 = vld [vmem:[%s4016 + $0x18] sm:$0xf]
        %v4024 = vld [vmem:[%s4016 + $0x1c] sm:$0xf]
        %v4025 = vld [vmem:[%s4016 + $0x20] sm:$0xf]
        %v4026 = vld [vmem:[%s4016 + $0x24] sm:$0xf]
        %v4027 = vld [vmem:[%s4016 + $0x28] sm:$0xf]
        %v4028 = vld [vmem:[%s4016 + $0x2c] sm:$0xf]
        %v4029 = vld [vmem:[%s4016 + $0x30] sm:$0xf]
        %v4030 = vld [vmem:[%s4016 + $0x34] sm:$0xf]
        %v4031 = vld [vmem:[%s4016 + $0x38] sm:$0xf]
        %v4032 = vld [vmem:[%s4016 + $0x3c] sm:$0xf]
        %v4033 = vld [vmem:[%s4016 + $0x40] sm:$0xf]
        %v4034 = vld [vmem:[%s4016 + $0x44] sm:$0xf]
        %v4035 = vld [vmem:[%s4016 + $0x48] sm:$0xf]
        %v4036 = vld [vmem:[%s4016 + $0x4c] sm:$0xf]
        %v4037 = vld [vmem:[%s4016 + $0x50] sm:$0xf]
        %v4038 = vld [vmem:[%s4016 + $0x54] sm:$0xf]
        %v4039 = vld [vmem:[%s4016 + $0x58] sm:$0xf]
        %v4040 = vld [vmem:[%s4016 + $0x5c] sm:$0xf]
        %v4041 = vld [vmem:[%s4016 + $0x60] sm:$0xf]
        %v4042 = vld [vmem:[%s4016 + $0x64] sm:$0xf]
        %v4043 = vld [vmem:[%s4016 + $0x68] sm:$0xf]
        %v4044 = vld [vmem:[%s4016 + $0x6c] sm:$0xf]
        %v4045 = vld [vmem:[%s4016 + $0x70] sm:$0xf]
        %v4046 = vld [vmem:[%s4016 + $0x74] sm:$0xf]
        %v4047 = vld [vmem:[%s4016 + $0x78] sm:$0xf]
        %v4048 = vld [vmem:[%s4016 + $0x7c] sm:$0xf]
        %v4049 = vld [vmem:[%s4016 + $0x80] sm:$0xf]
        %v4050 = vld [vmem:[%s4016 + $0x84] sm:$0xf]
        %v4051 = vld [vmem:[%s4016 + $0x88] sm:$0xf]
        %v4052 = vld [vmem:[%s4016 + $0x8c] sm:$0xf]
        %v4053 = vld [vmem:[%s4016 + $0x90] sm:$0xf]
        %v4054 = vld [vmem:[%s4016 + $0x94] sm:$0xf]
        %v4055 = vld [vmem:[%s4016 + $0x98] sm:$0xf]
        %v4056 = vld [vmem:[%s4016 + $0x9c] sm:$0xf]
        %v4057 = vld [vmem:[%s4016 + $0xa0] sm:$0xf]
        %v4058 = vld [vmem:[%s4016 + $0xa4] sm:$0xf]
        %v4059 = vld [vmem:[%s4016 + $0xa8] sm:$0xf]
        %v4060 = vld [vmem:[%s4016 + $0xac] sm:$0xf]
        %v4061 = vld [vmem:[%s4016 + $0xb0] sm:$0xf]
        %v4062 = vld [vmem:[%s4016 + $0xb4] sm:$0xf]
        %v4063 = vld [vmem:[%s4016 + $0xb8] sm:$0xf]
        %v4064 = vld [vmem:[%s4016 + $0xbc] sm:$0xf]
        %v4065 = vld [vmem:[%s4016 + $0xc0] sm:$0xf]
        %v4066 = vld [vmem:[%s4016 + $0xc4] sm:$0xf]
        %v4067 = vld [vmem:[%s4016 + $0xc8] sm:$0xf]
        %v4068 = vld [vmem:[%s4016 + $0xcc] sm:$0xf]
        %v4069 = vld [vmem:[%s4016 + $0xd0] sm:$0xf]
        %v4070 = vld [vmem:[%s4016 + $0xd4] sm:$0xf]
        %v4071 = vld [vmem:[%s4016 + $0xd8] sm:$0xf]
        %v4072 = vld [vmem:[%s4016 + $0xdc] sm:$0xf]
        %v4073 = vld [vmem:[%s4016 + $0xe0] sm:$0xf]
        %v4074 = vld [vmem:[%s4016 + $0xe4] sm:$0xf]
        %v4075 = vld [vmem:[%s4016 + $0xe8] sm:$0xf]
        %v4076 = vld [vmem:[%s4016 + $0xec] sm:$0xf]
        %v4077 = vld [vmem:[%s4016 + $0xf0] sm:$0xf]
        %v4078 = vld [vmem:[%s4016 + $0xf4] sm:$0xf]
        %v4079 = vld [vmem:[%s4016 + $0xf8] sm:$0xf]
        %v4080 = vld [vmem:[%s4016 + $0xfc] sm:$0xf]
        %v4081 = vld [vmem:[%s818 + $0x1] sm:$0x1]
        %v4082 = vperm.slane %v4081, 0
        %v4147 = vunpack.c.l.b16 %v4017
        %v4148 = vunpack.c.l.b16 %v4018
        %v4149 = vunpack.c.l.b16 %v4019
        %v4150 = vunpack.c.l.b16 %v4020
        %v4151 = vunpack.c.l.b16 %v4021
        %v4152 = vunpack.c.l.b16 %v4022
        %v4153 = vunpack.c.l.b16 %v4023
        %v4154 = vunpack.c.l.b16 %v4024
        %v4155 = vunpack.c.l.b16 %v4025
        %v4156 = vunpack.c.l.b16 %v4026
        %v4157 = vunpack.c.l.b16 %v4027
        %v4158 = vunpack.c.l.b16 %v4028
        %v4159 = vunpack.c.l.b16 %v4029
        %v4160 = vunpack.c.l.b16 %v4030
        %v4161 = vunpack.c.l.b16 %v4031
        %v4162 = vunpack.c.l.b16 %v4032
        %v4163 = vunpack.c.l.b16 %v4033
        %v4164 = vunpack.c.l.b16 %v4034
        %v4165 = vunpack.c.l.b16 %v4035
        %v4166 = vunpack.c.l.b16 %v4036
        %v4167 = vunpack.c.l.b16 %v4037
        %v4168 = vunpack.c.l.b16 %v4038
        %v4169 = vunpack.c.l.b16 %v4039
        %v4170 = vunpack.c.l.b16 %v4040
        %v4171 = vunpack.c.l.b16 %v4041
        %v4172 = vunpack.c.l.b16 %v4042
        %v4173 = vunpack.c.l.b16 %v4043
        %v4174 = vunpack.c.l.b16 %v4044
        %v4175 = vunpack.c.l.b16 %v4045
        %v4176 = vunpack.c.l.b16 %v4046
        %v4177 = vunpack.c.l.b16 %v4047
        %v4178 = vunpack.c.l.b16 %v4048
        %v4179 = vunpack.c.l.b16 %v4049
        %v4180 = vunpack.c.l.b16 %v4050
        %v4181 = vunpack.c.l.b16 %v4051
        %v4182 = vunpack.c.l.b16 %v4052
        %v4183 = vunpack.c.l.b16 %v4053
        %v4184 = vunpack.c.l.b16 %v4054
        %v4185 = vunpack.c.l.b16 %v4055
        %v4186 = vunpack.c.l.b16 %v4056
        %v4187 = vunpack.c.l.b16 %v4057
        %v4188 = vunpack.c.l.b16 %v4058
        %v4189 = vunpack.c.l.b16 %v4059
        %v4190 = vunpack.c.l.b16 %v4060
        %v4191 = vunpack.c.l.b16 %v4061
        %v4192 = vunpack.c.l.b16 %v4062
        %v4193 = vunpack.c.l.b16 %v4063
        %v4194 = vunpack.c.l.b16 %v4064
        %v4195 = vunpack.c.l.b16 %v4065
        %v4196 = vunpack.c.l.b16 %v4066
        %v4197 = vunpack.c.l.b16 %v4067
        %v4198 = vunpack.c.l.b16 %v4068
        %v4199 = vunpack.c.l.b16 %v4069
        %v4200 = vunpack.c.l.b16 %v4070
        %v4201 = vunpack.c.l.b16 %v4071
        %v4202 = vunpack.c.l.b16 %v4072
        %v4203 = vunpack.c.l.b16 %v4073
        %v4204 = vunpack.c.l.b16 %v4074
        %v4205 = vunpack.c.l.b16 %v4075
        %v4206 = vunpack.c.l.b16 %v4076
        %v4207 = vunpack.c.l.b16 %v4077
        %v4208 = vunpack.c.l.b16 %v4078
        %v4209 = vunpack.c.l.b16 %v4079
        %v4210 = vunpack.c.l.b16 %v4080
        %v4211 = vpack.c.b16 %v4148, %v4147
        %v4212 = vpack.c.b16 %v4150, %v4149
        %v4213 = vpack.c.b16 %v4152, %v4151
        %v4214 = vpack.c.b16 %v4154, %v4153
        %v4215 = vpack.c.b16 %v4156, %v4155
        %v4216 = vpack.c.b16 %v4158, %v4157
        %v4217 = vpack.c.b16 %v4160, %v4159
        %v4218 = vpack.c.b16 %v4162, %v4161
        %v4219 = vpack.c.b16 %v4164, %v4163
        %v4220 = vpack.c.b16 %v4166, %v4165
        %v4221 = vpack.c.b16 %v4168, %v4167
        %v4222 = vpack.c.b16 %v4170, %v4169
        %v4223 = vpack.c.b16 %v4172, %v4171
        %v4224 = vpack.c.b16 %v4174, %v4173
        %v4225 = vpack.c.b16 %v4176, %v4175
        %v4226 = vpack.c.b16 %v4178, %v4177
        %v4227 = vpack.c.b16 %v4180, %v4179
        %v4228 = vpack.c.b16 %v4182, %v4181
        %v4229 = vpack.c.b16 %v4184, %v4183
        %v4230 = vpack.c.b16 %v4186, %v4185
        %v4231 = vpack.c.b16 %v4188, %v4187
        %v4232 = vpack.c.b16 %v4190, %v4189
        %v4233 = vpack.c.b16 %v4192, %v4191
        %v4234 = vpack.c.b16 %v4194, %v4193
        %v4235 = vpack.c.b16 %v4196, %v4195
        %v4236 = vpack.c.b16 %v4198, %v4197
        %v4237 = vpack.c.b16 %v4200, %v4199
        %v4238 = vpack.c.b16 %v4202, %v4201
        %v4239 = vpack.c.b16 %v4204, %v4203
        %v4240 = vpack.c.b16 %v4206, %v4205
        %v4241 = vpack.c.b16 %v4208, %v4207
        %v4242 = vpack.c.b16 %v4210, %v4209
        %4275 = vmatpush.bf16.msra.mxu0 %v4218
        %4276 = vmatpush.bf16.msra.mxu0 %v4217
        %4277 = vmatpush.bf16.msra.mxu0 %v4216
        %4278 = vmatpush.bf16.msra.mxu0 %v4215
        %4279 = vmatpush.bf16.msra.mxu0 %v4214
        %4280 = vmatpush.bf16.msra.mxu0 %v4213
        %4281 = vmatpush.bf16.msra.mxu0 %v4212
        %4282 = vmatpush.bf16.msra.mxu0 %v4211
        %4283 = vmatmul.bf16.gmra.mxu0 %v3996
        %v4284 = vpop.f32.mrf.mxu0
        %v4285 = vadd.f32 %v4082, %v4284
        %v4286 = vpop.f32.mrf.mxu0
        %v4287 = vadd.f32 %v4082, %v4286
        %4288 = vdwg.mxu0
        %4289 = vmatpush.bf16.msra.mxu0 %v4226
        %4290 = vmatpush.bf16.msra.mxu0 %v4225
        %4291 = vmatpush.bf16.msra.mxu0 %v4224
        %4292 = vmatpush.bf16.msra.mxu0 %v4223
        %4293 = vmatpush.bf16.msra.mxu0 %v4222
        %4294 = vmatpush.bf16.msra.mxu0 %v4221
        %4295 = vmatpush.bf16.msra.mxu0 %v4220
        %4296 = vmatpush.bf16.msra.mxu0 %v4219
        %4297 = vmatmul.bf16.gmra.mxu0 %v4002
        %v4298 = vpop.f32.mrf.mxu0
        %v4299 = vadd.f32 %v4285, %v4298
        %v4300 = vpop.f32.mrf.mxu0
        %v4301 = vadd.f32 %v4287, %v4300
        %4302 = vdwg.mxu0
        %4303 = vmatpush.bf16.msra.mxu0 %v4234
        %4304 = vmatpush.bf16.msra.mxu0 %v4233
        %4305 = vmatpush.bf16.msra.mxu0 %v4232
        %4306 = vmatpush.bf16.msra.mxu0 %v4231
        %4307 = vmatpush.bf16.msra.mxu0 %v4230
        %4308 = vmatpush.bf16.msra.mxu0 %v4229
        %4309 = vmatpush.bf16.msra.mxu0 %v4228
        %4310 = vmatpush.bf16.msra.mxu0 %v4227
        %4311 = vmatmul.bf16.gmra.mxu0 %v4008
        %v4312 = vpop.f32.mrf.mxu0
        %v4313 = vadd.f32 %v4299, %v4312
        %v4314 = vpop.f32.mrf.mxu0
        %v4315 = vadd.f32 %v4301, %v4314
        %4316 = vdwg.mxu0
        %4317 = vmatpush.bf16.msra.mxu0 %v4242
        %4318 = vmatpush.bf16.msra.mxu0 %v4241
        %4319 = vmatpush.bf16.msra.mxu0 %v4240
        %4320 = vmatpush.bf16.msra.mxu0 %v4239
        %4321 = vmatpush.bf16.msra.mxu0 %v4238
        %4322 = vmatpush.bf16.msra.mxu0 %v4237
        %4323 = vmatpush.bf16.msra.mxu0 %v4236
        %4324 = vmatpush.bf16.msra.mxu0 %v4235
        %4325 = vmatmul.bf16.gmra.mxu0 %v4014
        %v4326 = vpop.f32.mrf.mxu0
        %v4327 = vadd.f32 %v4313, %v4326
        %v4328 = vpop.f32.mrf.mxu0
        %v4329 = vadd.f32 %v4315, %v4328
        %4330 = vdwg.mxu0
        %v4331 = vadd.f32 %v1037, %v4327
        %v4332 = vadd.f32 %v1038, %v4329
        %v4333 = vld [vmem:[%s956 + $0x2] sm:$0x1]
        %v4334 = vld [vmem:[%s768 + $0x2] sm:$0x1]
        %4335 = vadd.xlane.f32.xlu0 %v2878
        %v4336 = vpop.xlane.xlu0 %4335
        %4337 = vadd.xlane.f32.xlu0 %v2879
        %v4338 = vpop.xlane.xlu0 %4337
        %4339 = vadd.xlane.f32.xlu0 %v2880
        %v4340 = vpop.xlane.xlu0 %4339
        %4341 = vadd.xlane.f32.xlu0 %v2881
        %v4342 = vpop.xlane.xlu0 %4341
        %v4343 = vmul.f32 %v4336, %v1055
        %v4344 = vmul.f32 %v4338, %v1055
        %v4345 = vmul.f32 %v4340, %v1055
        %v4346 = vmul.f32 %v4342, %v1055
        %v4347 = vsub.f32 %v2878, %v4343
        %v4348 = vsub.f32 %v2879, %v4344
        %v4349 = vsub.f32 %v2880, %v4345
        %v4350 = vsub.f32 %v2881, %v4346
        %v4351 = vmul.f32 %v4347, %v4347
        %v4352 = vmul.f32 %v4348, %v4348
        %v4353 = vmul.f32 %v4349, %v4349
        %v4354 = vmul.f32 %v4350, %v4350
        %4355 = vadd.xlane.f32.xlu0 %v4351
        %v4356 = vpop.xlane.xlu0 %4355
        %4357 = vadd.xlane.f32.xlu0 %v4352
        %v4358 = vpop.xlane.xlu0 %4357
        %4359 = vadd.xlane.f32.xlu0 %v4353
        %v4360 = vpop.xlane.xlu0 %4359
        %4361 = vadd.xlane.f32.xlu0 %v4354
        %v4362 = vpop.xlane.xlu0 %4361
        %v4363 = vmul.f32 %v4356, %v1055
        %v4364 = vmul.f32 %v4358, %v1055
        %v4365 = vmul.f32 %v4360, %v1055
        %v4366 = vmul.f32 %v4362, %v1055
        %v4367 = vadd.f32 %v4363, 1e-05
        %v4368 = vadd.f32 %v4364, 1e-05
        %v4369 = vadd.f32 %v4365, 1e-05
        %v4370 = vadd.f32 %v4366, 1e-05
        %v4371 = vrsqrt.pop %v4367
        %v4372 = vmul.f32 %v4371, %v4367
        %v4373 = vmul.f32 %v4372, %v4371
        %v4374 = vmul.f32 0.5, %v4373
        %v4375 = vsub.f32 1.5, %v4374
        %v4376 = vmul.f32 %v4371, %v4375
        %vm4377 = vweird.f32 %v4367
        %vm4378 = vweird.f32 %v4371
        %vm4379 = vmor %vm4377, %vm4378
        %v4380 = vsel %vm4379, %v4371, %v4376
        %v4381 = vrsqrt.pop %v4368
        %v4382 = vmul.f32 %v4381, %v4368
        %v4383 = vmul.f32 %v4382, %v4381
        %v4384 = vmul.f32 0.5, %v4383
        %v4385 = vsub.f32 1.5, %v4384
        %v4386 = vmul.f32 %v4381, %v4385
        %vm4387 = vweird.f32 %v4368
        %vm4388 = vweird.f32 %v4381
        %vm4389 = vmor %vm4387, %vm4388
        %v4390 = vsel %vm4389, %v4381, %v4386
        %v4391 = vrsqrt.pop %v4369
        %v4392 = vmul.f32 %v4391, %v4369
        %v4393 = vmul.f32 %v4392, %v4391
        %v4394 = vmul.f32 0.5, %v4393
        %v4395 = vsub.f32 1.5, %v4394
        %v4396 = vmul.f32 %v4391, %v4395
        %vm4397 = vweird.f32 %v4369
        %vm4398 = vweird.f32 %v4391
        %vm4399 = vmor %vm4397, %vm4398
        %v4400 = vsel %vm4399, %v4391, %v4396
        %v4401 = vrsqrt.pop %v4370
        %v4402 = vmul.f32 %v4401, %v4370
        %v4403 = vmul.f32 %v4402, %v4401
        %v4404 = vmul.f32 0.5, %v4403
        %v4405 = vsub.f32 1.5, %v4404
        %v4406 = vmul.f32 %v4401, %v4405
        %vm4407 = vweird.f32 %v4370
        %vm4408 = vweird.f32 %v4401
        %vm4409 = vmor %vm4407, %vm4408
        %v4410 = vsel %vm4409, %v4401, %v4406
        %v4411 = vmul.f32 %v4347, %v4380
        %v4412 = vmul.f32 %v4348, %v4390
        %v4413 = vmul.f32 %v4349, %v4400
        %v4414 = vmul.f32 %v4350, %v4410
        %v4415 = vperm.slane %v4333, 0
        %v4416 = vmul.f32 %v4411, %v4415
        %v4417 = vmul.f32 %v4412, %v4415
        %v4418 = vmul.f32 %v4413, %v4415
        %v4419 = vmul.f32 %v4414, %v4415
        %v4420 = vperm.slane %v4334, 0
        %v4421 = vadd.f32 %v4416, %v4420
        %v4422 = vadd.f32 %v4417, %v4420
        %v4423 = vadd.f32 %v4418, %v4420
        %v4424 = vadd.f32 %v4419, %v4420
        %v4425 = vpack.c.bf16 %v4422, %v4421
        %v4426 = vpack.c.bf16 %v4424, %v4423
        %4427 = vadd.xlane.f32.xlu0 %v4331
        %v4428 = vpop.xlane.xlu0 %4427
        %4429 = vadd.xlane.f32.xlu0 %v4332
        %v4430 = vpop.xlane.xlu0 %4429
        %v4431 = vmul.f32 %v4428, %v1055
        %v4432 = vmul.f32 %v4430, %v1055
        %v4433 = vsub.f32 %v4331, %v4431
        %v4434 = vsub.f32 %v4332, %v4432
        %v4435 = vmul.f32 %v4433, %v4433
        %v4436 = vmul.f32 %v4434, %v4434
        %4437 = vadd.xlane.f32.xlu0 %v4435
        %v4438 = vpop.xlane.xlu0 %4437
        %4439 = vadd.xlane.f32.xlu0 %v4436
        %v4440 = vpop.xlane.xlu0 %4439
        %v4441 = vmul.f32 %v4438, %v1055
        %v4442 = vmul.f32 %v4440, %v1055
        %v4443 = vadd.f32 %v4441, 1e-05
        %v4444 = vadd.f32 %v4442, 1e-05
        %v4445 = vrsqrt.pop %v4443
        %v4446 = vmul.f32 %v4445, %v4443
        %v4447 = vmul.f32 %v4446, %v4445
        %v4448 = vmul.f32 0.5, %v4447
        %v4449 = vsub.f32 1.5, %v4448
        %v4450 = vmul.f32 %v4445, %v4449
        %vm4451 = vweird.f32 %v4443
        %vm4452 = vweird.f32 %v4445
        %vm4453 = vmor %vm4451, %vm4452
        %v4454 = vsel %vm4453, %v4445, %v4450
        %v4455 = vrsqrt.pop %v4444
        %v4456 = vmul.f32 %v4455, %v4444
        %v4457 = vmul.f32 %v4456, %v4455
        %v4458 = vmul.f32 0.5, %v4457
        %v4459 = vsub.f32 1.5, %v4458
        %v4460 = vmul.f32 %v4455, %v4459
        %vm4461 = vweird.f32 %v4444
        %vm4462 = vweird.f32 %v4455
        %vm4463 = vmor %vm4461, %vm4462
        %v4464 = vsel %vm4463, %v4455, %v4460
        %v4465 = vmul.f32 %v4433, %v4454
        %v4466 = vmul.f32 %v4434, %v4464
        %v4467 = vmul.f32 %v4465, %v4415
        %v4468 = vmul.f32 %v4466, %v4415
        %v4469 = vadd.f32 %v4467, %v4420
        %v4470 = vadd.f32 %v4468, %v4420
        %v4471 = vpack.c.bf16 %v4470, %v4469
        %vm4472 = vcmp.eq.f32.partialorder %v1143, %v2942
        %vm4473 = vcmp.eq.f32.partialorder %v1148, %v2942
        %vm4474 = vcmp.eq.f32.partialorder %v1153, %v2942
        %vm4475 = vcmp.eq.f32.partialorder %v1158, %v2942
        %v4476 = vsel %vm4472, 0.0, -1e+09
        %v4477 = vsel %vm4473, 0.0, -1e+09
        %v4478 = vsel %vm4474, 0.0, -1e+09
        %v4479 = vsel %vm4475, 0.0, -1e+09
        %s4480 = scalar_lea.vmem %s778, 512 [#allocation6]
        %v4481 = vld [vmem:[%s4480] sm:$0xff]
        %v4482 = vld [vmem:[%s4480 + $0x8] sm:$0xff]
        %v4483 = vld [vmem:[%s4480 + $0x10] sm:$0xff]
        %v4484 = vld [vmem:[%s4480 + $0x18] sm:$0xff]
        %v4485 = vld [vmem:[%s4480 + $0x20] sm:$0xff]
        %v4486 = vld [vmem:[%s4480 + $0x28] sm:$0xff]
        %v4487 = vld [vmem:[%s4480 + $0x30] sm:$0xff]
        %v4488 = vld [vmem:[%s4480 + $0x38] sm:$0xff]
        %v4489 = vld [vmem:[%s4480 + $0x40] sm:$0xff]
        %v4490 = vld [vmem:[%s4480 + $0x48] sm:$0xff]
        %v4491 = vld [vmem:[%s4480 + $0x50] sm:$0xff]
        %v4492 = vld [vmem:[%s4480 + $0x58] sm:$0xff]
        %v4493 = vld [vmem:[%s4480 + $0x60] sm:$0xff]
        %v4494 = vld [vmem:[%s4480 + $0x68] sm:$0xff]
        %v4495 = vld [vmem:[%s4480 + $0x70] sm:$0xff]
        %v4496 = vld [vmem:[%s4480 + $0x78] sm:$0xff]
        %v4497 = vld [vmem:[%s4480 + $0x80] sm:$0xff]
        %v4498 = vld [vmem:[%s4480 + $0x88] sm:$0xff]
        %v4499 = vld [vmem:[%s4480 + $0x90] sm:$0xff]
        %v4500 = vld [vmem:[%s4480 + $0x98] sm:$0xff]
        %v4501 = vld [vmem:[%s4480 + $0xa0] sm:$0xff]
        %v4502 = vld [vmem:[%s4480 + $0xa8] sm:$0xff]
        %v4503 = vld [vmem:[%s4480 + $0xb0] sm:$0xff]
        %v4504 = vld [vmem:[%s4480 + $0xb8] sm:$0xff]
        %v4505 = vld [vmem:[%s4480 + $0xc0] sm:$0xff]
        %v4506 = vld [vmem:[%s4480 + $0xc8] sm:$0xff]
        %v4507 = vld [vmem:[%s4480 + $0xd0] sm:$0xff]
        %v4508 = vld [vmem:[%s4480 + $0xd8] sm:$0xff]
        %v4509 = vld [vmem:[%s4480 + $0xe0] sm:$0xff]
        %v4510 = vld [vmem:[%s4480 + $0xe8] sm:$0xff]
        %v4511 = vld [vmem:[%s4480 + $0xf0] sm:$0xff]
        %v4512 = vld [vmem:[%s4480 + $0xf8] sm:$0xff]
        %v4545 = vunpack.c.l.b16 %v4481
        %v4546 = vunpack.c.h.b16 %v4481
        %v4547 = vunpack.c.l.b16 %v4482
        %v4548 = vunpack.c.h.b16 %v4482
        %v4549 = vunpack.c.l.b16 %v4483
        %v4550 = vunpack.c.h.b16 %v4483
        %v4551 = vunpack.c.l.b16 %v4484
        %v4552 = vunpack.c.h.b16 %v4484
        %v4553 = vunpack.c.l.b16 %v4485
        %v4554 = vunpack.c.h.b16 %v4485
        %v4555 = vunpack.c.l.b16 %v4486
        %v4556 = vunpack.c.h.b16 %v4486
        %v4557 = vunpack.c.l.b16 %v4487
        %v4558 = vunpack.c.h.b16 %v4487
        %v4559 = vunpack.c.l.b16 %v4488
        %v4560 = vunpack.c.h.b16 %v4488
        %v4561 = vunpack.c.l.b16 %v4489
        %v4562 = vunpack.c.h.b16 %v4489
        %v4563 = vunpack.c.l.b16 %v4490
        %v4564 = vunpack.c.h.b16 %v4490
        %v4565 = vunpack.c.l.b16 %v4491
        %v4566 = vunpack.c.h.b16 %v4491
        %v4567 = vunpack.c.l.b16 %v4492
        %v4568 = vunpack.c.h.b16 %v4492
        %v4569 = vunpack.c.l.b16 %v4493
        %v4570 = vunpack.c.h.b16 %v4493
        %v4571 = vunpack.c.l.b16 %v4494
        %v4572 = vunpack.c.h.b16 %v4494
        %v4573 = vunpack.c.l.b16 %v4495
        %v4574 = vunpack.c.h.b16 %v4495
        %v4575 = vunpack.c.l.b16 %v4496
        %v4576 = vunpack.c.h.b16 %v4496
        %v4577 = vunpack.c.l.b16 %v4497
        %v4578 = vunpack.c.h.b16 %v4497
        %v4579 = vunpack.c.l.b16 %v4498
        %v4580 = vunpack.c.h.b16 %v4498
        %v4581 = vunpack.c.l.b16 %v4499
        %v4582 = vunpack.c.h.b16 %v4499
        %v4583 = vunpack.c.l.b16 %v4500
        %v4584 = vunpack.c.h.b16 %v4500
        %v4585 = vunpack.c.l.b16 %v4501
        %v4586 = vunpack.c.h.b16 %v4501
        %v4587 = vunpack.c.l.b16 %v4502
        %v4588 = vunpack.c.h.b16 %v4502
        %v4589 = vunpack.c.l.b16 %v4503
        %v4590 = vunpack.c.h.b16 %v4503
        %v4591 = vunpack.c.l.b16 %v4504
        %v4592 = vunpack.c.h.b16 %v4504
        %v4593 = vunpack.c.l.b16 %v4505
        %v4594 = vunpack.c.h.b16 %v4505
        %v4595 = vunpack.c.l.b16 %v4506
        %v4596 = vunpack.c.h.b16 %v4506
        %v4597 = vunpack.c.l.b16 %v4507
        %v4598 = vunpack.c.h.b16 %v4507
        %v4599 = vunpack.c.l.b16 %v4508
        %v4600 = vunpack.c.h.b16 %v4508
        %v4601 = vunpack.c.l.b16 %v4509
        %v4602 = vunpack.c.h.b16 %v4509
        %v4603 = vunpack.c.l.b16 %v4510
        %v4604 = vunpack.c.h.b16 %v4510
        %v4605 = vunpack.c.l.b16 %v4511
        %v4606 = vunpack.c.h.b16 %v4511
        %v4607 = vunpack.c.l.b16 %v4512
        %v4608 = vunpack.c.h.b16 %v4512
        %v4609 = vpack.c.b16 %v4549, %v4545
        %v4610 = vpack.c.b16 %v4550, %v4546
        %v4611 = vpack.c.b16 %v4551, %v4547
        %v4612 = vpack.c.b16 %v4552, %v4548
        %v4613 = vpack.c.b16 %v4557, %v4553
        %v4614 = vpack.c.b16 %v4558, %v4554
        %v4615 = vpack.c.b16 %v4559, %v4555
        %v4616 = vpack.c.b16 %v4560, %v4556
        %v4617 = vpack.c.b16 %v4565, %v4561
        %v4618 = vpack.c.b16 %v4566, %v4562
        %v4619 = vpack.c.b16 %v4567, %v4563
        %v4620 = vpack.c.b16 %v4568, %v4564
        %v4621 = vpack.c.b16 %v4573, %v4569
        %v4622 = vpack.c.b16 %v4574, %v4570
        %v4623 = vpack.c.b16 %v4575, %v4571
        %v4624 = vpack.c.b16 %v4576, %v4572
        %v4625 = vpack.c.b16 %v4581, %v4577
        %v4626 = vpack.c.b16 %v4582, %v4578
        %v4627 = vpack.c.b16 %v4583, %v4579
        %v4628 = vpack.c.b16 %v4584, %v4580
        %v4629 = vpack.c.b16 %v4589, %v4585
        %v4630 = vpack.c.b16 %v4590, %v4586
        %v4631 = vpack.c.b16 %v4591, %v4587
        %v4632 = vpack.c.b16 %v4592, %v4588
        %v4633 = vpack.c.b16 %v4597, %v4593
        %v4634 = vpack.c.b16 %v4598, %v4594
        %v4635 = vpack.c.b16 %v4599, %v4595
        %v4636 = vpack.c.b16 %v4600, %v4596
        %v4637 = vpack.c.b16 %v4605, %v4601
        %v4638 = vpack.c.b16 %v4606, %v4602
        %v4639 = vpack.c.b16 %v4607, %v4603
        %v4640 = vpack.c.b16 %v4608, %v4604
        %4673 = vmatpush.bf16.msra.mxu0 %v4637
        %4674 = vmatpush.bf16.msra.mxu0 %v4633
        %4675 = vmatpush.bf16.msra.mxu0 %v4629
        %4676 = vmatpush.bf16.msra.mxu0 %v4625
        %4677 = vmatpush.bf16.msra.mxu0 %v4621
        %4678 = vmatpush.bf16.msra.mxu0 %v4617
        %4679 = vmatpush.bf16.msra.mxu0 %v4613
        %4680 = vmatpush.bf16.msra.mxu0 %v4609
        %4681 = vmatmul.bf16.gmra.mxu0 %v4425
        %v4682 = vpop.f32.mrf.mxu0
        %v4683 = vadd.f32 0.0, %v4682
        %v4684 = vpop.f32.mrf.mxu0
        %v4685 = vadd.f32 0.0, %v4684
        %4686 = vmatmul.bf16.gmra.mxu0 %v4426
        %v4687 = vpop.f32.mrf.mxu0
        %v4688 = vadd.f32 0.0, %v4687
        %v4689 = vpop.f32.mrf.mxu0
        %v4690 = vadd.f32 0.0, %v4689
        %4691 = vdwg.mxu0
        %4692 = vmatpush.bf16.msra.mxu0 %v4638
        %4693 = vmatpush.bf16.msra.mxu0 %v4634
        %4694 = vmatpush.bf16.msra.mxu0 %v4630
        %4695 = vmatpush.bf16.msra.mxu0 %v4626
        %4696 = vmatpush.bf16.msra.mxu0 %v4622
        %4697 = vmatpush.bf16.msra.mxu0 %v4618
        %4698 = vmatpush.bf16.msra.mxu0 %v4614
        %4699 = vmatpush.bf16.msra.mxu0 %v4610
        %4700 = vmatmul.bf16.gmra.mxu0 %v4425
        %v4701 = vpop.f32.mrf.mxu0
        %v4702 = vadd.f32 0.0, %v4701
        %v4703 = vpop.f32.mrf.mxu0
        %v4704 = vadd.f32 0.0, %v4703
        %4705 = vmatmul.bf16.gmra.mxu0 %v4426
        %v4706 = vpop.f32.mrf.mxu0
        %v4707 = vadd.f32 0.0, %v4706
        %v4708 = vpop.f32.mrf.mxu0
        %v4709 = vadd.f32 0.0, %v4708
        %4710 = vdwg.mxu0
        %4711 = vmatpush.bf16.msra.mxu0 %v4639
        %4712 = vmatpush.bf16.msra.mxu0 %v4635
        %4713 = vmatpush.bf16.msra.mxu0 %v4631
        %4714 = vmatpush.bf16.msra.mxu0 %v4627
        %4715 = vmatpush.bf16.msra.mxu0 %v4623
        %4716 = vmatpush.bf16.msra.mxu0 %v4619
        %4717 = vmatpush.bf16.msra.mxu0 %v4615
        %4718 = vmatpush.bf16.msra.mxu0 %v4611
        %4719 = vmatmul.bf16.gmra.mxu0 %v4425
        %v4720 = vpop.f32.mrf.mxu0
        %v4721 = vadd.f32 0.0, %v4720
        %v4722 = vpop.f32.mrf.mxu0
        %v4723 = vadd.f32 0.0, %v4722
        %4724 = vmatmul.bf16.gmra.mxu0 %v4426
        %v4725 = vpop.f32.mrf.mxu0
        %v4726 = vadd.f32 0.0, %v4725
        %v4727 = vpop.f32.mrf.mxu0
        %v4728 = vadd.f32 0.0, %v4727
        %4729 = vdwg.mxu0
        %4730 = vmatpush.bf16.msra.mxu0 %v4640
        %4731 = vmatpush.bf16.msra.mxu0 %v4636
        %4732 = vmatpush.bf16.msra.mxu0 %v4632
        %4733 = vmatpush.bf16.msra.mxu0 %v4628
        %4734 = vmatpush.bf16.msra.mxu0 %v4624
        %4735 = vmatpush.bf16.msra.mxu0 %v4620
        %4736 = vmatpush.bf16.msra.mxu0 %v4616
        %4737 = vmatpush.bf16.msra.mxu0 %v4612
        %4738 = vmatmul.bf16.gmra.mxu0 %v4425
        %v4739 = vpop.f32.mrf.mxu0
        %v4740 = vadd.f32 0.0, %v4739
        %v4741 = vpop.f32.mrf.mxu0
        %v4742 = vadd.f32 0.0, %v4741
        %4743 = vmatmul.bf16.gmra.mxu0 %v4426
        %v4744 = vpop.f32.mrf.mxu0
        %v4745 = vadd.f32 0.0, %v4744
        %v4746 = vpop.f32.mrf.mxu0
        %v4747 = vadd.f32 0.0, %v4746
        %4748 = vdwg.mxu0
        %v4749 = vpack.c.bf16 %v4702, %v4683
        %v4750 = vpack.c.bf16 %v4740, %v4721
        %v4751 = vpack.c.bf16 %v4704, %v4685
        %v4752 = vpack.c.bf16 %v4742, %v4723
        %v4753 = vpack.c.bf16 %v4707, %v4688
        %v4754 = vpack.c.bf16 %v4745, %v4726
        %v4755 = vpack.c.bf16 %v4709, %v4690
        %v4756 = vpack.c.bf16 %v4747, %v4728
        %s4757 = scalar_lea.vmem %s788, 512 [#allocation8]
        %v4758 = vld [vmem:[%s4757] sm:$0xff]
        %v4759 = vld [vmem:[%s4757 + $0x8] sm:$0xff]
        %v4760 = vld [vmem:[%s4757 + $0x10] sm:$0xff]
        %v4761 = vld [vmem:[%s4757 + $0x18] sm:$0xff]
        %v4762 = vld [vmem:[%s4757 + $0x20] sm:$0xff]
        %v4763 = vld [vmem:[%s4757 + $0x28] sm:$0xff]
        %v4764 = vld [vmem:[%s4757 + $0x30] sm:$0xff]
        %v4765 = vld [vmem:[%s4757 + $0x38] sm:$0xff]
        %v4766 = vld [vmem:[%s4757 + $0x40] sm:$0xff]
        %v4767 = vld [vmem:[%s4757 + $0x48] sm:$0xff]
        %v4768 = vld [vmem:[%s4757 + $0x50] sm:$0xff]
        %v4769 = vld [vmem:[%s4757 + $0x58] sm:$0xff]
        %v4770 = vld [vmem:[%s4757 + $0x60] sm:$0xff]
        %v4771 = vld [vmem:[%s4757 + $0x68] sm:$0xff]
        %v4772 = vld [vmem:[%s4757 + $0x70] sm:$0xff]
        %v4773 = vld [vmem:[%s4757 + $0x78] sm:$0xff]
        %v4774 = vld [vmem:[%s4757 + $0x80] sm:$0xff]
        %v4775 = vld [vmem:[%s4757 + $0x88] sm:$0xff]
        %v4776 = vld [vmem:[%s4757 + $0x90] sm:$0xff]
        %v4777 = vld [vmem:[%s4757 + $0x98] sm:$0xff]
        %v4778 = vld [vmem:[%s4757 + $0xa0] sm:$0xff]
        %v4779 = vld [vmem:[%s4757 + $0xa8] sm:$0xff]
        %v4780 = vld [vmem:[%s4757 + $0xb0] sm:$0xff]
        %v4781 = vld [vmem:[%s4757 + $0xb8] sm:$0xff]
        %v4782 = vld [vmem:[%s4757 + $0xc0] sm:$0xff]
        %v4783 = vld [vmem:[%s4757 + $0xc8] sm:$0xff]
        %v4784 = vld [vmem:[%s4757 + $0xd0] sm:$0xff]
        %v4785 = vld [vmem:[%s4757 + $0xd8] sm:$0xff]
        %v4786 = vld [vmem:[%s4757 + $0xe0] sm:$0xff]
        %v4787 = vld [vmem:[%s4757 + $0xe8] sm:$0xff]
        %v4788 = vld [vmem:[%s4757 + $0xf0] sm:$0xff]
        %v4789 = vld [vmem:[%s4757 + $0xf8] sm:$0xff]
        %v4822 = vunpack.c.l.b16 %v4758
        %v4823 = vunpack.c.h.b16 %v4758
        %v4824 = vunpack.c.l.b16 %v4759
        %v4825 = vunpack.c.h.b16 %v4759
        %v4826 = vunpack.c.l.b16 %v4760
        %v4827 = vunpack.c.h.b16 %v4760
        %v4828 = vunpack.c.l.b16 %v4761
        %v4829 = vunpack.c.h.b16 %v4761
        %v4830 = vunpack.c.l.b16 %v4762
        %v4831 = vunpack.c.h.b16 %v4762
        %v4832 = vunpack.c.l.b16 %v4763
        %v4833 = vunpack.c.h.b16 %v4763
        %v4834 = vunpack.c.l.b16 %v4764
        %v4835 = vunpack.c.h.b16 %v4764
        %v4836 = vunpack.c.l.b16 %v4765
        %v4837 = vunpack.c.h.b16 %v4765
        %v4838 = vunpack.c.l.b16 %v4766
        %v4839 = vunpack.c.h.b16 %v4766
        %v4840 = vunpack.c.l.b16 %v4767
        %v4841 = vunpack.c.h.b16 %v4767
        %v4842 = vunpack.c.l.b16 %v4768
        %v4843 = vunpack.c.h.b16 %v4768
        %v4844 = vunpack.c.l.b16 %v4769
        %v4845 = vunpack.c.h.b16 %v4769
        %v4846 = vunpack.c.l.b16 %v4770
        %v4847 = vunpack.c.h.b16 %v4770
        %v4848 = vunpack.c.l.b16 %v4771
        %v4849 = vunpack.c.h.b16 %v4771
        %v4850 = vunpack.c.l.b16 %v4772
        %v4851 = vunpack.c.h.b16 %v4772
        %v4852 = vunpack.c.l.b16 %v4773
        %v4853 = vunpack.c.h.b16 %v4773
        %v4854 = vunpack.c.l.b16 %v4774
        %v4855 = vunpack.c.h.b16 %v4774
        %v4856 = vunpack.c.l.b16 %v4775
        %v4857 = vunpack.c.h.b16 %v4775
        %v4858 = vunpack.c.l.b16 %v4776
        %v4859 = vunpack.c.h.b16 %v4776
        %v4860 = vunpack.c.l.b16 %v4777
        %v4861 = vunpack.c.h.b16 %v4777
        %v4862 = vunpack.c.l.b16 %v4778
        %v4863 = vunpack.c.h.b16 %v4778
        %v4864 = vunpack.c.l.b16 %v4779
        %v4865 = vunpack.c.h.b16 %v4779
        %v4866 = vunpack.c.l.b16 %v4780
        %v4867 = vunpack.c.h.b16 %v4780
        %v4868 = vunpack.c.l.b16 %v4781
        %v4869 = vunpack.c.h.b16 %v4781
        %v4870 = vunpack.c.l.b16 %v4782
        %v4871 = vunpack.c.h.b16 %v4782
        %v4872 = vunpack.c.l.b16 %v4783
        %v4873 = vunpack.c.h.b16 %v4783
        %v4874 = vunpack.c.l.b16 %v4784
        %v4875 = vunpack.c.h.b16 %v4784
        %v4876 = vunpack.c.l.b16 %v4785
        %v4877 = vunpack.c.h.b16 %v4785
        %v4878 = vunpack.c.l.b16 %v4786
        %v4879 = vunpack.c.h.b16 %v4786
        %v4880 = vunpack.c.l.b16 %v4787
        %v4881 = vunpack.c.h.b16 %v4787
        %v4882 = vunpack.c.l.b16 %v4788
        %v4883 = vunpack.c.h.b16 %v4788
        %v4884 = vunpack.c.l.b16 %v4789
        %v4885 = vunpack.c.h.b16 %v4789
        %v4886 = vpack.c.b16 %v4826, %v4822
        %v4887 = vpack.c.b16 %v4827, %v4823
        %v4888 = vpack.c.b16 %v4828, %v4824
        %v4889 = vpack.c.b16 %v4829, %v4825
        %v4890 = vpack.c.b16 %v4834, %v4830
        %v4891 = vpack.c.b16 %v4835, %v4831
        %v4892 = vpack.c.b16 %v4836, %v4832
        %v4893 = vpack.c.b16 %v4837, %v4833
        %v4894 = vpack.c.b16 %v4842, %v4838
        %v4895 = vpack.c.b16 %v4843, %v4839
        %v4896 = vpack.c.b16 %v4844, %v4840
        %v4897 = vpack.c.b16 %v4845, %v4841
        %v4898 = vpack.c.b16 %v4850, %v4846
        %v4899 = vpack.c.b16 %v4851, %v4847
        %v4900 = vpack.c.b16 %v4852, %v4848
        %v4901 = vpack.c.b16 %v4853, %v4849
        %v4902 = vpack.c.b16 %v4858, %v4854
        %v4903 = vpack.c.b16 %v4859, %v4855
        %v4904 = vpack.c.b16 %v4860, %v4856
        %v4905 = vpack.c.b16 %v4861, %v4857
        %v4906 = vpack.c.b16 %v4866, %v4862
        %v4907 = vpack.c.b16 %v4867, %v4863
        %v4908 = vpack.c.b16 %v4868, %v4864
        %v4909 = vpack.c.b16 %v4869, %v4865
        %v4910 = vpack.c.b16 %v4874, %v4870
        %v4911 = vpack.c.b16 %v4875, %v4871
        %v4912 = vpack.c.b16 %v4876, %v4872
        %v4913 = vpack.c.b16 %v4877, %v4873
        %v4914 = vpack.c.b16 %v4882, %v4878
        %v4915 = vpack.c.b16 %v4883, %v4879
        %v4916 = vpack.c.b16 %v4884, %v4880
        %v4917 = vpack.c.b16 %v4885, %v4881
        %4950 = vmatpush.bf16.msra.mxu0 %v4914
        %4951 = vmatpush.bf16.msra.mxu0 %v4910
        %4952 = vmatpush.bf16.msra.mxu0 %v4906
        %4953 = vmatpush.bf16.msra.mxu0 %v4902
        %4954 = vmatpush.bf16.msra.mxu0 %v4898
        %4955 = vmatpush.bf16.msra.mxu0 %v4894
        %4956 = vmatpush.bf16.msra.mxu0 %v4890
        %4957 = vmatpush.bf16.msra.mxu0 %v4886
        %4958 = vmatmul.bf16.gmra.mxu0 %v4471
        %v4959 = vpop.f32.mrf.mxu0
        %v4960 = vadd.f32 0.0, %v4959
        %v4961 = vpop.f32.mrf.mxu0
        %v4962 = vadd.f32 0.0, %v4961
        %4963 = vdwg.mxu0
        %4964 = vmatpush.bf16.msra.mxu0 %v4915
        %4965 = vmatpush.bf16.msra.mxu0 %v4911
        %4966 = vmatpush.bf16.msra.mxu0 %v4907
        %4967 = vmatpush.bf16.msra.mxu0 %v4903
        %4968 = vmatpush.bf16.msra.mxu0 %v4899
        %4969 = vmatpush.bf16.msra.mxu0 %v4895
        %4970 = vmatpush.bf16.msra.mxu0 %v4891
        %4971 = vmatpush.bf16.msra.mxu0 %v4887
        %4972 = vmatmul.bf16.gmra.mxu0 %v4471
        %v4973 = vpop.f32.mrf.mxu0
        %v4974 = vadd.f32 0.0, %v4973
        %v4975 = vpop.f32.mrf.mxu0
        %v4976 = vadd.f32 0.0, %v4975
        %4977 = vdwg.mxu0
        %4978 = vmatpush.bf16.msra.mxu0 %v4916
        %4979 = vmatpush.bf16.msra.mxu0 %v4912
        %4980 = vmatpush.bf16.msra.mxu0 %v4908
        %4981 = vmatpush.bf16.msra.mxu0 %v4904
        %4982 = vmatpush.bf16.msra.mxu0 %v4900
        %4983 = vmatpush.bf16.msra.mxu0 %v4896
        %4984 = vmatpush.bf16.msra.mxu0 %v4892
        %4985 = vmatpush.bf16.msra.mxu0 %v4888
        %4986 = vmatmul.bf16.gmra.mxu0 %v4471
        %v4987 = vpop.f32.mrf.mxu0
        %v4988 = vadd.f32 0.0, %v4987
        %v4989 = vpop.f32.mrf.mxu0
        %v4990 = vadd.f32 0.0, %v4989
        %4991 = vdwg.mxu0
        %4992 = vmatpush.bf16.msra.mxu0 %v4917
        %4993 = vmatpush.bf16.msra.mxu0 %v4913
        %4994 = vmatpush.bf16.msra.mxu0 %v4909
        %4995 = vmatpush.bf16.msra.mxu0 %v4905
        %4996 = vmatpush.bf16.msra.mxu0 %v4901
        %4997 = vmatpush.bf16.msra.mxu0 %v4897
        %4998 = vmatpush.bf16.msra.mxu0 %v4893
        %4999 = vmatpush.bf16.msra.mxu0 %v4889
        %5000 = vmatmul.bf16.gmra.mxu0 %v4471
        %v5001 = vpop.f32.mrf.mxu0
        %v5002 = vadd.f32 0.0, %v5001
        %v5003 = vpop.f32.mrf.mxu0
        %v5004 = vadd.f32 0.0, %v5003
        %5005 = vdwg.mxu0
        %v5006 = vpack.c.bf16 %v4974, %v4960
        %v5007 = vpack.c.bf16 %v5002, %v4988
        %v5008 = vpack.c.bf16 %v4976, %v4962
        %v5009 = vpack.c.bf16 %v5004, %v4990
        %s5010 = scalar_lea.vmem %s798, 512 [#allocation9]
        %v5011 = vld [vmem:[%s5010] sm:$0xff]
        %v5012 = vld [vmem:[%s5010 + $0x8] sm:$0xff]
        %v5013 = vld [vmem:[%s5010 + $0x10] sm:$0xff]
        %v5014 = vld [vmem:[%s5010 + $0x18] sm:$0xff]
        %v5015 = vld [vmem:[%s5010 + $0x20] sm:$0xff]
        %v5016 = vld [vmem:[%s5010 + $0x28] sm:$0xff]
        %v5017 = vld [vmem:[%s5010 + $0x30] sm:$0xff]
        %v5018 = vld [vmem:[%s5010 + $0x38] sm:$0xff]
        %v5019 = vld [vmem:[%s5010 + $0x40] sm:$0xff]
        %v5020 = vld [vmem:[%s5010 + $0x48] sm:$0xff]
        %v5021 = vld [vmem:[%s5010 + $0x50] sm:$0xff]
        %v5022 = vld [vmem:[%s5010 + $0x58] sm:$0xff]
        %v5023 = vld [vmem:[%s5010 + $0x60] sm:$0xff]
        %v5024 = vld [vmem:[%s5010 + $0x68] sm:$0xff]
        %v5025 = vld [vmem:[%s5010 + $0x70] sm:$0xff]
        %v5026 = vld [vmem:[%s5010 + $0x78] sm:$0xff]
        %v5027 = vld [vmem:[%s5010 + $0x80] sm:$0xff]
        %v5028 = vld [vmem:[%s5010 + $0x88] sm:$0xff]
        %v5029 = vld [vmem:[%s5010 + $0x90] sm:$0xff]
        %v5030 = vld [vmem:[%s5010 + $0x98] sm:$0xff]
        %v5031 = vld [vmem:[%s5010 + $0xa0] sm:$0xff]
        %v5032 = vld [vmem:[%s5010 + $0xa8] sm:$0xff]
        %v5033 = vld [vmem:[%s5010 + $0xb0] sm:$0xff]
        %v5034 = vld [vmem:[%s5010 + $0xb8] sm:$0xff]
        %v5035 = vld [vmem:[%s5010 + $0xc0] sm:$0xff]
        %v5036 = vld [vmem:[%s5010 + $0xc8] sm:$0xff]
        %v5037 = vld [vmem:[%s5010 + $0xd0] sm:$0xff]
        %v5038 = vld [vmem:[%s5010 + $0xd8] sm:$0xff]
        %v5039 = vld [vmem:[%s5010 + $0xe0] sm:$0xff]
        %v5040 = vld [vmem:[%s5010 + $0xe8] sm:$0xff]
        %v5041 = vld [vmem:[%s5010 + $0xf0] sm:$0xff]
        %v5042 = vld [vmem:[%s5010 + $0xf8] sm:$0xff]
        %v5075 = vunpack.c.l.b16 %v5011
        %v5076 = vunpack.c.h.b16 %v5011
        %v5077 = vunpack.c.l.b16 %v5012
        %v5078 = vunpack.c.h.b16 %v5012
        %v5079 = vunpack.c.l.b16 %v5013
        %v5080 = vunpack.c.h.b16 %v5013
        %v5081 = vunpack.c.l.b16 %v5014
        %v5082 = vunpack.c.h.b16 %v5014
        %v5083 = vunpack.c.l.b16 %v5015
        %v5084 = vunpack.c.h.b16 %v5015
        %v5085 = vunpack.c.l.b16 %v5016
        %v5086 = vunpack.c.h.b16 %v5016
        %v5087 = vunpack.c.l.b16 %v5017
        %v5088 = vunpack.c.h.b16 %v5017
        %v5089 = vunpack.c.l.b16 %v5018
        %v5090 = vunpack.c.h.b16 %v5018
        %v5091 = vunpack.c.l.b16 %v5019
        %v5092 = vunpack.c.h.b16 %v5019
        %v5093 = vunpack.c.l.b16 %v5020
        %v5094 = vunpack.c.h.b16 %v5020
        %v5095 = vunpack.c.l.b16 %v5021
        %v5096 = vunpack.c.h.b16 %v5021
        %v5097 = vunpack.c.l.b16 %v5022
        %v5098 = vunpack.c.h.b16 %v5022
        %v5099 = vunpack.c.l.b16 %v5023
        %v5100 = vunpack.c.h.b16 %v5023
        %v5101 = vunpack.c.l.b16 %v5024
        %v5102 = vunpack.c.h.b16 %v5024
        %v5103 = vunpack.c.l.b16 %v5025
        %v5104 = vunpack.c.h.b16 %v5025
        %v5105 = vunpack.c.l.b16 %v5026
        %v5106 = vunpack.c.h.b16 %v5026
        %v5107 = vunpack.c.l.b16 %v5027
        %v5108 = vunpack.c.h.b16 %v5027
        %v5109 = vunpack.c.l.b16 %v5028
        %v5110 = vunpack.c.h.b16 %v5028
        %v5111 = vunpack.c.l.b16 %v5029
        %v5112 = vunpack.c.h.b16 %v5029
        %v5113 = vunpack.c.l.b16 %v5030
        %v5114 = vunpack.c.h.b16 %v5030
        %v5115 = vunpack.c.l.b16 %v5031
        %v5116 = vunpack.c.h.b16 %v5031
        %v5117 = vunpack.c.l.b16 %v5032
        %v5118 = vunpack.c.h.b16 %v5032
        %v5119 = vunpack.c.l.b16 %v5033
        %v5120 = vunpack.c.h.b16 %v5033
        %v5121 = vunpack.c.l.b16 %v5034
        %v5122 = vunpack.c.h.b16 %v5034
        %v5123 = vunpack.c.l.b16 %v5035
        %v5124 = vunpack.c.h.b16 %v5035
        %v5125 = vunpack.c.l.b16 %v5036
        %v5126 = vunpack.c.h.b16 %v5036
        %v5127 = vunpack.c.l.b16 %v5037
        %v5128 = vunpack.c.h.b16 %v5037
        %v5129 = vunpack.c.l.b16 %v5038
        %v5130 = vunpack.c.h.b16 %v5038
        %v5131 = vunpack.c.l.b16 %v5039
        %v5132 = vunpack.c.h.b16 %v5039
        %v5133 = vunpack.c.l.b16 %v5040
        %v5134 = vunpack.c.h.b16 %v5040
        %v5135 = vunpack.c.l.b16 %v5041
        %v5136 = vunpack.c.h.b16 %v5041
        %v5137 = vunpack.c.l.b16 %v5042
        %v5138 = vunpack.c.h.b16 %v5042
        %v5139 = vpack.c.b16 %v5079, %v5075
        %v5140 = vpack.c.b16 %v5080, %v5076
        %v5141 = vpack.c.b16 %v5081, %v5077
        %v5142 = vpack.c.b16 %v5082, %v5078
        %v5143 = vpack.c.b16 %v5087, %v5083
        %v5144 = vpack.c.b16 %v5088, %v5084
        %v5145 = vpack.c.b16 %v5089, %v5085
        %v5146 = vpack.c.b16 %v5090, %v5086
        %v5147 = vpack.c.b16 %v5095, %v5091
        %v5148 = vpack.c.b16 %v5096, %v5092
        %v5149 = vpack.c.b16 %v5097, %v5093
        %v5150 = vpack.c.b16 %v5098, %v5094
        %v5151 = vpack.c.b16 %v5103, %v5099
        %v5152 = vpack.c.b16 %v5104, %v5100
        %v5153 = vpack.c.b16 %v5105, %v5101
        %v5154 = vpack.c.b16 %v5106, %v5102
        %v5155 = vpack.c.b16 %v5111, %v5107
        %v5156 = vpack.c.b16 %v5112, %v5108
        %v5157 = vpack.c.b16 %v5113, %v5109
        %v5158 = vpack.c.b16 %v5114, %v5110
        %v5159 = vpack.c.b16 %v5119, %v5115
        %v5160 = vpack.c.b16 %v5120, %v5116
        %v5161 = vpack.c.b16 %v5121, %v5117
        %v5162 = vpack.c.b16 %v5122, %v5118
        %v5163 = vpack.c.b16 %v5127, %v5123
        %v5164 = vpack.c.b16 %v5128, %v5124
        %v5165 = vpack.c.b16 %v5129, %v5125
        %v5166 = vpack.c.b16 %v5130, %v5126
        %v5167 = vpack.c.b16 %v5135, %v5131
        %v5168 = vpack.c.b16 %v5136, %v5132
        %v5169 = vpack.c.b16 %v5137, %v5133
        %v5170 = vpack.c.b16 %v5138, %v5134
        %5203 = vmatpush.bf16.msra.mxu0 %v5167
        %5204 = vmatpush.bf16.msra.mxu0 %v5163
        %5205 = vmatpush.bf16.msra.mxu0 %v5159
        %5206 = vmatpush.bf16.msra.mxu0 %v5155
        %5207 = vmatpush.bf16.msra.mxu0 %v5151
        %5208 = vmatpush.bf16.msra.mxu0 %v5147
        %5209 = vmatpush.bf16.msra.mxu0 %v5143
        %5210 = vmatpush.bf16.msra.mxu0 %v5139
        %5211 = vmatmul.bf16.gmra.mxu0 %v4471
        %v5212 = vpop.f32.mrf.mxu0
        %v5213 = vadd.f32 0.0, %v5212
        %v5214 = vpop.f32.mrf.mxu0
        %v5215 = vadd.f32 0.0, %v5214
        %5216 = vdwg.mxu0
        %5217 = vmatpush.bf16.msra.mxu0 %v5168
        %5218 = vmatpush.bf16.msra.mxu0 %v5164
        %5219 = vmatpush.bf16.msra.mxu0 %v5160
        %5220 = vmatpush.bf16.msra.mxu0 %v5156
        %5221 = vmatpush.bf16.msra.mxu0 %v5152
        %5222 = vmatpush.bf16.msra.mxu0 %v5148
        %5223 = vmatpush.bf16.msra.mxu0 %v5144
        %5224 = vmatpush.bf16.msra.mxu0 %v5140
        %5225 = vmatmul.bf16.gmra.mxu0 %v4471
        %v5226 = vpop.f32.mrf.mxu0
        %v5227 = vadd.f32 0.0, %v5226
        %v5228 = vpop.f32.mrf.mxu0
        %v5229 = vadd.f32 0.0, %v5228
        %5230 = vdwg.mxu0
        %5231 = vmatpush.bf16.msra.mxu0 %v5169
        %5232 = vmatpush.bf16.msra.mxu0 %v5165
        %5233 = vmatpush.bf16.msra.mxu0 %v5161
        %5234 = vmatpush.bf16.msra.mxu0 %v5157
        %5235 = vmatpush.bf16.msra.mxu0 %v5153
        %5236 = vmatpush.bf16.msra.mxu0 %v5149
        %5237 = vmatpush.bf16.msra.mxu0 %v5145
        %5238 = vmatpush.bf16.msra.mxu0 %v5141
        %5239 = vmatmul.bf16.gmra.mxu0 %v4471
        %v5240 = vpop.f32.mrf.mxu0
        %v5241 = vadd.f32 0.0, %v5240
        %v5242 = vpop.f32.mrf.mxu0
        %v5243 = vadd.f32 0.0, %v5242
        %5244 = vdwg.mxu0
        %5245 = vmatpush.bf16.msra.mxu0 %v5170
        %5246 = vmatpush.bf16.msra.mxu0 %v5166
        %5247 = vmatpush.bf16.msra.mxu0 %v5162
        %5248 = vmatpush.bf16.msra.mxu0 %v5158
        %5249 = vmatpush.bf16.msra.mxu0 %v5154
        %5250 = vmatpush.bf16.msra.mxu0 %v5150
        %5251 = vmatpush.bf16.msra.mxu0 %v5146
        %5252 = vmatpush.bf16.msra.mxu0 %v5142
        %5253 = vmatmul.bf16.gmra.mxu0 %v4471
        %v5254 = vpop.f32.mrf.mxu0
        %v5255 = vadd.f32 0.0, %v5254
        %v5256 = vpop.f32.mrf.mxu0
        %v5257 = vadd.f32 0.0, %v5256
        %5258 = vdwg.mxu0
        %v5259 = vpack.c.bf16 %v5227, %v5213
        %v5260 = vpack.c.bf16 %v5255, %v5241
        %v5261 = vpack.c.bf16 %v5229, %v5215
        %v5262 = vpack.c.bf16 %v5257, %v5243
        %v5267 = vunpack.c.l.b16 %v4749
        %v5268 = vunpack.c.l.b16 %v4751
        %v5269 = vunpack.c.l.b16 %v4753
        %v5270 = vunpack.c.l.b16 %v4755
        %v5271 = vpack.c.b16 %v5268, %v5267
        %v5272 = vpack.c.b16 %v5270, %v5269
        %v5277 = vunpack.c.l.b16 %v5006
        %v5278 = vunpack.c.l.b16 %v5008
        %v5279 = vpack.c.b16 %v5278, %v5277
        %5281 = vmatpush.bf16.xpose.msra.mxu0 0
        %5282 = vmatpush.bf16.xpose.msra.mxu0 0
        %5283 = vmatpush.bf16.xpose.msra.mxu0 0
        %5284 = vmatpush.bf16.xpose.msra.mxu0 0
        %5285 = vmatpush.bf16.xpose.msra.mxu0 0
        %5286 = vmatpush.bf16.xpose.msra.mxu0 0
        %5287 = vmatpush.bf16.xpose.msra.mxu0 0
        %5288 = vmatpush.bf16.xpose.msra.mxu0 %v5279
        %5289 = vmatmul.bf16.gmra.mxu0 %v5271
        %v5290 = vpop.f32.mrf.mxu0
        %v5291 = vadd.f32 %v4476, %v5290
        %v5292 = vpop.f32.mrf.mxu0
        %v5293 = vadd.f32 %v4477, %v5292
        %5294 = vmatmul.bf16.gmra.mxu0 %v5272
        %v5295 = vpop.f32.mrf.mxu0
        %v5296 = vadd.f32 %v4478, %v5295
        %v5297 = vpop.f32.mrf.mxu0
        %v5298 = vadd.f32 %v4479, %v5297
        %5299 = vdwg.mxu0
        %v5300 = vsel %vm3733, %v5291, -inf
        %5301 = vmax.xlane.f32.xlu0 %v5300
        %v5302 = vpop.xlane.xlu0 %5301
        %v5303 = vsel %vm3733, %v5293, -inf
        %5304 = vmax.xlane.f32.xlu0 %v5303
        %v5305 = vpop.xlane.xlu0 %5304
        %v5306 = vsel %vm3733, %v5296, -inf
        %5307 = vmax.xlane.f32.xlu0 %v5306
        %v5308 = vpop.xlane.xlu0 %5307
        %v5309 = vsel %vm3733, %v5298, -inf
        %5310 = vmax.xlane.f32.xlu0 %v5309
        %v5311 = vpop.xlane.xlu0 %5310
        %v5312 = vsub.f32 %v5291, %v5302
        %v5313 = vsub.f32 %v5293, %v5305
        %v5314 = vsub.f32 %v5296, %v5308
        %v5315 = vsub.f32 %v5298, %v5311
        %v5316 = vmul.f32 %v5312, 1.442695
        %v5317 = vpow.pop %v5316
        %v5318 = vmul.f32 %v5313, 1.442695
        %v5319 = vpow.pop %v5318
        %v5320 = vmul.f32 %v5314, 1.442695
        %v5321 = vpow.pop %v5320
        %v5322 = vmul.f32 %v5315, 1.442695
        %v5323 = vpow.pop %v5322
        %v5324 = vsel %vm3733, %v5317, 0.0
        %5325 = vadd.xlane.f32.xlu0 %v5324
        %v5326 = vpop.xlane.xlu0 %5325
        %v5327 = vsel %vm3733, %v5319, 0.0
        %5328 = vadd.xlane.f32.xlu0 %v5327
        %v5329 = vpop.xlane.xlu0 %5328
        %v5330 = vsel %vm3733, %v5321, 0.0
        %5331 = vadd.xlane.f32.xlu0 %v5330
        %v5332 = vpop.xlane.xlu0 %5331
        %v5333 = vsel %vm3733, %v5323, 0.0
        %5334 = vadd.xlane.f32.xlu0 %v5333
        %v5335 = vpop.xlane.xlu0 %5334
        %v5336 = vrcp.pop %v5326
        %v5337 = vrcp.pop %v5329
        %v5338 = vrcp.pop %v5332
        %v5339 = vrcp.pop %v5335
        %v5340 = vmul.f32 %v5317, %v5336
        %v5341 = vmul.f32 %v5319, %v5337
        %v5342 = vmul.f32 %v5321, %v5338
        %v5343 = vmul.f32 %v5323, %v5339
        %v5344 = vpack.c.bf16 %v5341, %v5340
        %v5345 = vpack.c.bf16 %v5343, %v5342
        %v5348 = vunpack.c.l.b16 %v5259
        %v5349 = vunpack.c.l.b16 %v5261
        %v5350 = vpack.c.b16 %v5349, %v5348
        %v5353 = vsel %vm3733, %v5344, 0
        %v5356 = vsel %vm3733, %v5345, 0
        %5358 = vmatpush.bf16.msra.mxu0 0
        %5359 = vmatpush.bf16.msra.mxu0 0
        %5360 = vmatpush.bf16.msra.mxu0 0
        %5361 = vmatpush.bf16.msra.mxu0 0
        %5362 = vmatpush.bf16.msra.mxu0 0
        %5363 = vmatpush.bf16.msra.mxu0 0
        %5364 = vmatpush.bf16.msra.mxu0 0
        %5365 = vmatpush.bf16.msra.mxu0 %v5350
        %5366 = vmatmul.bf16.gmra.mxu0 %v5353
        %v5367 = vpop.f32.mrf.mxu0
        %v5368 = vadd.f32 0.0, %v5367
        %v5369 = vpop.f32.mrf.mxu0
        %v5370 = vadd.f32 0.0, %v5369
        %5371 = vmatmul.bf16.gmra.mxu0 %v5356
        %v5372 = vpop.f32.mrf.mxu0
        %v5373 = vadd.f32 0.0, %v5372
        %v5374 = vpop.f32.mrf.mxu0
        %v5375 = vadd.f32 0.0, %v5374
        %5376 = vdwg.mxu0
        %v5377 = vpack.c.bf16 %v5368, %v5368
        %v5378 = vpack.c.bf16 %v5370, %v5370
        %v5379 = vpack.c.bf16 %v5373, %v5373
        %v5380 = vpack.c.bf16 %v5375, %v5375
        %v5381 = vunpack.c.h.b16 %v4749
        %v5382 = vunpack.c.h.b16 %v4751
        %v5383 = vunpack.c.h.b16 %v4753
        %v5384 = vunpack.c.h.b16 %v4755
        %v5385 = vpack.c.b16 %v5382, %v5381
        %v5386 = vpack.c.b16 %v5384, %v5383
        %v5389 = vunpack.c.h.b16 %v5006
        %v5390 = vunpack.c.h.b16 %v5008
        %v5391 = vpack.c.b16 %v5390, %v5389
        %5393 = vmatpush.bf16.xpose.msra.mxu0 0
        %5394 = vmatpush.bf16.xpose.msra.mxu0 0
        %5395 = vmatpush.bf16.xpose.msra.mxu0 0
        %5396 = vmatpush.bf16.xpose.msra.mxu0 0
        %5397 = vmatpush.bf16.xpose.msra.mxu0 0
        %5398 = vmatpush.bf16.xpose.msra.mxu0 0
        %5399 = vmatpush.bf16.xpose.msra.mxu0 0
        %5400 = vmatpush.bf16.xpose.msra.mxu0 %v5391
        %5401 = vmatmul.bf16.gmra.mxu0 %v5385
        %v5402 = vpop.f32.mrf.mxu0
        %v5403 = vadd.f32 %v4476, %v5402
        %v5404 = vpop.f32.mrf.mxu0
        %v5405 = vadd.f32 %v4477, %v5404
        %5406 = vmatmul.bf16.gmra.mxu0 %v5386
        %v5407 = vpop.f32.mrf.mxu0
        %v5408 = vadd.f32 %v4478, %v5407
        %v5409 = vpop.f32.mrf.mxu0
        %v5410 = vadd.f32 %v4479, %v5409
        %5411 = vdwg.mxu0
        %v5412 = vsel %vm3733, %v5403, -inf
        %5413 = vmax.xlane.f32.xlu0 %v5412
        %v5414 = vpop.xlane.xlu0 %5413
        %v5415 = vsel %vm3733, %v5405, -inf
        %5416 = vmax.xlane.f32.xlu0 %v5415
        %v5417 = vpop.xlane.xlu0 %5416
        %v5418 = vsel %vm3733, %v5408, -inf
        %5419 = vmax.xlane.f32.xlu0 %v5418
        %v5420 = vpop.xlane.xlu0 %5419
        %v5421 = vsel %vm3733, %v5410, -inf
        %5422 = vmax.xlane.f32.xlu0 %v5421
        %v5423 = vpop.xlane.xlu0 %5422
        %v5424 = vsub.f32 %v5403, %v5414
        %v5425 = vsub.f32 %v5405, %v5417
        %v5426 = vsub.f32 %v5408, %v5420
        %v5427 = vsub.f32 %v5410, %v5423
        %v5428 = vmul.f32 %v5424, 1.442695
        %v5429 = vpow.pop %v5428
        %v5430 = vmul.f32 %v5425, 1.442695
        %v5431 = vpow.pop %v5430
        %v5432 = vmul.f32 %v5426, 1.442695
        %v5433 = vpow.pop %v5432
        %v5434 = vmul.f32 %v5427, 1.442695
        %v5435 = vpow.pop %v5434
        %v5436 = vsel %vm3733, %v5429, 0.0
        %5437 = vadd.xlane.f32.xlu0 %v5436
        %v5438 = vpop.xlane.xlu0 %5437
        %v5439 = vsel %vm3733, %v5431, 0.0
        %5440 = vadd.xlane.f32.xlu0 %v5439
        %v5441 = vpop.xlane.xlu0 %5440
        %v5442 = vsel %vm3733, %v5433, 0.0
        %5443 = vadd.xlane.f32.xlu0 %v5442
        %v5444 = vpop.xlane.xlu0 %5443
        %v5445 = vsel %vm3733, %v5435, 0.0
        %5446 = vadd.xlane.f32.xlu0 %v5445
        %v5447 = vpop.xlane.xlu0 %5446
        %v5448 = vrcp.pop %v5438
        %v5449 = vrcp.pop %v5441
        %v5450 = vrcp.pop %v5444
        %v5451 = vrcp.pop %v5447
        %v5452 = vmul.f32 %v5429, %v5448
        %v5453 = vmul.f32 %v5431, %v5449
        %v5454 = vmul.f32 %v5433, %v5450
        %v5455 = vmul.f32 %v5435, %v5451
        %v5456 = vpack.c.bf16 %v5453, %v5452
        %v5457 = vpack.c.bf16 %v5455, %v5454
        %v5458 = vunpack.c.h.b16 %v5259
        %v5459 = vunpack.c.h.b16 %v5261
        %v5460 = vpack.c.b16 %v5459, %v5458
        %v5463 = vsel %vm3733, %v5456, 0
        %v5466 = vsel %vm3733, %v5457, 0
        %5468 = vmatpush.bf16.msra.mxu0 0
        %5469 = vmatpush.bf16.msra.mxu0 0
        %5470 = vmatpush.bf16.msra.mxu0 0
        %5471 = vmatpush.bf16.msra.mxu0 0
        %5472 = vmatpush.bf16.msra.mxu0 0
        %5473 = vmatpush.bf16.msra.mxu0 0
        %5474 = vmatpush.bf16.msra.mxu0 0
        %5475 = vmatpush.bf16.msra.mxu0 %v5460
        %5476 = vmatmul.bf16.gmra.mxu0 %v5463
        %v5477 = vpop.f32.mrf.mxu0
        %v5478 = vadd.f32 0.0, %v5477
        %v5479 = vpop.f32.mrf.mxu0
        %v5480 = vadd.f32 0.0, %v5479
        %5481 = vmatmul.bf16.gmra.mxu0 %v5466
        %v5482 = vpop.f32.mrf.mxu0
        %v5483 = vadd.f32 0.0, %v5482
        %v5484 = vpop.f32.mrf.mxu0
        %v5485 = vadd.f32 0.0, %v5484
        %5486 = vdwg.mxu0
        %v5487 = vpack.c.bf16 %v5478, %v5478
        %v5488 = vpack.c.bf16 %v5480, %v5480
        %v5489 = vpack.c.bf16 %v5483, %v5483
        %v5490 = vpack.c.bf16 %v5485, %v5485
        %v5495 = vunpack.c.l.b16 %v4750
        %v5496 = vunpack.c.l.b16 %v4752
        %v5497 = vunpack.c.l.b16 %v4754
        %v5498 = vunpack.c.l.b16 %v4756
        %v5499 = vpack.c.b16 %v5496, %v5495
        %v5500 = vpack.c.b16 %v5498, %v5497
        %v5505 = vunpack.c.l.b16 %v5007
        %v5506 = vunpack.c.l.b16 %v5009
        %v5507 = vpack.c.b16 %v5506, %v5505
        %5509 = vmatpush.bf16.xpose.msra.mxu0 0
        %5510 = vmatpush.bf16.xpose.msra.mxu0 0
        %5511 = vmatpush.bf16.xpose.msra.mxu0 0
        %5512 = vmatpush.bf16.xpose.msra.mxu0 0
        %5513 = vmatpush.bf16.xpose.msra.mxu0 0
        %5514 = vmatpush.bf16.xpose.msra.mxu0 0
        %5515 = vmatpush.bf16.xpose.msra.mxu0 0
        %5516 = vmatpush.bf16.xpose.msra.mxu0 %v5507
        %5517 = vmatmul.bf16.gmra.mxu0 %v5499
        %v5518 = vpop.f32.mrf.mxu0
        %v5519 = vadd.f32 %v4476, %v5518
        %v5520 = vpop.f32.mrf.mxu0
        %v5521 = vadd.f32 %v4477, %v5520
        %5522 = vmatmul.bf16.gmra.mxu0 %v5500
        %v5523 = vpop.f32.mrf.mxu0
        %v5524 = vadd.f32 %v4478, %v5523
        %v5525 = vpop.f32.mrf.mxu0
        %v5526 = vadd.f32 %v4479, %v5525
        %5527 = vdwg.mxu0
        %v5528 = vsel %vm3733, %v5519, -inf
        %5529 = vmax.xlane.f32.xlu0 %v5528
        %v5530 = vpop.xlane.xlu0 %5529
        %v5531 = vsel %vm3733, %v5521, -inf
        %5532 = vmax.xlane.f32.xlu0 %v5531
        %v5533 = vpop.xlane.xlu0 %5532
        %v5534 = vsel %vm3733, %v5524, -inf
        %5535 = vmax.xlane.f32.xlu0 %v5534
        %v5536 = vpop.xlane.xlu0 %5535
        %v5537 = vsel %vm3733, %v5526, -inf
        %5538 = vmax.xlane.f32.xlu0 %v5537
        %v5539 = vpop.xlane.xlu0 %5538
        %v5540 = vsub.f32 %v5519, %v5530
        %v5541 = vsub.f32 %v5521, %v5533
        %v5542 = vsub.f32 %v5524, %v5536
        %v5543 = vsub.f32 %v5526, %v5539
        %v5544 = vmul.f32 %v5540, 1.442695
        %v5545 = vpow.pop %v5544
        %v5546 = vmul.f32 %v5541, 1.442695
        %v5547 = vpow.pop %v5546
        %v5548 = vmul.f32 %v5542, 1.442695
        %v5549 = vpow.pop %v5548
        %v5550 = vmul.f32 %v5543, 1.442695
        %v5551 = vpow.pop %v5550
        %v5552 = vsel %vm3733, %v5545, 0.0
        %5553 = vadd.xlane.f32.xlu0 %v5552
        %v5554 = vpop.xlane.xlu0 %5553
        %v5555 = vsel %vm3733, %v5547, 0.0
        %5556 = vadd.xlane.f32.xlu0 %v5555
        %v5557 = vpop.xlane.xlu0 %5556
        %v5558 = vsel %vm3733, %v5549, 0.0
        %5559 = vadd.xlane.f32.xlu0 %v5558
        %v5560 = vpop.xlane.xlu0 %5559
        %v5561 = vsel %vm3733, %v5551, 0.0
        %5562 = vadd.xlane.f32.xlu0 %v5561
        %v5563 = vpop.xlane.xlu0 %5562
        %v5564 = vrcp.pop %v5554
        %v5565 = vrcp.pop %v5557
        %v5566 = vrcp.pop %v5560
        %v5567 = vrcp.pop %v5563
        %v5568 = vmul.f32 %v5545, %v5564
        %v5569 = vmul.f32 %v5547, %v5565
        %v5570 = vmul.f32 %v5549, %v5566
        %v5571 = vmul.f32 %v5551, %v5567
        %v5572 = vpack.c.bf16 %v5569, %v5568
        %v5573 = vpack.c.bf16 %v5571, %v5570
        %v5576 = vunpack.c.l.b16 %v5260
        %v5577 = vunpack.c.l.b16 %v5262
        %v5578 = vpack.c.b16 %v5577, %v5576
        %v5581 = vsel %vm3733, %v5572, 0
        %v5584 = vsel %vm3733, %v5573, 0
        %5586 = vmatpush.bf16.msra.mxu0 0
        %5587 = vmatpush.bf16.msra.mxu0 0
        %5588 = vmatpush.bf16.msra.mxu0 0
        %5589 = vmatpush.bf16.msra.mxu0 0
        %5590 = vmatpush.bf16.msra.mxu0 0
        %5591 = vmatpush.bf16.msra.mxu0 0
        %5592 = vmatpush.bf16.msra.mxu0 0
        %5593 = vmatpush.bf16.msra.mxu0 %v5578
        %5594 = vmatmul.bf16.gmra.mxu0 %v5581
        %v5595 = vpop.f32.mrf.mxu0
        %v5596 = vadd.f32 0.0, %v5595
        %v5597 = vpop.f32.mrf.mxu0
        %v5598 = vadd.f32 0.0, %v5597
        %5599 = vmatmul.bf16.gmra.mxu0 %v5584
        %v5600 = vpop.f32.mrf.mxu0
        %v5601 = vadd.f32 0.0, %v5600
        %v5602 = vpop.f32.mrf.mxu0
        %v5603 = vadd.f32 0.0, %v5602
        %5604 = vdwg.mxu0
        %v5605 = vpack.c.bf16 %v5596, %v5596
        %v5606 = vpack.c.bf16 %v5598, %v5598
        %v5607 = vpack.c.bf16 %v5601, %v5601
        %v5608 = vpack.c.bf16 %v5603, %v5603
        %v5609 = vunpack.c.h.b16 %v4750
        %v5610 = vunpack.c.h.b16 %v4752
        %v5611 = vunpack.c.h.b16 %v4754
        %v5612 = vunpack.c.h.b16 %v4756
        %v5613 = vpack.c.b16 %v5610, %v5609
        %v5614 = vpack.c.b16 %v5612, %v5611
        %v5617 = vunpack.c.h.b16 %v5007
        %v5618 = vunpack.c.h.b16 %v5009
        %v5619 = vpack.c.b16 %v5618, %v5617
        %5621 = vmatpush.bf16.xpose.msra.mxu0 0
        %5622 = vmatpush.bf16.xpose.msra.mxu0 0
        %5623 = vmatpush.bf16.xpose.msra.mxu0 0
        %5624 = vmatpush.bf16.xpose.msra.mxu0 0
        %5625 = vmatpush.bf16.xpose.msra.mxu0 0
        %5626 = vmatpush.bf16.xpose.msra.mxu0 0
        %5627 = vmatpush.bf16.xpose.msra.mxu0 0
        %5628 = vmatpush.bf16.xpose.msra.mxu0 %v5619
        %5629 = vmatmul.bf16.gmra.mxu0 %v5613
        %v5630 = vpop.f32.mrf.mxu0
        %v5631 = vadd.f32 %v4476, %v5630
        %v5632 = vpop.f32.mrf.mxu0
        %v5633 = vadd.f32 %v4477, %v5632
        %5634 = vmatmul.bf16.gmra.mxu0 %v5614
        %v5635 = vpop.f32.mrf.mxu0
        %v5636 = vadd.f32 %v4478, %v5635
        %v5637 = vpop.f32.mrf.mxu0
        %v5638 = vadd.f32 %v4479, %v5637
        %5639 = vdwg.mxu0
        %v5640 = vsel %vm3733, %v5631, -inf
        %5641 = vmax.xlane.f32.xlu0 %v5640
        %v5642 = vpop.xlane.xlu0 %5641
        %v5643 = vsel %vm3733, %v5633, -inf
        %5644 = vmax.xlane.f32.xlu0 %v5643
        %v5645 = vpop.xlane.xlu0 %5644
        %v5646 = vsel %vm3733, %v5636, -inf
        %5647 = vmax.xlane.f32.xlu0 %v5646
        %v5648 = vpop.xlane.xlu0 %5647
        %v5649 = vsel %vm3733, %v5638, -inf
        %5650 = vmax.xlane.f32.xlu0 %v5649
        %v5651 = vpop.xlane.xlu0 %5650
        %v5652 = vsub.f32 %v5631, %v5642
        %v5653 = vsub.f32 %v5633, %v5645
        %v5654 = vsub.f32 %v5636, %v5648
        %v5655 = vsub.f32 %v5638, %v5651
        %v5656 = vmul.f32 %v5652, 1.442695
        %v5657 = vpow.pop %v5656
        %v5658 = vmul.f32 %v5653, 1.442695
        %v5659 = vpow.pop %v5658
        %v5660 = vmul.f32 %v5654, 1.442695
        %v5661 = vpow.pop %v5660
        %v5662 = vmul.f32 %v5655, 1.442695
        %v5663 = vpow.pop %v5662
        %v5664 = vsel %vm3733, %v5657, 0.0
        %5665 = vadd.xlane.f32.xlu0 %v5664
        %v5666 = vpop.xlane.xlu0 %5665
        %v5667 = vsel %vm3733, %v5659, 0.0
        %5668 = vadd.xlane.f32.xlu0 %v5667
        %v5669 = vpop.xlane.xlu0 %5668
        %v5670 = vsel %vm3733, %v5661, 0.0
        %5671 = vadd.xlane.f32.xlu0 %v5670
        %v5672 = vpop.xlane.xlu0 %5671
        %v5673 = vsel %vm3733, %v5663, 0.0
        %5674 = vadd.xlane.f32.xlu0 %v5673
        %v5675 = vpop.xlane.xlu0 %5674
        %v5676 = vrcp.pop %v5666
        %v5677 = vrcp.pop %v5669
        %v5678 = vrcp.pop %v5672
        %v5679 = vrcp.pop %v5675
        %v5680 = vmul.f32 %v5657, %v5676
        %v5681 = vmul.f32 %v5659, %v5677
        %v5682 = vmul.f32 %v5661, %v5678
        %v5683 = vmul.f32 %v5663, %v5679
        %v5684 = vpack.c.bf16 %v5681, %v5680
        %v5685 = vpack.c.bf16 %v5683, %v5682
        %v5686 = vunpack.c.h.b16 %v5260
        %v5687 = vunpack.c.h.b16 %v5262
        %v5688 = vpack.c.b16 %v5687, %v5686
        %v5691 = vsel %vm3733, %v5684, 0
        %v5694 = vsel %vm3733, %v5685, 0
        %5696 = vmatpush.bf16.msra.mxu0 0
        %5697 = vmatpush.bf16.msra.mxu0 0
        %5698 = vmatpush.bf16.msra.mxu0 0
        %5699 = vmatpush.bf16.msra.mxu0 0
        %5700 = vmatpush.bf16.msra.mxu0 0
        %5701 = vmatpush.bf16.msra.mxu0 0
        %5702 = vmatpush.bf16.msra.mxu0 0
        %5703 = vmatpush.bf16.msra.mxu0 %v5688
        %5704 = vmatmul.bf16.gmra.mxu0 %v5691
        %v5705 = vpop.f32.mrf.mxu0
        %v5706 = vadd.f32 0.0, %v5705
        %v5707 = vpop.f32.mrf.mxu0
        %v5708 = vadd.f32 0.0, %v5707
        %5709 = vmatmul.bf16.gmra.mxu0 %v5694
        %v5710 = vpop.f32.mrf.mxu0
        %v5711 = vadd.f32 0.0, %v5710
        %v5712 = vpop.f32.mrf.mxu0
        %v5713 = vadd.f32 0.0, %v5712
        %5714 = vdwg.mxu0
        %v5715 = vpack.c.bf16 %v5706, %v5706
        %v5716 = vpack.c.bf16 %v5708, %v5708
        %v5717 = vpack.c.bf16 %v5711, %v5711
        %v5718 = vpack.c.bf16 %v5713, %v5713
        %v5723 = vunpack.c.l.b16 %v5377
        %v5724 = vunpack.c.l.b16 %v5378
        %v5725 = vunpack.c.l.b16 %v5379
        %v5726 = vunpack.c.l.b16 %v5380
        %v5727 = vpack.c.b16 %v5724, %v5723
        %v5728 = vpack.c.b16 %v5726, %v5725
        %v5735 = vunpack.c.l.b16 %v5487
        %v5736 = vunpack.c.l.b16 %v5488
        %v5737 = vunpack.c.l.b16 %v5489
        %v5738 = vunpack.c.l.b16 %v5490
        %v5739 = vpack.c.b16 %v5736, %v5735
        %v5740 = vpack.c.b16 %v5738, %v5737
        %v5747 = vunpack.c.l.b16 %v5605
        %v5748 = vunpack.c.l.b16 %v5606
        %v5749 = vunpack.c.l.b16 %v5607
        %v5750 = vunpack.c.l.b16 %v5608
        %v5751 = vpack.c.b16 %v5748, %v5747
        %v5752 = vpack.c.b16 %v5750, %v5749
        %v5759 = vunpack.c.l.b16 %v5715
        %v5760 = vunpack.c.l.b16 %v5716
        %v5761 = vunpack.c.l.b16 %v5717
        %v5762 = vunpack.c.l.b16 %v5718
        %v5763 = vpack.c.b16 %v5760, %v5759
        %v5764 = vpack.c.b16 %v5762, %v5761
        %s5767 = scalar_lea.vmem %s808, 512 [#allocation11]
        %v5768 = vld [vmem:[%s5767] sm:$0xf]
        %v5769 = vld [vmem:[%s5767 + $0x4] sm:$0xf]
        %v5770 = vld [vmem:[%s5767 + $0x8] sm:$0xf]
        %v5771 = vld [vmem:[%s5767 + $0xc] sm:$0xf]
        %v5772 = vld [vmem:[%s5767 + $0x10] sm:$0xf]
        %v5773 = vld [vmem:[%s5767 + $0x14] sm:$0xf]
        %v5774 = vld [vmem:[%s5767 + $0x18] sm:$0xf]
        %v5775 = vld [vmem:[%s5767 + $0x1c] sm:$0xf]
        %v5776 = vld [vmem:[%s5767 + $0x20] sm:$0xf]
        %v5777 = vld [vmem:[%s5767 + $0x24] sm:$0xf]
        %v5778 = vld [vmem:[%s5767 + $0x28] sm:$0xf]
        %v5779 = vld [vmem:[%s5767 + $0x2c] sm:$0xf]
        %v5780 = vld [vmem:[%s5767 + $0x30] sm:$0xf]
        %v5781 = vld [vmem:[%s5767 + $0x34] sm:$0xf]
        %v5782 = vld [vmem:[%s5767 + $0x38] sm:$0xf]
        %v5783 = vld [vmem:[%s5767 + $0x3c] sm:$0xf]
        %v5784 = vld [vmem:[%s5767 + $0x40] sm:$0xf]
        %v5785 = vld [vmem:[%s5767 + $0x44] sm:$0xf]
        %v5786 = vld [vmem:[%s5767 + $0x48] sm:$0xf]
        %v5787 = vld [vmem:[%s5767 + $0x4c] sm:$0xf]
        %v5788 = vld [vmem:[%s5767 + $0x50] sm:$0xf]
        %v5789 = vld [vmem:[%s5767 + $0x54] sm:$0xf]
        %v5790 = vld [vmem:[%s5767 + $0x58] sm:$0xf]
        %v5791 = vld [vmem:[%s5767 + $0x5c] sm:$0xf]
        %v5792 = vld [vmem:[%s5767 + $0x60] sm:$0xf]
        %v5793 = vld [vmem:[%s5767 + $0x64] sm:$0xf]
        %v5794 = vld [vmem:[%s5767 + $0x68] sm:$0xf]
        %v5795 = vld [vmem:[%s5767 + $0x6c] sm:$0xf]
        %v5796 = vld [vmem:[%s5767 + $0x70] sm:$0xf]
        %v5797 = vld [vmem:[%s5767 + $0x74] sm:$0xf]
        %v5798 = vld [vmem:[%s5767 + $0x78] sm:$0xf]
        %v5799 = vld [vmem:[%s5767 + $0x7c] sm:$0xf]
        %v5800 = vld [vmem:[%s5767 + $0x80] sm:$0xf]
        %v5801 = vld [vmem:[%s5767 + $0x84] sm:$0xf]
        %v5802 = vld [vmem:[%s5767 + $0x88] sm:$0xf]
        %v5803 = vld [vmem:[%s5767 + $0x8c] sm:$0xf]
        %v5804 = vld [vmem:[%s5767 + $0x90] sm:$0xf]
        %v5805 = vld [vmem:[%s5767 + $0x94] sm:$0xf]
        %v5806 = vld [vmem:[%s5767 + $0x98] sm:$0xf]
        %v5807 = vld [vmem:[%s5767 + $0x9c] sm:$0xf]
        %v5808 = vld [vmem:[%s5767 + $0xa0] sm:$0xf]
        %v5809 = vld [vmem:[%s5767 + $0xa4] sm:$0xf]
        %v5810 = vld [vmem:[%s5767 + $0xa8] sm:$0xf]
        %v5811 = vld [vmem:[%s5767 + $0xac] sm:$0xf]
        %v5812 = vld [vmem:[%s5767 + $0xb0] sm:$0xf]
        %v5813 = vld [vmem:[%s5767 + $0xb4] sm:$0xf]
        %v5814 = vld [vmem:[%s5767 + $0xb8] sm:$0xf]
        %v5815 = vld [vmem:[%s5767 + $0xbc] sm:$0xf]
        %v5816 = vld [vmem:[%s5767 + $0xc0] sm:$0xf]
        %v5817 = vld [vmem:[%s5767 + $0xc4] sm:$0xf]
        %v5818 = vld [vmem:[%s5767 + $0xc8] sm:$0xf]
        %v5819 = vld [vmem:[%s5767 + $0xcc] sm:$0xf]
        %v5820 = vld [vmem:[%s5767 + $0xd0] sm:$0xf]
        %v5821 = vld [vmem:[%s5767 + $0xd4] sm:$0xf]
        %v5822 = vld [vmem:[%s5767 + $0xd8] sm:$0xf]
        %v5823 = vld [vmem:[%s5767 + $0xdc] sm:$0xf]
        %v5824 = vld [vmem:[%s5767 + $0xe0] sm:$0xf]
        %v5825 = vld [vmem:[%s5767 + $0xe4] sm:$0xf]
        %v5826 = vld [vmem:[%s5767 + $0xe8] sm:$0xf]
        %v5827 = vld [vmem:[%s5767 + $0xec] sm:$0xf]
        %v5828 = vld [vmem:[%s5767 + $0xf0] sm:$0xf]
        %v5829 = vld [vmem:[%s5767 + $0xf4] sm:$0xf]
        %v5830 = vld [vmem:[%s5767 + $0xf8] sm:$0xf]
        %v5831 = vld [vmem:[%s5767 + $0xfc] sm:$0xf]
        %v5832 = vld [vmem:[%s818 + $0x2] sm:$0x1]
        %v5833 = vperm.slane %v5832, 0
        %v5898 = vunpack.c.l.b16 %v5768
        %v5899 = vunpack.c.l.b16 %v5769
        %v5900 = vunpack.c.l.b16 %v5770
        %v5901 = vunpack.c.l.b16 %v5771
        %v5902 = vunpack.c.l.b16 %v5772
        %v5903 = vunpack.c.l.b16 %v5773
        %v5904 = vunpack.c.l.b16 %v5774
        %v5905 = vunpack.c.l.b16 %v5775
        %v5906 = vunpack.c.l.b16 %v5776
        %v5907 = vunpack.c.l.b16 %v5777
        %v5908 = vunpack.c.l.b16 %v5778
        %v5909 = vunpack.c.l.b16 %v5779
        %v5910 = vunpack.c.l.b16 %v5780
        %v5911 = vunpack.c.l.b16 %v5781
        %v5912 = vunpack.c.l.b16 %v5782
        %v5913 = vunpack.c.l.b16 %v5783
        %v5914 = vunpack.c.l.b16 %v5784
        %v5915 = vunpack.c.l.b16 %v5785
        %v5916 = vunpack.c.l.b16 %v5786
        %v5917 = vunpack.c.l.b16 %v5787
        %v5918 = vunpack.c.l.b16 %v5788
        %v5919 = vunpack.c.l.b16 %v5789
        %v5920 = vunpack.c.l.b16 %v5790
        %v5921 = vunpack.c.l.b16 %v5791
        %v5922 = vunpack.c.l.b16 %v5792
        %v5923 = vunpack.c.l.b16 %v5793
        %v5924 = vunpack.c.l.b16 %v5794
        %v5925 = vunpack.c.l.b16 %v5795
        %v5926 = vunpack.c.l.b16 %v5796
        %v5927 = vunpack.c.l.b16 %v5797
        %v5928 = vunpack.c.l.b16 %v5798
        %v5929 = vunpack.c.l.b16 %v5799
        %v5930 = vunpack.c.l.b16 %v5800
        %v5931 = vunpack.c.l.b16 %v5801
        %v5932 = vunpack.c.l.b16 %v5802
        %v5933 = vunpack.c.l.b16 %v5803
        %v5934 = vunpack.c.l.b16 %v5804
        %v5935 = vunpack.c.l.b16 %v5805
        %v5936 = vunpack.c.l.b16 %v5806
        %v5937 = vunpack.c.l.b16 %v5807
        %v5938 = vunpack.c.l.b16 %v5808
        %v5939 = vunpack.c.l.b16 %v5809
        %v5940 = vunpack.c.l.b16 %v5810
        %v5941 = vunpack.c.l.b16 %v5811
        %v5942 = vunpack.c.l.b16 %v5812
        %v5943 = vunpack.c.l.b16 %v5813
        %v5944 = vunpack.c.l.b16 %v5814
        %v5945 = vunpack.c.l.b16 %v5815
        %v5946 = vunpack.c.l.b16 %v5816
        %v5947 = vunpack.c.l.b16 %v5817
        %v5948 = vunpack.c.l.b16 %v5818
        %v5949 = vunpack.c.l.b16 %v5819
        %v5950 = vunpack.c.l.b16 %v5820
        %v5951 = vunpack.c.l.b16 %v5821
        %v5952 = vunpack.c.l.b16 %v5822
        %v5953 = vunpack.c.l.b16 %v5823
        %v5954 = vunpack.c.l.b16 %v5824
        %v5955 = vunpack.c.l.b16 %v5825
        %v5956 = vunpack.c.l.b16 %v5826
        %v5957 = vunpack.c.l.b16 %v5827
        %v5958 = vunpack.c.l.b16 %v5828
        %v5959 = vunpack.c.l.b16 %v5829
        %v5960 = vunpack.c.l.b16 %v5830
        %v5961 = vunpack.c.l.b16 %v5831
        %v5962 = vpack.c.b16 %v5899, %v5898
        %v5963 = vpack.c.b16 %v5901, %v5900
        %v5964 = vpack.c.b16 %v5903, %v5902
        %v5965 = vpack.c.b16 %v5905, %v5904
        %v5966 = vpack.c.b16 %v5907, %v5906
        %v5967 = vpack.c.b16 %v5909, %v5908
        %v5968 = vpack.c.b16 %v5911, %v5910
        %v5969 = vpack.c.b16 %v5913, %v5912
        %v5970 = vpack.c.b16 %v5915, %v5914
        %v5971 = vpack.c.b16 %v5917, %v5916
        %v5972 = vpack.c.b16 %v5919, %v5918
        %v5973 = vpack.c.b16 %v5921, %v5920
        %v5974 = vpack.c.b16 %v5923, %v5922
        %v5975 = vpack.c.b16 %v5925, %v5924
        %v5976 = vpack.c.b16 %v5927, %v5926
        %v5977 = vpack.c.b16 %v5929, %v5928
        %v5978 = vpack.c.b16 %v5931, %v5930
        %v5979 = vpack.c.b16 %v5933, %v5932
        %v5980 = vpack.c.b16 %v5935, %v5934
        %v5981 = vpack.c.b16 %v5937, %v5936
        %v5982 = vpack.c.b16 %v5939, %v5938
        %v5983 = vpack.c.b16 %v5941, %v5940
        %v5984 = vpack.c.b16 %v5943, %v5942
        %v5985 = vpack.c.b16 %v5945, %v5944
        %v5986 = vpack.c.b16 %v5947, %v5946
        %v5987 = vpack.c.b16 %v5949, %v5948
        %v5988 = vpack.c.b16 %v5951, %v5950
        %v5989 = vpack.c.b16 %v5953, %v5952
        %v5990 = vpack.c.b16 %v5955, %v5954
        %v5991 = vpack.c.b16 %v5957, %v5956
        %v5992 = vpack.c.b16 %v5959, %v5958
        %v5993 = vpack.c.b16 %v5961, %v5960
        %6026 = vmatpush.bf16.msra.mxu0 %v5969
        %6027 = vmatpush.bf16.msra.mxu0 %v5968
        %6028 = vmatpush.bf16.msra.mxu0 %v5967
        %6029 = vmatpush.bf16.msra.mxu0 %v5966
        %6030 = vmatpush.bf16.msra.mxu0 %v5965
        %6031 = vmatpush.bf16.msra.mxu0 %v5964
        %6032 = vmatpush.bf16.msra.mxu0 %v5963
        %6033 = vmatpush.bf16.msra.mxu0 %v5962
        %6034 = vmatmul.bf16.gmra.mxu0 %v5727
        %v6035 = vpop.f32.mrf.mxu0
        %v6036 = vadd.f32 %v5833, %v6035
        %v6037 = vpop.f32.mrf.mxu0
        %v6038 = vadd.f32 %v5833, %v6037
        %6039 = vmatmul.bf16.gmra.mxu0 %v5728
        %v6040 = vpop.f32.mrf.mxu0
        %v6041 = vadd.f32 %v5833, %v6040
        %v6042 = vpop.f32.mrf.mxu0
        %v6043 = vadd.f32 %v5833, %v6042
        %6044 = vdwg.mxu0
        %6045 = vmatpush.bf16.msra.mxu0 %v5977
        %6046 = vmatpush.bf16.msra.mxu0 %v5976
        %6047 = vmatpush.bf16.msra.mxu0 %v5975
        %6048 = vmatpush.bf16.msra.mxu0 %v5974
        %6049 = vmatpush.bf16.msra.mxu0 %v5973
        %6050 = vmatpush.bf16.msra.mxu0 %v5972
        %6051 = vmatpush.bf16.msra.mxu0 %v5971
        %6052 = vmatpush.bf16.msra.mxu0 %v5970
        %6053 = vmatmul.bf16.gmra.mxu0 %v5739
        %v6054 = vpop.f32.mrf.mxu0
        %v6055 = vadd.f32 %v6036, %v6054
        %v6056 = vpop.f32.mrf.mxu0
        %v6057 = vadd.f32 %v6038, %v6056
        %6058 = vmatmul.bf16.gmra.mxu0 %v5740
        %v6059 = vpop.f32.mrf.mxu0
        %v6060 = vadd.f32 %v6041, %v6059
        %v6061 = vpop.f32.mrf.mxu0
        %v6062 = vadd.f32 %v6043, %v6061
        %6063 = vdwg.mxu0
        %6064 = vmatpush.bf16.msra.mxu0 %v5985
        %6065 = vmatpush.bf16.msra.mxu0 %v5984
        %6066 = vmatpush.bf16.msra.mxu0 %v5983
        %6067 = vmatpush.bf16.msra.mxu0 %v5982
        %6068 = vmatpush.bf16.msra.mxu0 %v5981
        %6069 = vmatpush.bf16.msra.mxu0 %v5980
        %6070 = vmatpush.bf16.msra.mxu0 %v5979
        %6071 = vmatpush.bf16.msra.mxu0 %v5978
        %6072 = vmatmul.bf16.gmra.mxu0 %v5751
        %v6073 = vpop.f32.mrf.mxu0
        %v6074 = vadd.f32 %v6055, %v6073
        %v6075 = vpop.f32.mrf.mxu0
        %v6076 = vadd.f32 %v6057, %v6075
        %6077 = vmatmul.bf16.gmra.mxu0 %v5752
        %v6078 = vpop.f32.mrf.mxu0
        %v6079 = vadd.f32 %v6060, %v6078
        %v6080 = vpop.f32.mrf.mxu0
        %v6081 = vadd.f32 %v6062, %v6080
        %6082 = vdwg.mxu0
        %6083 = vmatpush.bf16.msra.mxu0 %v5993
        %6084 = vmatpush.bf16.msra.mxu0 %v5992
        %6085 = vmatpush.bf16.msra.mxu0 %v5991
        %6086 = vmatpush.bf16.msra.mxu0 %v5990
        %6087 = vmatpush.bf16.msra.mxu0 %v5989
        %6088 = vmatpush.bf16.msra.mxu0 %v5988
        %6089 = vmatpush.bf16.msra.mxu0 %v5987
        %6090 = vmatpush.bf16.msra.mxu0 %v5986
        %6091 = vmatmul.bf16.gmra.mxu0 %v5763
        %v6092 = vpop.f32.mrf.mxu0
        %v6093 = vadd.f32 %v6074, %v6092
        %v6094 = vpop.f32.mrf.mxu0
        %v6095 = vadd.f32 %v6076, %v6094
        %6096 = vmatmul.bf16.gmra.mxu0 %v5764
        %v6097 = vpop.f32.mrf.mxu0
        %v6098 = vadd.f32 %v6079, %v6097
        %v6099 = vpop.f32.mrf.mxu0
        %v6100 = vadd.f32 %v6081, %v6099
        %6101 = vdwg.mxu0
        %v6102 = vadd.f32 %v2878, %v6093
        %v6103 = vadd.f32 %v2879, %v6095
        %v6104 = vadd.f32 %v2880, %v6098
        %v6105 = vadd.f32 %v2881, %v6100
        %v6106 = vld [vmem:[%s956 + $0x3] sm:$0x1]
        %v6107 = vld [vmem:[%s768 + $0x3] sm:$0x1]
        %v6108 = vperm.slane %v6106, 0
        %v6109 = vmul.f32 %v4465, %v6108
        %v6110 = vmul.f32 %v4466, %v6108
        %v6111 = vperm.slane %v6107, 0
        %v6112 = vadd.f32 %v6109, %v6111
        %v6113 = vadd.f32 %v6110, %v6111
        %v6114 = vpack.c.bf16 %v6113, %v6112
        %6115 = vadd.xlane.f32.xlu0 %v6102
        %v6116 = vpop.xlane.xlu0 %6115
        %6117 = vadd.xlane.f32.xlu0 %v6103
        %v6118 = vpop.xlane.xlu0 %6117
        %6119 = vadd.xlane.f32.xlu0 %v6104
        %v6120 = vpop.xlane.xlu0 %6119
        %6121 = vadd.xlane.f32.xlu0 %v6105
        %v6122 = vpop.xlane.xlu0 %6121
        %v6123 = vmul.f32 %v6116, %v1055
        %v6124 = vmul.f32 %v6118, %v1055
        %v6125 = vmul.f32 %v6120, %v1055
        %v6126 = vmul.f32 %v6122, %v1055
        %v6127 = vsub.f32 %v6102, %v6123
        %v6128 = vsub.f32 %v6103, %v6124
        %v6129 = vsub.f32 %v6104, %v6125
        %v6130 = vsub.f32 %v6105, %v6126
        %v6131 = vmul.f32 %v6127, %v6127
        %v6132 = vmul.f32 %v6128, %v6128
        %v6133 = vmul.f32 %v6129, %v6129
        %v6134 = vmul.f32 %v6130, %v6130
        %6135 = vadd.xlane.f32.xlu0 %v6131
        %v6136 = vpop.xlane.xlu0 %6135
        %6137 = vadd.xlane.f32.xlu0 %v6132
        %v6138 = vpop.xlane.xlu0 %6137
        %6139 = vadd.xlane.f32.xlu0 %v6133
        %v6140 = vpop.xlane.xlu0 %6139
        %6141 = vadd.xlane.f32.xlu0 %v6134
        %v6142 = vpop.xlane.xlu0 %6141
        %v6143 = vmul.f32 %v6136, %v1055
        %v6144 = vmul.f32 %v6138, %v1055
        %v6145 = vmul.f32 %v6140, %v1055
        %v6146 = vmul.f32 %v6142, %v1055
        %v6147 = vadd.f32 %v6143, 1e-05
        %v6148 = vadd.f32 %v6144, 1e-05
        %v6149 = vadd.f32 %v6145, 1e-05
        %v6150 = vadd.f32 %v6146, 1e-05
        %v6151 = vrsqrt.pop %v6147
        %v6152 = vmul.f32 %v6151, %v6147
        %v6153 = vmul.f32 %v6152, %v6151
        %v6154 = vmul.f32 0.5, %v6153
        %v6155 = vsub.f32 1.5, %v6154
        %v6156 = vmul.f32 %v6151, %v6155
        %vm6157 = vweird.f32 %v6147
        %vm6158 = vweird.f32 %v6151
        %vm6159 = vmor %vm6157, %vm6158
        %v6160 = vsel %vm6159, %v6151, %v6156
        %v6161 = vrsqrt.pop %v6148
        %v6162 = vmul.f32 %v6161, %v6148
        %v6163 = vmul.f32 %v6162, %v6161
        %v6164 = vmul.f32 0.5, %v6163
        %v6165 = vsub.f32 1.5, %v6164
        %v6166 = vmul.f32 %v6161, %v6165
        %vm6167 = vweird.f32 %v6148
        %vm6168 = vweird.f32 %v6161
        %vm6169 = vmor %vm6167, %vm6168
        %v6170 = vsel %vm6169, %v6161, %v6166
        %v6171 = vrsqrt.pop %v6149
        %v6172 = vmul.f32 %v6171, %v6149
        %v6173 = vmul.f32 %v6172, %v6171
        %v6174 = vmul.f32 0.5, %v6173
        %v6175 = vsub.f32 1.5, %v6174
        %v6176 = vmul.f32 %v6171, %v6175
        %vm6177 = vweird.f32 %v6149
        %vm6178 = vweird.f32 %v6171
        %vm6179 = vmor %vm6177, %vm6178
        %v6180 = vsel %vm6179, %v6171, %v6176
        %v6181 = vrsqrt.pop %v6150
        %v6182 = vmul.f32 %v6181, %v6150
        %v6183 = vmul.f32 %v6182, %v6181
        %v6184 = vmul.f32 0.5, %v6183
        %v6185 = vsub.f32 1.5, %v6184
        %v6186 = vmul.f32 %v6181, %v6185
        %vm6187 = vweird.f32 %v6150
        %vm6188 = vweird.f32 %v6181
        %vm6189 = vmor %vm6187, %vm6188
        %v6190 = vsel %vm6189, %v6181, %v6186
        %v6191 = vmul.f32 %v6127, %v6160
        %v6192 = vmul.f32 %v6128, %v6170
        %v6193 = vmul.f32 %v6129, %v6180
        %v6194 = vmul.f32 %v6130, %v6190
        %v6195 = vmul.f32 %v6191, %v6108
        %v6196 = vmul.f32 %v6192, %v6108
        %v6197 = vmul.f32 %v6193, %v6108
        %v6198 = vmul.f32 %v6194, %v6108
        %v6199 = vadd.f32 %v6195, %v6111
        %v6200 = vadd.f32 %v6196, %v6111
        %v6201 = vadd.f32 %v6197, %v6111
        %v6202 = vadd.f32 %v6198, %v6111
        %v6203 = vpack.c.bf16 %v6200, %v6199
        %v6204 = vpack.c.bf16 %v6202, %v6201
        %vm6205 = vcmp.eq.f32.partialorder %v2934, %v1161
        %vm6206 = vcmp.eq.f32.partialorder %v2939, %v1161
        %v6207 = vsel %vm6205, 0.0, -1e+09
        %v6208 = vsel %vm6206, 0.0, -1e+09
        %s6209 = scalar_lea.vmem %s778, 768 [#allocation6]
        %v6210 = vld [vmem:[%s6209] sm:$0xff]
        %v6211 = vld [vmem:[%s6209 + $0x8] sm:$0xff]
        %v6212 = vld [vmem:[%s6209 + $0x10] sm:$0xff]
        %v6213 = vld [vmem:[%s6209 + $0x18] sm:$0xff]
        %v6214 = vld [vmem:[%s6209 + $0x20] sm:$0xff]
        %v6215 = vld [vmem:[%s6209 + $0x28] sm:$0xff]
        %v6216 = vld [vmem:[%s6209 + $0x30] sm:$0xff]
        %v6217 = vld [vmem:[%s6209 + $0x38] sm:$0xff]
        %v6218 = vld [vmem:[%s6209 + $0x40] sm:$0xff]
        %v6219 = vld [vmem:[%s6209 + $0x48] sm:$0xff]
        %v6220 = vld [vmem:[%s6209 + $0x50] sm:$0xff]
        %v6221 = vld [vmem:[%s6209 + $0x58] sm:$0xff]
        %v6222 = vld [vmem:[%s6209 + $0x60] sm:$0xff]
        %v6223 = vld [vmem:[%s6209 + $0x68] sm:$0xff]
        %v6224 = vld [vmem:[%s6209 + $0x70] sm:$0xff]
        %v6225 = vld [vmem:[%s6209 + $0x78] sm:$0xff]
        %v6226 = vld [vmem:[%s6209 + $0x80] sm:$0xff]
        %v6227 = vld [vmem:[%s6209 + $0x88] sm:$0xff]
        %v6228 = vld [vmem:[%s6209 + $0x90] sm:$0xff]
        %v6229 = vld [vmem:[%s6209 + $0x98] sm:$0xff]
        %v6230 = vld [vmem:[%s6209 + $0xa0] sm:$0xff]
        %v6231 = vld [vmem:[%s6209 + $0xa8] sm:$0xff]
        %v6232 = vld [vmem:[%s6209 + $0xb0] sm:$0xff]
        %v6233 = vld [vmem:[%s6209 + $0xb8] sm:$0xff]
        %v6234 = vld [vmem:[%s6209 + $0xc0] sm:$0xff]
        %v6235 = vld [vmem:[%s6209 + $0xc8] sm:$0xff]
        %v6236 = vld [vmem:[%s6209 + $0xd0] sm:$0xff]
        %v6237 = vld [vmem:[%s6209 + $0xd8] sm:$0xff]
        %v6238 = vld [vmem:[%s6209 + $0xe0] sm:$0xff]
        %v6239 = vld [vmem:[%s6209 + $0xe8] sm:$0xff]
        %v6240 = vld [vmem:[%s6209 + $0xf0] sm:$0xff]
        %v6241 = vld [vmem:[%s6209 + $0xf8] sm:$0xff]
        %v6274 = vunpack.c.l.b16 %v6210
        %v6275 = vunpack.c.h.b16 %v6210
        %v6276 = vunpack.c.l.b16 %v6211
        %v6277 = vunpack.c.h.b16 %v6211
        %v6278 = vunpack.c.l.b16 %v6212
        %v6279 = vunpack.c.h.b16 %v6212
        %v6280 = vunpack.c.l.b16 %v6213
        %v6281 = vunpack.c.h.b16 %v6213
        %v6282 = vunpack.c.l.b16 %v6214
        %v6283 = vunpack.c.h.b16 %v6214
        %v6284 = vunpack.c.l.b16 %v6215
        %v6285 = vunpack.c.h.b16 %v6215
        %v6286 = vunpack.c.l.b16 %v6216
        %v6287 = vunpack.c.h.b16 %v6216
        %v6288 = vunpack.c.l.b16 %v6217
        %v6289 = vunpack.c.h.b16 %v6217
        %v6290 = vunpack.c.l.b16 %v6218
        %v6291 = vunpack.c.h.b16 %v6218
        %v6292 = vunpack.c.l.b16 %v6219
        %v6293 = vunpack.c.h.b16 %v6219
        %v6294 = vunpack.c.l.b16 %v6220
        %v6295 = vunpack.c.h.b16 %v6220
        %v6296 = vunpack.c.l.b16 %v6221
        %v6297 = vunpack.c.h.b16 %v6221
        %v6298 = vunpack.c.l.b16 %v6222
        %v6299 = vunpack.c.h.b16 %v6222
        %v6300 = vunpack.c.l.b16 %v6223
        %v6301 = vunpack.c.h.b16 %v6223
        %v6302 = vunpack.c.l.b16 %v6224
        %v6303 = vunpack.c.h.b16 %v6224
        %v6304 = vunpack.c.l.b16 %v6225
        %v6305 = vunpack.c.h.b16 %v6225
        %v6306 = vunpack.c.l.b16 %v6226
        %v6307 = vunpack.c.h.b16 %v6226
        %v6308 = vunpack.c.l.b16 %v6227
        %v6309 = vunpack.c.h.b16 %v6227
        %v6310 = vunpack.c.l.b16 %v6228
        %v6311 = vunpack.c.h.b16 %v6228
        %v6312 = vunpack.c.l.b16 %v6229
        %v6313 = vunpack.c.h.b16 %v6229
        %v6314 = vunpack.c.l.b16 %v6230
        %v6315 = vunpack.c.h.b16 %v6230
        %v6316 = vunpack.c.l.b16 %v6231
        %v6317 = vunpack.c.h.b16 %v6231
        %v6318 = vunpack.c.l.b16 %v6232
        %v6319 = vunpack.c.h.b16 %v6232
        %v6320 = vunpack.c.l.b16 %v6233
        %v6321 = vunpack.c.h.b16 %v6233
        %v6322 = vunpack.c.l.b16 %v6234
        %v6323 = vunpack.c.h.b16 %v6234
        %v6324 = vunpack.c.l.b16 %v6235
        %v6325 = vunpack.c.h.b16 %v6235
        %v6326 = vunpack.c.l.b16 %v6236
        %v6327 = vunpack.c.h.b16 %v6236
        %v6328 = vunpack.c.l.b16 %v6237
        %v6329 = vunpack.c.h.b16 %v6237
        %v6330 = vunpack.c.l.b16 %v6238
        %v6331 = vunpack.c.h.b16 %v6238
        %v6332 = vunpack.c.l.b16 %v6239
        %v6333 = vunpack.c.h.b16 %v6239
        %v6334 = vunpack.c.l.b16 %v6240
        %v6335 = vunpack.c.h.b16 %v6240
        %v6336 = vunpack.c.l.b16 %v6241
        %v6337 = vunpack.c.h.b16 %v6241
        %v6338 = vpack.c.b16 %v6278, %v6274
        %v6339 = vpack.c.b16 %v6279, %v6275
        %v6340 = vpack.c.b16 %v6280, %v6276
        %v6341 = vpack.c.b16 %v6281, %v6277
        %v6342 = vpack.c.b16 %v6286, %v6282
        %v6343 = vpack.c.b16 %v6287, %v6283
        %v6344 = vpack.c.b16 %v6288, %v6284
        %v6345 = vpack.c.b16 %v6289, %v6285
        %v6346 = vpack.c.b16 %v6294, %v6290
        %v6347 = vpack.c.b16 %v6295, %v6291
        %v6348 = vpack.c.b16 %v6296, %v6292
        %v6349 = vpack.c.b16 %v6297, %v6293
        %v6350 = vpack.c.b16 %v6302, %v6298
        %v6351 = vpack.c.b16 %v6303, %v6299
        %v6352 = vpack.c.b16 %v6304, %v6300
        %v6353 = vpack.c.b16 %v6305, %v6301
        %v6354 = vpack.c.b16 %v6310, %v6306
        %v6355 = vpack.c.b16 %v6311, %v6307
        %v6356 = vpack.c.b16 %v6312, %v6308
        %v6357 = vpack.c.b16 %v6313, %v6309
        %v6358 = vpack.c.b16 %v6318, %v6314
        %v6359 = vpack.c.b16 %v6319, %v6315
        %v6360 = vpack.c.b16 %v6320, %v6316
        %v6361 = vpack.c.b16 %v6321, %v6317
        %v6362 = vpack.c.b16 %v6326, %v6322
        %v6363 = vpack.c.b16 %v6327, %v6323
        %v6364 = vpack.c.b16 %v6328, %v6324
        %v6365 = vpack.c.b16 %v6329, %v6325
        %v6366 = vpack.c.b16 %v6334, %v6330
        %v6367 = vpack.c.b16 %v6335, %v6331
        %v6368 = vpack.c.b16 %v6336, %v6332
        %v6369 = vpack.c.b16 %v6337, %v6333
        %6402 = vmatpush.bf16.msra.mxu0 %v6366
        %6403 = vmatpush.bf16.msra.mxu0 %v6362
        %6404 = vmatpush.bf16.msra.mxu0 %v6358
        %6405 = vmatpush.bf16.msra.mxu0 %v6354
        %6406 = vmatpush.bf16.msra.mxu0 %v6350
        %6407 = vmatpush.bf16.msra.mxu0 %v6346
        %6408 = vmatpush.bf16.msra.mxu0 %v6342
        %6409 = vmatpush.bf16.msra.mxu0 %v6338
        %6410 = vmatmul.bf16.gmra.mxu0 %v6114
        %v6411 = vpop.f32.mrf.mxu0
        %v6412 = vadd.f32 0.0, %v6411
        %v6413 = vpop.f32.mrf.mxu0
        %v6414 = vadd.f32 0.0, %v6413
        %6415 = vdwg.mxu0
        %6416 = vmatpush.bf16.msra.mxu0 %v6367
        %6417 = vmatpush.bf16.msra.mxu0 %v6363
        %6418 = vmatpush.bf16.msra.mxu0 %v6359
        %6419 = vmatpush.bf16.msra.mxu0 %v6355
        %6420 = vmatpush.bf16.msra.mxu0 %v6351
        %6421 = vmatpush.bf16.msra.mxu0 %v6347
        %6422 = vmatpush.bf16.msra.mxu0 %v6343
        %6423 = vmatpush.bf16.msra.mxu0 %v6339
        %6424 = vmatmul.bf16.gmra.mxu0 %v6114
        %v6425 = vpop.f32.mrf.mxu0
        %v6426 = vadd.f32 0.0, %v6425
        %v6427 = vpop.f32.mrf.mxu0
        %v6428 = vadd.f32 0.0, %v6427
        %6429 = vdwg.mxu0
        %6430 = vmatpush.bf16.msra.mxu0 %v6368
        %6431 = vmatpush.bf16.msra.mxu0 %v6364
        %6432 = vmatpush.bf16.msra.mxu0 %v6360
        %6433 = vmatpush.bf16.msra.mxu0 %v6356
        %6434 = vmatpush.bf16.msra.mxu0 %v6352
        %6435 = vmatpush.bf16.msra.mxu0 %v6348
        %6436 = vmatpush.bf16.msra.mxu0 %v6344
        %6437 = vmatpush.bf16.msra.mxu0 %v6340
        %6438 = vmatmul.bf16.gmra.mxu0 %v6114
        %v6439 = vpop.f32.mrf.mxu0
        %v6440 = vadd.f32 0.0, %v6439
        %v6441 = vpop.f32.mrf.mxu0
        %v6442 = vadd.f32 0.0, %v6441
        %6443 = vdwg.mxu0
        %6444 = vmatpush.bf16.msra.mxu0 %v6369
        %6445 = vmatpush.bf16.msra.mxu0 %v6365
        %6446 = vmatpush.bf16.msra.mxu0 %v6361
        %6447 = vmatpush.bf16.msra.mxu0 %v6357
        %6448 = vmatpush.bf16.msra.mxu0 %v6353
        %6449 = vmatpush.bf16.msra.mxu0 %v6349
        %6450 = vmatpush.bf16.msra.mxu0 %v6345
        %6451 = vmatpush.bf16.msra.mxu0 %v6341
        %6452 = vmatmul.bf16.gmra.mxu0 %v6114
        %v6453 = vpop.f32.mrf.mxu0
        %v6454 = vadd.f32 0.0, %v6453
        %v6455 = vpop.f32.mrf.mxu0
        %v6456 = vadd.f32 0.0, %v6455
        %6457 = vdwg.mxu0
        %v6458 = vpack.c.bf16 %v6426, %v6412
        %v6459 = vpack.c.bf16 %v6454, %v6440
        %v6460 = vpack.c.bf16 %v6428, %v6414
        %v6461 = vpack.c.bf16 %v6456, %v6442
        %s6462 = scalar_lea.vmem %s788, 768 [#allocation8]
        %v6463 = vld [vmem:[%s6462] sm:$0xff]
        %v6464 = vld [vmem:[%s6462 + $0x8] sm:$0xff]
        %v6465 = vld [vmem:[%s6462 + $0x10] sm:$0xff]
        %v6466 = vld [vmem:[%s6462 + $0x18] sm:$0xff]
        %v6467 = vld [vmem:[%s6462 + $0x20] sm:$0xff]
        %v6468 = vld [vmem:[%s6462 + $0x28] sm:$0xff]
        %v6469 = vld [vmem:[%s6462 + $0x30] sm:$0xff]
        %v6470 = vld [vmem:[%s6462 + $0x38] sm:$0xff]
        %v6471 = vld [vmem:[%s6462 + $0x40] sm:$0xff]
        %v6472 = vld [vmem:[%s6462 + $0x48] sm:$0xff]
        %v6473 = vld [vmem:[%s6462 + $0x50] sm:$0xff]
        %v6474 = vld [vmem:[%s6462 + $0x58] sm:$0xff]
        %v6475 = vld [vmem:[%s6462 + $0x60] sm:$0xff]
        %v6476 = vld [vmem:[%s6462 + $0x68] sm:$0xff]
        %v6477 = vld [vmem:[%s6462 + $0x70] sm:$0xff]
        %v6478 = vld [vmem:[%s6462 + $0x78] sm:$0xff]
        %v6479 = vld [vmem:[%s6462 + $0x80] sm:$0xff]
        %v6480 = vld [vmem:[%s6462 + $0x88] sm:$0xff]
        %v6481 = vld [vmem:[%s6462 + $0x90] sm:$0xff]
        %v6482 = vld [vmem:[%s6462 + $0x98] sm:$0xff]
        %v6483 = vld [vmem:[%s6462 + $0xa0] sm:$0xff]
        %v6484 = vld [vmem:[%s6462 + $0xa8] sm:$0xff]
        %v6485 = vld [vmem:[%s6462 + $0xb0] sm:$0xff]
        %v6486 = vld [vmem:[%s6462 + $0xb8] sm:$0xff]
        %v6487 = vld [vmem:[%s6462 + $0xc0] sm:$0xff]
        %v6488 = vld [vmem:[%s6462 + $0xc8] sm:$0xff]
        %v6489 = vld [vmem:[%s6462 + $0xd0] sm:$0xff]
        %v6490 = vld [vmem:[%s6462 + $0xd8] sm:$0xff]
        %v6491 = vld [vmem:[%s6462 + $0xe0] sm:$0xff]
        %v6492 = vld [vmem:[%s6462 + $0xe8] sm:$0xff]
        %v6493 = vld [vmem:[%s6462 + $0xf0] sm:$0xff]
        %v6494 = vld [vmem:[%s6462 + $0xf8] sm:$0xff]
        %v6527 = vunpack.c.l.b16 %v6463
        %v6528 = vunpack.c.h.b16 %v6463
        %v6529 = vunpack.c.l.b16 %v6464
        %v6530 = vunpack.c.h.b16 %v6464
        %v6531 = vunpack.c.l.b16 %v6465
        %v6532 = vunpack.c.h.b16 %v6465
        %v6533 = vunpack.c.l.b16 %v6466
        %v6534 = vunpack.c.h.b16 %v6466
        %v6535 = vunpack.c.l.b16 %v6467
        %v6536 = vunpack.c.h.b16 %v6467
        %v6537 = vunpack.c.l.b16 %v6468
        %v6538 = vunpack.c.h.b16 %v6468
        %v6539 = vunpack.c.l.b16 %v6469
        %v6540 = vunpack.c.h.b16 %v6469
        %v6541 = vunpack.c.l.b16 %v6470
        %v6542 = vunpack.c.h.b16 %v6470
        %v6543 = vunpack.c.l.b16 %v6471
        %v6544 = vunpack.c.h.b16 %v6471
        %v6545 = vunpack.c.l.b16 %v6472
        %v6546 = vunpack.c.h.b16 %v6472
        %v6547 = vunpack.c.l.b16 %v6473
        %v6548 = vunpack.c.h.b16 %v6473
        %v6549 = vunpack.c.l.b16 %v6474
        %v6550 = vunpack.c.h.b16 %v6474
        %v6551 = vunpack.c.l.b16 %v6475
        %v6552 = vunpack.c.h.b16 %v6475
        %v6553 = vunpack.c.l.b16 %v6476
        %v6554 = vunpack.c.h.b16 %v6476
        %v6555 = vunpack.c.l.b16 %v6477
        %v6556 = vunpack.c.h.b16 %v6477
        %v6557 = vunpack.c.l.b16 %v6478
        %v6558 = vunpack.c.h.b16 %v6478
        %v6559 = vunpack.c.l.b16 %v6479
        %v6560 = vunpack.c.h.b16 %v6479
        %v6561 = vunpack.c.l.b16 %v6480
        %v6562 = vunpack.c.h.b16 %v6480
        %v6563 = vunpack.c.l.b16 %v6481
        %v6564 = vunpack.c.h.b16 %v6481
        %v6565 = vunpack.c.l.b16 %v6482
        %v6566 = vunpack.c.h.b16 %v6482
        %v6567 = vunpack.c.l.b16 %v6483
        %v6568 = vunpack.c.h.b16 %v6483
        %v6569 = vunpack.c.l.b16 %v6484
        %v6570 = vunpack.c.h.b16 %v6484
        %v6571 = vunpack.c.l.b16 %v6485
        %v6572 = vunpack.c.h.b16 %v6485
        %v6573 = vunpack.c.l.b16 %v6486
        %v6574 = vunpack.c.h.b16 %v6486
        %v6575 = vunpack.c.l.b16 %v6487
        %v6576 = vunpack.c.h.b16 %v6487
        %v6577 = vunpack.c.l.b16 %v6488
        %v6578 = vunpack.c.h.b16 %v6488
        %v6579 = vunpack.c.l.b16 %v6489
        %v6580 = vunpack.c.h.b16 %v6489
        %v6581 = vunpack.c.l.b16 %v6490
        %v6582 = vunpack.c.h.b16 %v6490
        %v6583 = vunpack.c.l.b16 %v6491
        %v6584 = vunpack.c.h.b16 %v6491
        %v6585 = vunpack.c.l.b16 %v6492
        %v6586 = vunpack.c.h.b16 %v6492
        %v6587 = vunpack.c.l.b16 %v6493
        %v6588 = vunpack.c.h.b16 %v6493
        %v6589 = vunpack.c.l.b16 %v6494
        %v6590 = vunpack.c.h.b16 %v6494
        %v6591 = vpack.c.b16 %v6531, %v6527
        %v6592 = vpack.c.b16 %v6532, %v6528
        %v6593 = vpack.c.b16 %v6533, %v6529
        %v6594 = vpack.c.b16 %v6534, %v6530
        %v6595 = vpack.c.b16 %v6539, %v6535
        %v6596 = vpack.c.b16 %v6540, %v6536
        %v6597 = vpack.c.b16 %v6541, %v6537
        %v6598 = vpack.c.b16 %v6542, %v6538
        %v6599 = vpack.c.b16 %v6547, %v6543
        %v6600 = vpack.c.b16 %v6548, %v6544
        %v6601 = vpack.c.b16 %v6549, %v6545
        %v6602 = vpack.c.b16 %v6550, %v6546
        %v6603 = vpack.c.b16 %v6555, %v6551
        %v6604 = vpack.c.b16 %v6556, %v6552
        %v6605 = vpack.c.b16 %v6557, %v6553
        %v6606 = vpack.c.b16 %v6558, %v6554
        %v6607 = vpack.c.b16 %v6563, %v6559
        %v6608 = vpack.c.b16 %v6564, %v6560
        %v6609 = vpack.c.b16 %v6565, %v6561
        %v6610 = vpack.c.b16 %v6566, %v6562
        %v6611 = vpack.c.b16 %v6571, %v6567
        %v6612 = vpack.c.b16 %v6572, %v6568
        %v6613 = vpack.c.b16 %v6573, %v6569
        %v6614 = vpack.c.b16 %v6574, %v6570
        %v6615 = vpack.c.b16 %v6579, %v6575
        %v6616 = vpack.c.b16 %v6580, %v6576
        %v6617 = vpack.c.b16 %v6581, %v6577
        %v6618 = vpack.c.b16 %v6582, %v6578
        %v6619 = vpack.c.b16 %v6587, %v6583
        %v6620 = vpack.c.b16 %v6588, %v6584
        %v6621 = vpack.c.b16 %v6589, %v6585
        %v6622 = vpack.c.b16 %v6590, %v6586
        %6655 = vmatpush.bf16.msra.mxu0 %v6619
        %6656 = vmatpush.bf16.msra.mxu0 %v6615
        %6657 = vmatpush.bf16.msra.mxu0 %v6611
        %6658 = vmatpush.bf16.msra.mxu0 %v6607
        %6659 = vmatpush.bf16.msra.mxu0 %v6603
        %6660 = vmatpush.bf16.msra.mxu0 %v6599
        %6661 = vmatpush.bf16.msra.mxu0 %v6595
        %6662 = vmatpush.bf16.msra.mxu0 %v6591
        %6663 = vmatmul.bf16.gmra.mxu0 %v6203
        %v6664 = vpop.f32.mrf.mxu0
        %v6665 = vadd.f32 0.0, %v6664
        %v6666 = vpop.f32.mrf.mxu0
        %v6667 = vadd.f32 0.0, %v6666
        %6668 = vmatmul.bf16.gmra.mxu0 %v6204
        %v6669 = vpop.f32.mrf.mxu0
        %v6670 = vadd.f32 0.0, %v6669
        %v6671 = vpop.f32.mrf.mxu0
        %v6672 = vadd.f32 0.0, %v6671
        %6673 = vdwg.mxu0
        %6674 = vmatpush.bf16.msra.mxu0 %v6620
        %6675 = vmatpush.bf16.msra.mxu0 %v6616
        %6676 = vmatpush.bf16.msra.mxu0 %v6612
        %6677 = vmatpush.bf16.msra.mxu0 %v6608
        %6678 = vmatpush.bf16.msra.mxu0 %v6604
        %6679 = vmatpush.bf16.msra.mxu0 %v6600
        %6680 = vmatpush.bf16.msra.mxu0 %v6596
        %6681 = vmatpush.bf16.msra.mxu0 %v6592
        %6682 = vmatmul.bf16.gmra.mxu0 %v6203
        %v6683 = vpop.f32.mrf.mxu0
        %v6684 = vadd.f32 0.0, %v6683
        %v6685 = vpop.f32.mrf.mxu0
        %v6686 = vadd.f32 0.0, %v6685
        %6687 = vmatmul.bf16.gmra.mxu0 %v6204
        %v6688 = vpop.f32.mrf.mxu0
        %v6689 = vadd.f32 0.0, %v6688
        %v6690 = vpop.f32.mrf.mxu0
        %v6691 = vadd.f32 0.0, %v6690
        %6692 = vdwg.mxu0
        %6693 = vmatpush.bf16.msra.mxu0 %v6621
        %6694 = vmatpush.bf16.msra.mxu0 %v6617
        %6695 = vmatpush.bf16.msra.mxu0 %v6613
        %6696 = vmatpush.bf16.msra.mxu0 %v6609
        %6697 = vmatpush.bf16.msra.mxu0 %v6605
        %6698 = vmatpush.bf16.msra.mxu0 %v6601
        %6699 = vmatpush.bf16.msra.mxu0 %v6597
        %6700 = vmatpush.bf16.msra.mxu0 %v6593
        %6701 = vmatmul.bf16.gmra.mxu0 %v6203
        %v6702 = vpop.f32.mrf.mxu0
        %v6703 = vadd.f32 0.0, %v6702
        %v6704 = vpop.f32.mrf.mxu0
        %v6705 = vadd.f32 0.0, %v6704
        %6706 = vmatmul.bf16.gmra.mxu0 %v6204
        %v6707 = vpop.f32.mrf.mxu0
        %v6708 = vadd.f32 0.0, %v6707
        %v6709 = vpop.f32.mrf.mxu0
        %v6710 = vadd.f32 0.0, %v6709
        %6711 = vdwg.mxu0
        %6712 = vmatpush.bf16.msra.mxu0 %v6622
        %6713 = vmatpush.bf16.msra.mxu0 %v6618
        %6714 = vmatpush.bf16.msra.mxu0 %v6614
        %6715 = vmatpush.bf16.msra.mxu0 %v6610
        %6716 = vmatpush.bf16.msra.mxu0 %v6606
        %6717 = vmatpush.bf16.msra.mxu0 %v6602
        %6718 = vmatpush.bf16.msra.mxu0 %v6598
        %6719 = vmatpush.bf16.msra.mxu0 %v6594
        %6720 = vmatmul.bf16.gmra.mxu0 %v6203
        %v6721 = vpop.f32.mrf.mxu0
        %v6722 = vadd.f32 0.0, %v6721
        %v6723 = vpop.f32.mrf.mxu0
        %v6724 = vadd.f32 0.0, %v6723
        %6725 = vmatmul.bf16.gmra.mxu0 %v6204
        %v6726 = vpop.f32.mrf.mxu0
        %v6727 = vadd.f32 0.0, %v6726
        %v6728 = vpop.f32.mrf.mxu0
        %v6729 = vadd.f32 0.0, %v6728
        %6730 = vdwg.mxu0
        %v6731 = vpack.c.bf16 %v6684, %v6665
        %v6732 = vpack.c.bf16 %v6722, %v6703
        %v6733 = vpack.c.bf16 %v6686, %v6667
        %v6734 = vpack.c.bf16 %v6724, %v6705
        %v6735 = vpack.c.bf16 %v6689, %v6670
        %v6736 = vpack.c.bf16 %v6727, %v6708
        %v6737 = vpack.c.bf16 %v6691, %v6672
        %v6738 = vpack.c.bf16 %v6729, %v6710
        %s6739 = scalar_lea.vmem %s798, 768 [#allocation9]
        %v6740 = vld [vmem:[%s6739] sm:$0xff]
        %v6741 = vld [vmem:[%s6739 + $0x8] sm:$0xff]
        %v6742 = vld [vmem:[%s6739 + $0x10] sm:$0xff]
        %v6743 = vld [vmem:[%s6739 + $0x18] sm:$0xff]
        %v6744 = vld [vmem:[%s6739 + $0x20] sm:$0xff]
        %v6745 = vld [vmem:[%s6739 + $0x28] sm:$0xff]
        %v6746 = vld [vmem:[%s6739 + $0x30] sm:$0xff]
        %v6747 = vld [vmem:[%s6739 + $0x38] sm:$0xff]
        %v6748 = vld [vmem:[%s6739 + $0x40] sm:$0xff]
        %v6749 = vld [vmem:[%s6739 + $0x48] sm:$0xff]
        %v6750 = vld [vmem:[%s6739 + $0x50] sm:$0xff]
        %v6751 = vld [vmem:[%s6739 + $0x58] sm:$0xff]
        %v6752 = vld [vmem:[%s6739 + $0x60] sm:$0xff]
        %v6753 = vld [vmem:[%s6739 + $0x68] sm:$0xff]
        %v6754 = vld [vmem:[%s6739 + $0x70] sm:$0xff]
        %v6755 = vld [vmem:[%s6739 + $0x78] sm:$0xff]
        %v6756 = vld [vmem:[%s6739 + $0x80] sm:$0xff]
        %v6757 = vld [vmem:[%s6739 + $0x88] sm:$0xff]
        %v6758 = vld [vmem:[%s6739 + $0x90] sm:$0xff]
        %v6759 = vld [vmem:[%s6739 + $0x98] sm:$0xff]
        %v6760 = vld [vmem:[%s6739 + $0xa0] sm:$0xff]
        %v6761 = vld [vmem:[%s6739 + $0xa8] sm:$0xff]
        %v6762 = vld [vmem:[%s6739 + $0xb0] sm:$0xff]
        %v6763 = vld [vmem:[%s6739 + $0xb8] sm:$0xff]
        %v6764 = vld [vmem:[%s6739 + $0xc0] sm:$0xff]
        %v6765 = vld [vmem:[%s6739 + $0xc8] sm:$0xff]
        %v6766 = vld [vmem:[%s6739 + $0xd0] sm:$0xff]
        %v6767 = vld [vmem:[%s6739 + $0xd8] sm:$0xff]
        %v6768 = vld [vmem:[%s6739 + $0xe0] sm:$0xff]
        %v6769 = vld [vmem:[%s6739 + $0xe8] sm:$0xff]
        %v6770 = vld [vmem:[%s6739 + $0xf0] sm:$0xff]
        %v6771 = vld [vmem:[%s6739 + $0xf8] sm:$0xff]
        %v6804 = vunpack.c.l.b16 %v6740
        %v6805 = vunpack.c.h.b16 %v6740
        %v6806 = vunpack.c.l.b16 %v6741
        %v6807 = vunpack.c.h.b16 %v6741
        %v6808 = vunpack.c.l.b16 %v6742
        %v6809 = vunpack.c.h.b16 %v6742
        %v6810 = vunpack.c.l.b16 %v6743
        %v6811 = vunpack.c.h.b16 %v6743
        %v6812 = vunpack.c.l.b16 %v6744
        %v6813 = vunpack.c.h.b16 %v6744
        %v6814 = vunpack.c.l.b16 %v6745
        %v6815 = vunpack.c.h.b16 %v6745
        %v6816 = vunpack.c.l.b16 %v6746
        %v6817 = vunpack.c.h.b16 %v6746
        %v6818 = vunpack.c.l.b16 %v6747
        %v6819 = vunpack.c.h.b16 %v6747
        %v6820 = vunpack.c.l.b16 %v6748
        %v6821 = vunpack.c.h.b16 %v6748
        %v6822 = vunpack.c.l.b16 %v6749
        %v6823 = vunpack.c.h.b16 %v6749
        %v6824 = vunpack.c.l.b16 %v6750
        %v6825 = vunpack.c.h.b16 %v6750
        %v6826 = vunpack.c.l.b16 %v6751
        %v6827 = vunpack.c.h.b16 %v6751
        %v6828 = vunpack.c.l.b16 %v6752
        %v6829 = vunpack.c.h.b16 %v6752
        %v6830 = vunpack.c.l.b16 %v6753
        %v6831 = vunpack.c.h.b16 %v6753
        %v6832 = vunpack.c.l.b16 %v6754
        %v6833 = vunpack.c.h.b16 %v6754
        %v6834 = vunpack.c.l.b16 %v6755
        %v6835 = vunpack.c.h.b16 %v6755
        %v6836 = vunpack.c.l.b16 %v6756
        %v6837 = vunpack.c.h.b16 %v6756
        %v6838 = vunpack.c.l.b16 %v6757
        %v6839 = vunpack.c.h.b16 %v6757
        %v6840 = vunpack.c.l.b16 %v6758
        %v6841 = vunpack.c.h.b16 %v6758
        %v6842 = vunpack.c.l.b16 %v6759
        %v6843 = vunpack.c.h.b16 %v6759
        %v6844 = vunpack.c.l.b16 %v6760
        %v6845 = vunpack.c.h.b16 %v6760
        %v6846 = vunpack.c.l.b16 %v6761
        %v6847 = vunpack.c.h.b16 %v6761
        %v6848 = vunpack.c.l.b16 %v6762
        %v6849 = vunpack.c.h.b16 %v6762
        %v6850 = vunpack.c.l.b16 %v6763
        %v6851 = vunpack.c.h.b16 %v6763
        %v6852 = vunpack.c.l.b16 %v6764
        %v6853 = vunpack.c.h.b16 %v6764
        %v6854 = vunpack.c.l.b16 %v6765
        %v6855 = vunpack.c.h.b16 %v6765
        %v6856 = vunpack.c.l.b16 %v6766
        %v6857 = vunpack.c.h.b16 %v6766
        %v6858 = vunpack.c.l.b16 %v6767
        %v6859 = vunpack.c.h.b16 %v6767
        %v6860 = vunpack.c.l.b16 %v6768
        %v6861 = vunpack.c.h.b16 %v6768
        %v6862 = vunpack.c.l.b16 %v6769
        %v6863 = vunpack.c.h.b16 %v6769
        %v6864 = vunpack.c.l.b16 %v6770
        %v6865 = vunpack.c.h.b16 %v6770
        %v6866 = vunpack.c.l.b16 %v6771
        %v6867 = vunpack.c.h.b16 %v6771
        %v6868 = vpack.c.b16 %v6808, %v6804
        %v6869 = vpack.c.b16 %v6809, %v6805
        %v6870 = vpack.c.b16 %v6810, %v6806
        %v6871 = vpack.c.b16 %v6811, %v6807
        %v6872 = vpack.c.b16 %v6816, %v6812
        %v6873 = vpack.c.b16 %v6817, %v6813
        %v6874 = vpack.c.b16 %v6818, %v6814
        %v6875 = vpack.c.b16 %v6819, %v6815
        %v6876 = vpack.c.b16 %v6824, %v6820
        %v6877 = vpack.c.b16 %v6825, %v6821
        %v6878 = vpack.c.b16 %v6826, %v6822
        %v6879 = vpack.c.b16 %v6827, %v6823
        %v6880 = vpack.c.b16 %v6832, %v6828
        %v6881 = vpack.c.b16 %v6833, %v6829
        %v6882 = vpack.c.b16 %v6834, %v6830
        %v6883 = vpack.c.b16 %v6835, %v6831
        %v6884 = vpack.c.b16 %v6840, %v6836
        %v6885 = vpack.c.b16 %v6841, %v6837
        %v6886 = vpack.c.b16 %v6842, %v6838
        %v6887 = vpack.c.b16 %v6843, %v6839
        %v6888 = vpack.c.b16 %v6848, %v6844
        %v6889 = vpack.c.b16 %v6849, %v6845
        %v6890 = vpack.c.b16 %v6850, %v6846
        %v6891 = vpack.c.b16 %v6851, %v6847
        %v6892 = vpack.c.b16 %v6856, %v6852
        %v6893 = vpack.c.b16 %v6857, %v6853
        %v6894 = vpack.c.b16 %v6858, %v6854
        %v6895 = vpack.c.b16 %v6859, %v6855
        %v6896 = vpack.c.b16 %v6864, %v6860
        %v6897 = vpack.c.b16 %v6865, %v6861
        %v6898 = vpack.c.b16 %v6866, %v6862
        %v6899 = vpack.c.b16 %v6867, %v6863
        %6932 = vmatpush.bf16.msra.mxu0 %v6896
        %6933 = vmatpush.bf16.msra.mxu0 %v6892
        %6934 = vmatpush.bf16.msra.mxu0 %v6888
        %6935 = vmatpush.bf16.msra.mxu0 %v6884
        %6936 = vmatpush.bf16.msra.mxu0 %v6880
        %6937 = vmatpush.bf16.msra.mxu0 %v6876
        %6938 = vmatpush.bf16.msra.mxu0 %v6872
        %6939 = vmatpush.bf16.msra.mxu0 %v6868
        %6940 = vmatmul.bf16.gmra.mxu0 %v6203
        %v6941 = vpop.f32.mrf.mxu0
        %v6942 = vadd.f32 0.0, %v6941
        %v6943 = vpop.f32.mrf.mxu0
        %v6944 = vadd.f32 0.0, %v6943
        %6945 = vmatmul.bf16.gmra.mxu0 %v6204
        %v6946 = vpop.f32.mrf.mxu0
        %v6947 = vadd.f32 0.0, %v6946
        %v6948 = vpop.f32.mrf.mxu0
        %v6949 = vadd.f32 0.0, %v6948
        %6950 = vdwg.mxu0
        %6951 = vmatpush.bf16.msra.mxu0 %v6897
        %6952 = vmatpush.bf16.msra.mxu0 %v6893
        %6953 = vmatpush.bf16.msra.mxu0 %v6889
        %6954 = vmatpush.bf16.msra.mxu0 %v6885
        %6955 = vmatpush.bf16.msra.mxu0 %v6881
        %6956 = vmatpush.bf16.msra.mxu0 %v6877
        %6957 = vmatpush.bf16.msra.mxu0 %v6873
        %6958 = vmatpush.bf16.msra.mxu0 %v6869
        %6959 = vmatmul.bf16.gmra.mxu0 %v6203
        %v6960 = vpop.f32.mrf.mxu0
        %v6961 = vadd.f32 0.0, %v6960
        %v6962 = vpop.f32.mrf.mxu0
        %v6963 = vadd.f32 0.0, %v6962
        %6964 = vmatmul.bf16.gmra.mxu0 %v6204
        %v6965 = vpop.f32.mrf.mxu0
        %v6966 = vadd.f32 0.0, %v6965
        %v6967 = vpop.f32.mrf.mxu0
        %v6968 = vadd.f32 0.0, %v6967
        %6969 = vdwg.mxu0
        %6970 = vmatpush.bf16.msra.mxu0 %v6898
        %6971 = vmatpush.bf16.msra.mxu0 %v6894
        %6972 = vmatpush.bf16.msra.mxu0 %v6890
        %6973 = vmatpush.bf16.msra.mxu0 %v6886
        %6974 = vmatpush.bf16.msra.mxu0 %v6882
        %6975 = vmatpush.bf16.msra.mxu0 %v6878
        %6976 = vmatpush.bf16.msra.mxu0 %v6874
        %6977 = vmatpush.bf16.msra.mxu0 %v6870
        %6978 = vmatmul.bf16.gmra.mxu0 %v6203
        %v6979 = vpop.f32.mrf.mxu0
        %v6980 = vadd.f32 0.0, %v6979
        %v6981 = vpop.f32.mrf.mxu0
        %v6982 = vadd.f32 0.0, %v6981
        %6983 = vmatmul.bf16.gmra.mxu0 %v6204
        %v6984 = vpop.f32.mrf.mxu0
        %v6985 = vadd.f32 0.0, %v6984
        %v6986 = vpop.f32.mrf.mxu0
        %v6987 = vadd.f32 0.0, %v6986
        %6988 = vdwg.mxu0
        %6989 = vmatpush.bf16.msra.mxu0 %v6899
        %6990 = vmatpush.bf16.msra.mxu0 %v6895
        %6991 = vmatpush.bf16.msra.mxu0 %v6891
        %6992 = vmatpush.bf16.msra.mxu0 %v6887
        %6993 = vmatpush.bf16.msra.mxu0 %v6883
        %6994 = vmatpush.bf16.msra.mxu0 %v6879
        %6995 = vmatpush.bf16.msra.mxu0 %v6875
        %6996 = vmatpush.bf16.msra.mxu0 %v6871
        %6997 = vmatmul.bf16.gmra.mxu0 %v6203
        %v6998 = vpop.f32.mrf.mxu0
        %v6999 = vadd.f32 0.0, %v6998
        %v7000 = vpop.f32.mrf.mxu0
        %v7001 = vadd.f32 0.0, %v7000
        %7002 = vmatmul.bf16.gmra.mxu0 %v6204
        %v7003 = vpop.f32.mrf.mxu0
        %v7004 = vadd.f32 0.0, %v7003
        %v7005 = vpop.f32.mrf.mxu0
        %v7006 = vadd.f32 0.0, %v7005
        %7007 = vdwg.mxu0
        %v7008 = vpack.c.bf16 %v6961, %v6942
        %v7009 = vpack.c.bf16 %v6999, %v6980
        %v7010 = vpack.c.bf16 %v6963, %v6944
        %v7011 = vpack.c.bf16 %v7001, %v6982
        %v7012 = vpack.c.bf16 %v6966, %v6947
        %v7013 = vpack.c.bf16 %v7004, %v6985
        %v7014 = vpack.c.bf16 %v6968, %v6949
        %v7015 = vpack.c.bf16 %v7006, %v6987
        %v7018 = vunpack.c.l.b16 %v6458
        %v7019 = vunpack.c.l.b16 %v6460
        %v7020 = vpack.c.b16 %v7019, %v7018
        %v7026 = vunpack.c.l.b16 %v6731
        %v7027 = vunpack.c.l.b16 %v6733
        %v7028 = vunpack.c.l.b16 %v6735
        %v7029 = vunpack.c.l.b16 %v6737
        %v7030 = vpack.c.b16 %v7027, %v7026
        %v7031 = vpack.c.b16 %v7029, %v7028
        %7034 = vmatpush.bf16.xpose.msra.mxu0 0
        %7035 = vmatpush.bf16.xpose.msra.mxu0 0
        %7036 = vmatpush.bf16.xpose.msra.mxu0 0
        %7037 = vmatpush.bf16.xpose.msra.mxu0 0
        %7038 = vmatpush.bf16.xpose.msra.mxu0 0
        %7039 = vmatpush.bf16.xpose.msra.mxu0 0
        %7040 = vmatpush.bf16.xpose.msra.mxu0 %v7031
        %7041 = vmatpush.bf16.xpose.msra.mxu0 %v7030
        %7042 = vmatmul.bf16.gmra.mxu0 %v7020
        %v7043 = vpop.f32.mrf.mxu0
        %v7044 = vadd.f32 %v6207, %v7043
        %v7045 = vpop.f32.mrf.mxu0
        %v7046 = vadd.f32 %v6208, %v7045
        %7047 = vdwg.mxu0
        %v7048 = vsel %vm2042, %v7044, -inf
        %7049 = vmax.xlane.f32.xlu0 %v7048
        %v7050 = vpop.xlane.xlu0 %7049
        %v7051 = vsel %vm2042, %v7046, -inf
        %7052 = vmax.xlane.f32.xlu0 %v7051
        %v7053 = vpop.xlane.xlu0 %7052
        %v7054 = vsub.f32 %v7044, %v7050
        %v7055 = vsub.f32 %v7046, %v7053
        %v7056 = vmul.f32 %v7054, 1.442695
        %v7057 = vpow.pop %v7056
        %v7058 = vmul.f32 %v7055, 1.442695
        %v7059 = vpow.pop %v7058
        %v7060 = vsel %vm2042, %v7057, 0.0
        %7061 = vadd.xlane.f32.xlu0 %v7060
        %v7062 = vpop.xlane.xlu0 %7061
        %v7063 = vsel %vm2042, %v7059, 0.0
        %7064 = vadd.xlane.f32.xlu0 %v7063
        %v7065 = vpop.xlane.xlu0 %7064
        %v7066 = vrcp.pop %v7062
        %v7067 = vrcp.pop %v7065
        %v7068 = vmul.f32 %v7057, %v7066
        %v7069 = vmul.f32 %v7059, %v7067
        %v7070 = vpack.c.bf16 %v7069, %v7068
        %v7075 = vunpack.c.l.b16 %v7008
        %v7076 = vunpack.c.l.b16 %v7010
        %v7077 = vunpack.c.l.b16 %v7012
        %v7078 = vunpack.c.l.b16 %v7014
        %v7079 = vpack.c.b16 %v7076, %v7075
        %v7080 = vpack.c.b16 %v7078, %v7077
        %v7084 = vsel %vm2042, %v7070, 0
        %7086 = vmatpush.bf16.msra.mxu0 0
        %7087 = vmatpush.bf16.msra.mxu0 0
        %7088 = vmatpush.bf16.msra.mxu0 0
        %7089 = vmatpush.bf16.msra.mxu0 0
        %7090 = vmatpush.bf16.msra.mxu0 0
        %7091 = vmatpush.bf16.msra.mxu0 0
        %7092 = vmatpush.bf16.msra.mxu0 %v7080
        %7093 = vmatpush.bf16.msra.mxu0 %v7079
        %7094 = vmatmul.bf16.gmra.mxu0 %v7084
        %v7095 = vpop.f32.mrf.mxu0
        %v7096 = vadd.f32 0.0, %v7095
        %v7097 = vpop.f32.mrf.mxu0
        %v7098 = vadd.f32 0.0, %v7097
        %7099 = vdwg.mxu0
        %v7100 = vpack.c.bf16 %v7096, %v7096
        %v7101 = vpack.c.bf16 %v7098, %v7098
        %v7102 = vunpack.c.h.b16 %v6458
        %v7103 = vunpack.c.h.b16 %v6460
        %v7104 = vpack.c.b16 %v7103, %v7102
        %v7106 = vunpack.c.h.b16 %v6731
        %v7107 = vunpack.c.h.b16 %v6733
        %v7108 = vunpack.c.h.b16 %v6735
        %v7109 = vunpack.c.h.b16 %v6737
        %v7110 = vpack.c.b16 %v7107, %v7106
        %v7111 = vpack.c.b16 %v7109, %v7108
        %7114 = vmatpush.bf16.xpose.msra.mxu0 0
        %7115 = vmatpush.bf16.xpose.msra.mxu0 0
        %7116 = vmatpush.bf16.xpose.msra.mxu0 0
        %7117 = vmatpush.bf16.xpose.msra.mxu0 0
        %7118 = vmatpush.bf16.xpose.msra.mxu0 0
        %7119 = vmatpush.bf16.xpose.msra.mxu0 0
        %7120 = vmatpush.bf16.xpose.msra.mxu0 %v7111
        %7121 = vmatpush.bf16.xpose.msra.mxu0 %v7110
        %7122 = vmatmul.bf16.gmra.mxu0 %v7104
        %v7123 = vpop.f32.mrf.mxu0
        %v7124 = vadd.f32 %v6207, %v7123
        %v7125 = vpop.f32.mrf.mxu0
        %v7126 = vadd.f32 %v6208, %v7125
        %7127 = vdwg.mxu0
        %v7128 = vsel %vm2042, %v7124, -inf
        %7129 = vmax.xlane.f32.xlu0 %v7128
        %v7130 = vpop.xlane.xlu0 %7129
        %v7131 = vsel %vm2042, %v7126, -inf
        %7132 = vmax.xlane.f32.xlu0 %v7131
        %v7133 = vpop.xlane.xlu0 %7132
        %v7134 = vsub.f32 %v7124, %v7130
        %v7135 = vsub.f32 %v7126, %v7133
        %v7136 = vmul.f32 %v7134, 1.442695
        %v7137 = vpow.pop %v7136
        %v7138 = vmul.f32 %v7135, 1.442695
        %v7139 = vpow.pop %v7138
        %v7140 = vsel %vm2042, %v7137, 0.0
        %7141 = vadd.xlane.f32.xlu0 %v7140
        %v7142 = vpop.xlane.xlu0 %7141
        %v7143 = vsel %vm2042, %v7139, 0.0
        %7144 = vadd.xlane.f32.xlu0 %v7143
        %v7145 = vpop.xlane.xlu0 %7144
        %v7146 = vrcp.pop %v7142
        %v7147 = vrcp.pop %v7145
        %v7148 = vmul.f32 %v7137, %v7146
        %v7149 = vmul.f32 %v7139, %v7147
        %v7150 = vpack.c.bf16 %v7149, %v7148
        %v7151 = vunpack.c.h.b16 %v7008
        %v7152 = vunpack.c.h.b16 %v7010
        %v7153 = vunpack.c.h.b16 %v7012
        %v7154 = vunpack.c.h.b16 %v7014
        %v7155 = vpack.c.b16 %v7152, %v7151
        %v7156 = vpack.c.b16 %v7154, %v7153
        %v7160 = vsel %vm2042, %v7150, 0
        %7162 = vmatpush.bf16.msra.mxu0 0
        %7163 = vmatpush.bf16.msra.mxu0 0
        %7164 = vmatpush.bf16.msra.mxu0 0
        %7165 = vmatpush.bf16.msra.mxu0 0
        %7166 = vmatpush.bf16.msra.mxu0 0
        %7167 = vmatpush.bf16.msra.mxu0 0
        %7168 = vmatpush.bf16.msra.mxu0 %v7156
        %7169 = vmatpush.bf16.msra.mxu0 %v7155
        %7170 = vmatmul.bf16.gmra.mxu0 %v7160
        %v7171 = vpop.f32.mrf.mxu0
        %v7172 = vadd.f32 0.0, %v7171
        %v7173 = vpop.f32.mrf.mxu0
        %v7174 = vadd.f32 0.0, %v7173
        %7175 = vdwg.mxu0
        %v7176 = vpack.c.bf16 %v7172, %v7172
        %v7177 = vpack.c.bf16 %v7174, %v7174
        %v7180 = vunpack.c.l.b16 %v6459
        %v7181 = vunpack.c.l.b16 %v6461
        %v7182 = vpack.c.b16 %v7181, %v7180
        %v7188 = vunpack.c.l.b16 %v6732
        %v7189 = vunpack.c.l.b16 %v6734
        %v7190 = vunpack.c.l.b16 %v6736
        %v7191 = vunpack.c.l.b16 %v6738
        %v7192 = vpack.c.b16 %v7189, %v7188
        %v7193 = vpack.c.b16 %v7191, %v7190
        %7196 = vmatpush.bf16.xpose.msra.mxu0 0
        %7197 = vmatpush.bf16.xpose.msra.mxu0 0
        %7198 = vmatpush.bf16.xpose.msra.mxu0 0
        %7199 = vmatpush.bf16.xpose.msra.mxu0 0
        %7200 = vmatpush.bf16.xpose.msra.mxu0 0
        %7201 = vmatpush.bf16.xpose.msra.mxu0 0
        %7202 = vmatpush.bf16.xpose.msra.mxu0 %v7193
        %7203 = vmatpush.bf16.xpose.msra.mxu0 %v7192
        %7204 = vmatmul.bf16.gmra.mxu0 %v7182
        %v7205 = vpop.f32.mrf.mxu0
        %v7206 = vadd.f32 %v6207, %v7205
        %v7207 = vpop.f32.mrf.mxu0
        %v7208 = vadd.f32 %v6208, %v7207
        %7209 = vdwg.mxu0
        %v7210 = vsel %vm2042, %v7206, -inf
        %7211 = vmax.xlane.f32.xlu0 %v7210
        %v7212 = vpop.xlane.xlu0 %7211
        %v7213 = vsel %vm2042, %v7208, -inf
        %7214 = vmax.xlane.f32.xlu0 %v7213
        %v7215 = vpop.xlane.xlu0 %7214
        %v7216 = vsub.f32 %v7206, %v7212
        %v7217 = vsub.f32 %v7208, %v7215
        %v7218 = vmul.f32 %v7216, 1.442695
        %v7219 = vpow.pop %v7218
        %v7220 = vmul.f32 %v7217, 1.442695
        %v7221 = vpow.pop %v7220
        %v7222 = vsel %vm2042, %v7219, 0.0
        %7223 = vadd.xlane.f32.xlu0 %v7222
        %v7224 = vpop.xlane.xlu0 %7223
        %v7225 = vsel %vm2042, %v7221, 0.0
        %7226 = vadd.xlane.f32.xlu0 %v7225
        %v7227 = vpop.xlane.xlu0 %7226
        %v7228 = vrcp.pop %v7224
        %v7229 = vrcp.pop %v7227
        %v7230 = vmul.f32 %v7219, %v7228
        %v7231 = vmul.f32 %v7221, %v7229
        %v7232 = vpack.c.bf16 %v7231, %v7230
        %v7237 = vunpack.c.l.b16 %v7009
        %v7238 = vunpack.c.l.b16 %v7011
        %v7239 = vunpack.c.l.b16 %v7013
        %v7240 = vunpack.c.l.b16 %v7015
        %v7241 = vpack.c.b16 %v7238, %v7237
        %v7242 = vpack.c.b16 %v7240, %v7239
        %v7246 = vsel %vm2042, %v7232, 0
        %7248 = vmatpush.bf16.msra.mxu0 0
        %7249 = vmatpush.bf16.msra.mxu0 0
        %7250 = vmatpush.bf16.msra.mxu0 0
        %7251 = vmatpush.bf16.msra.mxu0 0
        %7252 = vmatpush.bf16.msra.mxu0 0
        %7253 = vmatpush.bf16.msra.mxu0 0
        %7254 = vmatpush.bf16.msra.mxu0 %v7242
        %7255 = vmatpush.bf16.msra.mxu0 %v7241
        %7256 = vmatmul.bf16.gmra.mxu0 %v7246
        %v7257 = vpop.f32.mrf.mxu0
        %v7258 = vadd.f32 0.0, %v7257
        %v7259 = vpop.f32.mrf.mxu0
        %v7260 = vadd.f32 0.0, %v7259
        %7261 = vdwg.mxu0
        %v7262 = vpack.c.bf16 %v7258, %v7258
        %v7263 = vpack.c.bf16 %v7260, %v7260
        %v7264 = vunpack.c.h.b16 %v6459
        %v7265 = vunpack.c.h.b16 %v6461
        %v7266 = vpack.c.b16 %v7265, %v7264
        %v7268 = vunpack.c.h.b16 %v6732
        %v7269 = vunpack.c.h.b16 %v6734
        %v7270 = vunpack.c.h.b16 %v6736
        %v7271 = vunpack.c.h.b16 %v6738
        %v7272 = vpack.c.b16 %v7269, %v7268
        %v7273 = vpack.c.b16 %v7271, %v7270
        %7276 = vmatpush.bf16.xpose.msra.mxu0 0
        %7277 = vmatpush.bf16.xpose.msra.mxu0 0
        %7278 = vmatpush.bf16.xpose.msra.mxu0 0
        %7279 = vmatpush.bf16.xpose.msra.mxu0 0
        %7280 = vmatpush.bf16.xpose.msra.mxu0 0
        %7281 = vmatpush.bf16.xpose.msra.mxu0 0
        %7282 = vmatpush.bf16.xpose.msra.mxu0 %v7273
        %7283 = vmatpush.bf16.xpose.msra.mxu0 %v7272
        %7284 = vmatmul.bf16.gmra.mxu0 %v7266
        %v7285 = vpop.f32.mrf.mxu0
        %v7286 = vadd.f32 %v6207, %v7285
        %v7287 = vpop.f32.mrf.mxu0
        %v7288 = vadd.f32 %v6208, %v7287
        %7289 = vdwg.mxu0
        %v7290 = vsel %vm2042, %v7286, -inf
        %7291 = vmax.xlane.f32.xlu0 %v7290
        %v7292 = vpop.xlane.xlu0 %7291
        %v7293 = vsel %vm2042, %v7288, -inf
        %7294 = vmax.xlane.f32.xlu0 %v7293
        %v7295 = vpop.xlane.xlu0 %7294
        %v7296 = vsub.f32 %v7286, %v7292
        %v7297 = vsub.f32 %v7288, %v7295
        %v7298 = vmul.f32 %v7296, 1.442695
        %v7299 = vpow.pop %v7298
        %v7300 = vmul.f32 %v7297, 1.442695
        %v7301 = vpow.pop %v7300
        %v7302 = vsel %vm2042, %v7299, 0.0
        %7303 = vadd.xlane.f32.xlu0 %v7302
        %v7304 = vpop.xlane.xlu0 %7303
        %v7305 = vsel %vm2042, %v7301, 0.0
        %7306 = vadd.xlane.f32.xlu0 %v7305
        %v7307 = vpop.xlane.xlu0 %7306
        %v7308 = vrcp.pop %v7304
        %v7309 = vrcp.pop %v7307
        %v7310 = vmul.f32 %v7299, %v7308
        %v7311 = vmul.f32 %v7301, %v7309
        %v7312 = vpack.c.bf16 %v7311, %v7310
        %v7313 = vunpack.c.h.b16 %v7009
        %v7314 = vunpack.c.h.b16 %v7011
        %v7315 = vunpack.c.h.b16 %v7013
        %v7316 = vunpack.c.h.b16 %v7015
        %v7317 = vpack.c.b16 %v7314, %v7313
        %v7318 = vpack.c.b16 %v7316, %v7315
        %v7322 = vsel %vm2042, %v7312, 0
        %7324 = vmatpush.bf16.msra.mxu0 0
        %7325 = vmatpush.bf16.msra.mxu0 0
        %7326 = vmatpush.bf16.msra.mxu0 0
        %7327 = vmatpush.bf16.msra.mxu0 0
        %7328 = vmatpush.bf16.msra.mxu0 0
        %7329 = vmatpush.bf16.msra.mxu0 0
        %7330 = vmatpush.bf16.msra.mxu0 %v7318
        %7331 = vmatpush.bf16.msra.mxu0 %v7317
        %7332 = vmatmul.bf16.gmra.mxu0 %v7322
        %v7333 = vpop.f32.mrf.mxu0
        %v7334 = vadd.f32 0.0, %v7333
        %v7335 = vpop.f32.mrf.mxu0
        %v7336 = vadd.f32 0.0, %v7335
        %7337 = vdwg.mxu0
        %v7338 = vpack.c.bf16 %v7334, %v7334
        %v7339 = vpack.c.bf16 %v7336, %v7336
        %v7342 = vunpack.c.l.b16 %v7100
        %v7343 = vunpack.c.l.b16 %v7101
        %v7344 = vpack.c.b16 %v7343, %v7342
        %v7348 = vunpack.c.l.b16 %v7176
        %v7349 = vunpack.c.l.b16 %v7177
        %v7350 = vpack.c.b16 %v7349, %v7348
        %v7354 = vunpack.c.l.b16 %v7262
        %v7355 = vunpack.c.l.b16 %v7263
        %v7356 = vpack.c.b16 %v7355, %v7354
        %v7360 = vunpack.c.l.b16 %v7338
        %v7361 = vunpack.c.l.b16 %v7339
        %v7362 = vpack.c.b16 %v7361, %v7360
        %s7364 = scalar_lea.vmem %s808, 768 [#allocation11]
        %v7365 = vld [vmem:[%s7364] sm:$0xf]
        %v7366 = vld [vmem:[%s7364 + $0x4] sm:$0xf]
        %v7367 = vld [vmem:[%s7364 + $0x8] sm:$0xf]
        %v7368 = vld [vmem:[%s7364 + $0xc] sm:$0xf]
        %v7369 = vld [vmem:[%s7364 + $0x10] sm:$0xf]
        %v7370 = vld [vmem:[%s7364 + $0x14] sm:$0xf]
        %v7371 = vld [vmem:[%s7364 + $0x18] sm:$0xf]
        %v7372 = vld [vmem:[%s7364 + $0x1c] sm:$0xf]
        %v7373 = vld [vmem:[%s7364 + $0x20] sm:$0xf]
        %v7374 = vld [vmem:[%s7364 + $0x24] sm:$0xf]
        %v7375 = vld [vmem:[%s7364 + $0x28] sm:$0xf]
        %v7376 = vld [vmem:[%s7364 + $0x2c] sm:$0xf]
        %v7377 = vld [vmem:[%s7364 + $0x30] sm:$0xf]
        %v7378 = vld [vmem:[%s7364 + $0x34] sm:$0xf]
        %v7379 = vld [vmem:[%s7364 + $0x38] sm:$0xf]
        %v7380 = vld [vmem:[%s7364 + $0x3c] sm:$0xf]
        %v7381 = vld [vmem:[%s7364 + $0x40] sm:$0xf]
        %v7382 = vld [vmem:[%s7364 + $0x44] sm:$0xf]
        %v7383 = vld [vmem:[%s7364 + $0x48] sm:$0xf]
        %v7384 = vld [vmem:[%s7364 + $0x4c] sm:$0xf]
        %v7385 = vld [vmem:[%s7364 + $0x50] sm:$0xf]
        %v7386 = vld [vmem:[%s7364 + $0x54] sm:$0xf]
        %v7387 = vld [vmem:[%s7364 + $0x58] sm:$0xf]
        %v7388 = vld [vmem:[%s7364 + $0x5c] sm:$0xf]
        %v7389 = vld [vmem:[%s7364 + $0x60] sm:$0xf]
        %v7390 = vld [vmem:[%s7364 + $0x64] sm:$0xf]
        %v7391 = vld [vmem:[%s7364 + $0x68] sm:$0xf]
        %v7392 = vld [vmem:[%s7364 + $0x6c] sm:$0xf]
        %v7393 = vld [vmem:[%s7364 + $0x70] sm:$0xf]
        %v7394 = vld [vmem:[%s7364 + $0x74] sm:$0xf]
        %v7395 = vld [vmem:[%s7364 + $0x78] sm:$0xf]
        %v7396 = vld [vmem:[%s7364 + $0x7c] sm:$0xf]
        %v7397 = vld [vmem:[%s7364 + $0x80] sm:$0xf]
        %v7398 = vld [vmem:[%s7364 + $0x84] sm:$0xf]
        %v7399 = vld [vmem:[%s7364 + $0x88] sm:$0xf]
        %v7400 = vld [vmem:[%s7364 + $0x8c] sm:$0xf]
        %v7401 = vld [vmem:[%s7364 + $0x90] sm:$0xf]
        %v7402 = vld [vmem:[%s7364 + $0x94] sm:$0xf]
        %v7403 = vld [vmem:[%s7364 + $0x98] sm:$0xf]
        %v7404 = vld [vmem:[%s7364 + $0x9c] sm:$0xf]
        %v7405 = vld [vmem:[%s7364 + $0xa0] sm:$0xf]
        %v7406 = vld [vmem:[%s7364 + $0xa4] sm:$0xf]
        %v7407 = vld [vmem:[%s7364 + $0xa8] sm:$0xf]
        %v7408 = vld [vmem:[%s7364 + $0xac] sm:$0xf]
        %v7409 = vld [vmem:[%s7364 + $0xb0] sm:$0xf]
        %v7410 = vld [vmem:[%s7364 + $0xb4] sm:$0xf]
        %v7411 = vld [vmem:[%s7364 + $0xb8] sm:$0xf]
        %v7412 = vld [vmem:[%s7364 + $0xbc] sm:$0xf]
        %v7413 = vld [vmem:[%s7364 + $0xc0] sm:$0xf]
        %v7414 = vld [vmem:[%s7364 + $0xc4] sm:$0xf]
        %v7415 = vld [vmem:[%s7364 + $0xc8] sm:$0xf]
        %v7416 = vld [vmem:[%s7364 + $0xcc] sm:$0xf]
        %v7417 = vld [vmem:[%s7364 + $0xd0] sm:$0xf]
        %v7418 = vld [vmem:[%s7364 + $0xd4] sm:$0xf]
        %v7419 = vld [vmem:[%s7364 + $0xd8] sm:$0xf]
        %v7420 = vld [vmem:[%s7364 + $0xdc] sm:$0xf]
        %v7421 = vld [vmem:[%s7364 + $0xe0] sm:$0xf]
        %v7422 = vld [vmem:[%s7364 + $0xe4] sm:$0xf]
        %v7423 = vld [vmem:[%s7364 + $0xe8] sm:$0xf]
        %v7424 = vld [vmem:[%s7364 + $0xec] sm:$0xf]
        %v7425 = vld [vmem:[%s7364 + $0xf0] sm:$0xf]
        %v7426 = vld [vmem:[%s7364 + $0xf4] sm:$0xf]
        %v7427 = vld [vmem:[%s7364 + $0xf8] sm:$0xf]
        %v7428 = vld [vmem:[%s7364 + $0xfc] sm:$0xf]
        %v7429 = vld [vmem:[%s818 + $0x3] sm:$0x1]
        %v7430 = vperm.slane %v7429, 0
        %v7495 = vunpack.c.l.b16 %v7365
        %v7496 = vunpack.c.l.b16 %v7366
        %v7497 = vunpack.c.l.b16 %v7367
        %v7498 = vunpack.c.l.b16 %v7368
        %v7499 = vunpack.c.l.b16 %v7369
        %v7500 = vunpack.c.l.b16 %v7370
        %v7501 = vunpack.c.l.b16 %v7371
        %v7502 = vunpack.c.l.b16 %v7372
        %v7503 = vunpack.c.l.b16 %v7373
        %v7504 = vunpack.c.l.b16 %v7374
        %v7505 = vunpack.c.l.b16 %v7375
        %v7506 = vunpack.c.l.b16 %v7376
        %v7507 = vunpack.c.l.b16 %v7377
        %v7508 = vunpack.c.l.b16 %v7378
        %v7509 = vunpack.c.l.b16 %v7379
        %v7510 = vunpack.c.l.b16 %v7380
        %v7511 = vunpack.c.l.b16 %v7381
        %v7512 = vunpack.c.l.b16 %v7382
        %v7513 = vunpack.c.l.b16 %v7383
        %v7514 = vunpack.c.l.b16 %v7384
        %v7515 = vunpack.c.l.b16 %v7385
        %v7516 = vunpack.c.l.b16 %v7386
        %v7517 = vunpack.c.l.b16 %v7387
        %v7518 = vunpack.c.l.b16 %v7388
        %v7519 = vunpack.c.l.b16 %v7389
        %v7520 = vunpack.c.l.b16 %v7390
        %v7521 = vunpack.c.l.b16 %v7391
        %v7522 = vunpack.c.l.b16 %v7392
        %v7523 = vunpack.c.l.b16 %v7393
        %v7524 = vunpack.c.l.b16 %v7394
        %v7525 = vunpack.c.l.b16 %v7395
        %v7526 = vunpack.c.l.b16 %v7396
        %v7527 = vunpack.c.l.b16 %v7397
        %v7528 = vunpack.c.l.b16 %v7398
        %v7529 = vunpack.c.l.b16 %v7399
        %v7530 = vunpack.c.l.b16 %v7400
        %v7531 = vunpack.c.l.b16 %v7401
        %v7532 = vunpack.c.l.b16 %v7402
        %v7533 = vunpack.c.l.b16 %v7403
        %v7534 = vunpack.c.l.b16 %v7404
        %v7535 = vunpack.c.l.b16 %v7405
        %v7536 = vunpack.c.l.b16 %v7406
        %v7537 = vunpack.c.l.b16 %v7407
        %v7538 = vunpack.c.l.b16 %v7408
        %v7539 = vunpack.c.l.b16 %v7409
        %v7540 = vunpack.c.l.b16 %v7410
        %v7541 = vunpack.c.l.b16 %v7411
        %v7542 = vunpack.c.l.b16 %v7412
        %v7543 = vunpack.c.l.b16 %v7413
        %v7544 = vunpack.c.l.b16 %v7414
        %v7545 = vunpack.c.l.b16 %v7415
        %v7546 = vunpack.c.l.b16 %v7416
        %v7547 = vunpack.c.l.b16 %v7417
        %v7548 = vunpack.c.l.b16 %v7418
        %v7549 = vunpack.c.l.b16 %v7419
        %v7550 = vunpack.c.l.b16 %v7420
        %v7551 = vunpack.c.l.b16 %v7421
        %v7552 = vunpack.c.l.b16 %v7422
        %v7553 = vunpack.c.l.b16 %v7423
        %v7554 = vunpack.c.l.b16 %v7424
        %v7555 = vunpack.c.l.b16 %v7425
        %v7556 = vunpack.c.l.b16 %v7426
        %v7557 = vunpack.c.l.b16 %v7427
        %v7558 = vunpack.c.l.b16 %v7428
        %v7559 = vpack.c.b16 %v7496, %v7495
        %v7560 = vpack.c.b16 %v7498, %v7497
        %v7561 = vpack.c.b16 %v7500, %v7499
        %v7562 = vpack.c.b16 %v7502, %v7501
        %v7563 = vpack.c.b16 %v7504, %v7503
        %v7564 = vpack.c.b16 %v7506, %v7505
        %v7565 = vpack.c.b16 %v7508, %v7507
        %v7566 = vpack.c.b16 %v7510, %v7509
        %v7567 = vpack.c.b16 %v7512, %v7511
        %v7568 = vpack.c.b16 %v7514, %v7513
        %v7569 = vpack.c.b16 %v7516, %v7515
        %v7570 = vpack.c.b16 %v7518, %v7517
        %v7571 = vpack.c.b16 %v7520, %v7519
        %v7572 = vpack.c.b16 %v7522, %v7521
        %v7573 = vpack.c.b16 %v7524, %v7523
        %v7574 = vpack.c.b16 %v7526, %v7525
        %v7575 = vpack.c.b16 %v7528, %v7527
        %v7576 = vpack.c.b16 %v7530, %v7529
        %v7577 = vpack.c.b16 %v7532, %v7531
        %v7578 = vpack.c.b16 %v7534, %v7533
        %v7579 = vpack.c.b16 %v7536, %v7535
        %v7580 = vpack.c.b16 %v7538, %v7537
        %v7581 = vpack.c.b16 %v7540, %v7539
        %v7582 = vpack.c.b16 %v7542, %v7541
        %v7583 = vpack.c.b16 %v7544, %v7543
        %v7584 = vpack.c.b16 %v7546, %v7545
        %v7585 = vpack.c.b16 %v7548, %v7547
        %v7586 = vpack.c.b16 %v7550, %v7549
        %v7587 = vpack.c.b16 %v7552, %v7551
        %v7588 = vpack.c.b16 %v7554, %v7553
        %v7589 = vpack.c.b16 %v7556, %v7555
        %v7590 = vpack.c.b16 %v7558, %v7557
        %7623 = vmatpush.bf16.msra.mxu0 %v7566
        %7624 = vmatpush.bf16.msra.mxu0 %v7565
        %7625 = vmatpush.bf16.msra.mxu0 %v7564
        %7626 = vmatpush.bf16.msra.mxu0 %v7563
        %7627 = vmatpush.bf16.msra.mxu0 %v7562
        %7628 = vmatpush.bf16.msra.mxu0 %v7561
        %7629 = vmatpush.bf16.msra.mxu0 %v7560
        %7630 = vmatpush.bf16.msra.mxu0 %v7559
        %7631 = vmatmul.bf16.gmra.mxu0 %v7344
        %v7632 = vpop.f32.mrf.mxu0
        %v7633 = vadd.f32 %v7430, %v7632
        %v7634 = vpop.f32.mrf.mxu0
        %v7635 = vadd.f32 %v7430, %v7634
        %7636 = vdwg.mxu0
        %7637 = vmatpush.bf16.msra.mxu0 %v7574
        %7638 = vmatpush.bf16.msra.mxu0 %v7573
        %7639 = vmatpush.bf16.msra.mxu0 %v7572
        %7640 = vmatpush.bf16.msra.mxu0 %v7571
        %7641 = vmatpush.bf16.msra.mxu0 %v7570
        %7642 = vmatpush.bf16.msra.mxu0 %v7569
        %7643 = vmatpush.bf16.msra.mxu0 %v7568
        %7644 = vmatpush.bf16.msra.mxu0 %v7567
        %7645 = vmatmul.bf16.gmra.mxu0 %v7350
        %v7646 = vpop.f32.mrf.mxu0
        %v7647 = vadd.f32 %v7633, %v7646
        %v7648 = vpop.f32.mrf.mxu0
        %v7649 = vadd.f32 %v7635, %v7648
        %7650 = vdwg.mxu0
        %7651 = vmatpush.bf16.msra.mxu0 %v7582
        %7652 = vmatpush.bf16.msra.mxu0 %v7581
        %7653 = vmatpush.bf16.msra.mxu0 %v7580
        %7654 = vmatpush.bf16.msra.mxu0 %v7579
        %7655 = vmatpush.bf16.msra.mxu0 %v7578
        %7656 = vmatpush.bf16.msra.mxu0 %v7577
        %7657 = vmatpush.bf16.msra.mxu0 %v7576
        %7658 = vmatpush.bf16.msra.mxu0 %v7575
        %7659 = vmatmul.bf16.gmra.mxu0 %v7356
        %v7660 = vpop.f32.mrf.mxu0
        %v7661 = vadd.f32 %v7647, %v7660
        %v7662 = vpop.f32.mrf.mxu0
        %v7663 = vadd.f32 %v7649, %v7662
        %7664 = vdwg.mxu0
        %7665 = vmatpush.bf16.msra.mxu0 %v7590
        %7666 = vmatpush.bf16.msra.mxu0 %v7589
        %7667 = vmatpush.bf16.msra.mxu0 %v7588
        %7668 = vmatpush.bf16.msra.mxu0 %v7587
        %7669 = vmatpush.bf16.msra.mxu0 %v7586
        %7670 = vmatpush.bf16.msra.mxu0 %v7585
        %7671 = vmatpush.bf16.msra.mxu0 %v7584
        %7672 = vmatpush.bf16.msra.mxu0 %v7583
        %7673 = vmatmul.bf16.gmra.mxu0 %v7362
        %v7674 = vpop.f32.mrf.mxu0
        %v7675 = vadd.f32 %v7661, %v7674
        %v7676 = vpop.f32.mrf.mxu0
        %v7677 = vadd.f32 %v7663, %v7676
        %7678 = vdwg.mxu0
        %v7679 = vadd.f32 %v4331, %v7675
        %v7680 = vadd.f32 %v4332, %v7677
        %v7681 = vld [vmem:[%s960] sm:$0x1]
        %v7682 = vld [vmem:[%s964] sm:$0x1]
        %v7683 = vperm.slane %v7681, 0
        %v7684 = vmul.f32 %v6191, %v7683
        %v7685 = vmul.f32 %v6192, %v7683
        %v7686 = vmul.f32 %v6193, %v7683
        %v7687 = vmul.f32 %v6194, %v7683
        %v7688 = vperm.slane %v7682, 0
        %v7689 = vadd.f32 %v7684, %v7688
        %v7690 = vadd.f32 %v7685, %v7688
        %v7691 = vadd.f32 %v7686, %v7688
        %v7692 = vadd.f32 %v7687, %v7688
        %v7693 = vpack.c.bf16 %v7690, %v7689
        %v7694 = vpack.c.bf16 %v7692, %v7691
        %v7695 = vld [vmem:[%s828] sm:$0xff]
        %v7696 = vld [vmem:[%s828 + $0x8] sm:$0xff]
        %v7697 = vld [vmem:[%s828 + $0x10] sm:$0xff]
        %v7698 = vld [vmem:[%s828 + $0x18] sm:$0xff]
        %v7699 = vld [vmem:[%s828 + $0x20] sm:$0xff]
        %v7700 = vld [vmem:[%s828 + $0x28] sm:$0xff]
        %v7701 = vld [vmem:[%s828 + $0x30] sm:$0xff]
        %v7702 = vld [vmem:[%s828 + $0x38] sm:$0xff]
        %v7703 = vld [vmem:[%s828 + $0x40] sm:$0xff]
        %v7704 = vld [vmem:[%s828 + $0x48] sm:$0xff]
        %v7705 = vld [vmem:[%s828 + $0x50] sm:$0xff]
        %v7706 = vld [vmem:[%s828 + $0x58] sm:$0xff]
        %v7707 = vld [vmem:[%s828 + $0x60] sm:$0xff]
        %v7708 = vld [vmem:[%s828 + $0x68] sm:$0xff]
        %v7709 = vld [vmem:[%s828 + $0x70] sm:$0xff]
        %v7710 = vld [vmem:[%s828 + $0x78] sm:$0xff]
        %v7711 = vld [vmem:[%s828 + $0x80] sm:$0xff]
        %v7712 = vld [vmem:[%s828 + $0x88] sm:$0xff]
        %v7713 = vld [vmem:[%s828 + $0x90] sm:$0xff]
        %v7714 = vld [vmem:[%s828 + $0x98] sm:$0xff]
        %v7715 = vld [vmem:[%s828 + $0xa0] sm:$0xff]
        %v7716 = vld [vmem:[%s828 + $0xa8] sm:$0xff]
        %v7717 = vld [vmem:[%s828 + $0xb0] sm:$0xff]
        %v7718 = vld [vmem:[%s828 + $0xb8] sm:$0xff]
        %v7719 = vld [vmem:[%s828 + $0xc0] sm:$0xff]
        %v7720 = vld [vmem:[%s828 + $0xc8] sm:$0xff]
        %v7721 = vld [vmem:[%s828 + $0xd0] sm:$0xff]
        %v7722 = vld [vmem:[%s828 + $0xd8] sm:$0xff]
        %v7723 = vld [vmem:[%s828 + $0xe0] sm:$0xff]
        %v7724 = vld [vmem:[%s828 + $0xe8] sm:$0xff]
        %v7725 = vld [vmem:[%s828 + $0xf0] sm:$0xff]
        %v7726 = vld [vmem:[%s828 + $0xf8] sm:$0xff]
        %v7727 = vld [vmem:[%s838] ss:$2 sm:$0xf]
        %v7729 = vperm.slane %v7727, 0
        %v7730 = vperm.slane %v7727, 1
        %v7731 = vperm.slane %v7727, 2
        %v7732 = vperm.slane %v7727, 3
        %v7769 = vunpack.c.l.b16 %v7695
        %v7770 = vunpack.c.h.b16 %v7695
        %v7771 = vunpack.c.l.b16 %v7696
        %v7772 = vunpack.c.h.b16 %v7696
        %v7773 = vunpack.c.l.b16 %v7697
        %v7774 = vunpack.c.h.b16 %v7697
        %v7775 = vunpack.c.l.b16 %v7698
        %v7776 = vunpack.c.h.b16 %v7698
        %v7777 = vunpack.c.l.b16 %v7699
        %v7778 = vunpack.c.h.b16 %v7699
        %v7779 = vunpack.c.l.b16 %v7700
        %v7780 = vunpack.c.h.b16 %v7700
        %v7781 = vunpack.c.l.b16 %v7701
        %v7782 = vunpack.c.h.b16 %v7701
        %v7783 = vunpack.c.l.b16 %v7702
        %v7784 = vunpack.c.h.b16 %v7702
        %v7785 = vunpack.c.l.b16 %v7703
        %v7786 = vunpack.c.h.b16 %v7703
        %v7787 = vunpack.c.l.b16 %v7704
        %v7788 = vunpack.c.h.b16 %v7704
        %v7789 = vunpack.c.l.b16 %v7705
        %v7790 = vunpack.c.h.b16 %v7705
        %v7791 = vunpack.c.l.b16 %v7706
        %v7792 = vunpack.c.h.b16 %v7706
        %v7793 = vunpack.c.l.b16 %v7707
        %v7794 = vunpack.c.h.b16 %v7707
        %v7795 = vunpack.c.l.b16 %v7708
        %v7796 = vunpack.c.h.b16 %v7708
        %v7797 = vunpack.c.l.b16 %v7709
        %v7798 = vunpack.c.h.b16 %v7709
        %v7799 = vunpack.c.l.b16 %v7710
        %v7800 = vunpack.c.h.b16 %v7710
        %v7801 = vunpack.c.l.b16 %v7711
        %v7802 = vunpack.c.h.b16 %v7711
        %v7803 = vunpack.c.l.b16 %v7712
        %v7804 = vunpack.c.h.b16 %v7712
        %v7805 = vunpack.c.l.b16 %v7713
        %v7806 = vunpack.c.h.b16 %v7713
        %v7807 = vunpack.c.l.b16 %v7714
        %v7808 = vunpack.c.h.b16 %v7714
        %v7809 = vunpack.c.l.b16 %v7715
        %v7810 = vunpack.c.h.b16 %v7715
        %v7811 = vunpack.c.l.b16 %v7716
        %v7812 = vunpack.c.h.b16 %v7716
        %v7813 = vunpack.c.l.b16 %v7717
        %v7814 = vunpack.c.h.b16 %v7717
        %v7815 = vunpack.c.l.b16 %v7718
        %v7816 = vunpack.c.h.b16 %v7718
        %v7817 = vunpack.c.l.b16 %v7719
        %v7818 = vunpack.c.h.b16 %v7719
        %v7819 = vunpack.c.l.b16 %v7720
        %v7820 = vunpack.c.h.b16 %v7720
        %v7821 = vunpack.c.l.b16 %v7721
        %v7822 = vunpack.c.h.b16 %v7721
        %v7823 = vunpack.c.l.b16 %v7722
        %v7824 = vunpack.c.h.b16 %v7722
        %v7825 = vunpack.c.l.b16 %v7723
        %v7826 = vunpack.c.h.b16 %v7723
        %v7827 = vunpack.c.l.b16 %v7724
        %v7828 = vunpack.c.h.b16 %v7724
        %v7829 = vunpack.c.l.b16 %v7725
        %v7830 = vunpack.c.h.b16 %v7725
        %v7831 = vunpack.c.l.b16 %v7726
        %v7832 = vunpack.c.h.b16 %v7726
        %v7833 = vpack.c.b16 %v7773, %v7769
        %v7834 = vpack.c.b16 %v7774, %v7770
        %v7835 = vpack.c.b16 %v7775, %v7771
        %v7836 = vpack.c.b16 %v7776, %v7772
        %v7837 = vpack.c.b16 %v7781, %v7777
        %v7838 = vpack.c.b16 %v7782, %v7778
        %v7839 = vpack.c.b16 %v7783, %v7779
        %v7840 = vpack.c.b16 %v7784, %v7780
        %v7841 = vpack.c.b16 %v7789, %v7785
        %v7842 = vpack.c.b16 %v7790, %v7786
        %v7843 = vpack.c.b16 %v7791, %v7787
        %v7844 = vpack.c.b16 %v7792, %v7788
        %v7845 = vpack.c.b16 %v7797, %v7793
        %v7846 = vpack.c.b16 %v7798, %v7794
        %v7847 = vpack.c.b16 %v7799, %v7795
        %v7848 = vpack.c.b16 %v7800, %v7796
        %v7849 = vpack.c.b16 %v7805, %v7801
        %v7850 = vpack.c.b16 %v7806, %v7802
        %v7851 = vpack.c.b16 %v7807, %v7803
        %v7852 = vpack.c.b16 %v7808, %v7804
        %v7853 = vpack.c.b16 %v7813, %v7809
        %v7854 = vpack.c.b16 %v7814, %v7810
        %v7855 = vpack.c.b16 %v7815, %v7811
        %v7856 = vpack.c.b16 %v7816, %v7812
        %v7857 = vpack.c.b16 %v7821, %v7817
        %v7858 = vpack.c.b16 %v7822, %v7818
        %v7859 = vpack.c.b16 %v7823, %v7819
        %v7860 = vpack.c.b16 %v7824, %v7820
        %v7861 = vpack.c.b16 %v7829, %v7825
        %v7862 = vpack.c.b16 %v7830, %v7826
        %v7863 = vpack.c.b16 %v7831, %v7827
        %v7864 = vpack.c.b16 %v7832, %v7828
        %7897 = vmatpush.bf16.msra.mxu0 %v7861
        %7898 = vmatpush.bf16.msra.mxu0 %v7857
        %7899 = vmatpush.bf16.msra.mxu0 %v7853
        %7900 = vmatpush.bf16.msra.mxu0 %v7849
        %7901 = vmatpush.bf16.msra.mxu0 %v7845
        %7902 = vmatpush.bf16.msra.mxu0 %v7841
        %7903 = vmatpush.bf16.msra.mxu0 %v7837
        %7904 = vmatpush.bf16.msra.mxu0 %v7833
        %7905 = vmatmul.bf16.gmra.mxu0 %v7693
        %v7906 = vpop.f32.mrf.mxu0
        %v7907 = vadd.f32 %v7729, %v7906
        %v7908 = vpop.f32.mrf.mxu0
        %v7909 = vadd.f32 %v7729, %v7908
        %7910 = vmatmul.bf16.gmra.mxu0 %v7694
        %v7911 = vpop.f32.mrf.mxu0
        %v7912 = vadd.f32 %v7729, %v7911
        %v7913 = vpop.f32.mrf.mxu0
        %v7914 = vadd.f32 %v7729, %v7913
        %7915 = vdwg.mxu0
        %7916 = vmatpush.bf16.msra.mxu0 %v7862
        %7917 = vmatpush.bf16.msra.mxu0 %v7858
        %7918 = vmatpush.bf16.msra.mxu0 %v7854
        %7919 = vmatpush.bf16.msra.mxu0 %v7850
        %7920 = vmatpush.bf16.msra.mxu0 %v7846
        %7921 = vmatpush.bf16.msra.mxu0 %v7842
        %7922 = vmatpush.bf16.msra.mxu0 %v7838
        %7923 = vmatpush.bf16.msra.mxu0 %v7834
        %7924 = vmatmul.bf16.gmra.mxu0 %v7693
        %v7925 = vpop.f32.mrf.mxu0
        %v7926 = vadd.f32 %v7730, %v7925
        %v7927 = vpop.f32.mrf.mxu0
        %v7928 = vadd.f32 %v7730, %v7927
        %7929 = vmatmul.bf16.gmra.mxu0 %v7694
        %v7930 = vpop.f32.mrf.mxu0
        %v7931 = vadd.f32 %v7730, %v7930
        %v7932 = vpop.f32.mrf.mxu0
        %v7933 = vadd.f32 %v7730, %v7932
        %7934 = vdwg.mxu0
        %7935 = vmatpush.bf16.msra.mxu0 %v7863
        %7936 = vmatpush.bf16.msra.mxu0 %v7859
        %7937 = vmatpush.bf16.msra.mxu0 %v7855
        %7938 = vmatpush.bf16.msra.mxu0 %v7851
        %7939 = vmatpush.bf16.msra.mxu0 %v7847
        %7940 = vmatpush.bf16.msra.mxu0 %v7843
        %7941 = vmatpush.bf16.msra.mxu0 %v7839
        %7942 = vmatpush.bf16.msra.mxu0 %v7835
        %7943 = vmatmul.bf16.gmra.mxu0 %v7693
        %v7944 = vpop.f32.mrf.mxu0
        %v7945 = vadd.f32 %v7731, %v7944
        %v7946 = vpop.f32.mrf.mxu0
        %v7947 = vadd.f32 %v7731, %v7946
        %7948 = vmatmul.bf16.gmra.mxu0 %v7694
        %v7949 = vpop.f32.mrf.mxu0
        %v7950 = vadd.f32 %v7731, %v7949
        %v7951 = vpop.f32.mrf.mxu0
        %v7952 = vadd.f32 %v7731, %v7951
        %7953 = vdwg.mxu0
        %7954 = vmatpush.bf16.msra.mxu0 %v7864
        %7955 = vmatpush.bf16.msra.mxu0 %v7860
        %7956 = vmatpush.bf16.msra.mxu0 %v7856
        %7957 = vmatpush.bf16.msra.mxu0 %v7852
        %7958 = vmatpush.bf16.msra.mxu0 %v7848
        %7959 = vmatpush.bf16.msra.mxu0 %v7844
        %7960 = vmatpush.bf16.msra.mxu0 %v7840
        %7961 = vmatpush.bf16.msra.mxu0 %v7836
        %7962 = vmatmul.bf16.gmra.mxu0 %v7693
        %v7963 = vpop.f32.mrf.mxu0
        %v7964 = vadd.f32 %v7732, %v7963
        %v7965 = vpop.f32.mrf.mxu0
        %v7966 = vadd.f32 %v7732, %v7965
        %7967 = vmatmul.bf16.gmra.mxu0 %v7694
        %v7968 = vpop.f32.mrf.mxu0
        %v7969 = vadd.f32 %v7732, %v7968
        %v7970 = vpop.f32.mrf.mxu0
        %v7971 = vadd.f32 %v7732, %v7970
        %7972 = vdwg.mxu0
        %v7973 = vmul.f32 %v7907, %v7907
        %v7974 = vmul.f32 %v7926, %v7926
        %v7975 = vmul.f32 %v7945, %v7945
        %v7976 = vmul.f32 %v7964, %v7964
        %v7977 = vmul.f32 %v7909, %v7909
        %v7978 = vmul.f32 %v7928, %v7928
        %v7979 = vmul.f32 %v7947, %v7947
        %v7980 = vmul.f32 %v7966, %v7966
        %v7981 = vmul.f32 %v7912, %v7912
        %v7982 = vmul.f32 %v7931, %v7931
        %v7983 = vmul.f32 %v7950, %v7950
        %v7984 = vmul.f32 %v7969, %v7969
        %v7985 = vmul.f32 %v7914, %v7914
        %v7986 = vmul.f32 %v7933, %v7933
        %v7987 = vmul.f32 %v7952, %v7952
        %v7988 = vmul.f32 %v7971, %v7971
        %v7989 = vmul.f32 %v7907, %v7973
        %v7990 = vmul.f32 %v7926, %v7974
        %v7991 = vmul.f32 %v7945, %v7975
        %v7992 = vmul.f32 %v7964, %v7976
        %v7993 = vmul.f32 %v7909, %v7977
        %v7994 = vmul.f32 %v7928, %v7978
        %v7995 = vmul.f32 %v7947, %v7979
        %v7996 = vmul.f32 %v7966, %v7980
        %v7997 = vmul.f32 %v7912, %v7981
        %v7998 = vmul.f32 %v7931, %v7982
        %v7999 = vmul.f32 %v7950, %v7983
        %v8000 = vmul.f32 %v7969, %v7984
        %v8001 = vmul.f32 %v7914, %v7985
        %v8002 = vmul.f32 %v7933, %v7986
        %v8003 = vmul.f32 %v7952, %v7987
        %v8004 = vmul.f32 %v7971, %v7988
        %v8005 = vmul.f32 %v7989, 0.044715
        %v8006 = vmul.f32 %v7990, 0.044715
        %v8007 = vmul.f32 %v7991, 0.044715
        %v8008 = vmul.f32 %v7992, 0.044715
        %v8009 = vmul.f32 %v7993, 0.044715
        %v8010 = vmul.f32 %v7994, 0.044715
        %v8011 = vmul.f32 %v7995, 0.044715
        %v8012 = vmul.f32 %v7996, 0.044715
        %v8013 = vmul.f32 %v7997, 0.044715
        %v8014 = vmul.f32 %v7998, 0.044715
        %v8015 = vmul.f32 %v7999, 0.044715
        %v8016 = vmul.f32 %v8000, 0.044715
        %v8017 = vmul.f32 %v8001, 0.044715
        %v8018 = vmul.f32 %v8002, 0.044715
        %v8019 = vmul.f32 %v8003, 0.044715
        %v8020 = vmul.f32 %v8004, 0.044715
        %v8021 = vadd.f32 %v7907, %v8005
        %v8022 = vadd.f32 %v7926, %v8006
        %v8023 = vadd.f32 %v7945, %v8007
        %v8024 = vadd.f32 %v7964, %v8008
        %v8025 = vadd.f32 %v7909, %v8009
        %v8026 = vadd.f32 %v7928, %v8010
        %v8027 = vadd.f32 %v7947, %v8011
        %v8028 = vadd.f32 %v7966, %v8012
        %v8029 = vadd.f32 %v7912, %v8013
        %v8030 = vadd.f32 %v7931, %v8014
        %v8031 = vadd.f32 %v7950, %v8015
        %v8032 = vadd.f32 %v7969, %v8016
        %v8033 = vadd.f32 %v7914, %v8017
        %v8034 = vadd.f32 %v7933, %v8018
        %v8035 = vadd.f32 %v7952, %v8019
        %v8036 = vadd.f32 %v7971, %v8020
        %v8037 = vmul.f32 %v8021, 0.7978846
        %v8038 = vmul.f32 %v8022, 0.7978846
        %v8039 = vmul.f32 %v8023, 0.7978846
        %v8040 = vmul.f32 %v8024, 0.7978846
        %v8041 = vmul.f32 %v8025, 0.7978846
        %v8042 = vmul.f32 %v8026, 0.7978846
        %v8043 = vmul.f32 %v8027, 0.7978846
        %v8044 = vmul.f32 %v8028, 0.7978846
        %v8045 = vmul.f32 %v8029, 0.7978846
        %v8046 = vmul.f32 %v8030, 0.7978846
        %v8047 = vmul.f32 %v8031, 0.7978846
        %v8048 = vmul.f32 %v8032, 0.7978846
        %v8049 = vmul.f32 %v8033, 0.7978846
        %v8050 = vmul.f32 %v8034, 0.7978846
        %v8051 = vmul.f32 %v8035, 0.7978846
        %v8052 = vmul.f32 %v8036, 0.7978846
        %v8053 = vtanh.pop %v8037
        %v8054 = vtanh.pop %v8038
        %v8055 = vtanh.pop %v8039
        %v8056 = vtanh.pop %v8040
        %v8057 = vtanh.pop %v8041
        %v8058 = vtanh.pop %v8042
        %v8059 = vtanh.pop %v8043
        %v8060 = vtanh.pop %v8044
        %v8061 = vtanh.pop %v8045
        %v8062 = vtanh.pop %v8046
        %v8063 = vtanh.pop %v8047
        %v8064 = vtanh.pop %v8048
        %v8065 = vtanh.pop %v8049
        %v8066 = vtanh.pop %v8050
        %v8067 = vtanh.pop %v8051
        %v8068 = vtanh.pop %v8052
        %v8069 = vadd.f32 %v8053, 1.0
        %v8070 = vadd.f32 %v8054, 1.0
        %v8071 = vadd.f32 %v8055, 1.0
        %v8072 = vadd.f32 %v8056, 1.0
        %v8073 = vadd.f32 %v8057, 1.0
        %v8074 = vadd.f32 %v8058, 1.0
        %v8075 = vadd.f32 %v8059, 1.0
        %v8076 = vadd.f32 %v8060, 1.0
        %v8077 = vadd.f32 %v8061, 1.0
        %v8078 = vadd.f32 %v8062, 1.0
        %v8079 = vadd.f32 %v8063, 1.0
        %v8080 = vadd.f32 %v8064, 1.0
        %v8081 = vadd.f32 %v8065, 1.0
        %v8082 = vadd.f32 %v8066, 1.0
        %v8083 = vadd.f32 %v8067, 1.0
        %v8084 = vadd.f32 %v8068, 1.0
        %v8085 = vmul.f32 %v8069, 0.5
        %v8086 = vmul.f32 %v8070, 0.5
        %v8087 = vmul.f32 %v8071, 0.5
        %v8088 = vmul.f32 %v8072, 0.5
        %v8089 = vmul.f32 %v8073, 0.5
        %v8090 = vmul.f32 %v8074, 0.5
        %v8091 = vmul.f32 %v8075, 0.5
        %v8092 = vmul.f32 %v8076, 0.5
        %v8093 = vmul.f32 %v8077, 0.5
        %v8094 = vmul.f32 %v8078, 0.5
        %v8095 = vmul.f32 %v8079, 0.5
        %v8096 = vmul.f32 %v8080, 0.5
        %v8097 = vmul.f32 %v8081, 0.5
        %v8098 = vmul.f32 %v8082, 0.5
        %v8099 = vmul.f32 %v8083, 0.5
        %v8100 = vmul.f32 %v8084, 0.5
        %v8101 = vmul.f32 %v7907, %v8085
        %v8102 = vmul.f32 %v7926, %v8086
        %v8103 = vmul.f32 %v7945, %v8087
        %v8104 = vmul.f32 %v7964, %v8088
        %v8105 = vmul.f32 %v7909, %v8089
        %v8106 = vmul.f32 %v7928, %v8090
        %v8107 = vmul.f32 %v7947, %v8091
        %v8108 = vmul.f32 %v7966, %v8092
        %v8109 = vmul.f32 %v7912, %v8093
        %v8110 = vmul.f32 %v7931, %v8094
        %v8111 = vmul.f32 %v7950, %v8095
        %v8112 = vmul.f32 %v7969, %v8096
        %v8113 = vmul.f32 %v7914, %v8097
        %v8114 = vmul.f32 %v7933, %v8098
        %v8115 = vmul.f32 %v7952, %v8099
        %v8116 = vmul.f32 %v7971, %v8100
        %v8117 = vpack.c.bf16 %v8105, %v8101
        %v8118 = vpack.c.bf16 %v8106, %v8102
        %v8119 = vpack.c.bf16 %v8107, %v8103
        %v8120 = vpack.c.bf16 %v8108, %v8104
        %v8121 = vpack.c.bf16 %v8113, %v8109
        %v8122 = vpack.c.bf16 %v8114, %v8110
        %v8123 = vpack.c.bf16 %v8115, %v8111
        %v8124 = vpack.c.bf16 %v8116, %v8112
        %v8125 = vld [vmem:[%s848] sm:$0xf]
        %v8126 = vld [vmem:[%s848 + $0x4] sm:$0xf]
        %v8127 = vld [vmem:[%s848 + $0x8] sm:$0xf]
        %v8128 = vld [vmem:[%s848 + $0xc] sm:$0xf]
        %v8129 = vld [vmem:[%s848 + $0x10] sm:$0xf]
        %v8130 = vld [vmem:[%s848 + $0x14] sm:$0xf]
        %v8131 = vld [vmem:[%s848 + $0x18] sm:$0xf]
        %v8132 = vld [vmem:[%s848 + $0x1c] sm:$0xf]
        %v8133 = vld [vmem:[%s848 + $0x20] sm:$0xf]
        %v8134 = vld [vmem:[%s848 + $0x24] sm:$0xf]
        %v8135 = vld [vmem:[%s848 + $0x28] sm:$0xf]
        %v8136 = vld [vmem:[%s848 + $0x2c] sm:$0xf]
        %v8137 = vld [vmem:[%s848 + $0x30] sm:$0xf]
        %v8138 = vld [vmem:[%s848 + $0x34] sm:$0xf]
        %v8139 = vld [vmem:[%s848 + $0x38] sm:$0xf]
        %v8140 = vld [vmem:[%s848 + $0x3c] sm:$0xf]
        %v8141 = vld [vmem:[%s848 + $0x40] sm:$0xf]
        %v8142 = vld [vmem:[%s848 + $0x44] sm:$0xf]
        %v8143 = vld [vmem:[%s848 + $0x48] sm:$0xf]
        %v8144 = vld [vmem:[%s848 + $0x4c] sm:$0xf]
        %v8145 = vld [vmem:[%s848 + $0x50] sm:$0xf]
        %v8146 = vld [vmem:[%s848 + $0x54] sm:$0xf]
        %v8147 = vld [vmem:[%s848 + $0x58] sm:$0xf]
        %v8148 = vld [vmem:[%s848 + $0x5c] sm:$0xf]
        %v8149 = vld [vmem:[%s848 + $0x60] sm:$0xf]
        %v8150 = vld [vmem:[%s848 + $0x64] sm:$0xf]
        %v8151 = vld [vmem:[%s848 + $0x68] sm:$0xf]
        %v8152 = vld [vmem:[%s848 + $0x6c] sm:$0xf]
        %v8153 = vld [vmem:[%s848 + $0x70] sm:$0xf]
        %v8154 = vld [vmem:[%s848 + $0x74] sm:$0xf]
        %v8155 = vld [vmem:[%s848 + $0x78] sm:$0xf]
        %v8156 = vld [vmem:[%s848 + $0x7c] sm:$0xf]
        %v8157 = vld [vmem:[%s848 + $0x80] sm:$0xf]
        %v8158 = vld [vmem:[%s848 + $0x84] sm:$0xf]
        %v8159 = vld [vmem:[%s848 + $0x88] sm:$0xf]
        %v8160 = vld [vmem:[%s848 + $0x8c] sm:$0xf]
        %v8161 = vld [vmem:[%s848 + $0x90] sm:$0xf]
        %v8162 = vld [vmem:[%s848 + $0x94] sm:$0xf]
        %v8163 = vld [vmem:[%s848 + $0x98] sm:$0xf]
        %v8164 = vld [vmem:[%s848 + $0x9c] sm:$0xf]
        %v8165 = vld [vmem:[%s848 + $0xa0] sm:$0xf]
        %v8166 = vld [vmem:[%s848 + $0xa4] sm:$0xf]
        %v8167 = vld [vmem:[%s848 + $0xa8] sm:$0xf]
        %v8168 = vld [vmem:[%s848 + $0xac] sm:$0xf]
        %v8169 = vld [vmem:[%s848 + $0xb0] sm:$0xf]
        %v8170 = vld [vmem:[%s848 + $0xb4] sm:$0xf]
        %v8171 = vld [vmem:[%s848 + $0xb8] sm:$0xf]
        %v8172 = vld [vmem:[%s848 + $0xbc] sm:$0xf]
        %v8173 = vld [vmem:[%s848 + $0xc0] sm:$0xf]
        %v8174 = vld [vmem:[%s848 + $0xc4] sm:$0xf]
        %v8175 = vld [vmem:[%s848 + $0xc8] sm:$0xf]
        %v8176 = vld [vmem:[%s848 + $0xcc] sm:$0xf]
        %v8177 = vld [vmem:[%s848 + $0xd0] sm:$0xf]
        %v8178 = vld [vmem:[%s848 + $0xd4] sm:$0xf]
        %v8179 = vld [vmem:[%s848 + $0xd8] sm:$0xf]
        %v8180 = vld [vmem:[%s848 + $0xdc] sm:$0xf]
        %v8181 = vld [vmem:[%s848 + $0xe0] sm:$0xf]
        %v8182 = vld [vmem:[%s848 + $0xe4] sm:$0xf]
        %v8183 = vld [vmem:[%s848 + $0xe8] sm:$0xf]
        %v8184 = vld [vmem:[%s848 + $0xec] sm:$0xf]
        %v8185 = vld [vmem:[%s848 + $0xf0] sm:$0xf]
        %v8186 = vld [vmem:[%s848 + $0xf4] sm:$0xf]
        %v8187 = vld [vmem:[%s848 + $0xf8] sm:$0xf]
        %v8188 = vld [vmem:[%s848 + $0xfc] sm:$0xf]
        %v8189 = vld [vmem:[%s968] sm:$0x1]
        %v8190 = vperm.slane %v8189, 0
        %v8255 = vunpack.c.l.b16 %v8125
        %v8256 = vunpack.c.l.b16 %v8126
        %v8257 = vunpack.c.l.b16 %v8127
        %v8258 = vunpack.c.l.b16 %v8128
        %v8259 = vunpack.c.l.b16 %v8129
        %v8260 = vunpack.c.l.b16 %v8130
        %v8261 = vunpack.c.l.b16 %v8131
        %v8262 = vunpack.c.l.b16 %v8132
        %v8263 = vunpack.c.l.b16 %v8133
        %v8264 = vunpack.c.l.b16 %v8134
        %v8265 = vunpack.c.l.b16 %v8135
        %v8266 = vunpack.c.l.b16 %v8136
        %v8267 = vunpack.c.l.b16 %v8137
        %v8268 = vunpack.c.l.b16 %v8138
        %v8269 = vunpack.c.l.b16 %v8139
        %v8270 = vunpack.c.l.b16 %v8140
        %v8271 = vunpack.c.l.b16 %v8141
        %v8272 = vunpack.c.l.b16 %v8142
        %v8273 = vunpack.c.l.b16 %v8143
        %v8274 = vunpack.c.l.b16 %v8144
        %v8275 = vunpack.c.l.b16 %v8145
        %v8276 = vunpack.c.l.b16 %v8146
        %v8277 = vunpack.c.l.b16 %v8147
        %v8278 = vunpack.c.l.b16 %v8148
        %v8279 = vunpack.c.l.b16 %v8149
        %v8280 = vunpack.c.l.b16 %v8150
        %v8281 = vunpack.c.l.b16 %v8151
        %v8282 = vunpack.c.l.b16 %v8152
        %v8283 = vunpack.c.l.b16 %v8153
        %v8284 = vunpack.c.l.b16 %v8154
        %v8285 = vunpack.c.l.b16 %v8155
        %v8286 = vunpack.c.l.b16 %v8156
        %v8287 = vunpack.c.l.b16 %v8157
        %v8288 = vunpack.c.l.b16 %v8158
        %v8289 = vunpack.c.l.b16 %v8159
        %v8290 = vunpack.c.l.b16 %v8160
        %v8291 = vunpack.c.l.b16 %v8161
        %v8292 = vunpack.c.l.b16 %v8162
        %v8293 = vunpack.c.l.b16 %v8163
        %v8294 = vunpack.c.l.b16 %v8164
        %v8295 = vunpack.c.l.b16 %v8165
        %v8296 = vunpack.c.l.b16 %v8166
        %v8297 = vunpack.c.l.b16 %v8167
        %v8298 = vunpack.c.l.b16 %v8168
        %v8299 = vunpack.c.l.b16 %v8169
        %v8300 = vunpack.c.l.b16 %v8170
        %v8301 = vunpack.c.l.b16 %v8171
        %v8302 = vunpack.c.l.b16 %v8172
        %v8303 = vunpack.c.l.b16 %v8173
        %v8304 = vunpack.c.l.b16 %v8174
        %v8305 = vunpack.c.l.b16 %v8175
        %v8306 = vunpack.c.l.b16 %v8176
        %v8307 = vunpack.c.l.b16 %v8177
        %v8308 = vunpack.c.l.b16 %v8178
        %v8309 = vunpack.c.l.b16 %v8179
        %v8310 = vunpack.c.l.b16 %v8180
        %v8311 = vunpack.c.l.b16 %v8181
        %v8312 = vunpack.c.l.b16 %v8182
        %v8313 = vunpack.c.l.b16 %v8183
        %v8314 = vunpack.c.l.b16 %v8184
        %v8315 = vunpack.c.l.b16 %v8185
        %v8316 = vunpack.c.l.b16 %v8186
        %v8317 = vunpack.c.l.b16 %v8187
        %v8318 = vunpack.c.l.b16 %v8188
        %v8319 = vpack.c.b16 %v8256, %v8255
        %v8320 = vpack.c.b16 %v8258, %v8257
        %v8321 = vpack.c.b16 %v8260, %v8259
        %v8322 = vpack.c.b16 %v8262, %v8261
        %v8323 = vpack.c.b16 %v8264, %v8263
        %v8324 = vpack.c.b16 %v8266, %v8265
        %v8325 = vpack.c.b16 %v8268, %v8267
        %v8326 = vpack.c.b16 %v8270, %v8269
        %v8327 = vpack.c.b16 %v8272, %v8271
        %v8328 = vpack.c.b16 %v8274, %v8273
        %v8329 = vpack.c.b16 %v8276, %v8275
        %v8330 = vpack.c.b16 %v8278, %v8277
        %v8331 = vpack.c.b16 %v8280, %v8279
        %v8332 = vpack.c.b16 %v8282, %v8281
        %v8333 = vpack.c.b16 %v8284, %v8283
        %v8334 = vpack.c.b16 %v8286, %v8285
        %v8335 = vpack.c.b16 %v8288, %v8287
        %v8336 = vpack.c.b16 %v8290, %v8289
        %v8337 = vpack.c.b16 %v8292, %v8291
        %v8338 = vpack.c.b16 %v8294, %v8293
        %v8339 = vpack.c.b16 %v8296, %v8295
        %v8340 = vpack.c.b16 %v8298, %v8297
        %v8341 = vpack.c.b16 %v8300, %v8299
        %v8342 = vpack.c.b16 %v8302, %v8301
        %v8343 = vpack.c.b16 %v8304, %v8303
        %v8344 = vpack.c.b16 %v8306, %v8305
        %v8345 = vpack.c.b16 %v8308, %v8307
        %v8346 = vpack.c.b16 %v8310, %v8309
        %v8347 = vpack.c.b16 %v8312, %v8311
        %v8348 = vpack.c.b16 %v8314, %v8313
        %v8349 = vpack.c.b16 %v8316, %v8315
        %v8350 = vpack.c.b16 %v8318, %v8317
        %8383 = vmatpush.bf16.msra.mxu0 %v8326
        %8384 = vmatpush.bf16.msra.mxu0 %v8325
        %8385 = vmatpush.bf16.msra.mxu0 %v8324
        %8386 = vmatpush.bf16.msra.mxu0 %v8323
        %8387 = vmatpush.bf16.msra.mxu0 %v8322
        %8388 = vmatpush.bf16.msra.mxu0 %v8321
        %8389 = vmatpush.bf16.msra.mxu0 %v8320
        %8390 = vmatpush.bf16.msra.mxu0 %v8319
        %8391 = vmatmul.bf16.gmra.mxu0 %v8117
        %v8392 = vpop.f32.mrf.mxu0
        %v8393 = vadd.f32 %v8190, %v8392
        %v8394 = vpop.f32.mrf.mxu0
        %v8395 = vadd.f32 %v8190, %v8394
        %8396 = vmatmul.bf16.gmra.mxu0 %v8121
        %v8397 = vpop.f32.mrf.mxu0
        %v8398 = vadd.f32 %v8190, %v8397
        %v8399 = vpop.f32.mrf.mxu0
        %v8400 = vadd.f32 %v8190, %v8399
        %8401 = vdwg.mxu0
        %8402 = vmatpush.bf16.msra.mxu0 %v8334
        %8403 = vmatpush.bf16.msra.mxu0 %v8333
        %8404 = vmatpush.bf16.msra.mxu0 %v8332
        %8405 = vmatpush.bf16.msra.mxu0 %v8331
        %8406 = vmatpush.bf16.msra.mxu0 %v8330
        %8407 = vmatpush.bf16.msra.mxu0 %v8329
        %8408 = vmatpush.bf16.msra.mxu0 %v8328
        %8409 = vmatpush.bf16.msra.mxu0 %v8327
        %8410 = vmatmul.bf16.gmra.mxu0 %v8118
        %v8411 = vpop.f32.mrf.mxu0
        %v8412 = vadd.f32 %v8393, %v8411
        %v8413 = vpop.f32.mrf.mxu0
        %v8414 = vadd.f32 %v8395, %v8413
        %8415 = vmatmul.bf16.gmra.mxu0 %v8122
        %v8416 = vpop.f32.mrf.mxu0
        %v8417 = vadd.f32 %v8398, %v8416
        %v8418 = vpop.f32.mrf.mxu0
        %v8419 = vadd.f32 %v8400, %v8418
        %8420 = vdwg.mxu0
        %8421 = vmatpush.bf16.msra.mxu0 %v8342
        %8422 = vmatpush.bf16.msra.mxu0 %v8341
        %8423 = vmatpush.bf16.msra.mxu0 %v8340
        %8424 = vmatpush.bf16.msra.mxu0 %v8339
        %8425 = vmatpush.bf16.msra.mxu0 %v8338
        %8426 = vmatpush.bf16.msra.mxu0 %v8337
        %8427 = vmatpush.bf16.msra.mxu0 %v8336
        %8428 = vmatpush.bf16.msra.mxu0 %v8335
        %8429 = vmatmul.bf16.gmra.mxu0 %v8119
        %v8430 = vpop.f32.mrf.mxu0
        %v8431 = vadd.f32 %v8412, %v8430
        %v8432 = vpop.f32.mrf.mxu0
        %v8433 = vadd.f32 %v8414, %v8432
        %8434 = vmatmul.bf16.gmra.mxu0 %v8123
        %v8435 = vpop.f32.mrf.mxu0
        %v8436 = vadd.f32 %v8417, %v8435
        %v8437 = vpop.f32.mrf.mxu0
        %v8438 = vadd.f32 %v8419, %v8437
        %8439 = vdwg.mxu0
        %8440 = vmatpush.bf16.msra.mxu0 %v8350
        %8441 = vmatpush.bf16.msra.mxu0 %v8349
        %8442 = vmatpush.bf16.msra.mxu0 %v8348
        %8443 = vmatpush.bf16.msra.mxu0 %v8347
        %8444 = vmatpush.bf16.msra.mxu0 %v8346
        %8445 = vmatpush.bf16.msra.mxu0 %v8345
        %8446 = vmatpush.bf16.msra.mxu0 %v8344
        %8447 = vmatpush.bf16.msra.mxu0 %v8343
        %8448 = vmatmul.bf16.gmra.mxu0 %v8120
        %v8449 = vpop.f32.mrf.mxu0
        %v8450 = vadd.f32 %v8431, %v8449
        %v8451 = vpop.f32.mrf.mxu0
        %v8452 = vadd.f32 %v8433, %v8451
        %8453 = vmatmul.bf16.gmra.mxu0 %v8124
        %v8454 = vpop.f32.mrf.mxu0
        %v8455 = vadd.f32 %v8436, %v8454
        %v8456 = vpop.f32.mrf.mxu0
        %v8457 = vadd.f32 %v8438, %v8456
        %8458 = vdwg.mxu0
        %v8459 = vadd.f32 %v6102, %v8450
        %v8460 = vadd.f32 %v6103, %v8452
        %v8461 = vadd.f32 %v6104, %v8455
        %v8462 = vadd.f32 %v6105, %v8457
        %v8463 = vld [vmem:[%s960 + $0x1] sm:$0x1]
        %v8464 = vld [vmem:[%s964 + $0x1] sm:$0x1]
        %8465 = vadd.xlane.f32.xlu0 %v7679
        %v8466 = vpop.xlane.xlu0 %8465
        %8467 = vadd.xlane.f32.xlu0 %v7680
        %v8468 = vpop.xlane.xlu0 %8467
        %v8469 = vmul.f32 %v8466, %v1055
        %v8470 = vmul.f32 %v8468, %v1055
        %v8471 = vsub.f32 %v7679, %v8469
        %v8472 = vsub.f32 %v7680, %v8470
        %v8473 = vmul.f32 %v8471, %v8471
        %v8474 = vmul.f32 %v8472, %v8472
        %8475 = vadd.xlane.f32.xlu0 %v8473
        %v8476 = vpop.xlane.xlu0 %8475
        %8477 = vadd.xlane.f32.xlu0 %v8474
        %v8478 = vpop.xlane.xlu0 %8477
        %v8479 = vmul.f32 %v8476, %v1055
        %v8480 = vmul.f32 %v8478, %v1055
        %v8481 = vadd.f32 %v8479, 1e-05
        %v8482 = vadd.f32 %v8480, 1e-05
        %v8483 = vrsqrt.pop %v8481
        %v8484 = vmul.f32 %v8483, %v8481
        %v8485 = vmul.f32 %v8484, %v8483
        %v8486 = vmul.f32 0.5, %v8485
        %v8487 = vsub.f32 1.5, %v8486
        %v8488 = vmul.f32 %v8483, %v8487
        %vm8489 = vweird.f32 %v8481
        %vm8490 = vweird.f32 %v8483
        %vm8491 = vmor %vm8489, %vm8490
        %v8492 = vsel %vm8491, %v8483, %v8488
        %v8493 = vrsqrt.pop %v8482
        %v8494 = vmul.f32 %v8493, %v8482
        %v8495 = vmul.f32 %v8494, %v8493
        %v8496 = vmul.f32 0.5, %v8495
        %v8497 = vsub.f32 1.5, %v8496
        %v8498 = vmul.f32 %v8493, %v8497
        %vm8499 = vweird.f32 %v8482
        %vm8500 = vweird.f32 %v8493
        %vm8501 = vmor %vm8499, %vm8500
        %v8502 = vsel %vm8501, %v8493, %v8498
        %v8503 = vmul.f32 %v8471, %v8492
        %v8504 = vmul.f32 %v8472, %v8502
        %v8505 = vperm.slane %v8463, 0
        %v8506 = vmul.f32 %v8503, %v8505
        %v8507 = vmul.f32 %v8504, %v8505
        %v8508 = vperm.slane %v8464, 0
        %v8509 = vadd.f32 %v8506, %v8508
        %v8510 = vadd.f32 %v8507, %v8508
        %v8511 = vpack.c.bf16 %v8510, %v8509
        %s8512 = scalar_lea.vmem %s828, 256 [#allocation14]
        %v8513 = vld [vmem:[%s8512] sm:$0xff]
        %v8514 = vld [vmem:[%s8512 + $0x8] sm:$0xff]
        %v8515 = vld [vmem:[%s8512 + $0x10] sm:$0xff]
        %v8516 = vld [vmem:[%s8512 + $0x18] sm:$0xff]
        %v8517 = vld [vmem:[%s8512 + $0x20] sm:$0xff]
        %v8518 = vld [vmem:[%s8512 + $0x28] sm:$0xff]
        %v8519 = vld [vmem:[%s8512 + $0x30] sm:$0xff]
        %v8520 = vld [vmem:[%s8512 + $0x38] sm:$0xff]
        %v8521 = vld [vmem:[%s8512 + $0x40] sm:$0xff]
        %v8522 = vld [vmem:[%s8512 + $0x48] sm:$0xff]
        %v8523 = vld [vmem:[%s8512 + $0x50] sm:$0xff]
        %v8524 = vld [vmem:[%s8512 + $0x58] sm:$0xff]
        %v8525 = vld [vmem:[%s8512 + $0x60] sm:$0xff]
        %v8526 = vld [vmem:[%s8512 + $0x68] sm:$0xff]
        %v8527 = vld [vmem:[%s8512 + $0x70] sm:$0xff]
        %v8528 = vld [vmem:[%s8512 + $0x78] sm:$0xff]
        %v8529 = vld [vmem:[%s8512 + $0x80] sm:$0xff]
        %v8530 = vld [vmem:[%s8512 + $0x88] sm:$0xff]
        %v8531 = vld [vmem:[%s8512 + $0x90] sm:$0xff]
        %v8532 = vld [vmem:[%s8512 + $0x98] sm:$0xff]
        %v8533 = vld [vmem:[%s8512 + $0xa0] sm:$0xff]
        %v8534 = vld [vmem:[%s8512 + $0xa8] sm:$0xff]
        %v8535 = vld [vmem:[%s8512 + $0xb0] sm:$0xff]
        %v8536 = vld [vmem:[%s8512 + $0xb8] sm:$0xff]
        %v8537 = vld [vmem:[%s8512 + $0xc0] sm:$0xff]
        %v8538 = vld [vmem:[%s8512 + $0xc8] sm:$0xff]
        %v8539 = vld [vmem:[%s8512 + $0xd0] sm:$0xff]
        %v8540 = vld [vmem:[%s8512 + $0xd8] sm:$0xff]
        %v8541 = vld [vmem:[%s8512 + $0xe0] sm:$0xff]
        %v8542 = vld [vmem:[%s8512 + $0xe8] sm:$0xff]
        %v8543 = vld [vmem:[%s8512 + $0xf0] sm:$0xff]
        %v8544 = vld [vmem:[%s8512 + $0xf8] sm:$0xff]
        %s8545 = scalar_lea.vmem %s838, 1 [#allocation15]
        %v8546 = vld [vmem:[%s8545] ss:$2 sm:$0xf]
        %v8548 = vperm.slane %v8546, 0
        %v8549 = vperm.slane %v8546, 1
        %v8550 = vperm.slane %v8546, 2
        %v8551 = vperm.slane %v8546, 3
        %v8588 = vunpack.c.l.b16 %v8513
        %v8589 = vunpack.c.h.b16 %v8513
        %v8590 = vunpack.c.l.b16 %v8514
        %v8591 = vunpack.c.h.b16 %v8514
        %v8592 = vunpack.c.l.b16 %v8515
        %v8593 = vunpack.c.h.b16 %v8515
        %v8594 = vunpack.c.l.b16 %v8516
        %v8595 = vunpack.c.h.b16 %v8516
        %v8596 = vunpack.c.l.b16 %v8517
        %v8597 = vunpack.c.h.b16 %v8517
        %v8598 = vunpack.c.l.b16 %v8518
        %v8599 = vunpack.c.h.b16 %v8518
        %v8600 = vunpack.c.l.b16 %v8519
        %v8601 = vunpack.c.h.b16 %v8519
        %v8602 = vunpack.c.l.b16 %v8520
        %v8603 = vunpack.c.h.b16 %v8520
        %v8604 = vunpack.c.l.b16 %v8521
        %v8605 = vunpack.c.h.b16 %v8521
        %v8606 = vunpack.c.l.b16 %v8522
        %v8607 = vunpack.c.h.b16 %v8522
        %v8608 = vunpack.c.l.b16 %v8523
        %v8609 = vunpack.c.h.b16 %v8523
        %v8610 = vunpack.c.l.b16 %v8524
        %v8611 = vunpack.c.h.b16 %v8524
        %v8612 = vunpack.c.l.b16 %v8525
        %v8613 = vunpack.c.h.b16 %v8525
        %v8614 = vunpack.c.l.b16 %v8526
        %v8615 = vunpack.c.h.b16 %v8526
        %v8616 = vunpack.c.l.b16 %v8527
        %v8617 = vunpack.c.h.b16 %v8527
        %v8618 = vunpack.c.l.b16 %v8528
        %v8619 = vunpack.c.h.b16 %v8528
        %v8620 = vunpack.c.l.b16 %v8529
        %v8621 = vunpack.c.h.b16 %v8529
        %v8622 = vunpack.c.l.b16 %v8530
        %v8623 = vunpack.c.h.b16 %v8530
        %v8624 = vunpack.c.l.b16 %v8531
        %v8625 = vunpack.c.h.b16 %v8531
        %v8626 = vunpack.c.l.b16 %v8532
        %v8627 = vunpack.c.h.b16 %v8532
        %v8628 = vunpack.c.l.b16 %v8533
        %v8629 = vunpack.c.h.b16 %v8533
        %v8630 = vunpack.c.l.b16 %v8534
        %v8631 = vunpack.c.h.b16 %v8534
        %v8632 = vunpack.c.l.b16 %v8535
        %v8633 = vunpack.c.h.b16 %v8535
        %v8634 = vunpack.c.l.b16 %v8536
        %v8635 = vunpack.c.h.b16 %v8536
        %v8636 = vunpack.c.l.b16 %v8537
        %v8637 = vunpack.c.h.b16 %v8537
        %v8638 = vunpack.c.l.b16 %v8538
        %v8639 = vunpack.c.h.b16 %v8538
        %v8640 = vunpack.c.l.b16 %v8539
        %v8641 = vunpack.c.h.b16 %v8539
        %v8642 = vunpack.c.l.b16 %v8540
        %v8643 = vunpack.c.h.b16 %v8540
        %v8644 = vunpack.c.l.b16 %v8541
        %v8645 = vunpack.c.h.b16 %v8541
        %v8646 = vunpack.c.l.b16 %v8542
        %v8647 = vunpack.c.h.b16 %v8542
        %v8648 = vunpack.c.l.b16 %v8543
        %v8649 = vunpack.c.h.b16 %v8543
        %v8650 = vunpack.c.l.b16 %v8544
        %v8651 = vunpack.c.h.b16 %v8544
        %v8652 = vpack.c.b16 %v8592, %v8588
        %v8653 = vpack.c.b16 %v8593, %v8589
        %v8654 = vpack.c.b16 %v8594, %v8590
        %v8655 = vpack.c.b16 %v8595, %v8591
        %v8656 = vpack.c.b16 %v8600, %v8596
        %v8657 = vpack.c.b16 %v8601, %v8597
        %v8658 = vpack.c.b16 %v8602, %v8598
        %v8659 = vpack.c.b16 %v8603, %v8599
        %v8660 = vpack.c.b16 %v8608, %v8604
        %v8661 = vpack.c.b16 %v8609, %v8605
        %v8662 = vpack.c.b16 %v8610, %v8606
        %v8663 = vpack.c.b16 %v8611, %v8607
        %v8664 = vpack.c.b16 %v8616, %v8612
        %v8665 = vpack.c.b16 %v8617, %v8613
        %v8666 = vpack.c.b16 %v8618, %v8614
        %v8667 = vpack.c.b16 %v8619, %v8615
        %v8668 = vpack.c.b16 %v8624, %v8620
        %v8669 = vpack.c.b16 %v8625, %v8621
        %v8670 = vpack.c.b16 %v8626, %v8622
        %v8671 = vpack.c.b16 %v8627, %v8623
        %v8672 = vpack.c.b16 %v8632, %v8628
        %v8673 = vpack.c.b16 %v8633, %v8629
        %v8674 = vpack.c.b16 %v8634, %v8630
        %v8675 = vpack.c.b16 %v8635, %v8631
        %v8676 = vpack.c.b16 %v8640, %v8636
        %v8677 = vpack.c.b16 %v8641, %v8637
        %v8678 = vpack.c.b16 %v8642, %v8638
        %v8679 = vpack.c.b16 %v8643, %v8639
        %v8680 = vpack.c.b16 %v8648, %v8644
        %v8681 = vpack.c.b16 %v8649, %v8645
        %v8682 = vpack.c.b16 %v8650, %v8646
        %v8683 = vpack.c.b16 %v8651, %v8647
        %8716 = vmatpush.bf16.msra.mxu0 %v8680
        %8717 = vmatpush.bf16.msra.mxu0 %v8676
        %8718 = vmatpush.bf16.msra.mxu0 %v8672
        %8719 = vmatpush.bf16.msra.mxu0 %v8668
        %8720 = vmatpush.bf16.msra.mxu0 %v8664
        %8721 = vmatpush.bf16.msra.mxu0 %v8660
        %8722 = vmatpush.bf16.msra.mxu0 %v8656
        %8723 = vmatpush.bf16.msra.mxu0 %v8652
        %8724 = vmatmul.bf16.gmra.mxu0 %v8511
        %v8725 = vpop.f32.mrf.mxu0
        %v8726 = vadd.f32 %v8548, %v8725
        %v8727 = vpop.f32.mrf.mxu0
        %v8728 = vadd.f32 %v8548, %v8727
        %8729 = vdwg.mxu0
        %8730 = vmatpush.bf16.msra.mxu0 %v8681
        %8731 = vmatpush.bf16.msra.mxu0 %v8677
        %8732 = vmatpush.bf16.msra.mxu0 %v8673
        %8733 = vmatpush.bf16.msra.mxu0 %v8669
        %8734 = vmatpush.bf16.msra.mxu0 %v8665
        %8735 = vmatpush.bf16.msra.mxu0 %v8661
        %8736 = vmatpush.bf16.msra.mxu0 %v8657
        %8737 = vmatpush.bf16.msra.mxu0 %v8653
        %8738 = vmatmul.bf16.gmra.mxu0 %v8511
        %v8739 = vpop.f32.mrf.mxu0
        %v8740 = vadd.f32 %v8549, %v8739
        %v8741 = vpop.f32.mrf.mxu0
        %v8742 = vadd.f32 %v8549, %v8741
        %8743 = vdwg.mxu0
        %8744 = vmatpush.bf16.msra.mxu0 %v8682
        %8745 = vmatpush.bf16.msra.mxu0 %v8678
        %8746 = vmatpush.bf16.msra.mxu0 %v8674
        %8747 = vmatpush.bf16.msra.mxu0 %v8670
        %8748 = vmatpush.bf16.msra.mxu0 %v8666
        %8749 = vmatpush.bf16.msra.mxu0 %v8662
        %8750 = vmatpush.bf16.msra.mxu0 %v8658
        %8751 = vmatpush.bf16.msra.mxu0 %v8654
        %8752 = vmatmul.bf16.gmra.mxu0 %v8511
        %v8753 = vpop.f32.mrf.mxu0
        %v8754 = vadd.f32 %v8550, %v8753
        %v8755 = vpop.f32.mrf.mxu0
        %v8756 = vadd.f32 %v8550, %v8755
        %8757 = vdwg.mxu0
        %8758 = vmatpush.bf16.msra.mxu0 %v8683
        %8759 = vmatpush.bf16.msra.mxu0 %v8679
        %8760 = vmatpush.bf16.msra.mxu0 %v8675
        %8761 = vmatpush.bf16.msra.mxu0 %v8671
        %8762 = vmatpush.bf16.msra.mxu0 %v8667
        %8763 = vmatpush.bf16.msra.mxu0 %v8663
        %8764 = vmatpush.bf16.msra.mxu0 %v8659
        %8765 = vmatpush.bf16.msra.mxu0 %v8655
        %8766 = vmatmul.bf16.gmra.mxu0 %v8511
        %v8767 = vpop.f32.mrf.mxu0
        %v8768 = vadd.f32 %v8551, %v8767
        %v8769 = vpop.f32.mrf.mxu0
        %v8770 = vadd.f32 %v8551, %v8769
        %8771 = vdwg.mxu0
        %v8772 = vmul.f32 %v8726, %v8726
        %v8773 = vmul.f32 %v8740, %v8740
        %v8774 = vmul.f32 %v8754, %v8754
        %v8775 = vmul.f32 %v8768, %v8768
        %v8776 = vmul.f32 %v8728, %v8728
        %v8777 = vmul.f32 %v8742, %v8742
        %v8778 = vmul.f32 %v8756, %v8756
        %v8779 = vmul.f32 %v8770, %v8770
        %v8780 = vmul.f32 %v8726, %v8772
        %v8781 = vmul.f32 %v8740, %v8773
        %v8782 = vmul.f32 %v8754, %v8774
        %v8783 = vmul.f32 %v8768, %v8775
        %v8784 = vmul.f32 %v8728, %v8776
        %v8785 = vmul.f32 %v8742, %v8777
        %v8786 = vmul.f32 %v8756, %v8778
        %v8787 = vmul.f32 %v8770, %v8779
        %v8788 = vmul.f32 %v8780, 0.044715
        %v8789 = vmul.f32 %v8781, 0.044715
        %v8790 = vmul.f32 %v8782, 0.044715
        %v8791 = vmul.f32 %v8783, 0.044715
        %v8792 = vmul.f32 %v8784, 0.044715
        %v8793 = vmul.f32 %v8785, 0.044715
        %v8794 = vmul.f32 %v8786, 0.044715
        %v8795 = vmul.f32 %v8787, 0.044715
        %v8796 = vadd.f32 %v8726, %v8788
        %v8797 = vadd.f32 %v8740, %v8789
        %v8798 = vadd.f32 %v8754, %v8790
        %v8799 = vadd.f32 %v8768, %v8791
        %v8800 = vadd.f32 %v8728, %v8792
        %v8801 = vadd.f32 %v8742, %v8793
        %v8802 = vadd.f32 %v8756, %v8794
        %v8803 = vadd.f32 %v8770, %v8795
        %v8804 = vmul.f32 %v8796, 0.7978846
        %v8805 = vmul.f32 %v8797, 0.7978846
        %v8806 = vmul.f32 %v8798, 0.7978846
        %v8807 = vmul.f32 %v8799, 0.7978846
        %v8808 = vmul.f32 %v8800, 0.7978846
        %v8809 = vmul.f32 %v8801, 0.7978846
        %v8810 = vmul.f32 %v8802, 0.7978846
        %v8811 = vmul.f32 %v8803, 0.7978846
        %v8812 = vtanh.pop %v8804
        %v8813 = vtanh.pop %v8805
        %v8814 = vtanh.pop %v8806
        %v8815 = vtanh.pop %v8807
        %v8816 = vtanh.pop %v8808
        %v8817 = vtanh.pop %v8809
        %v8818 = vtanh.pop %v8810
        %v8819 = vtanh.pop %v8811
        %v8820 = vadd.f32 %v8812, 1.0
        %v8821 = vadd.f32 %v8813, 1.0
        %v8822 = vadd.f32 %v8814, 1.0
        %v8823 = vadd.f32 %v8815, 1.0
        %v8824 = vadd.f32 %v8816, 1.0
        %v8825 = vadd.f32 %v8817, 1.0
        %v8826 = vadd.f32 %v8818, 1.0
        %v8827 = vadd.f32 %v8819, 1.0
        %v8828 = vmul.f32 %v8820, 0.5
        %v8829 = vmul.f32 %v8821, 0.5
        %v8830 = vmul.f32 %v8822, 0.5
        %v8831 = vmul.f32 %v8823, 0.5
        %v8832 = vmul.f32 %v8824, 0.5
        %v8833 = vmul.f32 %v8825, 0.5
        %v8834 = vmul.f32 %v8826, 0.5
        %v8835 = vmul.f32 %v8827, 0.5
        %v8836 = vmul.f32 %v8726, %v8828
        %v8837 = vmul.f32 %v8740, %v8829
        %v8838 = vmul.f32 %v8754, %v8830
        %v8839 = vmul.f32 %v8768, %v8831
        %v8840 = vmul.f32 %v8728, %v8832
        %v8841 = vmul.f32 %v8742, %v8833
        %v8842 = vmul.f32 %v8756, %v8834
        %v8843 = vmul.f32 %v8770, %v8835
        %v8844 = vpack.c.bf16 %v8840, %v8836
        %v8845 = vpack.c.bf16 %v8841, %v8837
        %v8846 = vpack.c.bf16 %v8842, %v8838
        %v8847 = vpack.c.bf16 %v8843, %v8839
        %s8848 = scalar_lea.vmem %s848, 256 [#allocation17]
        %v8849 = vld [vmem:[%s8848] sm:$0xf]
        %v8850 = vld [vmem:[%s8848 + $0x4] sm:$0xf]
        %v8851 = vld [vmem:[%s8848 + $0x8] sm:$0xf]
        %v8852 = vld [vmem:[%s8848 + $0xc] sm:$0xf]
        %v8853 = vld [vmem:[%s8848 + $0x10] sm:$0xf]
        %v8854 = vld [vmem:[%s8848 + $0x14] sm:$0xf]
        %v8855 = vld [vmem:[%s8848 + $0x18] sm:$0xf]
        %v8856 = vld [vmem:[%s8848 + $0x1c] sm:$0xf]
        %v8857 = vld [vmem:[%s8848 + $0x20] sm:$0xf]
        %v8858 = vld [vmem:[%s8848 + $0x24] sm:$0xf]
        %v8859 = vld [vmem:[%s8848 + $0x28] sm:$0xf]
        %v8860 = vld [vmem:[%s8848 + $0x2c] sm:$0xf]
        %v8861 = vld [vmem:[%s8848 + $0x30] sm:$0xf]
        %v8862 = vld [vmem:[%s8848 + $0x34] sm:$0xf]
        %v8863 = vld [vmem:[%s8848 + $0x38] sm:$0xf]
        %v8864 = vld [vmem:[%s8848 + $0x3c] sm:$0xf]
        %v8865 = vld [vmem:[%s8848 + $0x40] sm:$0xf]
        %v8866 = vld [vmem:[%s8848 + $0x44] sm:$0xf]
        %v8867 = vld [vmem:[%s8848 + $0x48] sm:$0xf]
        %v8868 = vld [vmem:[%s8848 + $0x4c] sm:$0xf]
        %v8869 = vld [vmem:[%s8848 + $0x50] sm:$0xf]
        %v8870 = vld [vmem:[%s8848 + $0x54] sm:$0xf]
        %v8871 = vld [vmem:[%s8848 + $0x58] sm:$0xf]
        %v8872 = vld [vmem:[%s8848 + $0x5c] sm:$0xf]
        %v8873 = vld [vmem:[%s8848 + $0x60] sm:$0xf]
        %v8874 = vld [vmem:[%s8848 + $0x64] sm:$0xf]
        %v8875 = vld [vmem:[%s8848 + $0x68] sm:$0xf]
        %v8876 = vld [vmem:[%s8848 + $0x6c] sm:$0xf]
        %v8877 = vld [vmem:[%s8848 + $0x70] sm:$0xf]
        %v8878 = vld [vmem:[%s8848 + $0x74] sm:$0xf]
        %v8879 = vld [vmem:[%s8848 + $0x78] sm:$0xf]
        %v8880 = vld [vmem:[%s8848 + $0x7c] sm:$0xf]
        %v8881 = vld [vmem:[%s8848 + $0x80] sm:$0xf]
        %v8882 = vld [vmem:[%s8848 + $0x84] sm:$0xf]
        %v8883 = vld [vmem:[%s8848 + $0x88] sm:$0xf]
        %v8884 = vld [vmem:[%s8848 + $0x8c] sm:$0xf]
        %v8885 = vld [vmem:[%s8848 + $0x90] sm:$0xf]
        %v8886 = vld [vmem:[%s8848 + $0x94] sm:$0xf]
        %v8887 = vld [vmem:[%s8848 + $0x98] sm:$0xf]
        %v8888 = vld [vmem:[%s8848 + $0x9c] sm:$0xf]
        %v8889 = vld [vmem:[%s8848 + $0xa0] sm:$0xf]
        %v8890 = vld [vmem:[%s8848 + $0xa4] sm:$0xf]
        %v8891 = vld [vmem:[%s8848 + $0xa8] sm:$0xf]
        %v8892 = vld [vmem:[%s8848 + $0xac] sm:$0xf]
        %v8893 = vld [vmem:[%s8848 + $0xb0] sm:$0xf]
        %v8894 = vld [vmem:[%s8848 + $0xb4] sm:$0xf]
        %v8895 = vld [vmem:[%s8848 + $0xb8] sm:$0xf]
        %v8896 = vld [vmem:[%s8848 + $0xbc] sm:$0xf]
        %v8897 = vld [vmem:[%s8848 + $0xc0] sm:$0xf]
        %v8898 = vld [vmem:[%s8848 + $0xc4] sm:$0xf]
        %v8899 = vld [vmem:[%s8848 + $0xc8] sm:$0xf]
        %v8900 = vld [vmem:[%s8848 + $0xcc] sm:$0xf]
        %v8901 = vld [vmem:[%s8848 + $0xd0] sm:$0xf]
        %v8902 = vld [vmem:[%s8848 + $0xd4] sm:$0xf]
        %v8903 = vld [vmem:[%s8848 + $0xd8] sm:$0xf]
        %v8904 = vld [vmem:[%s8848 + $0xdc] sm:$0xf]
        %v8905 = vld [vmem:[%s8848 + $0xe0] sm:$0xf]
        %v8906 = vld [vmem:[%s8848 + $0xe4] sm:$0xf]
        %v8907 = vld [vmem:[%s8848 + $0xe8] sm:$0xf]
        %v8908 = vld [vmem:[%s8848 + $0xec] sm:$0xf]
        %v8909 = vld [vmem:[%s8848 + $0xf0] sm:$0xf]
        %v8910 = vld [vmem:[%s8848 + $0xf4] sm:$0xf]
        %v8911 = vld [vmem:[%s8848 + $0xf8] sm:$0xf]
        %v8912 = vld [vmem:[%s8848 + $0xfc] sm:$0xf]
        %v8913 = vld [vmem:[%s968 + $0x1] sm:$0x1]
        %v8914 = vperm.slane %v8913, 0
        %v8979 = vunpack.c.l.b16 %v8849
        %v8980 = vunpack.c.l.b16 %v8850
        %v8981 = vunpack.c.l.b16 %v8851
        %v8982 = vunpack.c.l.b16 %v8852
        %v8983 = vunpack.c.l.b16 %v8853
        %v8984 = vunpack.c.l.b16 %v8854
        %v8985 = vunpack.c.l.b16 %v8855
        %v8986 = vunpack.c.l.b16 %v8856
        %v8987 = vunpack.c.l.b16 %v8857
        %v8988 = vunpack.c.l.b16 %v8858
        %v8989 = vunpack.c.l.b16 %v8859
        %v8990 = vunpack.c.l.b16 %v8860
        %v8991 = vunpack.c.l.b16 %v8861
        %v8992 = vunpack.c.l.b16 %v8862
        %v8993 = vunpack.c.l.b16 %v8863
        %v8994 = vunpack.c.l.b16 %v8864
        %v8995 = vunpack.c.l.b16 %v8865
        %v8996 = vunpack.c.l.b16 %v8866
        %v8997 = vunpack.c.l.b16 %v8867
        %v8998 = vunpack.c.l.b16 %v8868
        %v8999 = vunpack.c.l.b16 %v8869
        %v9000 = vunpack.c.l.b16 %v8870
        %v9001 = vunpack.c.l.b16 %v8871
        %v9002 = vunpack.c.l.b16 %v8872
        %v9003 = vunpack.c.l.b16 %v8873
        %v9004 = vunpack.c.l.b16 %v8874
        %v9005 = vunpack.c.l.b16 %v8875
        %v9006 = vunpack.c.l.b16 %v8876
        %v9007 = vunpack.c.l.b16 %v8877
        %v9008 = vunpack.c.l.b16 %v8878
        %v9009 = vunpack.c.l.b16 %v8879
        %v9010 = vunpack.c.l.b16 %v8880
        %v9011 = vunpack.c.l.b16 %v8881
        %v9012 = vunpack.c.l.b16 %v8882
        %v9013 = vunpack.c.l.b16 %v8883
        %v9014 = vunpack.c.l.b16 %v8884
        %v9015 = vunpack.c.l.b16 %v8885
        %v9016 = vunpack.c.l.b16 %v8886
        %v9017 = vunpack.c.l.b16 %v8887
        %v9018 = vunpack.c.l.b16 %v8888
        %v9019 = vunpack.c.l.b16 %v8889
        %v9020 = vunpack.c.l.b16 %v8890
        %v9021 = vunpack.c.l.b16 %v8891
        %v9022 = vunpack.c.l.b16 %v8892
        %v9023 = vunpack.c.l.b16 %v8893
        %v9024 = vunpack.c.l.b16 %v8894
        %v9025 = vunpack.c.l.b16 %v8895
        %v9026 = vunpack.c.l.b16 %v8896
        %v9027 = vunpack.c.l.b16 %v8897
        %v9028 = vunpack.c.l.b16 %v8898
        %v9029 = vunpack.c.l.b16 %v8899
        %v9030 = vunpack.c.l.b16 %v8900
        %v9031 = vunpack.c.l.b16 %v8901
        %v9032 = vunpack.c.l.b16 %v8902
        %v9033 = vunpack.c.l.b16 %v8903
        %v9034 = vunpack.c.l.b16 %v8904
        %v9035 = vunpack.c.l.b16 %v8905
        %v9036 = vunpack.c.l.b16 %v8906
        %v9037 = vunpack.c.l.b16 %v8907
        %v9038 = vunpack.c.l.b16 %v8908
        %v9039 = vunpack.c.l.b16 %v8909
        %v9040 = vunpack.c.l.b16 %v8910
        %v9041 = vunpack.c.l.b16 %v8911
        %v9042 = vunpack.c.l.b16 %v8912
        %v9043 = vpack.c.b16 %v8980, %v8979
        %v9044 = vpack.c.b16 %v8982, %v8981
        %v9045 = vpack.c.b16 %v8984, %v8983
        %v9046 = vpack.c.b16 %v8986, %v8985
        %v9047 = vpack.c.b16 %v8988, %v8987
        %v9048 = vpack.c.b16 %v8990, %v8989
        %v9049 = vpack.c.b16 %v8992, %v8991
        %v9050 = vpack.c.b16 %v8994, %v8993
        %v9051 = vpack.c.b16 %v8996, %v8995
        %v9052 = vpack.c.b16 %v8998, %v8997
        %v9053 = vpack.c.b16 %v9000, %v8999
        %v9054 = vpack.c.b16 %v9002, %v9001
        %v9055 = vpack.c.b16 %v9004, %v9003
        %v9056 = vpack.c.b16 %v9006, %v9005
        %v9057 = vpack.c.b16 %v9008, %v9007
        %v9058 = vpack.c.b16 %v9010, %v9009
        %v9059 = vpack.c.b16 %v9012, %v9011
        %v9060 = vpack.c.b16 %v9014, %v9013
        %v9061 = vpack.c.b16 %v9016, %v9015
        %v9062 = vpack.c.b16 %v9018, %v9017
        %v9063 = vpack.c.b16 %v9020, %v9019
        %v9064 = vpack.c.b16 %v9022, %v9021
        %v9065 = vpack.c.b16 %v9024, %v9023
        %v9066 = vpack.c.b16 %v9026, %v9025
        %v9067 = vpack.c.b16 %v9028, %v9027
        %v9068 = vpack.c.b16 %v9030, %v9029
        %v9069 = vpack.c.b16 %v9032, %v9031
        %v9070 = vpack.c.b16 %v9034, %v9033
        %v9071 = vpack.c.b16 %v9036, %v9035
        %v9072 = vpack.c.b16 %v9038, %v9037
        %v9073 = vpack.c.b16 %v9040, %v9039
        %v9074 = vpack.c.b16 %v9042, %v9041
        %9107 = vmatpush.bf16.msra.mxu0 %v9050
        %9108 = vmatpush.bf16.msra.mxu0 %v9049
        %9109 = vmatpush.bf16.msra.mxu0 %v9048
        %9110 = vmatpush.bf16.msra.mxu0 %v9047
        %9111 = vmatpush.bf16.msra.mxu0 %v9046
        %9112 = vmatpush.bf16.msra.mxu0 %v9045
        %9113 = vmatpush.bf16.msra.mxu0 %v9044
        %9114 = vmatpush.bf16.msra.mxu0 %v9043
        %9115 = vmatmul.bf16.gmra.mxu0 %v8844
        %v9116 = vpop.f32.mrf.mxu0
        %v9117 = vadd.f32 %v8914, %v9116
        %v9118 = vpop.f32.mrf.mxu0
        %v9119 = vadd.f32 %v8914, %v9118
        %9120 = vdwg.mxu0
        %9121 = vmatpush.bf16.msra.mxu0 %v9058
        %9122 = vmatpush.bf16.msra.mxu0 %v9057
        %9123 = vmatpush.bf16.msra.mxu0 %v9056
        %9124 = vmatpush.bf16.msra.mxu0 %v9055
        %9125 = vmatpush.bf16.msra.mxu0 %v9054
        %9126 = vmatpush.bf16.msra.mxu0 %v9053
        %9127 = vmatpush.bf16.msra.mxu0 %v9052
        %9128 = vmatpush.bf16.msra.mxu0 %v9051
        %9129 = vmatmul.bf16.gmra.mxu0 %v8845
        %v9130 = vpop.f32.mrf.mxu0
        %v9131 = vadd.f32 %v9117, %v9130
        %v9132 = vpop.f32.mrf.mxu0
        %v9133 = vadd.f32 %v9119, %v9132
        %9134 = vdwg.mxu0
        %9135 = vmatpush.bf16.msra.mxu0 %v9066
        %9136 = vmatpush.bf16.msra.mxu0 %v9065
        %9137 = vmatpush.bf16.msra.mxu0 %v9064
        %9138 = vmatpush.bf16.msra.mxu0 %v9063
        %9139 = vmatpush.bf16.msra.mxu0 %v9062
        %9140 = vmatpush.bf16.msra.mxu0 %v9061
        %9141 = vmatpush.bf16.msra.mxu0 %v9060
        %9142 = vmatpush.bf16.msra.mxu0 %v9059
        %9143 = vmatmul.bf16.gmra.mxu0 %v8846
        %v9144 = vpop.f32.mrf.mxu0
        %v9145 = vadd.f32 %v9131, %v9144
        %v9146 = vpop.f32.mrf.mxu0
        %v9147 = vadd.f32 %v9133, %v9146
        %9148 = vdwg.mxu0
        %9149 = vmatpush.bf16.msra.mxu0 %v9074
        %9150 = vmatpush.bf16.msra.mxu0 %v9073
        %9151 = vmatpush.bf16.msra.mxu0 %v9072
        %9152 = vmatpush.bf16.msra.mxu0 %v9071
        %9153 = vmatpush.bf16.msra.mxu0 %v9070
        %9154 = vmatpush.bf16.msra.mxu0 %v9069
        %9155 = vmatpush.bf16.msra.mxu0 %v9068
        %9156 = vmatpush.bf16.msra.mxu0 %v9067
        %9157 = vmatmul.bf16.gmra.mxu0 %v8847
        %v9158 = vpop.f32.mrf.mxu0
        %v9159 = vadd.f32 %v9145, %v9158
        %v9160 = vpop.f32.mrf.mxu0
        %v9161 = vadd.f32 %v9147, %v9160
        %9162 = vdwg.mxu0
        %v9163 = vadd.f32 %v7679, %v9159
        %v9164 = vadd.f32 %v7680, %v9161
        %9165 = vst [vmem:[#allocation18] sm:$0xff] %v8459
        %9166 = vst [vmem:[#allocation18 + $0x8] sm:$0xff] %v8460
        %9167 = vst [vmem:[#allocation18 + $0x10] sm:$0xff] %v8461
        %9168 = vst [vmem:[#allocation18 + $0x18] sm:$0xff] %v8462
        %9169 = vst [vmem:[#allocation19] sm:$0xff] %v9163
        %9170 = vst [vmem:[#allocation19 + $0x8] sm:$0xff] %v9164
        // Predicated region
        $region167: #{sequential_sequence.1} parent=87 // pred_check
          %p9171 = pneg %p484
        $region168: #{sequential_sequence.1} parent=87 // pred_check_branch
          %9173 = sbr.rel (%p9171) target = $region170
        $region169: #{sequential_sequence.1} parent=87 // pred_region
          %9175 = vsyncadd [#allocation5], 0
          %s9176 = sshll.u32 [#allocation18], 4
          %s9177 = int_to_ptr.vmem [resolvable:$true] %s9176
          %s9178 = sshll.u32 %s19, 4
          %s9179 = int_to_ptr.hbm [resolvable:$true] %s9178
          %9184 = dma.vmem_to_hbm [thread:$0]  %s9177, 512, %s9179, [#allocation5], 128, 128, 8
        $region170: #{sequential_sequence.1} parent=87 // pred_fallthru
          _
        // Predicated region
        $region171: #{sequential_sequence.1} parent=87 // pred_check
          %p9185 = pneg %p505
        $region172: #{sequential_sequence.1} parent=87 // pred_check_branch
          %9187 = sbr.rel (%p9185) target = $region174
        $region173: #{sequential_sequence.1} parent=87 // pred_region
          %9189 = vsyncadd [#allocation20], 0
          %s9190 = sshll.u32 [#allocation19], 4
          %s9191 = int_to_ptr.vmem [resolvable:$true] %s9190
          %s9192 = sshll.u32 %s20, 4
          %s9193 = int_to_ptr.hbm [resolvable:$true] %s9192
          %9198 = dma.vmem_to_hbm [thread:$0]  %s9191, 256, %s9193, [#allocation20], 128, 128, 8
        $region174: #{sequential_sequence.1} parent=87 // pred_fallthru
          _
        // Predicated region
        $region175: #{sequential_sequence.1} parent=87 // pred_check
          %p9199 = pneg %p484
        $region176: #{sequential_sequence.1} parent=87 // pred_check_branch
          %9201 = sbr.rel (%p9199) target = $region178
        $region177: #{sequential_sequence.1} parent=87 // pred_region
          %9203 = dma.done [#allocation5], 512
        $region178: #{sequential_sequence.1} parent=87 // pred_fallthru
          _
        // Predicated region
        $region179: #{sequential_sequence.1} parent=87 // pred_check
          %p9204 = pneg %p505
        $region180: #{sequential_sequence.1} parent=87 // pred_check_branch
          %9206 = sbr.rel (%p9204) target = $region182
        $region181: #{sequential_sequence.1} parent=87 // pred_region
          %9208 = dma.done [#allocation20], 256
        $region182: #{sequential_sequence.1} parent=87 // pred_fallthru
          _
      $region88: #{sequential_sequence.1} parent=5 // pred_fallthru
        _
      %p9209 = scmp.le.s32.totalorder 2, %s44
      // Predicated region
      $region183: #{sequential_sequence.1} parent=5 // pred_check
        %p9210 = pneg %p9209
      $region184: #{sequential_sequence.1} parent=5 // pred_check_branch
        %9212 = sbr.rel (%p9210) target = $region186
      $region185: #{sequential_sequence.1} parent=5 // pred_region
        %s9213 = ssub.s32 %s44, 2
      $region186: #{sequential_sequence.1} parent=5 // pred_fallthru
        _
    $region6: #{sequential_sequence.1} parent=1 // loop_footer
      %s48 = sadd.s32 1, %s44
    $region7: #{sequential_sequence.1} parent=1 // loop_footer_branch
      %43 = sbr.rel target = $region3
    $region8: #{sequential_sequence.1} parent=1 // loop_exit
      _
    %9214 = vsyncpa [#allocation4], 1
    %s9215 = scalar_lea.sflag [#allocation4], 1
    %9216 = vsyncpa %s9215, 1
    %9217 = vsyncpa [#allocation7], 1
    %s9218 = scalar_lea.sflag [#allocation7], 1
    %9219 = vsyncpa %s9218, 1
    %9220 = vsyncpa [#allocation10], 1
    %s9221 = scalar_lea.sflag [#allocation10], 1
    %9222 = vsyncpa %s9221, 1
    %9223 = vsyncpa [#allocation13], 1
    %s9224 = scalar_lea.sflag [#allocation13], 1
    %9225 = vsyncpa %s9224, 1
    %9226 = vsyncpa [#allocation16], 1
    %s9227 = scalar_lea.sflag [#allocation16], 1
    %9228 = vsyncpa %s9227, 1
    %9229 = vsyncpa [#allocation5], 1
    %s9230 = scalar_lea.sflag [#allocation5], 1
    %9231 = vsyncpa %s9230, 1
    %9232 = vsyncpa [#allocation20], 1
  %9233 = vsyncmov [#allocation2]
  %s9234 = vpop.sfrf %9233
  %p9235 = scmp.eq.s32.totalorder %s9234, 0
  %p9236 = pneg %p9235
  %9238 = shalt.err (%p9236)
  %s9239 = scalar_lea.sflag [#allocation2], 1
  %9240 = vsyncmov %s9239
  %s9241 = vpop.sfrf %9240
  %p9242 = scmp.eq.s32.totalorder %s9241, 0
  %p9243 = pneg %p9242
  %9245 = shalt.err (%p9243)

</llo_original>
